<compile_context>
chip_gen: v6e
topology: v6e:2x2x1
jax: 0.10.0
libtpu: 0.0.40
codegen_flags: <defaults>
</compile_context>

<pallas_src>
import functools

import jax
import jax.numpy as jnp
from jax.experimental import pallas as pl
from jax.experimental.pallas import tpu as pltpu

# ---------------- scaled-down config (stands in for the 768-dim / 12-layer models) ----
BATCH = 2
SEQ_TEXT = 8           # text sequence length (sublane multiple)
VOCAB = 50             # synthetic vocab
D_MODEL = 128          # encoder width (stands for 768) -- lane-dense
NUM_HEADS = 2
HEAD_DIM = D_MODEL // NUM_HEADS   # 64 (real head dim; padded to 128 in weight layout)
DH_PAD = 128           # lane-aligned per-head slab width
FF = 256               # mlp dim (stands for 3072)
NUM_LAYERS = 2         # stands for 12 (>1 so the fused layer loop is exercised)
IMG = 16               # image spatial (stands for 384)
CH = 3
PATCH = 8              # -> 2x2 = 4 patches (+ CLS = 5 tokens)
HIDDEN = 128           # TextImage hidden_dim (real module value)
NUM_CLS = 2

N_PATCH = (IMG // PATCH) ** 2
SEQ_IMG = N_PATCH + 1          # 5 real image tokens
SEQ_IMG_PAD = 8                # padded to sublane granule; pad tokens attention-masked

# packed head output slab layout (five 128-wide lane-dense segments):
#   [ image_feat(128) | text_aligned(128) | image_aligned(128) | fusion(128) |
#     tail(128) = t_logit(2) | i_logit(2) | sims(1) | logit(1) | zero pad(122) ]
SLAB_W = 5 * 128


def _bcast_spec(arr):
    """Full-array block, same block every grid step (weights / biases)."""
    nd = arr.ndim
    return pl.BlockSpec(arr.shape, lambda *_, _nd=nd: (0,) * _nd)


# ================================ Pallas kernels ======================================

def _embed_ln_kernel(tok_ref, pos_ref, type_ref, g_ref, b_ref, o_ref, *, eps):
    """word + positional + token-type embedding sum, then LayerNorm (one batch elem)."""
    f32 = jnp.float32
    x = (tok_ref[0].astype(f32) + pos_ref[...].astype(f32) + type_ref[...].astype(f32))
    mu = jnp.mean(x, axis=-1, keepdims=True)
    xc = x - mu
    var = jnp.mean(xc * xc, axis=-1, keepdims=True)
    y = xc * jax.lax.rsqrt(var + eps) * g_ref[...].astype(f32) + b_ref[...].astype(f32)
    o_ref[0] = y.astype(o_ref.dtype)


def pallas_embed_ln(tok_emb, pos_emb, type_emb, g, b, *, eps):
    bsz, s, d = tok_emb.shape
    return pl.pallas_call(
        functools.partial(_embed_ln_kernel, eps=eps),
        out_shape=jax.ShapeDtypeStruct((bsz, s, d), jnp.float32),
        grid=(bsz,),
        in_specs=[pl.BlockSpec((1, s, d), lambda i: (i, 0, 0)),
                  _bcast_spec(pos_emb), _bcast_spec(type_emb),
                  _bcast_spec(g), _bcast_spec(b)],
        out_specs=pl.BlockSpec((1, s, d), lambda i: (i, 0, 0)),
        compiler_params=pltpu.CompilerParams(dimension_semantics=("parallel",)),
    )(tok_emb, pos_emb, type_emb, g, b)


def _patch_embed_kernel(p_ref, w_ref, b_ref, cls_ref, pos_ref, o_ref):
    """patch matmul (Conv2d-as-matmul) + CLS concat + sublane padding + pos-emb add."""
    f32, bf16 = jnp.float32, jnp.bfloat16
    patches = p_ref[0].astype(bf16)                                       # (N, C*P*P)
    tok = jnp.dot(patches, w_ref[...], preferred_element_type=f32) + b_ref[...].astype(f32)
    s_pad = o_ref.shape[1]
    n_pad = s_pad - 1 - tok.shape[0]
    pad = jnp.zeros((n_pad, tok.shape[1]), f32)
    toks = jnp.concatenate([cls_ref[...].astype(f32), tok, pad], axis=0)  # (S_pad, D)
    o_ref[0] = (toks + pos_ref[...].astype(f32)).astype(o_ref.dtype)


def pallas_patch_embed(patches, w, b, cls_tok, pos_emb):
    bsz, n, cpp = patches.shape
    d = w.shape[1]
    s = pos_emb.shape[0]
    return pl.pallas_call(
        _patch_embed_kernel,
        out_shape=jax.ShapeDtypeStruct((bsz, s, d), jnp.float32),
        grid=(bsz,),
        in_specs=[pl.BlockSpec((1, n, cpp), lambda i: (i, 0, 0)),
                  _bcast_spec(w), _bcast_spec(b), _bcast_spec(cls_tok), _bcast_spec(pos_emb)],
        out_specs=pl.BlockSpec((1, s, d), lambda i: (i, 0, 0)),
        compiler_params=pltpu.CompilerParams(dimension_semantics=("parallel",)),
    )(patches, w, b, cls_tok, pos_emb)


def _encoder_kernel(x_ref, mask_ref, wqkv_ref, bqkv_ref, wo_ref, bo_ref,
                    ln1g_ref, ln1b_ref, ln2g_ref, ln2b_ref,
                    w1_ref, b1_ref, w2_ref, b2_ref, o_ref,
                    *, heads, dh_pad, pre_ln, eps):
    """Fused FULL encoder for one batch element.

    grid = (B, L); the activation lives in the revisited output block across the L
    axis (init from x_ref at l==0), so layer-to-layer activations never touch HBM.
    One layer = (opt pre-LN) -> fused QKV -> per-head attention -> out-proj ->
    residual/LN -> MLP -> residual/(post-)LN.
    """
    f32, bf16 = jnp.float32, jnp.bfloat16
    l = pl.program_id(1)

    @pl.when(l == 0)
    def _():
        o_ref[...] = x_ref[...]

    def ln(v, g_ref, b_ref):
        mu = jnp.mean(v, axis=-1, keepdims=True)
        c = v - mu
        var = jnp.mean(c * c, axis=-1, keepdims=True)
        return c * jax.lax.rsqrt(var + eps) * g_ref[0].astype(f32) + b_ref[0].astype(f32)

    def mm(a, w, b):  # bf16 operands, fp32 MXU accumulation
        return jnp.dot(a.astype(bf16), w, preferred_element_type=f32) + b

    x = o_ref[0].astype(f32)                       # (S, D) VMEM-resident activation
    s_len = x.shape[0]
    # hoist the mask broadcast out of the per-head loop (JAX does not CSE it)
    mask = jnp.broadcast_to(mask_ref[0].astype(f32), (s_len, s_len))

    h_in = ln(x, ln1g_ref, ln1b_ref) if pre_ln else x
    # 1/sqrt(head_dim) is folded into the Q columns of wqkv at init time.
    qkv = mm(h_in, wqkv_ref[0], bqkv_ref[0].astype(f32))       # (S, 3*H*DH_PAD)

    koff = heads * dh_pad
    voff = 2 * heads * dh_pad
    ctxs = []
    for h in range(heads):                         # static unroll; 128-aligned slices
        qh = qkv[:, h * dh_pad:(h + 1) * dh_pad]
        kh = qkv[:, koff + h * dh_pad:koff + (h + 1) * dh_pad]
        vh = qkv[:, voff + h * dh_pad:voff + (h + 1) * dh_pad]
        s = jax.lax.dot_general(qh.astype(bf16), kh.astype(bf16),
                                (((1,), (1,)), ((), ())),
                                preferred_element_type=f32)                  # (S, S)
        s = s + mask
        s = s - jnp.max(s, axis=-1, keepdims=True)
        p = jnp.exp(s)
        p = p * pl.reciprocal(jnp.sum(p, axis=-1, keepdims=True), approx=True)
        ctxs.append(jnp.dot(p.astype(bf16), vh.astype(bf16),
                            preferred_element_type=f32))                     # (S, DH_PAD)
    ctx_all = jnp.concatenate(ctxs, axis=-1)                                 # (S, H*DH_PAD)
    attn = (jnp.dot(ctx_all.astype(bf16), wo_ref[0], preferred_element_type=f32)
            + bo_ref[0].astype(f32))                                         # K=256 contraction

    if pre_ln:                                     # torchvision ViT encoder block
        x = x + attn
        y = ln(x, ln2g_ref, ln2b_ref)
    else:                                          # RoBERTa post-LN block
        x = ln(x + attn, ln1g_ref, ln1b_ref)
        y = x
    # TODO(synk): tanh-approx GELU (PyTorch default is exact erf, ~1e-3 divergence).
    hmid = jax.nn.gelu(mm(y, w1_ref[0], b1_ref[0].astype(f32)), approximate=True)
    out = x + mm(hmid, w2_ref[0], b2_ref[0].astype(f32))
    if not pre_ln:
        out = ln(out, ln2g_ref, ln2b_ref)
    o_ref[0] = out.astype(o_ref.dtype)


_ENC_WEIGHT_KEYS = ('wqkv', 'bqkv', 'wo', 'bo', 'ln1_g', 'ln1_b', 'ln2_g', 'ln2_b',
                    'w1', 'b1', 'w2', 'b2')


def pallas_encoder(x, mask_add, stacked, *, heads, dh_pad, pre_ln, eps):
    """One pallas_call for the whole layer stack. Weights stacked along a leading L
    axis and streamed one layer per grid step (double-buffered by the pipeline)."""
    bsz, s, d = x.shape
    num_layers = stacked['wqkv'].shape[0]
    weights = tuple(stacked[k] for k in _ENC_WEIGHT_KEYS)
    return pl.pallas_call(
        functools.partial(_encoder_kernel, heads=heads, dh_pad=dh_pad,
                          pre_ln=pre_ln, eps=eps),
        out_shape=jax.ShapeDtypeStruct((bsz, s, d), jnp.float32),
        grid=(bsz, num_layers),                      # batch parallel, layers sequential
        in_specs=[pl.BlockSpec((1, s, d), lambda b, l: (b, 0, 0)),
                  pl.BlockSpec((1, 1, s), lambda b, l: (b, 0, 0))]
                 + [pl.BlockSpec((1,) + w.shape[1:], lambda b, l: (l, 0, 0))
                    for w in weights],
        out_specs=pl.BlockSpec((1, s, d), lambda b, l: (b, 0, 0)),   # resident across l
        compiler_params=pltpu.CompilerParams(
            dimension_semantics=("parallel", "arbitrary"),
            # sized with headroom for the production D=768/FF=3072 weight stream
            vmem_limit_bytes=64 * 1024 * 1024),
    )(x, mask_add, *weights)


def _head_kernel(t_ref, i_ref, lng_ref, lnb_ref,
                 tpw_ref, tpb_ref, ipw_ref, ipb_ref,
                 tcw_ref, tcb_ref, icw_ref, icb_ref,
                 cw_ref, cb_ref, o_ref, *, eps):
    """ViT final LN + both projections + both classifiers + consistency + final clf,
       packed into one lane-dense output slab written with a single unmasked store."""
    f32, bf16 = jnp.float32, jnp.bfloat16

    def mm(a, w_ref, b_ref):
        return (jnp.dot(a.astype(bf16), w_ref[...], preferred_element_type=f32)
                + b_ref[...].astype(f32))

    t_feat = t_ref[...].astype(f32)                          # (B, D) RoBERTa CLS (post-LN)
    i_raw = i_ref[...].astype(f32)                           # (B, D) ViT CLS (pre final-LN)
    mu = jnp.mean(i_raw, axis=-1, keepdims=True)
    c = i_raw - mu
    var = jnp.mean(c * c, axis=-1, keepdims=True)
    i_feat = c * jax.lax.rsqrt(var + eps) * lng_ref[...].astype(f32) + lnb_ref[...].astype(f32)

    t_al = mm(t_feat, tpw_ref, tpb_ref)                      # (B, HIDDEN)
    i_al = mm(i_feat, ipw_ref, ipb_ref)                      # (B, HIDDEN)
    t_log = mm(t_al, tcw_ref, tcb_ref)                       # (B, NUM_CLS)
    i_log = mm(i_al, icw_ref, icb_ref)                       # (B, NUM_CLS)

    # TODO(synk): Consistency stand-in (cosine sim + mean fusion of the aligned views).
    tn = t_al * jax.lax.rsqrt(jnp.sum(t_al * t_al, axis=-1, keepdims=True) + 1e-8)
    inn = i_al * jax.lax.rsqrt(jnp.sum(i_al * i_al, axis=-1, keepdims=True) + 1e-8)
    sims = jnp.sum(tn * inn, axis=-1, keepdims=True)         # (B, 1)
    fusion = 0.5 * (t_al + i_al)
    logit = mm(jax.nn.gelu(fusion, approximate=True), cw_ref, cb_ref)   # (B, 1)

    bsz = t_feat.shape[0]
    nc = t_log.shape[-1]
    tail_pad = jnp.zeros((bsz, 128 - (2 * nc + 2)), f32)
    tail = jnp.concatenate([t_log, i_log, sims, logit, tail_pad], axis=-1)   # (B, 128)
    slab = jnp.concatenate([i_feat, t_al, i_al, fusion, tail], axis=-1)      # (B, 640)
    o_ref[...] = slab.astype(o_ref.dtype)                    # single unmasked store


def pallas_head(text_feat, image_cls_raw, hp):
    bsz = text_feat.shape[0]
    args = (text_feat, image_cls_raw,
            hp['final_ln_g'], hp['final_ln_b'],
            hp['text_proj_w'], hp['text_proj_b'],
            hp['image_proj_w'], hp['image_proj_b'],
            hp['text_clf_w'], hp['text_clf_b'],
            hp['image_clf_w'], hp['image_clf_b'],
            hp['clf_w'], hp['clf_b'])
    return pl.pallas_call(
        functools.partial(_head_kernel, eps=1e-6),
        out_shape=jax.ShapeDtypeStruct((bsz, SLAB_W), jnp.float32),
        grid=(1,),
        in_specs=[_bcast_spec(a) for a in args],
        out_specs=pl.BlockSpec((bsz, SLAB_W), lambda i: (0, 0)),
    )(*args)


# ================================ model glue ==========================================

def text_encode(p, token_ids, attn_mask):
    """RoBERTa-style encoder; returns last_hidden_state[:, 0] (CLS feature)."""
    tok_emb = p['word_emb'][token_ids]                                  # (B, S, D)
    x = pallas_embed_ln(tok_emb, p['pos_emb'], p['type_emb'],
                        p['emb_ln_g'], p['emb_ln_b'], eps=1e-5)
    mask_add = ((1.0 - attn_mask.astype(jnp.float32)) * -1e9)[:, None, :]   # (B, 1, S)
    x = pallas_encoder(x, mask_add, p['stacked'],
                       heads=NUM_HEADS, dh_pad=DH_PAD, pre_ln=False, eps=1e-5)
    return x[:, 0]                                                      # (B, D)


def image_encode_cls(p, image):
    """ViT-style encoder; returns the class-token feature BEFORE the final LayerNorm
       (the final LN is fused into the head kernel; LN(x)[:,0] == LN(x[:,0]))."""
    bsz, c, h_img, w_img = image.shape
    nh, nw = h_img // PATCH, w_img // PATCH
    # TODO(synk): NCHW->patch relayout kept in XLA glue; at production 384x384 this
    # should move into the patch-embed kernel as a strided DMA gather.
    patches = image.reshape(bsz, c, nh, PATCH, nw, PATCH)
    patches = patches.transpose(0, 2, 4, 1, 3, 5).reshape(bsz, nh * nw, c * PATCH * PATCH)
    x = pallas_patch_embed(patches, p['patch_w'], p['patch_b'],
                           p['class_token'], p['pos_emb'])              # (B, S_pad, D)
    key_keep = (jnp.arange(SEQ_IMG_PAD) < SEQ_IMG).astype(jnp.float32)  # mask pad tokens
    mask_add = jnp.broadcast_to(((1.0 - key_keep) * -1e9)[None, None, :],
                                (bsz, 1, SEQ_IMG_PAD))
    x = pallas_encoder(x, mask_add, p['stacked'],
                       heads=NUM_HEADS, dh_pad=DH_PAD, pre_ln=True, eps=1e-6)
    return x[:, 0]                                                      # (B, D) pre final-LN


def text_image_forward(params, token_ids, attn_mask, image):
    text_feature = text_encode(params['text'], token_ids, attn_mask)
    image_cls_raw = image_encode_cls(params['image'], image)

    head_params = dict(
        final_ln_g=params['image']['final_ln_g'], final_ln_b=params['image']['final_ln_b'],
        text_proj_w=params['text_proj_w'], text_proj_b=params['text_proj_b'],
        image_proj_w=params['image_proj_w'], image_proj_b=params['image_proj_b'],
        text_clf_w=params['text_clf_w'], text_clf_b=params['text_clf_b'],
        image_clf_w=params['image_clf_w'], image_clf_b=params['image_clf_b'],
        clf_w=params['clf_w'], clf_b=params['clf_b'])
    slab = pallas_head(text_feature, image_cls_raw, head_params)        # (B, 640)

    di, hd, nc = D_MODEL, HIDDEN, NUM_CLS
    image_feature = slab[:, 0:di]
    text_aligned = slab[:, di:di + hd]
    image_aligned = slab[:, di + hd:di + 2 * hd]
    fusion = slab[:, di + 2 * hd:di + 3 * hd]
    off = di + 3 * hd
    text_logit = slab[:, off:off + nc]
    image_logit = slab[:, off + nc:off + 2 * nc]
    sims = slab[:, off + 2 * nc]
    logit = slab[:, off + 2 * nc + 1]

    return_dict = {
        'text_feat': text_feature, 'image_feat': image_feature,
        'text_aligned': text_aligned, 'image_aligned': image_aligned,
        'feat': fusion, 'logits': logit,
        'text_logit': text_logit, 'image_logit': image_logit, 'sims': sims,
    }
    return logit, return_dict


# ================================ parameter init ======================================

def init_params(key):
    keys = iter(jax.random.split(key, 128))

    def nrm(shape, scale=0.05):
        return scale * jax.random.normal(next(keys), shape, jnp.float32)

    def lin(din, dout):
        # matmul weights stored bf16 (MXU-native rate); biases fp32, pre-shaped (1, dout)
        return nrm((din, dout)).astype(jnp.bfloat16), jnp.zeros((1, dout), jnp.float32)

    def layer(d, ff, heads, dh, dh_pad):
        pad = dh_pad - dh
        scale = dh ** -0.5
        # fold the 1/sqrt(dh) softmax scale into Q; pad each head's Q/K/V to 128 lanes
        wq = nrm((d, heads, dh)) * scale
        wk = nrm((d, heads, dh))
        wv = nrm((d, heads, dh))

        def padh(w):  # (d, H, dh) -> (d, H*dh_pad), zero-padded lanes per head
            return jnp.pad(w, ((0, 0), (0, 0), (0, pad))).reshape(d, heads * dh_pad)

        wqkv = jnp.concatenate([padh(wq), padh(wk), padh(wv)], axis=1).astype(jnp.bfloat16)
        bqkv = jnp.zeros((1, 3 * heads * dh_pad), jnp.float32)
        wo_core = nrm((heads, dh, d))
        wo = jnp.pad(wo_core, ((0, 0), (0, pad), (0, 0))).reshape(heads * dh_pad, d)
        wo = wo.astype(jnp.bfloat16)
        bo = jnp.zeros((1, d), jnp.float32)
        w1, b1 = lin(d, ff)
        w2, b2 = lin(ff, d)
        return dict(wqkv=wqkv, bqkv=bqkv, wo=wo, bo=bo,
                    ln1_g=jnp.ones((1, d), jnp.float32), ln1_b=jnp.zeros((1, d), jnp.float32),
                    ln2_g=jnp.ones((1, d), jnp.float32), ln2_b=jnp.zeros((1, d), jnp.float32),
                    w1=w1, b1=b1, w2=w2, b2=b2)

    def stack_layers(layers):
        return {k: jnp.stack([lp[k] for lp in layers], axis=0) for k in layers[0]}

    text = dict(
        word_emb=nrm((VOCAB, D_MODEL)),
        pos_emb=nrm((SEQ_TEXT, D_MODEL)),
        type_emb=nrm((1, D_MODEL)),
        emb_ln_g=jnp.ones((1, D_MODEL), jnp.float32),
        emb_ln_b=jnp.zeros((1, D_MODEL), jnp.float32),
        stacked=stack_layers([layer(D_MODEL, FF, NUM_HEADS, HEAD_DIM, DH_PAD)
                              for _ in range(NUM_LAYERS)]),
    )

    patch_w, patch_b = lin(CH * PATCH * PATCH, D_MODEL)
    img_pos = jnp.zeros((SEQ_IMG_PAD, D_MODEL), jnp.float32).at[:SEQ_IMG].set(
        nrm((SEQ_IMG, D_MODEL)))
    image = dict(
        patch_w=patch_w, patch_b=patch_b,
        class_token=nrm((1, D_MODEL)),
        pos_emb=img_pos,
        stacked=stack_layers([layer(D_MODEL, FF, NUM_HEADS, HEAD_DIM, DH_PAD)
                              for _ in range(NUM_LAYERS)]),
        final_ln_g=jnp.ones((1, D_MODEL), jnp.float32),
        final_ln_b=jnp.zeros((1, D_MODEL), jnp.float32),
    )

    text_proj_w, text_proj_b = lin(D_MODEL, HIDDEN)
    image_proj_w, image_proj_b = lin(D_MODEL, HIDDEN)
    text_clf_w, text_clf_b = lin(HIDDEN, NUM_CLS)
    image_clf_w, image_clf_b = lin(HIDDEN, NUM_CLS)
    clf_w, clf_b = lin(HIDDEN, 1)

    return dict(text=text, image=image,
                text_proj_w=text_proj_w, text_proj_b=text_proj_b,
                image_proj_w=image_proj_w, image_proj_b=image_proj_b,
                text_clf_w=text_clf_w, text_clf_b=text_clf_b,
                image_clf_w=image_clf_w, image_clf_b=image_clf_b,
                clf_w=clf_w, clf_b=clf_b)


# ================================ main ================================================

if __name__ == "__main__":
    params = init_params(jax.random.PRNGKey(0))

    k_tok, k_img = jax.random.split(jax.random.PRNGKey(0), 2)
    token_ids = jax.random.randint(k_tok, (BATCH, SEQ_TEXT), 0, VOCAB)
    attn_mask = jnp.ones((BATCH, SEQ_TEXT), jnp.float32).at[1, 6:].set(0.0)
    image = jax.random.normal(k_img, (BATCH, CH, IMG, IMG), jnp.float32)

    forward = jax.jit(text_image_forward)
    logit, return_dict = forward(params, token_ids, attn_mask, image)
    jax.block_until_ready((logit, return_dict))

    assert logit.shape == (BATCH,)
    assert return_dict['text_feat'].shape == (BATCH, D_MODEL)
    assert return_dict['image_feat'].shape == (BATCH, D_MODEL)
    assert return_dict['text_logit'].shape == (BATCH, NUM_CLS)
    assert return_dict['image_logit'].shape == (BATCH, NUM_CLS)
    assert return_dict['feat'].shape == (BATCH, HIDDEN)
    assert return_dict['sims'].shape == (BATCH,)
    assert bool(jnp.all(jnp.isfinite(logit)))
    assert bool(jnp.all(jnp.isfinite(return_dict['text_logit'])))
    assert bool(jnp.all(jnp.isfinite(return_dict['image_logit'])))
    print("KERNEL_OK")
</pallas_src>

<mosaic_0001>
module attributes {stable_mosaic.version = 11 : i64} {
  func.func @_embed_ln_kernel(%arg0: i32, %arg1: memref<1x8x128xf32, #tpu.memory_space<vmem>>, %arg2: memref<8x128xf32, #tpu.memory_space<vmem>>, %arg3: memref<1x128xf32, #tpu.memory_space<vmem>>, %arg4: memref<1x128xf32, #tpu.memory_space<vmem>>, %arg5: memref<1x128xf32, #tpu.memory_space<vmem>>, %arg6: memref<1x8x128xf32, #tpu.memory_space<vmem>>) attributes {dimension_semantics = [#tpu.dimension_semantics<parallel>], iteration_bounds = array<i64: 2>, scalar_prefetch = 0 : i64, scratch_operands = 0 : i64, tpu.core_type = #tpu.core_type<tc>, window_params = [{transform_indices = @transform_0, window_bounds = array<i64: 1, 8, 128>}, {pipeline_mode = #tpu.pipeline_mode<synchronous>, transform_indices = @transform_1, window_bounds = array<i64: 8, 128>}, {pipeline_mode = #tpu.pipeline_mode<synchronous>, transform_indices = @transform_2, window_bounds = array<i64: 1, 128>}, {pipeline_mode = #tpu.pipeline_mode<synchronous>, transform_indices = @transform_3, window_bounds = array<i64: 1, 128>}, {pipeline_mode = #tpu.pipeline_mode<synchronous>, transform_indices = @transform_4, window_bounds = array<i64: 1, 128>}, {transform_indices = @transform_5, window_bounds = array<i64: 1, 8, 128>}]} {
    %c0 = arith.constant 0 : index
    %c0_0 = arith.constant 0 : index
    %c0_1 = arith.constant 0 : index
    %0 = vector.load %arg1[%c0, %c0_0, %c0_1] : memref<1x8x128xf32, #tpu.memory_space<vmem>>, vector<1x8x128xf32>
    %1 = vector.shape_cast %0 : vector<1x8x128xf32> to vector<8x128xf32>
    %c0_2 = arith.constant 0 : index
    %c0_3 = arith.constant 0 : index
    %2 = vector.load %arg2[%c0_2, %c0_3] : memref<8x128xf32, #tpu.memory_space<vmem>>, vector<8x128xf32>
    %3 = arith.addf %1, %2 : vector<8x128xf32>
    %c0_4 = arith.constant 0 : index
    %c0_5 = arith.constant 0 : index
    %4 = vector.load %arg3[%c0_4, %c0_5] : memref<1x128xf32, #tpu.memory_space<vmem>>, vector<1x128xf32>
    %5 = vector.broadcast %4 : vector<1x128xf32> to vector<8x128xf32>
    %6 = arith.addf %3, %5 : vector<8x128xf32>
    %cst = arith.constant dense<0.000000e+00> : vector<8xf32>
    %7 = vector.multi_reduction <add>, %6, %cst [1] : vector<8x128xf32> to vector<8xf32>
    %8 = vector.shape_cast %7 : vector<8xf32> to vector<8x1xf32>
    %cst_6 = arith.constant 1.280000e+02 : f32
    %9 = vector.broadcast %cst_6 : f32 to vector<8x1xf32>
    %10 = arith.divf %8, %9 : vector<8x1xf32>
    %11 = vector.broadcast %10 : vector<8x1xf32> to vector<8x128xf32>
    %12 = arith.subf %6, %11 : vector<8x128xf32>
    %13 = arith.mulf %12, %12 : vector<8x128xf32>
    %cst_7 = arith.constant dense<0.000000e+00> : vector<8xf32>
    %14 = vector.multi_reduction <add>, %13, %cst_7 [1] : vector<8x128xf32> to vector<8xf32>
    %15 = vector.shape_cast %14 : vector<8xf32> to vector<8x1xf32>
    %cst_8 = arith.constant 1.280000e+02 : f32
    %16 = vector.broadcast %cst_8 : f32 to vector<8x1xf32>
    %17 = arith.divf %15, %16 : vector<8x1xf32>
    %cst_9 = arith.constant 9.99999974E-6 : f32
    %18 = vector.broadcast %cst_9 : f32 to vector<8x1xf32>
    %19 = arith.addf %17, %18 : vector<8x1xf32>
    %20 = math.rsqrt %19 : vector<8x1xf32>
    %21 = vector.broadcast %20 : vector<8x1xf32> to vector<8x128xf32>
    %22 = arith.mulf %12, %21 : vector<8x128xf32>
    %c0_10 = arith.constant 0 : index
    %c0_11 = arith.constant 0 : index
    %23 = vector.load %arg4[%c0_10, %c0_11] : memref<1x128xf32, #tpu.memory_space<vmem>>, vector<1x128xf32>
    %24 = vector.broadcast %23 : vector<1x128xf32> to vector<8x128xf32>
    %25 = arith.mulf %22, %24 : vector<8x128xf32>
    %c0_12 = arith.constant 0 : index
    %c0_13 = arith.constant 0 : index
    %26 = vector.load %arg5[%c0_12, %c0_13] : memref<1x128xf32, #tpu.memory_space<vmem>>, vector<1x128xf32>
    %27 = vector.broadcast %26 : vector<1x128xf32> to vector<8x128xf32>
    %28 = arith.addf %25, %27 : vector<8x128xf32>
    %c0_14 = arith.constant 0 : index
    %c0_15 = arith.constant 0 : index
    %c0_16 = arith.constant 0 : index
    %29 = vector.load %arg6[%c0_14, %c0_15, %c0_16] : memref<1x8x128xf32, #tpu.memory_space<vmem>>, vector<1x8x128xf32>
    %30 = vector.shape_cast %29 : vector<1x8x128xf32> to vector<8x128xf32>
    %31 = vector.shape_cast %28 : vector<8x128xf32> to vector<1x8x128xf32>
    tpu.vector_store %arg6[%c0_14, %c0_15, %c0_16], %31 {strides = array<i32>} : memref<1x8x128xf32, #tpu.memory_space<vmem>>, vector<1x8x128xf32>,
    return
  }
  func.func @transform_0(%arg0: i32) -> (i32, i32, i32) {
    %c0_i32 = arith.constant 0 : i32
    %c0_i32_0 = arith.constant 0 : i32
    %c0_i32_1 = arith.constant 0 : i32
    return %arg0, %c0_i32, %c0_i32_0 : i32, i32, i32
  }
  func.func @transform_1(%arg0: i32) -> (i32, i32) {
    %c0_i32 = arith.constant 0 : i32
    %c0_i32_0 = arith.constant 0 : i32
    %c0_i32_1 = arith.constant 0 : i32
    return %c0_i32, %c0_i32_0 : i32, i32
  }
  func.func @transform_2(%arg0: i32) -> (i32, i32) {
    %c0_i32 = arith.constant 0 : i32
    %c0_i32_0 = arith.constant 0 : i32
    %c0_i32_1 = arith.constant 0 : i32
    return %c0_i32, %c0_i32_0 : i32, i32
  }
  func.func @transform_3(%arg0: i32) -> (i32, i32) {
    %c0_i32 = arith.constant 0 : i32
    %c0_i32_0 = arith.constant 0 : i32
    %c0_i32_1 = arith.constant 0 : i32
    return %c0_i32, %c0_i32_0 : i32, i32
  }
  func.func @transform_4(%arg0: i32) -> (i32, i32) {
    %c0_i32 = arith.constant 0 : i32
    %c0_i32_0 = arith.constant 0 : i32
    %c0_i32_1 = arith.constant 0 : i32
    return %c0_i32, %c0_i32_0 : i32, i32
  }
  func.func @transform_5(%arg0: i32) -> (i32, i32, i32) {
    %c0_i32 = arith.constant 0 : i32
    %c0_i32_0 = arith.constant 0 : i32
    %c0_i32_1 = arith.constant 0 : i32
    return %arg0, %c0_i32, %c0_i32_0 : i32, i32, i32
  }
}

module attributes {stable_mosaic.version = 11 : i64} {
  func.func @_encoder_kernel(%arg0: i32, %arg1: i32, %arg2: memref<1x8x128xf32, #tpu.memory_space<vmem>>, %arg3: memref<1x1x8xf32, #tpu.memory_space<vmem>>, %arg4: memref<1x128x768xbf16, #tpu.memory_space<vmem>>, %arg5: memref<1x1x768xf32, #tpu.memory_space<vmem>>, %arg6: memref<1x256x128xbf16, #tpu.memory_space<vmem>>, %arg7: memref<1x1x128xf32, #tpu.memory_space<vmem>>, %arg8: memref<1x1x128xf32, #tpu.memory_space<vmem>>, %arg9: memref<1x1x128xf32, #tpu.memory_space<vmem>>, %arg10: memref<1x1x128xf32, #tpu.memory_space<vmem>>, %arg11: memref<1x1x128xf32, #tpu.memory_space<vmem>>, %arg12: memref<1x128x256xbf16, #tpu.memory_space<vmem>>, %arg13: memref<1x1x256xf32, #tpu.memory_space<vmem>>, %arg14: memref<1x256x128xbf16, #tpu.memory_space<vmem>>, %arg15: memref<1x1x128xf32, #tpu.memory_space<vmem>>, %arg16: memref<1x8x128xf32, #tpu.memory_space<vmem>>) attributes {dimension_semantics = [#tpu.dimension_semantics<parallel>, #tpu.dimension_semantics<arbitrary>], iteration_bounds = array<i64: 2, 2>, scalar_prefetch = 0 : i64, scratch_operands = 0 : i64, tpu.core_type = #tpu.core_type<tc>, window_params = [{transform_indices = @transform_0, window_bounds = array<i64: 1, 8, 128>}, {transform_indices = @transform_1, window_bounds = array<i64: 1, 1, 8>}, {transform_indices = @transform_2, window_bounds = array<i64: 1, 128, 768>}, {transform_indices = @transform_3, window_bounds = array<i64: 1, 1, 768>}, {transform_indices = @transform_4, window_bounds = array<i64: 1, 256, 128>}, {transform_indices = @transform_5, window_bounds = array<i64: 1, 1, 128>}, {transform_indices = @transform_6, window_bounds = array<i64: 1, 1, 128>}, {transform_indices = @transform_7, window_bounds = array<i64: 1, 1, 128>}, {transform_indices = @transform_8, window_bounds = array<i64: 1, 1, 128>}, {transform_indices = @transform_9, window_bounds = array<i64: 1, 1, 128>}, {transform_indices = @transform_10, window_bounds = array<i64: 1, 128, 256>}, {transform_indices = @transform_11, window_bounds = array<i64: 1, 1, 256>}, {transform_indices = @transform_12, window_bounds = array<i64: 1, 256, 128>}, {transform_indices = @transform_13, window_bounds = array<i64: 1, 1, 128>}, {transform_indices = @transform_14, window_bounds = array<i64: 1, 8, 128>}]} {
    %c0_i32 = arith.constant 0 : i32
    %0 = arith.cmpi eq, %arg1, %c0_i32 : i32
    %1 = arith.extui %0 : i1 to i32
    %c0_i32_0 = arith.constant 0 : i32
    %2 = arith.cmpi ne, %1, %c0_i32_0 : i32
    scf.if %2 {
      %c0_70 = arith.constant 0 : index
      %c0_71 = arith.constant 0 : index
      %c0_72 = arith.constant 0 : index
      %148 = vector.load %arg2[%c0_70, %c0_71, %c0_72] : memref<1x8x128xf32, #tpu.memory_space<vmem>>, vector<1x8x128xf32>
      %c0_73 = arith.constant 0 : index
      %c0_74 = arith.constant 0 : index
      %c0_75 = arith.constant 0 : index
      %149 = vector.load %arg16[%c0_73, %c0_74, %c0_75] : memref<1x8x128xf32, #tpu.memory_space<vmem>>, vector<1x8x128xf32>
      tpu.vector_store %arg16[%c0_73, %c0_74, %c0_75], %148 {strides = array<i32>} : memref<1x8x128xf32, #tpu.memory_space<vmem>>, vector<1x8x128xf32>,
    } else {
    }
    %c0 = arith.constant 0 : index
    %c0_1 = arith.constant 0 : index
    %c0_2 = arith.constant 0 : index
    %3 = vector.load %arg16[%c0, %c0_1, %c0_2] : memref<1x8x128xf32, #tpu.memory_space<vmem>>, vector<1x8x128xf32>
    %4 = vector.shape_cast %3 : vector<1x8x128xf32> to vector<8x128xf32>
    %c0_3 = arith.constant 0 : index
    %c0_4 = arith.constant 0 : index
    %c0_5 = arith.constant 0 : index
    %5 = vector.load %arg3[%c0_3, %c0_4, %c0_5] : memref<1x1x8xf32, #tpu.memory_space<vmem>>, vector<1x1x8xf32>
    %6 = vector.shape_cast %5 : vector<1x1x8xf32> to vector<1x8xf32>
    %7 = vector.shape_cast %6 : vector<1x8xf32> to vector<1x8xf32>
    %8 = vector.broadcast %7 : vector<1x8xf32> to vector<8x8xf32>
    %c0_6 = arith.constant 0 : index
    %c0_7 = arith.constant 0 : index
    %c0_8 = arith.constant 0 : index
    %9 = vector.load %arg4[%c0_6, %c0_7, %c0_8] : memref<1x128x768xbf16, #tpu.memory_space<vmem>>, vector<1x128x768xbf16>
    %10 = vector.shape_cast %9 : vector<1x128x768xbf16> to vector<128x768xbf16>
    %c0_9 = arith.constant 0 : index
    %c0_10 = arith.constant 0 : index
    %c0_11 = arith.constant 0 : index
    %11 = vector.load %arg5[%c0_9, %c0_10, %c0_11] : memref<1x1x768xf32, #tpu.memory_space<vmem>>, vector<1x1x768xf32>
    %12 = vector.shape_cast %11 : vector<1x1x768xf32> to vector<1x768xf32>
    %13 = arith.truncf %4 : vector<8x128xf32> to vector<8x128xbf16>
    %cst = arith.constant dense<0.000000e+00> : vector<8x768xf32>
    %14 = tpu.matmul %13, %10, %cst {dimension_numbers = #tpu.dot_dimension_numbers<[1], [0], [0], [1], [0, 0, 1, 1], [], []>} : vector<8x128xbf16>, vector<128x768xbf16>, vector<8x768xf32> -> vector<8x768xf32>
    %15 = vector.broadcast %12 : vector<1x768xf32> to vector<8x768xf32>
    %16 = arith.addf %14, %15 : vector<8x768xf32>
    %17 = vector.extract_strided_slice %16 {offsets = [0, 0], sizes = [8, 128], strides = [1, 1]} : vector<8x768xf32> to vector<8x128xf32>
    %18 = vector.extract_strided_slice %16 {offsets = [0, 256], sizes = [8, 128], strides = [1, 1]} : vector<8x768xf32> to vector<8x128xf32>
    %19 = vector.extract_strided_slice %16 {offsets = [0, 512], sizes = [8, 128], strides = [1, 1]} : vector<8x768xf32> to vector<8x128xf32>
    %20 = arith.truncf %17 : vector<8x128xf32> to vector<8x128xbf16>
    %21 = arith.truncf %18 : vector<8x128xf32> to vector<8x128xbf16>
    %cst_12 = arith.constant dense<0.000000e+00> : vector<8x8xf32>
    %22 = tpu.matmul %20, %21, %cst_12 {dimension_numbers = #tpu.dot_dimension_numbers<[1], [1], [0], [0], [0, 0, 1, 0], [], []>} : vector<8x128xbf16>, vector<8x128xbf16>, vector<8x8xf32> -> vector<8x8xf32>
    %23 = arith.addf %22, %8 : vector<8x8xf32>
    %cst_13 = arith.constant dense<0xFF800000> : vector<8xf32>
    %24 = vector.multi_reduction <maximumf>, %23, %cst_13 [1] : vector<8x8xf32> to vector<8xf32>
    %25 = vector.shape_cast %24 : vector<8xf32> to vector<8x1xf32>
    %26 = vector.broadcast %25 : vector<8x1xf32> to vector<8x8xf32>
    %27 = arith.subf %23, %26 : vector<8x8xf32>
    %28 = math.exp %27 : vector<8x8xf32>
    %cst_14 = arith.constant dense<0.000000e+00> : vector<8xf32>
    %29 = vector.multi_reduction <add>, %28, %cst_14 [1] : vector<8x8xf32> to vector<8xf32>
    %30 = vector.shape_cast %29 : vector<8xf32> to vector<8x1xf32>
    %31 = tpu.reciprocal %30 {approx = true} : vector<8x1xf32> -> vector<8x1xf32>
    %32 = vector.broadcast %31 : vector<8x1xf32> to vector<8x8xf32>
    %33 = arith.mulf %28, %32 : vector<8x8xf32>
    %34 = arith.truncf %33 : vector<8x8xf32> to vector<8x8xbf16>
    %35 = arith.truncf %19 : vector<8x128xf32> to vector<8x128xbf16>
    %cst_15 = arith.constant dense<0.000000e+00> : vector<8x128xf32>
    %36 = tpu.matmul %34, %35, %cst_15 {dimension_numbers = #tpu.dot_dimension_numbers<[1], [0], [0], [1], [0, 0, 1, 1], [], []>} : vector<8x8xbf16>, vector<8x128xbf16>, vector<8x128xf32> -> vector<8x128xf32>
    %37 = vector.extract_strided_slice %16 {offsets = [0, 128], sizes = [8, 128], strides = [1, 1]} : vector<8x768xf32> to vector<8x128xf32>
    %38 = vector.extract_strided_slice %16 {offsets = [0, 384], sizes = [8, 128], strides = [1, 1]} : vector<8x768xf32> to vector<8x128xf32>
    %39 = vector.extract_strided_slice %16 {offsets = [0, 640], sizes = [8, 128], strides = [1, 1]} : vector<8x768xf32> to vector<8x128xf32>
    %40 = arith.truncf %37 : vector<8x128xf32> to vector<8x128xbf16>
    %41 = arith.truncf %38 : vector<8x128xf32> to vector<8x128xbf16>
    %cst_16 = arith.constant dense<0.000000e+00> : vector<8x8xf32>
    %42 = tpu.matmul %40, %41, %cst_16 {dimension_numbers = #tpu.dot_dimension_numbers<[1], [1], [0], [0], [0, 0, 1, 0], [], []>} : vector<8x128xbf16>, vector<8x128xbf16>, vector<8x8xf32> -> vector<8x8xf32>
    %43 = arith.addf %42, %8 : vector<8x8xf32>
    %cst_17 = arith.constant dense<0xFF800000> : vector<8xf32>
    %44 = vector.multi_reduction <maximumf>, %43, %cst_17 [1] : vector<8x8xf32> to vector<8xf32>
    %45 = vector.shape_cast %44 : vector<8xf32> to vector<8x1xf32>
    %46 = vector.broadcast %45 : vector<8x1xf32> to vector<8x8xf32>
    %47 = arith.subf %43, %46 : vector<8x8xf32>
    %48 = math.exp %47 : vector<8x8xf32>
    %cst_18 = arith.constant dense<0.000000e+00> : vector<8xf32>
    %49 = vector.multi_reduction <add>, %48, %cst_18 [1] : vector<8x8xf32> to vector<8xf32>
    %50 = vector.shape_cast %49 : vector<8xf32> to vector<8x1xf32>
    %51 = tpu.reciprocal %50 {approx = true} : vector<8x1xf32> -> vector<8x1xf32>
    %52 = vector.broadcast %51 : vector<8x1xf32> to vector<8x8xf32>
    %53 = arith.mulf %48, %52 : vector<8x8xf32>
    %54 = arith.truncf %53 : vector<8x8xf32> to vector<8x8xbf16>
    %55 = arith.truncf %39 : vector<8x128xf32> to vector<8x128xbf16>
    %cst_19 = arith.constant dense<0.000000e+00> : vector<8x128xf32>
    %56 = tpu.matmul %54, %55, %cst_19 {dimension_numbers = #tpu.dot_dimension_numbers<[1], [0], [0], [1], [0, 0, 1, 1], [], []>} : vector<8x8xbf16>, vector<8x128xbf16>, vector<8x128xf32> -> vector<8x128xf32>
    %57 = tpu.concatenate %36, %56 in 1 : vector<8x128xf32>, vector<8x128xf32> -> vector<8x256xf32>
    %58 = arith.truncf %57 : vector<8x256xf32> to vector<8x256xbf16>
    %c0_20 = arith.constant 0 : index
    %c0_21 = arith.constant 0 : index
    %c0_22 = arith.constant 0 : index
    %59 = vector.load %arg6[%c0_20, %c0_21, %c0_22] : memref<1x256x128xbf16, #tpu.memory_space<vmem>>, vector<1x256x128xbf16>
    %60 = vector.shape_cast %59 : vector<1x256x128xbf16> to vector<256x128xbf16>
    %cst_23 = arith.constant dense<0.000000e+00> : vector<8x128xf32>
    %61 = tpu.matmul %58, %60, %cst_23 {dimension_numbers = #tpu.dot_dimension_numbers<[1], [0], [0], [1], [0, 0, 1, 1], [], []>} : vector<8x256xbf16>, vector<256x128xbf16>, vector<8x128xf32> -> vector<8x128xf32>
    %c0_24 = arith.constant 0 : index
    %c0_25 = arith.constant 0 : index
    %c0_26 = arith.constant 0 : index
    %62 = vector.load %arg7[%c0_24, %c0_25, %c0_26] : memref<1x1x128xf32, #tpu.memory_space<vmem>>, vector<1x1x128xf32>
    %63 = vector.shape_cast %62 : vector<1x1x128xf32> to vector<1x128xf32>
    %64 = vector.broadcast %63 : vector<1x128xf32> to vector<8x128xf32>
    %65 = arith.addf %61, %64 : vector<8x128xf32>
    %66 = arith.addf %4, %65 : vector<8x128xf32>
    %cst_27 = arith.constant dense<0.000000e+00> : vector<8xf32>
    %67 = vector.multi_reduction <add>, %66, %cst_27 [1] : vector<8x128xf32> to vector<8xf32>
    %68 = vector.shape_cast %67 : vector<8xf32> to vector<8x1xf32>
    %cst_28 = arith.constant 1.280000e+02 : f32
    %69 = vector.broadcast %cst_28 : f32 to vector<8x1xf32>
    %70 = arith.divf %68, %69 : vector<8x1xf32>
    %71 = vector.broadcast %70 : vector<8x1xf32> to vector<8x128xf32>
    %72 = arith.subf %66, %71 : vector<8x128xf32>
    %73 = arith.mulf %72, %72 : vector<8x128xf32>
    %cst_29 = arith.constant dense<0.000000e+00> : vector<8xf32>
    %74 = vector.multi_reduction <add>, %73, %cst_29 [1] : vector<8x128xf32> to vector<8xf32>
    %75 = vector.shape_cast %74 : vector<8xf32> to vector<8x1xf32>
    %cst_30 = arith.constant 1.280000e+02 : f32
    %76 = vector.broadcast %cst_30 : f32 to vector<8x1xf32>
    %77 = arith.divf %75, %76 : vector<8x1xf32>
    %cst_31 = arith.constant 9.99999974E-6 : f32
    %78 = vector.broadcast %cst_31 : f32 to vector<8x1xf32>
    %79 = arith.addf %77, %78 : vector<8x1xf32>
    %80 = math.rsqrt %79 : vector<8x1xf32>
    %81 = vector.broadcast %80 : vector<8x1xf32> to vector<8x128xf32>
    %82 = arith.mulf %72, %81 : vector<8x128xf32>
    %c0_32 = arith.constant 0 : index
    %c0_33 = arith.constant 0 : index
    %c0_34 = arith.constant 0 : index
    %83 = vector.load %arg8[%c0_32, %c0_33, %c0_34] : memref<1x1x128xf32, #tpu.memory_space<vmem>>, vector<1x1x128xf32>
    %84 = vector.shape_cast %83 : vector<1x1x128xf32> to vector<1x128xf32>
    %85 = vector.broadcast %84 : vector<1x128xf32> to vector<8x128xf32>
    %86 = arith.mulf %82, %85 : vector<8x128xf32>
    %c0_35 = arith.constant 0 : index
    %c0_36 = arith.constant 0 : index
    %c0_37 = arith.constant 0 : index
    %87 = vector.load %arg9[%c0_35, %c0_36, %c0_37] : memref<1x1x128xf32, #tpu.memory_space<vmem>>, vector<1x1x128xf32>
    %88 = vector.shape_cast %87 : vector<1x1x128xf32> to vector<1x128xf32>
    %89 = vector.broadcast %88 : vector<1x128xf32> to vector<8x128xf32>
    %90 = arith.addf %86, %89 : vector<8x128xf32>
    %c0_38 = arith.constant 0 : index
    %c0_39 = arith.constant 0 : index
    %c0_40 = arith.constant 0 : index
    %91 = vector.load %arg12[%c0_38, %c0_39, %c0_40] : memref<1x128x256xbf16, #tpu.memory_space<vmem>>, vector<1x128x256xbf16>
    %92 = vector.shape_cast %91 : vector<1x128x256xbf16> to vector<128x256xbf16>
    %c0_41 = arith.constant 0 : index
    %c0_42 = arith.constant 0 : index
    %c0_43 = arith.constant 0 : index
    %93 = vector.load %arg13[%c0_41, %c0_42, %c0_43] : memref<1x1x256xf32, #tpu.memory_space<vmem>>, vector<1x1x256xf32>
    %94 = vector.shape_cast %93 : vector<1x1x256xf32> to vector<1x256xf32>
    %95 = arith.truncf %90 : vector<8x128xf32> to vector<8x128xbf16>
    %cst_44 = arith.constant dense<0.000000e+00> : vector<8x256xf32>
    %96 = tpu.matmul %95, %92, %cst_44 {dimension_numbers = #tpu.dot_dimension_numbers<[1], [0], [0], [1], [0, 0, 1, 1], [], []>} : vector<8x128xbf16>, vector<128x256xbf16>, vector<8x256xf32> -> vector<8x256xf32>
    %97 = vector.broadcast %94 : vector<1x256xf32> to vector<8x256xf32>
    %98 = arith.addf %96, %97 : vector<8x256xf32>
    %99 = arith.mulf %98, %98 : vector<8x256xf32>
    %100 = arith.mulf %98, %99 : vector<8x256xf32>
    %cst_45 = arith.constant 4.471500e-02 : f32
    %101 = vector.broadcast %cst_45 : f32 to vector<8x256xf32>
    %102 = arith.mulf %101, %100 : vector<8x256xf32>
    %103 = arith.addf %98, %102 : vector<8x256xf32>
    %cst_46 = arith.constant 0.797884583 : f32
    %104 = vector.broadcast %cst_46 : f32 to vector<8x256xf32>
    %105 = arith.mulf %104, %103 : vector<8x256xf32>
    %106 = math.tanh %105 : vector<8x256xf32>
    %cst_47 = arith.constant 1.000000e+00 : f32
    %107 = vector.broadcast %cst_47 : f32 to vector<8x256xf32>
    %108 = arith.addf %107, %106 : vector<8x256xf32>
    %cst_48 = arith.constant 5.000000e-01 : f32
    %109 = vector.broadcast %cst_48 : f32 to vector<8x256xf32>
    %110 = arith.mulf %109, %108 : vector<8x256xf32>
    %111 = arith.mulf %98, %110 : vector<8x256xf32>
    %c0_49 = arith.constant 0 : index
    %c0_50 = arith.constant 0 : index
    %c0_51 = arith.constant 0 : index
    %112 = vector.load %arg14[%c0_49, %c0_50, %c0_51] : memref<1x256x128xbf16, #tpu.memory_space<vmem>>, vector<1x256x128xbf16>
    %113 = vector.shape_cast %112 : vector<1x256x128xbf16> to vector<256x128xbf16>
    %c0_52 = arith.constant 0 : index
    %c0_53 = arith.constant 0 : index
    %c0_54 = arith.constant 0 : index
    %114 = vector.load %arg15[%c0_52, %c0_53, %c0_54] : memref<1x1x128xf32, #tpu.memory_space<vmem>>, vector<1x1x128xf32>
    %115 = vector.shape_cast %114 : vector<1x1x128xf32> to vector<1x128xf32>
    %116 = arith.truncf %111 : vector<8x256xf32> to vector<8x256xbf16>
    %cst_55 = arith.constant dense<0.000000e+00> : vector<8x128xf32>
    %117 = tpu.matmul %116, %113, %cst_55 {dimension_numbers = #tpu.dot_dimension_numbers<[1], [0], [0], [1], [0, 0, 1, 1], [], []>} : vector<8x256xbf16>, vector<256x128xbf16>, vector<8x128xf32> -> vector<8x128xf32>
    %118 = vector.broadcast %115 : vector<1x128xf32> to vector<8x128xf32>
    %119 = arith.addf %117, %118 : vector<8x128xf32>
    %120 = arith.addf %90, %119 : vector<8x128xf32>
    %cst_56 = arith.constant dense<0.000000e+00> : vector<8xf32>
    %121 = vector.multi_reduction <add>, %120, %cst_56 [1] : vector<8x128xf32> to vector<8xf32>
    %122 = vector.shape_cast %121 : vector<8xf32> to vector<8x1xf32>
    %cst_57 = arith.constant 1.280000e+02 : f32
    %123 = vector.broadcast %cst_57 : f32 to vector<8x1xf32>
    %124 = arith.divf %122, %123 : vector<8x1xf32>
    %125 = vector.broadcast %124 : vector<8x1xf32> to vector<8x128xf32>
    %126 = arith.subf %120, %125 : vector<8x128xf32>
    %127 = arith.mulf %126, %126 : vector<8x128xf32>
    %cst_58 = arith.constant dense<0.000000e+00> : vector<8xf32>
    %128 = vector.multi_reduction <add>, %127, %cst_58 [1] : vector<8x128xf32> to vector<8xf32>
    %129 = vector.shape_cast %128 : vector<8xf32> to vector<8x1xf32>
    %cst_59 = arith.constant 1.280000e+02 : f32
    %130 = vector.broadcast %cst_59 : f32 to vector<8x1xf32>
    %131 = arith.divf %129, %130 : vector<8x1xf32>
    %cst_60 = arith.constant 9.99999974E-6 : f32
    %132 = vector.broadcast %cst_60 : f32 to vector<8x1xf32>
    %133 = arith.addf %131, %132 : vector<8x1xf32>
    %134 = math.rsqrt %133 : vector<8x1xf32>
    %135 = vector.broadcast %134 : vector<8x1xf32> to vector<8x128xf32>
    %136 = arith.mulf %126, %135 : vector<8x128xf32>
    %c0_61 = arith.constant 0 : index
    %c0_62 = arith.constant 0 : index
    %c0_63 = arith.constant 0 : index
    %137 = vector.load %arg10[%c0_61, %c0_62, %c0_63] : memref<1x1x128xf32, #tpu.memory_space<vmem>>, vector<1x1x128xf32>
    %138 = vector.shape_cast %137 : vector<1x1x128xf32> to vector<1x128xf32>
    %139 = vector.broadcast %138 : vector<1x128xf32> to vector<8x128xf32>
    %140 = arith.mulf %136, %139 : vector<8x128xf32>
    %c0_64 = arith.constant 0 : index
    %c0_65 = arith.constant 0 : index
    %c0_66 = arith.constant 0 : index
    %141 = vector.load %arg11[%c0_64, %c0_65, %c0_66] : memref<1x1x128xf32, #tpu.memory_space<vmem>>, vector<1x1x128xf32>
    %142 = vector.shape_cast %141 : vector<1x1x128xf32> to vector<1x128xf32>
    %143 = vector.broadcast %142 : vector<1x128xf32> to vector<8x128xf32>
    %144 = arith.addf %140, %143 : vector<8x128xf32>
    %c0_67 = arith.constant 0 : index
    %c0_68 = arith.constant 0 : index
    %c0_69 = arith.constant 0 : index
    %145 = vector.load %arg16[%c0_67, %c0_68, %c0_69] : memref<1x8x128xf32, #tpu.memory_space<vmem>>, vector<1x8x128xf32>
    %146 = vector.shape_cast %145 : vector<1x8x128xf32> to vector<8x128xf32>
    %147 = vector.shape_cast %144 : vector<8x128xf32> to vector<1x8x128xf32>
    tpu.vector_store %arg16[%c0_67, %c0_68, %c0_69], %147 {strides = array<i32>} : memref<1x8x128xf32, #tpu.memory_space<vmem>>, vector<1x8x128xf32>,
    return
  }
  func.func @transform_0(%arg0: i32, %arg1: i32) -> (i32, i32, i32) {
    %c0_i32 = arith.constant 0 : i32
    %c0_i32_0 = arith.constant 0 : i32
    %c0_i32_1 = arith.constant 0 : i32
    return %arg0, %c0_i32, %c0_i32_0 : i32, i32, i32
  }
  func.func @transform_1(%arg0: i32, %arg1: i32) -> (i32, i32, i32) {
    %c0_i32 = arith.constant 0 : i32
    %c0_i32_0 = arith.constant 0 : i32
    %c0_i32_1 = arith.constant 0 : i32
    return %arg0, %c0_i32, %c0_i32_0 : i32, i32, i32
  }
  func.func @transform_2(%arg0: i32, %arg1: i32) -> (i32, i32, i32) {
    %c0_i32 = arith.constant 0 : i32
    %c0_i32_0 = arith.constant 0 : i32
    %c0_i32_1 = arith.constant 0 : i32
    return %arg1, %c0_i32, %c0_i32_0 : i32, i32, i32
  }
  func.func @transform_3(%arg0: i32, %arg1: i32) -> (i32, i32, i32) {
    %c0_i32 = arith.constant 0 : i32
    %c0_i32_0 = arith.constant 0 : i32
    %c0_i32_1 = arith.constant 0 : i32
    return %arg1, %c0_i32, %c0_i32_0 : i32, i32, i32
  }
  func.func @transform_4(%arg0: i32, %arg1: i32) -> (i32, i32, i32) {
    %c0_i32 = arith.constant 0 : i32
    %c0_i32_0 = arith.constant 0 : i32
    %c0_i32_1 = arith.constant 0 : i32
    return %arg1, %c0_i32, %c0_i32_0 : i32, i32, i32
  }
  func.func @transform_5(%arg0: i32, %arg1: i32) -> (i32, i32, i32) {
    %c0_i32 = arith.constant 0 : i32
    %c0_i32_0 = arith.constant 0 : i32
    %c0_i32_1 = arith.constant 0 : i32
    return %arg1, %c0_i32, %c0_i32_0 : i32, i32, i32
  }
  func.func @transform_6(%arg0: i32, %arg1: i32) -> (i32, i32, i32) {
    %c0_i32 = arith.constant 0 : i32
    %c0_i32_0 = arith.constant 0 : i32
    %c0_i32_1 = arith.constant 0 : i32
    return %arg1, %c0_i32, %c0_i32_0 : i32, i32, i32
  }
  func.func @transform_7(%arg0: i32, %arg1: i32) -> (i32, i32, i32) {
    %c0_i32 = arith.constant 0 : i32
    %c0_i32_0 = arith.constant 0 : i32
    %c0_i32_1 = arith.constant 0 : i32
    return %arg1, %c0_i32, %c0_i32_0 : i32, i32, i32
  }
  func.func @transform_8(%arg0: i32, %arg1: i32) -> (i32, i32, i32) {
    %c0_i32 = arith.constant 0 : i32
    %c0_i32_0 = arith.constant 0 : i32
    %c0_i32_1 = arith.constant 0 : i32
    return %arg1, %c0_i32, %c0_i32_0 : i32, i32, i32
  }
  func.func @transform_9(%arg0: i32, %arg1: i32) -> (i32, i32, i32) {
    %c0_i32 = arith.constant 0 : i32
    %c0_i32_0 = arith.constant 0 : i32
    %c0_i32_1 = arith.constant 0 : i32
    return %arg1, %c0_i32, %c0_i32_0 : i32, i32, i32
  }
  func.func @transform_10(%arg0: i32, %arg1: i32) -> (i32, i32, i32) {
    %c0_i32 = arith.constant 0 : i32
    %c0_i32_0 = arith.constant 0 : i32
    %c0_i32_1 = arith.constant 0 : i32
    return %arg1, %c0_i32, %c0_i32_0 : i32, i32, i32
  }
  func.func @transform_11(%arg0: i32, %arg1: i32) -> (i32, i32, i32) {
    %c0_i32 = arith.constant 0 : i32
    %c0_i32_0 = arith.constant 0 : i32
    %c0_i32_1 = arith.constant 0 : i32
    return %arg1, %c0_i32, %c0_i32_0 : i32, i32, i32
  }
  func.func @transform_12(%arg0: i32, %arg1: i32) -> (i32, i32, i32) {
    %c0_i32 = arith.constant 0 : i32
    %c0_i32_0 = arith.constant 0 : i32
    %c0_i32_1 = arith.constant 0 : i32
    return %arg1, %c0_i32, %c0_i32_0 : i32, i32, i32
  }
  func.func @transform_13(%arg0: i32, %arg1: i32) -> (i32, i32, i32) {
    %c0_i32 = arith.constant 0 : i32
    %c0_i32_0 = arith.constant 0 : i32
    %c0_i32_1 = arith.constant 0 : i32
    return %arg1, %c0_i32, %c0_i32_0 : i32, i32, i32
  }
  func.func @transform_14(%arg0: i32, %arg1: i32) -> (i32, i32, i32) {
    %c0_i32 = arith.constant 0 : i32
    %c0_i32_0 = arith.constant 0 : i32
    %c0_i32_1 = arith.constant 0 : i32
    return %arg0, %c0_i32, %c0_i32_0 : i32, i32, i32
  }
}

module attributes {stable_mosaic.version = 11 : i64} {
  func.func @_patch_embed_kernel(%arg0: i32, %arg1: memref<1x4x192xf32, #tpu.memory_space<vmem>>, %arg2: memref<192x128xbf16, #tpu.memory_space<vmem>>, %arg3: memref<1x128xf32, #tpu.memory_space<vmem>>, %arg4: memref<1x128xf32, #tpu.memory_space<vmem>>, %arg5: memref<8x128xf32, #tpu.memory_space<vmem>>, %arg6: memref<1x8x128xf32, #tpu.memory_space<vmem>>) attributes {dimension_semantics = [#tpu.dimension_semantics<parallel>], iteration_bounds = array<i64: 2>, scalar_prefetch = 0 : i64, scratch_operands = 0 : i64, tpu.core_type = #tpu.core_type<tc>, window_params = [{transform_indices = @transform_0, window_bounds = array<i64: 1, 4, 192>}, {pipeline_mode = #tpu.pipeline_mode<synchronous>, transform_indices = @transform_1, window_bounds = array<i64: 192, 128>}, {pipeline_mode = #tpu.pipeline_mode<synchronous>, transform_indices = @transform_2, window_bounds = array<i64: 1, 128>}, {pipeline_mode = #tpu.pipeline_mode<synchronous>, transform_indices = @transform_3, window_bounds = array<i64: 1, 128>}, {pipeline_mode = #tpu.pipeline_mode<synchronous>, transform_indices = @transform_4, window_bounds = array<i64: 8, 128>}, {transform_indices = @transform_5, window_bounds = array<i64: 1, 8, 128>}]} {
    %c0 = arith.constant 0 : index
    %c0_0 = arith.constant 0 : index
    %c0_1 = arith.constant 0 : index
    %0 = vector.load %arg1[%c0, %c0_0, %c0_1] : memref<1x4x192xf32, #tpu.memory_space<vmem>>, vector<1x4x192xf32>
    %1 = vector.shape_cast %0 : vector<1x4x192xf32> to vector<4x192xf32>
    %2 = arith.truncf %1 : vector<4x192xf32> to vector<4x192xbf16>
    %c0_2 = arith.constant 0 : index
    %c0_3 = arith.constant 0 : index
    %3 = vector.load %arg2[%c0_2, %c0_3] : memref<192x128xbf16, #tpu.memory_space<vmem>>, vector<192x128xbf16>
    %cst = arith.constant dense<0.000000e+00> : vector<4x128xf32>
    %4 = tpu.matmul %2, %3, %cst {dimension_numbers = #tpu.dot_dimension_numbers<[1], [0], [0], [1], [0, 0, 1, 1], [], []>} : vector<4x192xbf16>, vector<192x128xbf16>, vector<4x128xf32> -> vector<4x128xf32>
    %c0_4 = arith.constant 0 : index
    %c0_5 = arith.constant 0 : index
    %5 = vector.load %arg3[%c0_4, %c0_5] : memref<1x128xf32, #tpu.memory_space<vmem>>, vector<1x128xf32>
    %6 = vector.broadcast %5 : vector<1x128xf32> to vector<4x128xf32>
    %7 = arith.addf %4, %6 : vector<4x128xf32>
    %cst_6 = arith.constant 0.000000e+00 : f32
    %8 = vector.broadcast %cst_6 : f32 to vector<3x128xf32>
    %c0_7 = arith.constant 0 : index
    %c0_8 = arith.constant 0 : index
    %9 = vector.load %arg4[%c0_7, %c0_8] : memref<1x128xf32, #tpu.memory_space<vmem>>, vector<1x128xf32>
    %10 = tpu.concatenate %9, %7, %8 in 0 : vector<1x128xf32>, vector<4x128xf32>, vector<3x128xf32> -> vector<8x128xf32>
    %c0_9 = arith.constant 0 : index
    %c0_10 = arith.constant 0 : index
    %11 = vector.load %arg5[%c0_9, %c0_10] : memref<8x128xf32, #tpu.memory_space<vmem>>, vector<8x128xf32>
    %12 = arith.addf %10, %11 : vector<8x128xf32>
    %c0_11 = arith.constant 0 : index
    %c0_12 = arith.constant 0 : index
    %c0_13 = arith.constant 0 : index
    %13 = vector.load %arg6[%c0_11, %c0_12, %c0_13] : memref<1x8x128xf32, #tpu.memory_space<vmem>>, vector<1x8x128xf32>
    %14 = vector.shape_cast %13 : vector<1x8x128xf32> to vector<8x128xf32>
    %15 = vector.shape_cast %12 : vector<8x128xf32> to vector<1x8x128xf32>
    tpu.vector_store %arg6[%c0_11, %c0_12, %c0_13], %15 {strides = array<i32>} : memref<1x8x128xf32, #tpu.memory_space<vmem>>, vector<1x8x128xf32>,
    return
  }
  func.func @transform_0(%arg0: i32) -> (i32, i32, i32) {
    %c0_i32 = arith.constant 0 : i32
    %c0_i32_0 = arith.constant 0 : i32
    %c0_i32_1 = arith.constant 0 : i32
    return %arg0, %c0_i32, %c0_i32_0 : i32, i32, i32
  }
  func.func @transform_1(%arg0: i32) -> (i32, i32) {
    %c0_i32 = arith.constant 0 : i32
    %c0_i32_0 = arith.constant 0 : i32
    %c0_i32_1 = arith.constant 0 : i32
    return %c0_i32, %c0_i32_0 : i32, i32
  }
  func.func @transform_2(%arg0: i32) -> (i32, i32) {
    %c0_i32 = arith.constant 0 : i32
    %c0_i32_0 = arith.constant 0 : i32
    %c0_i32_1 = arith.constant 0 : i32
    return %c0_i32, %c0_i32_0 : i32, i32
  }
  func.func @transform_3(%arg0: i32) -> (i32, i32) {
    %c0_i32 = arith.constant 0 : i32
    %c0_i32_0 = arith.constant 0 : i32
    %c0_i32_1 = arith.constant 0 : i32
    return %c0_i32, %c0_i32_0 : i32, i32
  }
  func.func @transform_4(%arg0: i32) -> (i32, i32) {
    %c0_i32 = arith.constant 0 : i32
    %c0_i32_0 = arith.constant 0 : i32
    %c0_i32_1 = arith.constant 0 : i32
    return %c0_i32, %c0_i32_0 : i32, i32
  }
  func.func @transform_5(%arg0: i32) -> (i32, i32, i32) {
    %c0_i32 = arith.constant 0 : i32
    %c0_i32_0 = arith.constant 0 : i32
    %c0_i32_1 = arith.constant 0 : i32
    return %arg0, %c0_i32, %c0_i32_0 : i32, i32, i32
  }
}

module attributes {stable_mosaic.version = 11 : i64} {
  func.func @_encoder_kernel(%arg0: i32, %arg1: i32, %arg2: memref<1x8x128xf32, #tpu.memory_space<vmem>>, %arg3: memref<1x1x8xf32, #tpu.memory_space<vmem>>, %arg4: memref<1x128x768xbf16, #tpu.memory_space<vmem>>, %arg5: memref<1x1x768xf32, #tpu.memory_space<vmem>>, %arg6: memref<1x256x128xbf16, #tpu.memory_space<vmem>>, %arg7: memref<1x1x128xf32, #tpu.memory_space<vmem>>, %arg8: memref<1x1x128xf32, #tpu.memory_space<vmem>>, %arg9: memref<1x1x128xf32, #tpu.memory_space<vmem>>, %arg10: memref<1x1x128xf32, #tpu.memory_space<vmem>>, %arg11: memref<1x1x128xf32, #tpu.memory_space<vmem>>, %arg12: memref<1x128x256xbf16, #tpu.memory_space<vmem>>, %arg13: memref<1x1x256xf32, #tpu.memory_space<vmem>>, %arg14: memref<1x256x128xbf16, #tpu.memory_space<vmem>>, %arg15: memref<1x1x128xf32, #tpu.memory_space<vmem>>, %arg16: memref<1x8x128xf32, #tpu.memory_space<vmem>>) attributes {dimension_semantics = [#tpu.dimension_semantics<parallel>, #tpu.dimension_semantics<arbitrary>], iteration_bounds = array<i64: 2, 2>, scalar_prefetch = 0 : i64, scratch_operands = 0 : i64, tpu.core_type = #tpu.core_type<tc>, window_params = [{transform_indices = @transform_0, window_bounds = array<i64: 1, 8, 128>}, {transform_indices = @transform_1, window_bounds = array<i64: 1, 1, 8>}, {transform_indices = @transform_2, window_bounds = array<i64: 1, 128, 768>}, {transform_indices = @transform_3, window_bounds = array<i64: 1, 1, 768>}, {transform_indices = @transform_4, window_bounds = array<i64: 1, 256, 128>}, {transform_indices = @transform_5, window_bounds = array<i64: 1, 1, 128>}, {transform_indices = @transform_6, window_bounds = array<i64: 1, 1, 128>}, {transform_indices = @transform_7, window_bounds = array<i64: 1, 1, 128>}, {transform_indices = @transform_8, window_bounds = array<i64: 1, 1, 128>}, {transform_indices = @transform_9, window_bounds = array<i64: 1, 1, 128>}, {transform_indices = @transform_10, window_bounds = array<i64: 1, 128, 256>}, {transform_indices = @transform_11, window_bounds = array<i64: 1, 1, 256>}, {transform_indices = @transform_12, window_bounds = array<i64: 1, 256, 128>}, {transform_indices = @transform_13, window_bounds = array<i64: 1, 1, 128>}, {transform_indices = @transform_14, window_bounds = array<i64: 1, 8, 128>}]} {
    %c0_i32 = arith.constant 0 : i32
    %0 = arith.cmpi eq, %arg1, %c0_i32 : i32
    %1 = arith.extui %0 : i1 to i32
    %c0_i32_0 = arith.constant 0 : i32
    %2 = arith.cmpi ne, %1, %c0_i32_0 : i32
    scf.if %2 {
      %c0_70 = arith.constant 0 : index
      %c0_71 = arith.constant 0 : index
      %c0_72 = arith.constant 0 : index
      %148 = vector.load %arg2[%c0_70, %c0_71, %c0_72] : memref<1x8x128xf32, #tpu.memory_space<vmem>>, vector<1x8x128xf32>
      %c0_73 = arith.constant 0 : index
      %c0_74 = arith.constant 0 : index
      %c0_75 = arith.constant 0 : index
      %149 = vector.load %arg16[%c0_73, %c0_74, %c0_75] : memref<1x8x128xf32, #tpu.memory_space<vmem>>, vector<1x8x128xf32>
      tpu.vector_store %arg16[%c0_73, %c0_74, %c0_75], %148 {strides = array<i32>} : memref<1x8x128xf32, #tpu.memory_space<vmem>>, vector<1x8x128xf32>,
    } else {
    }
    %c0 = arith.constant 0 : index
    %c0_1 = arith.constant 0 : index
    %c0_2 = arith.constant 0 : index
    %3 = vector.load %arg16[%c0, %c0_1, %c0_2] : memref<1x8x128xf32, #tpu.memory_space<vmem>>, vector<1x8x128xf32>
    %4 = vector.shape_cast %3 : vector<1x8x128xf32> to vector<8x128xf32>
    %c0_3 = arith.constant 0 : index
    %c0_4 = arith.constant 0 : index
    %c0_5 = arith.constant 0 : index
    %5 = vector.load %arg3[%c0_3, %c0_4, %c0_5] : memref<1x1x8xf32, #tpu.memory_space<vmem>>, vector<1x1x8xf32>
    %6 = vector.shape_cast %5 : vector<1x1x8xf32> to vector<1x8xf32>
    %7 = vector.shape_cast %6 : vector<1x8xf32> to vector<1x8xf32>
    %8 = vector.broadcast %7 : vector<1x8xf32> to vector<8x8xf32>
    %cst = arith.constant dense<0.000000e+00> : vector<8xf32>
    %9 = vector.multi_reduction <add>, %4, %cst [1] : vector<8x128xf32> to vector<8xf32>
    %10 = vector.shape_cast %9 : vector<8xf32> to vector<8x1xf32>
    %cst_6 = arith.constant 1.280000e+02 : f32
    %11 = vector.broadcast %cst_6 : f32 to vector<8x1xf32>
    %12 = arith.divf %10, %11 : vector<8x1xf32>
    %13 = vector.broadcast %12 : vector<8x1xf32> to vector<8x128xf32>
    %14 = arith.subf %4, %13 : vector<8x128xf32>
    %15 = arith.mulf %14, %14 : vector<8x128xf32>
    %cst_7 = arith.constant dense<0.000000e+00> : vector<8xf32>
    %16 = vector.multi_reduction <add>, %15, %cst_7 [1] : vector<8x128xf32> to vector<8xf32>
    %17 = vector.shape_cast %16 : vector<8xf32> to vector<8x1xf32>
    %cst_8 = arith.constant 1.280000e+02 : f32
    %18 = vector.broadcast %cst_8 : f32 to vector<8x1xf32>
    %19 = arith.divf %17, %18 : vector<8x1xf32>
    %cst_9 = arith.constant 9.99999997E-7 : f32
    %20 = vector.broadcast %cst_9 : f32 to vector<8x1xf32>
    %21 = arith.addf %19, %20 : vector<8x1xf32>
    %22 = math.rsqrt %21 : vector<8x1xf32>
    %23 = vector.broadcast %22 : vector<8x1xf32> to vector<8x128xf32>
    %24 = arith.mulf %14, %23 : vector<8x128xf32>
    %c0_10 = arith.constant 0 : index
    %c0_11 = arith.constant 0 : index
    %c0_12 = arith.constant 0 : index
    %25 = vector.load %arg8[%c0_10, %c0_11, %c0_12] : memref<1x1x128xf32, #tpu.memory_space<vmem>>, vector<1x1x128xf32>
    %26 = vector.shape_cast %25 : vector<1x1x128xf32> to vector<1x128xf32>
    %27 = vector.broadcast %26 : vector<1x128xf32> to vector<8x128xf32>
    %28 = arith.mulf %24, %27 : vector<8x128xf32>
    %c0_13 = arith.constant 0 : index
    %c0_14 = arith.constant 0 : index
    %c0_15 = arith.constant 0 : index
    %29 = vector.load %arg9[%c0_13, %c0_14, %c0_15] : memref<1x1x128xf32, #tpu.memory_space<vmem>>, vector<1x1x128xf32>
    %30 = vector.shape_cast %29 : vector<1x1x128xf32> to vector<1x128xf32>
    %31 = vector.broadcast %30 : vector<1x128xf32> to vector<8x128xf32>
    %32 = arith.addf %28, %31 : vector<8x128xf32>
    %c0_16 = arith.constant 0 : index
    %c0_17 = arith.constant 0 : index
    %c0_18 = arith.constant 0 : index
    %33 = vector.load %arg4[%c0_16, %c0_17, %c0_18] : memref<1x128x768xbf16, #tpu.memory_space<vmem>>, vector<1x128x768xbf16>
    %34 = vector.shape_cast %33 : vector<1x128x768xbf16> to vector<128x768xbf16>
    %c0_19 = arith.constant 0 : index
    %c0_20 = arith.constant 0 : index
    %c0_21 = arith.constant 0 : index
    %35 = vector.load %arg5[%c0_19, %c0_20, %c0_21] : memref<1x1x768xf32, #tpu.memory_space<vmem>>, vector<1x1x768xf32>
    %36 = vector.shape_cast %35 : vector<1x1x768xf32> to vector<1x768xf32>
    %37 = arith.truncf %32 : vector<8x128xf32> to vector<8x128xbf16>
    %cst_22 = arith.constant dense<0.000000e+00> : vector<8x768xf32>
    %38 = tpu.matmul %37, %34, %cst_22 {dimension_numbers = #tpu.dot_dimension_numbers<[1], [0], [0], [1], [0, 0, 1, 1], [], []>} : vector<8x128xbf16>, vector<128x768xbf16>, vector<8x768xf32> -> vector<8x768xf32>
    %39 = vector.broadcast %36 : vector<1x768xf32> to vector<8x768xf32>
    %40 = arith.addf %38, %39 : vector<8x768xf32>
    %41 = vector.extract_strided_slice %40 {offsets = [0, 0], sizes = [8, 128], strides = [1, 1]} : vector<8x768xf32> to vector<8x128xf32>
    %42 = vector.extract_strided_slice %40 {offsets = [0, 256], sizes = [8, 128], strides = [1, 1]} : vector<8x768xf32> to vector<8x128xf32>
    %43 = vector.extract_strided_slice %40 {offsets = [0, 512], sizes = [8, 128], strides = [1, 1]} : vector<8x768xf32> to vector<8x128xf32>
    %44 = arith.truncf %41 : vector<8x128xf32> to vector<8x128xbf16>
    %45 = arith.truncf %42 : vector<8x128xf32> to vector<8x128xbf16>
    %cst_23 = arith.constant dense<0.000000e+00> : vector<8x8xf32>
    %46 = tpu.matmul %44, %45, %cst_23 {dimension_numbers = #tpu.dot_dimension_numbers<[1], [1], [0], [0], [0, 0, 1, 0], [], []>} : vector<8x128xbf16>, vector<8x128xbf16>, vector<8x8xf32> -> vector<8x8xf32>
    %47 = arith.addf %46, %8 : vector<8x8xf32>
    %cst_24 = arith.constant dense<0xFF800000> : vector<8xf32>
    %48 = vector.multi_reduction <maximumf>, %47, %cst_24 [1] : vector<8x8xf32> to vector<8xf32>
    %49 = vector.shape_cast %48 : vector<8xf32> to vector<8x1xf32>
    %50 = vector.broadcast %49 : vector<8x1xf32> to vector<8x8xf32>
    %51 = arith.subf %47, %50 : vector<8x8xf32>
    %52 = math.exp %51 : vector<8x8xf32>
    %cst_25 = arith.constant dense<0.000000e+00> : vector<8xf32>
    %53 = vector.multi_reduction <add>, %52, %cst_25 [1] : vector<8x8xf32> to vector<8xf32>
    %54 = vector.shape_cast %53 : vector<8xf32> to vector<8x1xf32>
    %55 = tpu.reciprocal %54 {approx = true} : vector<8x1xf32> -> vector<8x1xf32>
    %56 = vector.broadcast %55 : vector<8x1xf32> to vector<8x8xf32>
    %57 = arith.mulf %52, %56 : vector<8x8xf32>
    %58 = arith.truncf %57 : vector<8x8xf32> to vector<8x8xbf16>
    %59 = arith.truncf %43 : vector<8x128xf32> to vector<8x128xbf16>
    %cst_26 = arith.constant dense<0.000000e+00> : vector<8x128xf32>
    %60 = tpu.matmul %58, %59, %cst_26 {dimension_numbers = #tpu.dot_dimension_numbers<[1], [0], [0], [1], [0, 0, 1, 1], [], []>} : vector<8x8xbf16>, vector<8x128xbf16>, vector<8x128xf32> -> vector<8x128xf32>
    %61 = vector.extract_strided_slice %40 {offsets = [0, 128], sizes = [8, 128], strides = [1, 1]} : vector<8x768xf32> to vector<8x128xf32>
    %62 = vector.extract_strided_slice %40 {offsets = [0, 384], sizes = [8, 128], strides = [1, 1]} : vector<8x768xf32> to vector<8x128xf32>
    %63 = vector.extract_strided_slice %40 {offsets = [0, 640], sizes = [8, 128], strides = [1, 1]} : vector<8x768xf32> to vector<8x128xf32>
    %64 = arith.truncf %61 : vector<8x128xf32> to vector<8x128xbf16>
    %65 = arith.truncf %62 : vector<8x128xf32> to vector<8x128xbf16>
    %cst_27 = arith.constant dense<0.000000e+00> : vector<8x8xf32>
    %66 = tpu.matmul %64, %65, %cst_27 {dimension_numbers = #tpu.dot_dimension_numbers<[1], [1], [0], [0], [0, 0, 1, 0], [], []>} : vector<8x128xbf16>, vector<8x128xbf16>, vector<8x8xf32> -> vector<8x8xf32>
    %67 = arith.addf %66, %8 : vector<8x8xf32>
    %cst_28 = arith.constant dense<0xFF800000> : vector<8xf32>
    %68 = vector.multi_reduction <maximumf>, %67, %cst_28 [1] : vector<8x8xf32> to vector<8xf32>
    %69 = vector.shape_cast %68 : vector<8xf32> to vector<8x1xf32>
    %70 = vector.broadcast %69 : vector<8x1xf32> to vector<8x8xf32>
    %71 = arith.subf %67, %70 : vector<8x8xf32>
    %72 = math.exp %71 : vector<8x8xf32>
    %cst_29 = arith.constant dense<0.000000e+00> : vector<8xf32>
    %73 = vector.multi_reduction <add>, %72, %cst_29 [1] : vector<8x8xf32> to vector<8xf32>
    %74 = vector.shape_cast %73 : vector<8xf32> to vector<8x1xf32>
    %75 = tpu.reciprocal %74 {approx = true} : vector<8x1xf32> -> vector<8x1xf32>
    %76 = vector.broadcast %75 : vector<8x1xf32> to vector<8x8xf32>
    %77 = arith.mulf %72, %76 : vector<8x8xf32>
    %78 = arith.truncf %77 : vector<8x8xf32> to vector<8x8xbf16>
    %79 = arith.truncf %63 : vector<8x128xf32> to vector<8x128xbf16>
    %cst_30 = arith.constant dense<0.000000e+00> : vector<8x128xf32>
    %80 = tpu.matmul %78, %79, %cst_30 {dimension_numbers = #tpu.dot_dimension_numbers<[1], [0], [0], [1], [0, 0, 1, 1], [], []>} : vector<8x8xbf16>, vector<8x128xbf16>, vector<8x128xf32> -> vector<8x128xf32>
    %81 = tpu.concatenate %60, %80 in 1 : vector<8x128xf32>, vector<8x128xf32> -> vector<8x256xf32>
    %82 = arith.truncf %81 : vector<8x256xf32> to vector<8x256xbf16>
    %c0_31 = arith.constant 0 : index
    %c0_32 = arith.constant 0 : index
    %c0_33 = arith.constant 0 : index
    %83 = vector.load %arg6[%c0_31, %c0_32, %c0_33] : memref<1x256x128xbf16, #tpu.memory_space<vmem>>, vector<1x256x128xbf16>
    %84 = vector.shape_cast %83 : vector<1x256x128xbf16> to vector<256x128xbf16>
    %cst_34 = arith.constant dense<0.000000e+00> : vector<8x128xf32>
    %85 = tpu.matmul %82, %84, %cst_34 {dimension_numbers = #tpu.dot_dimension_numbers<[1], [0], [0], [1], [0, 0, 1, 1], [], []>} : vector<8x256xbf16>, vector<256x128xbf16>, vector<8x128xf32> -> vector<8x128xf32>
    %c0_35 = arith.constant 0 : index
    %c0_36 = arith.constant 0 : index
    %c0_37 = arith.constant 0 : index
    %86 = vector.load %arg7[%c0_35, %c0_36, %c0_37] : memref<1x1x128xf32, #tpu.memory_space<vmem>>, vector<1x1x128xf32>
    %87 = vector.shape_cast %86 : vector<1x1x128xf32> to vector<1x128xf32>
    %88 = vector.broadcast %87 : vector<1x128xf32> to vector<8x128xf32>
    %89 = arith.addf %85, %88 : vector<8x128xf32>
    %90 = arith.addf %4, %89 : vector<8x128xf32>
    %cst_38 = arith.constant dense<0.000000e+00> : vector<8xf32>
    %91 = vector.multi_reduction <add>, %90, %cst_38 [1] : vector<8x128xf32> to vector<8xf32>
    %92 = vector.shape_cast %91 : vector<8xf32> to vector<8x1xf32>
    %cst_39 = arith.constant 1.280000e+02 : f32
    %93 = vector.broadcast %cst_39 : f32 to vector<8x1xf32>
    %94 = arith.divf %92, %93 : vector<8x1xf32>
    %95 = vector.broadcast %94 : vector<8x1xf32> to vector<8x128xf32>
    %96 = arith.subf %90, %95 : vector<8x128xf32>
    %97 = arith.mulf %96, %96 : vector<8x128xf32>
    %cst_40 = arith.constant dense<0.000000e+00> : vector<8xf32>
    %98 = vector.multi_reduction <add>, %97, %cst_40 [1] : vector<8x128xf32> to vector<8xf32>
    %99 = vector.shape_cast %98 : vector<8xf32> to vector<8x1xf32>
    %cst_41 = arith.constant 1.280000e+02 : f32
    %100 = vector.broadcast %cst_41 : f32 to vector<8x1xf32>
    %101 = arith.divf %99, %100 : vector<8x1xf32>
    %cst_42 = arith.constant 9.99999997E-7 : f32
    %102 = vector.broadcast %cst_42 : f32 to vector<8x1xf32>
    %103 = arith.addf %101, %102 : vector<8x1xf32>
    %104 = math.rsqrt %103 : vector<8x1xf32>
    %105 = vector.broadcast %104 : vector<8x1xf32> to vector<8x128xf32>
    %106 = arith.mulf %96, %105 : vector<8x128xf32>
    %c0_43 = arith.constant 0 : index
    %c0_44 = arith.constant 0 : index
    %c0_45 = arith.constant 0 : index
    %107 = vector.load %arg10[%c0_43, %c0_44, %c0_45] : memref<1x1x128xf32, #tpu.memory_space<vmem>>, vector<1x1x128xf32>
    %108 = vector.shape_cast %107 : vector<1x1x128xf32> to vector<1x128xf32>
    %109 = vector.broadcast %108 : vector<1x128xf32> to vector<8x128xf32>
    %110 = arith.mulf %106, %109 : vector<8x128xf32>
    %c0_46 = arith.constant 0 : index
    %c0_47 = arith.constant 0 : index
    %c0_48 = arith.constant 0 : index
    %111 = vector.load %arg11[%c0_46, %c0_47, %c0_48] : memref<1x1x128xf32, #tpu.memory_space<vmem>>, vector<1x1x128xf32>
    %112 = vector.shape_cast %111 : vector<1x1x128xf32> to vector<1x128xf32>
    %113 = vector.broadcast %112 : vector<1x128xf32> to vector<8x128xf32>
    %114 = arith.addf %110, %113 : vector<8x128xf32>
    %c0_49 = arith.constant 0 : index
    %c0_50 = arith.constant 0 : index
    %c0_51 = arith.constant 0 : index
    %115 = vector.load %arg12[%c0_49, %c0_50, %c0_51] : memref<1x128x256xbf16, #tpu.memory_space<vmem>>, vector<1x128x256xbf16>
    %116 = vector.shape_cast %115 : vector<1x128x256xbf16> to vector<128x256xbf16>
    %c0_52 = arith.constant 0 : index
    %c0_53 = arith.constant 0 : index
    %c0_54 = arith.constant 0 : index
    %117 = vector.load %arg13[%c0_52, %c0_53, %c0_54] : memref<1x1x256xf32, #tpu.memory_space<vmem>>, vector<1x1x256xf32>
    %118 = vector.shape_cast %117 : vector<1x1x256xf32> to vector<1x256xf32>
    %119 = arith.truncf %114 : vector<8x128xf32> to vector<8x128xbf16>
    %cst_55 = arith.constant dense<0.000000e+00> : vector<8x256xf32>
    %120 = tpu.matmul %119, %116, %cst_55 {dimension_numbers = #tpu.dot_dimension_numbers<[1], [0], [0], [1], [0, 0, 1, 1], [], []>} : vector<8x128xbf16>, vector<128x256xbf16>, vector<8x256xf32> -> vector<8x256xf32>
    %121 = vector.broadcast %118 : vector<1x256xf32> to vector<8x256xf32>
    %122 = arith.addf %120, %121 : vector<8x256xf32>
    %123 = arith.mulf %122, %122 : vector<8x256xf32>
    %124 = arith.mulf %122, %123 : vector<8x256xf32>
    %cst_56 = arith.constant 4.471500e-02 : f32
    %125 = vector.broadcast %cst_56 : f32 to vector<8x256xf32>
    %126 = arith.mulf %125, %124 : vector<8x256xf32>
    %127 = arith.addf %122, %126 : vector<8x256xf32>
    %cst_57 = arith.constant 0.797884583 : f32
    %128 = vector.broadcast %cst_57 : f32 to vector<8x256xf32>
    %129 = arith.mulf %128, %127 : vector<8x256xf32>
    %130 = math.tanh %129 : vector<8x256xf32>
    %cst_58 = arith.constant 1.000000e+00 : f32
    %131 = vector.broadcast %cst_58 : f32 to vector<8x256xf32>
    %132 = arith.addf %131, %130 : vector<8x256xf32>
    %cst_59 = arith.constant 5.000000e-01 : f32
    %133 = vector.broadcast %cst_59 : f32 to vector<8x256xf32>
    %134 = arith.mulf %133, %132 : vector<8x256xf32>
    %135 = arith.mulf %122, %134 : vector<8x256xf32>
    %c0_60 = arith.constant 0 : index
    %c0_61 = arith.constant 0 : index
    %c0_62 = arith.constant 0 : index
    %136 = vector.load %arg14[%c0_60, %c0_61, %c0_62] : memref<1x256x128xbf16, #tpu.memory_space<vmem>>, vector<1x256x128xbf16>
    %137 = vector.shape_cast %136 : vector<1x256x128xbf16> to vector<256x128xbf16>
    %c0_63 = arith.constant 0 : index
    %c0_64 = arith.constant 0 : index
    %c0_65 = arith.constant 0 : index
    %138 = vector.load %arg15[%c0_63, %c0_64, %c0_65] : memref<1x1x128xf32, #tpu.memory_space<vmem>>, vector<1x1x128xf32>
    %139 = vector.shape_cast %138 : vector<1x1x128xf32> to vector<1x128xf32>
    %140 = arith.truncf %135 : vector<8x256xf32> to vector<8x256xbf16>
    %cst_66 = arith.constant dense<0.000000e+00> : vector<8x128xf32>
    %141 = tpu.matmul %140, %137, %cst_66 {dimension_numbers = #tpu.dot_dimension_numbers<[1], [0], [0], [1], [0, 0, 1, 1], [], []>} : vector<8x256xbf16>, vector<256x128xbf16>, vector<8x128xf32> -> vector<8x128xf32>
    %142 = vector.broadcast %139 : vector<1x128xf32> to vector<8x128xf32>
    %143 = arith.addf %141, %142 : vector<8x128xf32>
    %144 = arith.addf %90, %143 : vector<8x128xf32>
    %c0_67 = arith.constant 0 : index
    %c0_68 = arith.constant 0 : index
    %c0_69 = arith.constant 0 : index
    %145 = vector.load %arg16[%c0_67, %c0_68, %c0_69] : memref<1x8x128xf32, #tpu.memory_space<vmem>>, vector<1x8x128xf32>
    %146 = vector.shape_cast %145 : vector<1x8x128xf32> to vector<8x128xf32>
    %147 = vector.shape_cast %144 : vector<8x128xf32> to vector<1x8x128xf32>
    tpu.vector_store %arg16[%c0_67, %c0_68, %c0_69], %147 {strides = array<i32>} : memref<1x8x128xf32, #tpu.memory_space<vmem>>, vector<1x8x128xf32>,
    return
  }
  func.func @transform_0(%arg0: i32, %arg1: i32) -> (i32, i32, i32) {
    %c0_i32 = arith.constant 0 : i32
    %c0_i32_0 = arith.constant 0 : i32
    %c0_i32_1 = arith.constant 0 : i32
    return %arg0, %c0_i32, %c0_i32_0 : i32, i32, i32
  }
  func.func @transform_1(%arg0: i32, %arg1: i32) -> (i32, i32, i32) {
    %c0_i32 = arith.constant 0 : i32
    %c0_i32_0 = arith.constant 0 : i32
    %c0_i32_1 = arith.constant 0 : i32
    return %arg0, %c0_i32, %c0_i32_0 : i32, i32, i32
  }
  func.func @transform_2(%arg0: i32, %arg1: i32) -> (i32, i32, i32) {
    %c0_i32 = arith.constant 0 : i32
    %c0_i32_0 = arith.constant 0 : i32
    %c0_i32_1 = arith.constant 0 : i32
    return %arg1, %c0_i32, %c0_i32_0 : i32, i32, i32
  }
  func.func @transform_3(%arg0: i32, %arg1: i32) -> (i32, i32, i32) {
    %c0_i32 = arith.constant 0 : i32
    %c0_i32_0 = arith.constant 0 : i32
    %c0_i32_1 = arith.constant 0 : i32
    return %arg1, %c0_i32, %c0_i32_0 : i32, i32, i32
  }
  func.func @transform_4(%arg0: i32, %arg1: i32) -> (i32, i32, i32) {
    %c0_i32 = arith.constant 0 : i32
    %c0_i32_0 = arith.constant 0 : i32
    %c0_i32_1 = arith.constant 0 : i32
    return %arg1, %c0_i32, %c0_i32_0 : i32, i32, i32
  }
  func.func @transform_5(%arg0: i32, %arg1: i32) -> (i32, i32, i32) {
    %c0_i32 = arith.constant 0 : i32
    %c0_i32_0 = arith.constant 0 : i32
    %c0_i32_1 = arith.constant 0 : i32
    return %arg1, %c0_i32, %c0_i32_0 : i32, i32, i32
  }
  func.func @transform_6(%arg0: i32, %arg1: i32) -> (i32, i32, i32) {
    %c0_i32 = arith.constant 0 : i32
    %c0_i32_0 = arith.constant 0 : i32
    %c0_i32_1 = arith.constant 0 : i32
    return %arg1, %c0_i32, %c0_i32_0 : i32, i32, i32
  }
  func.func @transform_7(%arg0: i32, %arg1: i32) -> (i32, i32, i32) {
    %c0_i32 = arith.constant 0 : i32
    %c0_i32_0 = arith.constant 0 : i32
    %c0_i32_1 = arith.constant 0 : i32
    return %arg1, %c0_i32, %c0_i32_0 : i32, i32, i32
  }
  func.func @transform_8(%arg0: i32, %arg1: i32) -> (i32, i32, i32) {
    %c0_i32 = arith.constant 0 : i32
    %c0_i32_0 = arith.constant 0 : i32
    %c0_i32_1 = arith.constant 0 : i32
    return %arg1, %c0_i32, %c0_i32_0 : i32, i32, i32
  }
  func.func @transform_9(%arg0: i32, %arg1: i32) -> (i32, i32, i32) {
    %c0_i32 = arith.constant 0 : i32
    %c0_i32_0 = arith.constant 0 : i32
    %c0_i32_1 = arith.constant 0 : i32
    return %arg1, %c0_i32, %c0_i32_0 : i32, i32, i32
  }
  func.func @transform_10(%arg0: i32, %arg1: i32) -> (i32, i32, i32) {
    %c0_i32 = arith.constant 0 : i32
    %c0_i32_0 = arith.constant 0 : i32
    %c0_i32_1 = arith.constant 0 : i32
    return %arg1, %c0_i32, %c0_i32_0 : i32, i32, i32
  }
  func.func @transform_11(%arg0: i32, %arg1: i32) -> (i32, i32, i32) {
    %c0_i32 = arith.constant 0 : i32
    %c0_i32_0 = arith.constant 0 : i32
    %c0_i32_1 = arith.constant 0 : i32
    return %arg1, %c0_i32, %c0_i32_0 : i32, i32, i32
  }
  func.func @transform_12(%arg0: i32, %arg1: i32) -> (i32, i32, i32) {
    %c0_i32 = arith.constant 0 : i32
    %c0_i32_0 = arith.constant 0 : i32
    %c0_i32_1 = arith.constant 0 : i32
    return %arg1, %c0_i32, %c0_i32_0 : i32, i32, i32
  }
  func.func @transform_13(%arg0: i32, %arg1: i32) -> (i32, i32, i32) {
    %c0_i32 = arith.constant 0 : i32
    %c0_i32_0 = arith.constant 0 : i32
    %c0_i32_1 = arith.constant 0 : i32
    return %arg1, %c0_i32, %c0_i32_0 : i32, i32, i32
  }
  func.func @transform_14(%arg0: i32, %arg1: i32) -> (i32, i32, i32) {
    %c0_i32 = arith.constant 0 : i32
    %c0_i32_0 = arith.constant 0 : i32
    %c0_i32_1 = arith.constant 0 : i32
    return %arg0, %c0_i32, %c0_i32_0 : i32, i32, i32
  }
}

module attributes {stable_mosaic.version = 11 : i64} {
  func.func @_head_kernel(%arg0: i32, %arg1: memref<2x128xf32, #tpu.memory_space<vmem>>, %arg2: memref<2x128xf32, #tpu.memory_space<vmem>>, %arg3: memref<1x128xf32, #tpu.memory_space<vmem>>, %arg4: memref<1x128xf32, #tpu.memory_space<vmem>>, %arg5: memref<128x128xbf16, #tpu.memory_space<vmem>>, %arg6: memref<1x128xf32, #tpu.memory_space<vmem>>, %arg7: memref<128x128xbf16, #tpu.memory_space<vmem>>, %arg8: memref<1x128xf32, #tpu.memory_space<vmem>>, %arg9: memref<128x2xbf16, #tpu.memory_space<vmem>>, %arg10: memref<1x2xf32, #tpu.memory_space<vmem>>, %arg11: memref<128x2xbf16, #tpu.memory_space<vmem>>, %arg12: memref<1x2xf32, #tpu.memory_space<vmem>>, %arg13: memref<128x1xbf16, #tpu.memory_space<vmem>>, %arg14: memref<1x1xf32, #tpu.memory_space<vmem>>, %arg15: memref<2x640xf32, #tpu.memory_space<vmem>>) attributes {dimension_semantics = [#tpu.dimension_semantics<arbitrary>], iteration_bounds = array<i64: 1>, scalar_prefetch = 0 : i64, scratch_operands = 0 : i64, tpu.core_type = #tpu.core_type<tc>, window_params = [{pipeline_mode = #tpu.pipeline_mode<synchronous>, transform_indices = @transform_0, window_bounds = array<i64: 2, 128>}, {pipeline_mode = #tpu.pipeline_mode<synchronous>, transform_indices = @transform_1, window_bounds = array<i64: 2, 128>}, {pipeline_mode = #tpu.pipeline_mode<synchronous>, transform_indices = @transform_2, window_bounds = array<i64: 1, 128>}, {pipeline_mode = #tpu.pipeline_mode<synchronous>, transform_indices = @transform_3, window_bounds = array<i64: 1, 128>}, {pipeline_mode = #tpu.pipeline_mode<synchronous>, transform_indices = @transform_4, window_bounds = array<i64: 128, 128>}, {pipeline_mode = #tpu.pipeline_mode<synchronous>, transform_indices = @transform_5, window_bounds = array<i64: 1, 128>}, {pipeline_mode = #tpu.pipeline_mode<synchronous>, transform_indices = @transform_6, window_bounds = array<i64: 128, 128>}, {pipeline_mode = #tpu.pipeline_mode<synchronous>, transform_indices = @transform_7, window_bounds = array<i64: 1, 128>}, {pipeline_mode = #tpu.pipeline_mode<synchronous>, transform_indices = @transform_8, window_bounds = array<i64: 128, 2>}, {pipeline_mode = #tpu.pipeline_mode<synchronous>, transform_indices = @transform_9, window_bounds = array<i64: 1, 2>}, {pipeline_mode = #tpu.pipeline_mode<synchronous>, transform_indices = @transform_10, window_bounds = array<i64: 128, 2>}, {pipeline_mode = #tpu.pipeline_mode<synchronous>, transform_indices = @transform_11, window_bounds = array<i64: 1, 2>}, {pipeline_mode = #tpu.pipeline_mode<synchronous>, transform_indices = @transform_12, window_bounds = array<i64: 128, 1>}, {pipeline_mode = #tpu.pipeline_mode<synchronous>, transform_indices = @transform_13, window_bounds = array<i64: 1, 1>}, {pipeline_mode = #tpu.pipeline_mode<synchronous>, transform_indices = @transform_14, window_bounds = array<i64: 2, 640>}]} {
    %c0 = arith.constant 0 : index
    %c0_0 = arith.constant 0 : index
    %0 = vector.load %arg1[%c0, %c0_0] : memref<2x128xf32, #tpu.memory_space<vmem>>, vector<2x128xf32>
    %c0_1 = arith.constant 0 : index
    %c0_2 = arith.constant 0 : index
    %1 = vector.load %arg2[%c0_1, %c0_2] : memref<2x128xf32, #tpu.memory_space<vmem>>, vector<2x128xf32>
    %cst = arith.constant dense<0.000000e+00> : vector<2xf32>
    %2 = vector.multi_reduction <add>, %1, %cst [1] : vector<2x128xf32> to vector<2xf32>
    %3 = vector.shape_cast %2 : vector<2xf32> to vector<2x1xf32>
    %cst_3 = arith.constant 1.280000e+02 : f32
    %4 = vector.broadcast %cst_3 : f32 to vector<2x1xf32>
    %5 = arith.divf %3, %4 : vector<2x1xf32>
    %6 = vector.broadcast %5 : vector<2x1xf32> to vector<2x128xf32>
    %7 = arith.subf %1, %6 : vector<2x128xf32>
    %8 = arith.mulf %7, %7 : vector<2x128xf32>
    %cst_4 = arith.constant dense<0.000000e+00> : vector<2xf32>
    %9 = vector.multi_reduction <add>, %8, %cst_4 [1] : vector<2x128xf32> to vector<2xf32>
    %10 = vector.shape_cast %9 : vector<2xf32> to vector<2x1xf32>
    %cst_5 = arith.constant 1.280000e+02 : f32
    %11 = vector.broadcast %cst_5 : f32 to vector<2x1xf32>
    %12 = arith.divf %10, %11 : vector<2x1xf32>
    %cst_6 = arith.constant 9.99999997E-7 : f32
    %13 = vector.broadcast %cst_6 : f32 to vector<2x1xf32>
    %14 = arith.addf %12, %13 : vector<2x1xf32>
    %15 = math.rsqrt %14 : vector<2x1xf32>
    %16 = vector.broadcast %15 : vector<2x1xf32> to vector<2x128xf32>
    %17 = arith.mulf %7, %16 : vector<2x128xf32>
    %c0_7 = arith.constant 0 : index
    %c0_8 = arith.constant 0 : index
    %18 = vector.load %arg3[%c0_7, %c0_8] : memref<1x128xf32, #tpu.memory_space<vmem>>, vector<1x128xf32>
    %19 = vector.broadcast %18 : vector<1x128xf32> to vector<2x128xf32>
    %20 = arith.mulf %17, %19 : vector<2x128xf32>
    %c0_9 = arith.constant 0 : index
    %c0_10 = arith.constant 0 : index
    %21 = vector.load %arg4[%c0_9, %c0_10] : memref<1x128xf32, #tpu.memory_space<vmem>>, vector<1x128xf32>
    %22 = vector.broadcast %21 : vector<1x128xf32> to vector<2x128xf32>
    %23 = arith.addf %20, %22 : vector<2x128xf32>
    %24 = arith.truncf %0 : vector<2x128xf32> to vector<2x128xbf16>
    %c0_11 = arith.constant 0 : index
    %c0_12 = arith.constant 0 : index
    %25 = vector.load %arg5[%c0_11, %c0_12] : memref<128x128xbf16, #tpu.memory_space<vmem>>, vector<128x128xbf16>
    %cst_13 = arith.constant dense<0.000000e+00> : vector<2x128xf32>
    %26 = tpu.matmul %24, %25, %cst_13 {dimension_numbers = #tpu.dot_dimension_numbers<[1], [0], [0], [1], [0, 0, 1, 1], [], []>} : vector<2x128xbf16>, vector<128x128xbf16>, vector<2x128xf32> -> vector<2x128xf32>
    %c0_14 = arith.constant 0 : index
    %c0_15 = arith.constant 0 : index
    %27 = vector.load %arg6[%c0_14, %c0_15] : memref<1x128xf32, #tpu.memory_space<vmem>>, vector<1x128xf32>
    %28 = vector.broadcast %27 : vector<1x128xf32> to vector<2x128xf32>
    %29 = arith.addf %26, %28 : vector<2x128xf32>
    %30 = arith.truncf %23 : vector<2x128xf32> to vector<2x128xbf16>
    %c0_16 = arith.constant 0 : index
    %c0_17 = arith.constant 0 : index
    %31 = vector.load %arg7[%c0_16, %c0_17] : memref<128x128xbf16, #tpu.memory_space<vmem>>, vector<128x128xbf16>
    %cst_18 = arith.constant dense<0.000000e+00> : vector<2x128xf32>
    %32 = tpu.matmul %30, %31, %cst_18 {dimension_numbers = #tpu.dot_dimension_numbers<[1], [0], [0], [1], [0, 0, 1, 1], [], []>} : vector<2x128xbf16>, vector<128x128xbf16>, vector<2x128xf32> -> vector<2x128xf32>
    %c0_19 = arith.constant 0 : index
    %c0_20 = arith.constant 0 : index
    %33 = vector.load %arg8[%c0_19, %c0_20] : memref<1x128xf32, #tpu.memory_space<vmem>>, vector<1x128xf32>
    %34 = vector.broadcast %33 : vector<1x128xf32> to vector<2x128xf32>
    %35 = arith.addf %32, %34 : vector<2x128xf32>
    %36 = arith.truncf %29 : vector<2x128xf32> to vector<2x128xbf16>
    %c0_21 = arith.constant 0 : index
    %c0_22 = arith.constant 0 : index
    %37 = vector.load %arg9[%c0_21, %c0_22] : memref<128x2xbf16, #tpu.memory_space<vmem>>, vector<128x2xbf16>
    %cst_23 = arith.constant dense<0.000000e+00> : vector<2x2xf32>
    %38 = tpu.matmul %36, %37, %cst_23 {dimension_numbers = #tpu.dot_dimension_numbers<[1], [0], [0], [1], [0, 0, 1, 1], [], []>} : vector<2x128xbf16>, vector<128x2xbf16>, vector<2x2xf32> -> vector<2x2xf32>
    %c0_24 = arith.constant 0 : index
    %c0_25 = arith.constant 0 : index
    %39 = vector.load %arg10[%c0_24, %c0_25] : memref<1x2xf32, #tpu.memory_space<vmem>>, vector<1x2xf32>
    %40 = vector.broadcast %39 : vector<1x2xf32> to vector<2x2xf32>
    %41 = arith.addf %38, %40 : vector<2x2xf32>
    %42 = arith.truncf %35 : vector<2x128xf32> to vector<2x128xbf16>
    %c0_26 = arith.constant 0 : index
    %c0_27 = arith.constant 0 : index
    %43 = vector.load %arg11[%c0_26, %c0_27] : memref<128x2xbf16, #tpu.memory_space<vmem>>, vector<128x2xbf16>
    %cst_28 = arith.constant dense<0.000000e+00> : vector<2x2xf32>
    %44 = tpu.matmul %42, %43, %cst_28 {dimension_numbers = #tpu.dot_dimension_numbers<[1], [0], [0], [1], [0, 0, 1, 1], [], []>} : vector<2x128xbf16>, vector<128x2xbf16>, vector<2x2xf32> -> vector<2x2xf32>
    %c0_29 = arith.constant 0 : index
    %c0_30 = arith.constant 0 : index
    %45 = vector.load %arg12[%c0_29, %c0_30] : memref<1x2xf32, #tpu.memory_space<vmem>>, vector<1x2xf32>
    %46 = vector.broadcast %45 : vector<1x2xf32> to vector<2x2xf32>
    %47 = arith.addf %44, %46 : vector<2x2xf32>
    %48 = arith.mulf %29, %29 : vector<2x128xf32>
    %cst_31 = arith.constant dense<0.000000e+00> : vector<2xf32>
    %49 = vector.multi_reduction <add>, %48, %cst_31 [1] : vector<2x128xf32> to vector<2xf32>
    %50 = vector.shape_cast %49 : vector<2xf32> to vector<2x1xf32>
    %cst_32 = arith.constant 9.99999993E-9 : f32
    %51 = vector.broadcast %cst_32 : f32 to vector<2x1xf32>
    %52 = arith.addf %50, %51 : vector<2x1xf32>
    %53 = math.rsqrt %52 : vector<2x1xf32>
    %54 = vector.broadcast %53 : vector<2x1xf32> to vector<2x128xf32>
    %55 = arith.mulf %29, %54 : vector<2x128xf32>
    %56 = arith.mulf %35, %35 : vector<2x128xf32>
    %cst_33 = arith.constant dense<0.000000e+00> : vector<2xf32>
    %57 = vector.multi_reduction <add>, %56, %cst_33 [1] : vector<2x128xf32> to vector<2xf32>
    %58 = vector.shape_cast %57 : vector<2xf32> to vector<2x1xf32>
    %cst_34 = arith.constant 9.99999993E-9 : f32
    %59 = vector.broadcast %cst_34 : f32 to vector<2x1xf32>
    %60 = arith.addf %58, %59 : vector<2x1xf32>
    %61 = math.rsqrt %60 : vector<2x1xf32>
    %62 = vector.broadcast %61 : vector<2x1xf32> to vector<2x128xf32>
    %63 = arith.mulf %35, %62 : vector<2x128xf32>
    %64 = arith.mulf %55, %63 : vector<2x128xf32>
    %cst_35 = arith.constant dense<0.000000e+00> : vector<2xf32>
    %65 = vector.multi_reduction <add>, %64, %cst_35 [1] : vector<2x128xf32> to vector<2xf32>
    %66 = vector.shape_cast %65 : vector<2xf32> to vector<2x1xf32>
    %67 = arith.addf %29, %35 : vector<2x128xf32>
    %cst_36 = arith.constant 5.000000e-01 : f32
    %68 = vector.broadcast %cst_36 : f32 to vector<2x128xf32>
    %69 = arith.mulf %68, %67 : vector<2x128xf32>
    %70 = arith.mulf %69, %69 : vector<2x128xf32>
    %71 = arith.mulf %69, %70 : vector<2x128xf32>
    %cst_37 = arith.constant 4.471500e-02 : f32
    %72 = vector.broadcast %cst_37 : f32 to vector<2x128xf32>
    %73 = arith.mulf %72, %71 : vector<2x128xf32>
    %74 = arith.addf %69, %73 : vector<2x128xf32>
    %cst_38 = arith.constant 0.797884583 : f32
    %75 = vector.broadcast %cst_38 : f32 to vector<2x128xf32>
    %76 = arith.mulf %75, %74 : vector<2x128xf32>
    %77 = math.tanh %76 : vector<2x128xf32>
    %cst_39 = arith.constant 1.000000e+00 : f32
    %78 = vector.broadcast %cst_39 : f32 to vector<2x128xf32>
    %79 = arith.addf %78, %77 : vector<2x128xf32>
    %cst_40 = arith.constant 5.000000e-01 : f32
    %80 = vector.broadcast %cst_40 : f32 to vector<2x128xf32>
    %81 = arith.mulf %80, %79 : vector<2x128xf32>
    %82 = arith.mulf %69, %81 : vector<2x128xf32>
    %83 = arith.truncf %82 : vector<2x128xf32> to vector<2x128xbf16>
    %c0_41 = arith.constant 0 : index
    %c0_42 = arith.constant 0 : index
    %84 = vector.load %arg13[%c0_41, %c0_42] : memref<128x1xbf16, #tpu.memory_space<vmem>>, vector<128x1xbf16>
    %cst_43 = arith.constant dense<0.000000e+00> : vector<2x1xf32>
    %85 = tpu.matmul %83, %84, %cst_43 {dimension_numbers = #tpu.dot_dimension_numbers<[1], [0], [0], [1], [0, 0, 1, 1], [], []>} : vector<2x128xbf16>, vector<128x1xbf16>, vector<2x1xf32> -> vector<2x1xf32>
    %c0_44 = arith.constant 0 : index
    %c0_45 = arith.constant 0 : index
    %86 = vector.load %arg14[%c0_44, %c0_45] : memref<1x1xf32, #tpu.memory_space<vmem>>, vector<1x1xf32>
    %87 = vector.broadcast %86 : vector<1x1xf32> to vector<2x1xf32>
    %88 = arith.addf %85, %87 : vector<2x1xf32>
    %cst_46 = arith.constant 0.000000e+00 : f32
    %89 = vector.broadcast %cst_46 : f32 to vector<2x122xf32>
    %90 = tpu.concatenate %41, %47, %66, %88, %89 in 1 : vector<2x2xf32>, vector<2x2xf32>, vector<2x1xf32>, vector<2x1xf32>, vector<2x122xf32> -> vector<2x128xf32>
    %91 = tpu.concatenate %23, %29, %35, %69, %90 in 1 : vector<2x128xf32>, vector<2x128xf32>, vector<2x128xf32>, vector<2x128xf32>, vector<2x128xf32> -> vector<2x640xf32>
    %c0_47 = arith.constant 0 : index
    %c0_48 = arith.constant 0 : index
    %92 = vector.load %arg15[%c0_47, %c0_48] : memref<2x640xf32, #tpu.memory_space<vmem>>, vector<2x640xf32>
    tpu.vector_store %arg15[%c0_47, %c0_48], %91 {strides = array<i32>} : memref<2x640xf32, #tpu.memory_space<vmem>>, vector<2x640xf32>,
    return
  }
  func.func @transform_0(%arg0: i32) -> (i32, i32) {
    %c0_i32 = arith.constant 0 : i32
    %c0_i32_0 = arith.constant 0 : i32
    %c0_i32_1 = arith.constant 0 : i32
    return %c0_i32, %c0_i32_0 : i32, i32
  }
  func.func @transform_1(%arg0: i32) -> (i32, i32) {
    %c0_i32 = arith.constant 0 : i32
    %c0_i32_0 = arith.constant 0 : i32
    %c0_i32_1 = arith.constant 0 : i32
    return %c0_i32, %c0_i32_0 : i32, i32
  }
  func.func @transform_2(%arg0: i32) -> (i32, i32) {
    %c0_i32 = arith.constant 0 : i32
    %c0_i32_0 = arith.constant 0 : i32
    %c0_i32_1 = arith.constant 0 : i32
    return %c0_i32, %c0_i32_0 : i32, i32
  }
  func.func @transform_3(%arg0: i32) -> (i32, i32) {
    %c0_i32 = arith.constant 0 : i32
    %c0_i32_0 = arith.constant 0 : i32
    %c0_i32_1 = arith.constant 0 : i32
    return %c0_i32, %c0_i32_0 : i32, i32
  }
  func.func @transform_4(%arg0: i32) -> (i32, i32) {
    %c0_i32 = arith.constant 0 : i32
    %c0_i32_0 = arith.constant 0 : i32
    %c0_i32_1 = arith.constant 0 : i32
    return %c0_i32, %c0_i32_0 : i32, i32
  }
  func.func @transform_5(%arg0: i32) -> (i32, i32) {
    %c0_i32 = arith.constant 0 : i32
    %c0_i32_0 = arith.constant 0 : i32
    %c0_i32_1 = arith.constant 0 : i32
    return %c0_i32, %c0_i32_0 : i32, i32
  }
  func.func @transform_6(%arg0: i32) -> (i32, i32) {
    %c0_i32 = arith.constant 0 : i32
    %c0_i32_0 = arith.constant 0 : i32
    %c0_i32_1 = arith.constant 0 : i32
    return %c0_i32, %c0_i32_0 : i32, i32
  }
  func.func @transform_7(%arg0: i32) -> (i32, i32) {
    %c0_i32 = arith.constant 0 : i32
    %c0_i32_0 = arith.constant 0 : i32
    %c0_i32_1 = arith.constant 0 : i32
    return %c0_i32, %c0_i32_0 : i32, i32
  }
  func.func @transform_8(%arg0: i32) -> (i32, i32) {
    %c0_i32 = arith.constant 0 : i32
    %c0_i32_0 = arith.constant 0 : i32
    %c0_i32_1 = arith.constant 0 : i32
    return %c0_i32, %c0_i32_0 : i32, i32
  }
  func.func @transform_9(%arg0: i32) -> (i32, i32) {
    %c0_i32 = arith.constant 0 : i32
    %c0_i32_0 = arith.constant 0 : i32
    %c0_i32_1 = arith.constant 0 : i32
    return %c0_i32, %c0_i32_0 : i32, i32
  }
  func.func @transform_10(%arg0: i32) -> (i32, i32) {
    %c0_i32 = arith.constant 0 : i32
    %c0_i32_0 = arith.constant 0 : i32
    %c0_i32_1 = arith.constant 0 : i32
    return %c0_i32, %c0_i32_0 : i32, i32
  }
  func.func @transform_11(%arg0: i32) -> (i32, i32) {
    %c0_i32 = arith.constant 0 : i32
    %c0_i32_0 = arith.constant 0 : i32
    %c0_i32_1 = arith.constant 0 : i32
    return %c0_i32, %c0_i32_0 : i32, i32
  }
  func.func @transform_12(%arg0: i32) -> (i32, i32) {
    %c0_i32 = arith.constant 0 : i32
    %c0_i32_0 = arith.constant 0 : i32
    %c0_i32_1 = arith.constant 0 : i32
    return %c0_i32, %c0_i32_0 : i32, i32
  }
  func.func @transform_13(%arg0: i32) -> (i32, i32) {
    %c0_i32 = arith.constant 0 : i32
    %c0_i32_0 = arith.constant 0 : i32
    %c0_i32_1 = arith.constant 0 : i32
    return %c0_i32, %c0_i32_0 : i32, i32
  }
  func.func @transform_14(%arg0: i32) -> (i32, i32) {
    %c0_i32 = arith.constant 0 : i32
    %c0_i32_0 = arith.constant 0 : i32
    %c0_i32_1 = arith.constant 0 : i32
    return %c0_i32, %c0_i32_0 : i32, i32
  }
}

</mosaic_0001>

<llo_original>
// kernel: text_image_forward.5
$region0: #{text_image_forward.5}
  #allocation0 [shape = 'u32[]', space=smem, size = 0x4, offset = 0x4, fixed_abs, tag = 'smem constant byte address 0x4 - core index']
  #allocation1 [shape = 'u32[144,128]{1,0:T(1,128)}', space=vmem, size = 0x12000, scoped, tag = 'internal scratch']
  %s0 = inlined_call_operand.vmem [shape: f32[2,8,128], index: 0, kind: input, shape index: {}]
  %s1 = inlined_call_operand.vmem [shape: f32[8,128], index: 1, kind: input, shape index: {}]
  %s2 = inlined_call_operand.vmem [shape: f32[1,128], index: 2, kind: input, shape index: {}]
  %s3 = inlined_call_operand.vmem [shape: f32[1,128], index: 3, kind: input, shape index: {}]
  %s4 = inlined_call_operand.vmem [shape: f32[1,128], index: 4, kind: input, shape index: {}]
  %s5 = inlined_call_operand.vmem [shape: f32[2,8,128], index: 5, kind: output, shape index: {}]
  %s6 = sld [smem:[#allocation0]]
  $region53: #{text_image_forward.5} parent=0
    _
  %s8 = ssub.s32 1, %s6
  %s9 = scalar_select 0, %s8, %s6
  loop: start=0, step=1, limit=4
  $region2: #{text_image_forward.5} parent=0 // loop_pre_header
    _
  $region3: #{text_image_forward.5} parent=0 // loop_header
    %s11 = sphi 0, %s15
    %p12 = scmp.ge.s32.totalorder %s11, 4
    %s21 = sphi 0, %s23
    %s24 = sphi 0, %s21
    %s25 = sphi 0, %s24
    %s41 = sphi 0, %s25
    %s45 = sphi 0, %s45
    %s47 = sphi 0, %s45
    %s48 = sphi 0, %s47
    %s62 = sphi 0, %s48
    %s66 = sphi 0, %s66
    %s68 = sphi 0, %s66
    %s69 = sphi 0, %s68
    %s83 = sphi 0, %s69
    %s87 = sphi 0, %s87
    %s89 = sphi 0, %s87
    %s90 = sphi 0, %s89
    %s104 = sphi 0, %s90
    %s108 = sphi 0, %s108
    %s110 = sphi 0, %s108
    %s111 = sphi 0, %s110
    %s125 = sphi 0, %s111
    %s131 = sphi 0, %s133
    %s134 = sphi 0, %s131
    %s135 = sphi 0, %s134
    %s151 = sphi 0, %s135
  $region4: #{text_image_forward.5} parent=0 // loop_header_branch
    %14 = sbr.rel (%p12) target = $region8
  $region5: #{text_image_forward.5} parent=0 // loop_body
    %s16 = ssub.s32 %s11, 1
    %s17 = ssub.s32 %s11, 2
    %s18 = sadd.s32 %s11, 1
    %s19 = ssub.s32 %s11, %s18
    %p20 = scmp.eq.s32.totalorder %s19, 0
    %s22 = sadd.s32 %s21, 1
    %s23 = scalar_select %p20, %s21, %s22
    %p26 = pneg %p20
    %p27 = scmp.eq.s32.totalorder %s11, 1
    %p28 = por %p26, %p27
    %p29 = scmp.ne.s32.totalorder %s21, %s24
    %p30 = scmp.eq.s32.totalorder %s11, 0
    %p31 = por %p29, %p30
    %p32 = scmp.ne.s32.totalorder %s21, %s24
    %p33 = scmp.eq.s32.totalorder %s16, 1
    %p34 = por %p32, %p33
    %p35 = scmp.ne.s32.totalorder %s24, %s25
    %p36 = scmp.eq.s32.totalorder %s16, 0
    %p37 = por %p35, %p36
    %p38 = scmp.ne.s32.totalorder %s24, %s25
    %p39 = scmp.eq.s32.totalorder %s17, 1
    %p40 = por %p38, %p39
    %p42 = scmp.ne.s32.totalorder %s25, %s41
    %p43 = scmp.eq.s32.totalorder %s17, 0
    %p44 = por %p42, %p43
    %s46 = sadd.s32 %s45, 1
    %p49 = scmp.eq.s32.totalorder %s11, 1
    %p50 = scmp.ne.s32.totalorder %s45, %s47
    %p51 = scmp.eq.s32.totalorder %s11, 0
    %p52 = por %p50, %p51
    %p53 = scmp.ne.s32.totalorder %s45, %s47
    %p54 = scmp.eq.s32.totalorder %s16, 1
    %p55 = por %p53, %p54
    %p56 = scmp.ne.s32.totalorder %s47, %s48
    %p57 = scmp.eq.s32.totalorder %s16, 0
    %p58 = por %p56, %p57
    %p59 = scmp.ne.s32.totalorder %s47, %s48
    %p60 = scmp.eq.s32.totalorder %s17, 1
    %p61 = por %p59, %p60
    %p63 = scmp.ne.s32.totalorder %s48, %s62
    %p64 = scmp.eq.s32.totalorder %s17, 0
    %p65 = por %p63, %p64
    %s67 = sadd.s32 %s66, 1
    %p70 = scmp.eq.s32.totalorder %s11, 1
    %p71 = scmp.ne.s32.totalorder %s66, %s68
    %p72 = scmp.eq.s32.totalorder %s11, 0
    %p73 = por %p71, %p72
    %p74 = scmp.ne.s32.totalorder %s66, %s68
    %p75 = scmp.eq.s32.totalorder %s16, 1
    %p76 = por %p74, %p75
    %p77 = scmp.ne.s32.totalorder %s68, %s69
    %p78 = scmp.eq.s32.totalorder %s16, 0
    %p79 = por %p77, %p78
    %p80 = scmp.ne.s32.totalorder %s68, %s69
    %p81 = scmp.eq.s32.totalorder %s17, 1
    %p82 = por %p80, %p81
    %p84 = scmp.ne.s32.totalorder %s69, %s83
    %p85 = scmp.eq.s32.totalorder %s17, 0
    %p86 = por %p84, %p85
    %s88 = sadd.s32 %s87, 1
    %p91 = scmp.eq.s32.totalorder %s11, 1
    %p92 = scmp.ne.s32.totalorder %s87, %s89
    %p93 = scmp.eq.s32.totalorder %s11, 0
    %p94 = por %p92, %p93
    %p95 = scmp.ne.s32.totalorder %s87, %s89
    %p96 = scmp.eq.s32.totalorder %s16, 1
    %p97 = por %p95, %p96
    %p98 = scmp.ne.s32.totalorder %s89, %s90
    %p99 = scmp.eq.s32.totalorder %s16, 0
    %p100 = por %p98, %p99
    %p101 = scmp.ne.s32.totalorder %s89, %s90
    %p102 = scmp.eq.s32.totalorder %s17, 1
    %p103 = por %p101, %p102
    %p105 = scmp.ne.s32.totalorder %s90, %s104
    %p106 = scmp.eq.s32.totalorder %s17, 0
    %p107 = por %p105, %p106
    %s109 = sadd.s32 %s108, 1
    %p112 = scmp.eq.s32.totalorder %s11, 1
    %p113 = scmp.ne.s32.totalorder %s108, %s110
    %p114 = scmp.eq.s32.totalorder %s11, 0
    %p115 = por %p113, %p114
    %p116 = scmp.ne.s32.totalorder %s108, %s110
    %p117 = scmp.eq.s32.totalorder %s16, 1
    %p118 = por %p116, %p117
    %p119 = scmp.ne.s32.totalorder %s110, %s111
    %p120 = scmp.eq.s32.totalorder %s16, 0
    %p121 = por %p119, %p120
    %p122 = scmp.ne.s32.totalorder %s110, %s111
    %p123 = scmp.eq.s32.totalorder %s17, 1
    %p124 = por %p122, %p123
    %p126 = scmp.ne.s32.totalorder %s111, %s125
    %p127 = scmp.eq.s32.totalorder %s17, 0
    %p128 = por %p126, %p127
    %s129 = ssub.s32 %s11, %s18
    %p130 = scmp.eq.s32.totalorder %s129, 0
    %s132 = sadd.s32 %s131, 1
    %s133 = scalar_select %p130, %s131, %s132
    %p136 = pneg %p130
    %p137 = scmp.eq.s32.totalorder %s11, 1
    %p138 = por %p136, %p137
    %p139 = scmp.ne.s32.totalorder %s131, %s134
    %p140 = scmp.eq.s32.totalorder %s11, 0
    %p141 = por %p139, %p140
    %p142 = scmp.ne.s32.totalorder %s131, %s134
    %p143 = scmp.eq.s32.totalorder %s16, 1
    %p144 = por %p142, %p143
    %p145 = scmp.ne.s32.totalorder %s134, %s135
    %p146 = scmp.eq.s32.totalorder %s16, 0
    %p147 = por %p145, %p146
    %p148 = scmp.ne.s32.totalorder %s134, %s135
    %p149 = scmp.eq.s32.totalorder %s17, 1
    %p150 = por %p148, %p149
    %p152 = scmp.ne.s32.totalorder %s135, %s151
    %p153 = scmp.eq.s32.totalorder %s17, 0
    %p154 = por %p152, %p153
    %p155 = scmp.le.s32.totalorder 1, %s11
    %p156 = scmp.lt.s32.totalorder %s11, 3
    %p157 = pnand %p155, %p156
    %p158 = pneg %p157
    // Predicated region
    $region9: #{text_image_forward.5} parent=5 // pred_check
      _
    $region10: #{text_image_forward.5} parent=5 // pred_check_branch
      %160 = sbr.rel (%p157) target = $region12
    $region11: #{text_image_forward.5} parent=5 // pred_region
      %s161 = ssub.s32 %s11, 1
      // Predicated region
      $region13: #{text_image_forward.5} parent=11 // pred_check
        %p162 = pneg %p58
      $region14: #{text_image_forward.5} parent=11 // pred_check_branch
        %164 = sbr.rel (%p162) target = $region16
      $region15: #{text_image_forward.5} parent=11 // pred_region
        _
      $region16: #{text_image_forward.5} parent=11 // pred_fallthru
        _
      // Predicated region
      $region17: #{text_image_forward.5} parent=11 // pred_check
        %p165 = pneg %p79
      $region18: #{text_image_forward.5} parent=11 // pred_check_branch
        %167 = sbr.rel (%p165) target = $region20
      $region19: #{text_image_forward.5} parent=11 // pred_region
        _
      $region20: #{text_image_forward.5} parent=11 // pred_fallthru
        _
      // Predicated region
      $region21: #{text_image_forward.5} parent=11 // pred_check
        %p168 = pneg %p100
      $region22: #{text_image_forward.5} parent=11 // pred_check_branch
        %170 = sbr.rel (%p168) target = $region24
      $region23: #{text_image_forward.5} parent=11 // pred_region
        _
      $region24: #{text_image_forward.5} parent=11 // pred_fallthru
        _
      // Predicated region
      $region25: #{text_image_forward.5} parent=11 // pred_check
        %p171 = pneg %p121
      $region26: #{text_image_forward.5} parent=11 // pred_check_branch
        %173 = sbr.rel (%p171) target = $region28
      $region27: #{text_image_forward.5} parent=11 // pred_region
        _
      $region28: #{text_image_forward.5} parent=11 // pred_fallthru
        _
    $region12: #{text_image_forward.5} parent=5 // pred_fallthru
      _
    %p174 = scmp.lt.s32.totalorder %s11, 2
    // Predicated region
    $region29: #{text_image_forward.5} parent=5 // pred_check
      %p175 = pneg %p174
    $region30: #{text_image_forward.5} parent=5 // pred_check_branch
      %177 = sbr.rel (%p175) target = $region32
    $region31: #{text_image_forward.5} parent=5 // pred_region
      // Predicated region
      $region33: #{text_image_forward.5} parent=31 // pred_check
        %p178 = pneg %p31
      $region34: #{text_image_forward.5} parent=31 // pred_check_branch
        %180 = sbr.rel (%p178) target = $region36
      $region35: #{text_image_forward.5} parent=31 // pred_region
        %p181 = scmp.lt.s32.totalorder %s11, 1
        %s182 = scalar_select %p181, %s11, 1
        %s183 = smul.addr %s182, 8
        %s184 = scalar_lea.vmem %s0, %s183
      $region36: #{text_image_forward.5} parent=31 // pred_fallthru
        _
    $region32: #{text_image_forward.5} parent=5 // pred_fallthru
      _
    %p185 = scmp.le.s32.totalorder 1, %s11
    %p186 = scmp.lt.s32.totalorder %s11, 3
    %p187 = pnand %p185, %p186
    %p188 = pneg %p187
    // Predicated region
    $region37: #{text_image_forward.5} parent=5 // pred_check
      _
    $region38: #{text_image_forward.5} parent=5 // pred_check_branch
      %190 = sbr.rel (%p187) target = $region40
    $region39: #{text_image_forward.5} parent=5 // pred_region
      %s191 = ssub.s32 %s11, 1
      %p192 = scmp.lt.s32.totalorder %s16, 1
      %s193 = scalar_select %p192, %s16, 1
      %s194 = smul.addr %s193, 8
      %s195 = scalar_lea.vmem %s0, %s194
      %p196 = pneg %p37
      %p197 = pneg %p34
      %p198 = pneg %p58
      %p199 = pneg %p55
      %p200 = pneg %p79
      %p201 = pneg %p76
      %p202 = pneg %p100
      %p203 = pneg %p97
      %p204 = pneg %p121
      %p205 = pneg %p118
      %p206 = pneg %p147
      %p207 = pneg %p144
      %p208 = scmp.lt.s32.totalorder %s16, 1
      %s209 = scalar_select %p208, %s16, 1
      %s210 = smul.addr %s209, 8
      %s211 = scalar_lea.vmem %s5, %s210
      %p212 = scmp.lt.s32.totalorder %s16, 1
      %s213 = scalar_select %p212, %s16, 1
      %s214 = smul.addr %s213, 8
      %s215 = scalar_lea.vmem %s0, %s214
      %p216 = scmp.lt.s32.totalorder %s16, 1
      %s217 = scalar_select %p216, %s16, 1
      %s218 = smul.addr %s217, 8
      %s219 = scalar_lea.vmem %s5, %s218
      %v220 = vld [vmem:[%s215] sm:$0xff]
      %v221 = vld [vmem:[%s1] sm:$0xff]
      %v222 = vadd.f32 %v220, %v221
      %v223 = vld [vmem:[%s2] sm:$0x1]
      %v225 = vlaneseq
      %v226 = vshrl.u32 %v225, 7
      %v227 = vsub.s32 0, %v226
      %v228 = vrot.slane %v223, %v227
      %v230 = vadd.f32 %v222, %v228
      %231 = vadd.xlane.f32.xlu0 %v230
      %v232 = vpop.xlane.xlu0 %231
      %v233 = vrcp.pop 128.0
      %v234 = vmul.f32 %v232, %v233
      %v235 = vsub.f32 %v230, %v234
      %v236 = vmul.f32 %v235, %v235
      %237 = vadd.xlane.f32.xlu0 %v236
      %v238 = vpop.xlane.xlu0 %237
      %v239 = vmul.f32 %v238, %v233
      %v240 = vadd.f32 %v239, 1e-05
      %v241 = vrsqrt.pop %v240
      %v242 = vmul.f32 %v235, %v241
      %v243 = vld [vmem:[%s3] sm:$0x1]
      %v245 = vlaneseq
      %v246 = vshrl.u32 %v245, 7
      %v247 = vsub.s32 0, %v246
      %v248 = vrot.slane %v243, %v247
      %v250 = vmul.f32 %v242, %v248
      %v251 = vld [vmem:[%s4] sm:$0x1]
      %v253 = vlaneseq
      %v254 = vshrl.u32 %v253, 7
      %v255 = vsub.s32 0, %v254
      %v256 = vrot.slane %v251, %v255
      %v258 = vadd.f32 %v250, %v256
      %259 = vst [vmem:[%s219] sm:$0xff] %v258
      %p260 = scmp.lt.s32.totalorder %s16, 1
      %s261 = scalar_select %p260, %s16, 1
      %s262 = smul.addr %s261, 8
      %s263 = scalar_lea.vmem %s5, %s262
      // Predicated region
      $region41: #{text_image_forward.5} parent=39 // pred_check
        %p264 = pneg %p144
      $region42: #{text_image_forward.5} parent=39 // pred_check_branch
        %266 = sbr.rel (%p264) target = $region44
      $region43: #{text_image_forward.5} parent=39 // pred_region
        _
      $region44: #{text_image_forward.5} parent=39 // pred_fallthru
        _
    $region40: #{text_image_forward.5} parent=5 // pred_fallthru
      _
    %p267 = scmp.le.s32.totalorder 2, %s11
    // Predicated region
    $region45: #{text_image_forward.5} parent=5 // pred_check
      %p268 = pneg %p267
    $region46: #{text_image_forward.5} parent=5 // pred_check_branch
      %270 = sbr.rel (%p268) target = $region48
    $region47: #{text_image_forward.5} parent=5 // pred_region
      %s271 = ssub.s32 %s11, 2
      // Predicated region
      $region49: #{text_image_forward.5} parent=47 // pred_check
        %p272 = pneg %p150
      $region50: #{text_image_forward.5} parent=47 // pred_check_branch
        %274 = sbr.rel (%p272) target = $region52
      $region51: #{text_image_forward.5} parent=47 // pred_region
        %p275 = scmp.lt.s32.totalorder %s17, 1
        %s276 = scalar_select %p275, %s17, 1
        %s277 = smul.addr %s276, 8
        %s278 = scalar_lea.vmem %s5, %s277
      $region52: #{text_image_forward.5} parent=47 // pred_fallthru
        _
    $region48: #{text_image_forward.5} parent=5 // pred_fallthru
      _
  $region6: #{text_image_forward.5} parent=0 // loop_footer
    %s15 = sadd.s32 1, %s11
  $region7: #{text_image_forward.5} parent=0 // loop_footer_branch
    %10 = sbr.rel target = $region3
  $region8: #{text_image_forward.5} parent=0 // loop_exit
    _

// kernel: text_image_forward.7
$region0: #{text_image_forward.7}
  #allocation0 [shape = 'u32[]', space=smem, size = 0x4, offset = 0x4, fixed_abs, tag = 'smem constant byte address 0x4 - core index']
  #allocation1 [shape = 'u32[144,128]{1,0:T(1,128)}', space=vmem, size = 0x12000, scoped, tag = 'internal scratch']
  %s0 = inlined_call_operand.vmem [shape: f32[2,4,192], index: 0, kind: input, shape index: {}]
  %s1 = inlined_call_operand.vmem [shape: bf16[192,128], index: 1, kind: input, shape index: {}]
  %s2 = inlined_call_operand.vmem [shape: f32[1,128], index: 2, kind: input, shape index: {}]
  %s3 = inlined_call_operand.vmem [shape: f32[1,128], index: 3, kind: input, shape index: {}]
  %s4 = inlined_call_operand.vmem [shape: f32[8,128], index: 4, kind: input, shape index: {}]
  %s5 = inlined_call_operand.vmem [shape: f32[2,8,128], index: 5, kind: output, shape index: {}]
  %s6 = sld [smem:[#allocation0]]
  $region53: #{text_image_forward.7} parent=0
    _
  %s8 = ssub.s32 1, %s6
  %s9 = scalar_select 0, %s8, %s6
  loop: start=0, step=1, limit=4
  $region2: #{text_image_forward.7} parent=0 // loop_pre_header
    _
  $region3: #{text_image_forward.7} parent=0 // loop_header
    %s11 = sphi 0, %s15
    %p12 = scmp.ge.s32.totalorder %s11, 4
    %s21 = sphi 0, %s23
    %s24 = sphi 0, %s21
    %s25 = sphi 0, %s24
    %s41 = sphi 0, %s25
    %s45 = sphi 0, %s45
    %s47 = sphi 0, %s45
    %s48 = sphi 0, %s47
    %s62 = sphi 0, %s48
    %s66 = sphi 0, %s66
    %s68 = sphi 0, %s66
    %s69 = sphi 0, %s68
    %s83 = sphi 0, %s69
    %s87 = sphi 0, %s87
    %s89 = sphi 0, %s87
    %s90 = sphi 0, %s89
    %s104 = sphi 0, %s90
    %s108 = sphi 0, %s108
    %s110 = sphi 0, %s108
    %s111 = sphi 0, %s110
    %s125 = sphi 0, %s111
    %s131 = sphi 0, %s133
    %s134 = sphi 0, %s131
    %s135 = sphi 0, %s134
    %s151 = sphi 0, %s135
  $region4: #{text_image_forward.7} parent=0 // loop_header_branch
    %14 = sbr.rel (%p12) target = $region8
  $region5: #{text_image_forward.7} parent=0 // loop_body
    %s16 = ssub.s32 %s11, 1
    %s17 = ssub.s32 %s11, 2
    %s18 = sadd.s32 %s11, 1
    %s19 = ssub.s32 %s11, %s18
    %p20 = scmp.eq.s32.totalorder %s19, 0
    %s22 = sadd.s32 %s21, 1
    %s23 = scalar_select %p20, %s21, %s22
    %p26 = pneg %p20
    %p27 = scmp.eq.s32.totalorder %s11, 1
    %p28 = por %p26, %p27
    %p29 = scmp.ne.s32.totalorder %s21, %s24
    %p30 = scmp.eq.s32.totalorder %s11, 0
    %p31 = por %p29, %p30
    %p32 = scmp.ne.s32.totalorder %s21, %s24
    %p33 = scmp.eq.s32.totalorder %s16, 1
    %p34 = por %p32, %p33
    %p35 = scmp.ne.s32.totalorder %s24, %s25
    %p36 = scmp.eq.s32.totalorder %s16, 0
    %p37 = por %p35, %p36
    %p38 = scmp.ne.s32.totalorder %s24, %s25
    %p39 = scmp.eq.s32.totalorder %s17, 1
    %p40 = por %p38, %p39
    %p42 = scmp.ne.s32.totalorder %s25, %s41
    %p43 = scmp.eq.s32.totalorder %s17, 0
    %p44 = por %p42, %p43
    %s46 = sadd.s32 %s45, 1
    %p49 = scmp.eq.s32.totalorder %s11, 1
    %p50 = scmp.ne.s32.totalorder %s45, %s47
    %p51 = scmp.eq.s32.totalorder %s11, 0
    %p52 = por %p50, %p51
    %p53 = scmp.ne.s32.totalorder %s45, %s47
    %p54 = scmp.eq.s32.totalorder %s16, 1
    %p55 = por %p53, %p54
    %p56 = scmp.ne.s32.totalorder %s47, %s48
    %p57 = scmp.eq.s32.totalorder %s16, 0
    %p58 = por %p56, %p57
    %p59 = scmp.ne.s32.totalorder %s47, %s48
    %p60 = scmp.eq.s32.totalorder %s17, 1
    %p61 = por %p59, %p60
    %p63 = scmp.ne.s32.totalorder %s48, %s62
    %p64 = scmp.eq.s32.totalorder %s17, 0
    %p65 = por %p63, %p64
    %s67 = sadd.s32 %s66, 1
    %p70 = scmp.eq.s32.totalorder %s11, 1
    %p71 = scmp.ne.s32.totalorder %s66, %s68
    %p72 = scmp.eq.s32.totalorder %s11, 0
    %p73 = por %p71, %p72
    %p74 = scmp.ne.s32.totalorder %s66, %s68
    %p75 = scmp.eq.s32.totalorder %s16, 1
    %p76 = por %p74, %p75
    %p77 = scmp.ne.s32.totalorder %s68, %s69
    %p78 = scmp.eq.s32.totalorder %s16, 0
    %p79 = por %p77, %p78
    %p80 = scmp.ne.s32.totalorder %s68, %s69
    %p81 = scmp.eq.s32.totalorder %s17, 1
    %p82 = por %p80, %p81
    %p84 = scmp.ne.s32.totalorder %s69, %s83
    %p85 = scmp.eq.s32.totalorder %s17, 0
    %p86 = por %p84, %p85
    %s88 = sadd.s32 %s87, 1
    %p91 = scmp.eq.s32.totalorder %s11, 1
    %p92 = scmp.ne.s32.totalorder %s87, %s89
    %p93 = scmp.eq.s32.totalorder %s11, 0
    %p94 = por %p92, %p93
    %p95 = scmp.ne.s32.totalorder %s87, %s89
    %p96 = scmp.eq.s32.totalorder %s16, 1
    %p97 = por %p95, %p96
    %p98 = scmp.ne.s32.totalorder %s89, %s90
    %p99 = scmp.eq.s32.totalorder %s16, 0
    %p100 = por %p98, %p99
    %p101 = scmp.ne.s32.totalorder %s89, %s90
    %p102 = scmp.eq.s32.totalorder %s17, 1
    %p103 = por %p101, %p102
    %p105 = scmp.ne.s32.totalorder %s90, %s104
    %p106 = scmp.eq.s32.totalorder %s17, 0
    %p107 = por %p105, %p106
    %s109 = sadd.s32 %s108, 1
    %p112 = scmp.eq.s32.totalorder %s11, 1
    %p113 = scmp.ne.s32.totalorder %s108, %s110
    %p114 = scmp.eq.s32.totalorder %s11, 0
    %p115 = por %p113, %p114
    %p116 = scmp.ne.s32.totalorder %s108, %s110
    %p117 = scmp.eq.s32.totalorder %s16, 1
    %p118 = por %p116, %p117
    %p119 = scmp.ne.s32.totalorder %s110, %s111
    %p120 = scmp.eq.s32.totalorder %s16, 0
    %p121 = por %p119, %p120
    %p122 = scmp.ne.s32.totalorder %s110, %s111
    %p123 = scmp.eq.s32.totalorder %s17, 1
    %p124 = por %p122, %p123
    %p126 = scmp.ne.s32.totalorder %s111, %s125
    %p127 = scmp.eq.s32.totalorder %s17, 0
    %p128 = por %p126, %p127
    %s129 = ssub.s32 %s11, %s18
    %p130 = scmp.eq.s32.totalorder %s129, 0
    %s132 = sadd.s32 %s131, 1
    %s133 = scalar_select %p130, %s131, %s132
    %p136 = pneg %p130
    %p137 = scmp.eq.s32.totalorder %s11, 1
    %p138 = por %p136, %p137
    %p139 = scmp.ne.s32.totalorder %s131, %s134
    %p140 = scmp.eq.s32.totalorder %s11, 0
    %p141 = por %p139, %p140
    %p142 = scmp.ne.s32.totalorder %s131, %s134
    %p143 = scmp.eq.s32.totalorder %s16, 1
    %p144 = por %p142, %p143
    %p145 = scmp.ne.s32.totalorder %s134, %s135
    %p146 = scmp.eq.s32.totalorder %s16, 0
    %p147 = por %p145, %p146
    %p148 = scmp.ne.s32.totalorder %s134, %s135
    %p149 = scmp.eq.s32.totalorder %s17, 1
    %p150 = por %p148, %p149
    %p152 = scmp.ne.s32.totalorder %s135, %s151
    %p153 = scmp.eq.s32.totalorder %s17, 0
    %p154 = por %p152, %p153
    %p155 = scmp.le.s32.totalorder 1, %s11
    %p156 = scmp.lt.s32.totalorder %s11, 3
    %p157 = pnand %p155, %p156
    %p158 = pneg %p157
    // Predicated region
    $region9: #{text_image_forward.7} parent=5 // pred_check
      _
    $region10: #{text_image_forward.7} parent=5 // pred_check_branch
      %160 = sbr.rel (%p157) target = $region12
    $region11: #{text_image_forward.7} parent=5 // pred_region
      %s161 = ssub.s32 %s11, 1
      // Predicated region
      $region13: #{text_image_forward.7} parent=11 // pred_check
        %p162 = pneg %p58
      $region14: #{text_image_forward.7} parent=11 // pred_check_branch
        %164 = sbr.rel (%p162) target = $region16
      $region15: #{text_image_forward.7} parent=11 // pred_region
        _
      $region16: #{text_image_forward.7} parent=11 // pred_fallthru
        _
      // Predicated region
      $region17: #{text_image_forward.7} parent=11 // pred_check
        %p165 = pneg %p79
      $region18: #{text_image_forward.7} parent=11 // pred_check_branch
        %167 = sbr.rel (%p165) target = $region20
      $region19: #{text_image_forward.7} parent=11 // pred_region
        _
      $region20: #{text_image_forward.7} parent=11 // pred_fallthru
        _
      // Predicated region
      $region21: #{text_image_forward.7} parent=11 // pred_check
        %p168 = pneg %p100
      $region22: #{text_image_forward.7} parent=11 // pred_check_branch
        %170 = sbr.rel (%p168) target = $region24
      $region23: #{text_image_forward.7} parent=11 // pred_region
        _
      $region24: #{text_image_forward.7} parent=11 // pred_fallthru
        _
      // Predicated region
      $region25: #{text_image_forward.7} parent=11 // pred_check
        %p171 = pneg %p121
      $region26: #{text_image_forward.7} parent=11 // pred_check_branch
        %173 = sbr.rel (%p171) target = $region28
      $region27: #{text_image_forward.7} parent=11 // pred_region
        _
      $region28: #{text_image_forward.7} parent=11 // pred_fallthru
        _
    $region12: #{text_image_forward.7} parent=5 // pred_fallthru
      _
    %p174 = scmp.lt.s32.totalorder %s11, 2
    // Predicated region
    $region29: #{text_image_forward.7} parent=5 // pred_check
      %p175 = pneg %p174
    $region30: #{text_image_forward.7} parent=5 // pred_check_branch
      %177 = sbr.rel (%p175) target = $region32
    $region31: #{text_image_forward.7} parent=5 // pred_region
      // Predicated region
      $region33: #{text_image_forward.7} parent=31 // pred_check
        %p178 = pneg %p31
      $region34: #{text_image_forward.7} parent=31 // pred_check_branch
        %180 = sbr.rel (%p178) target = $region36
      $region35: #{text_image_forward.7} parent=31 // pred_region
        %p181 = scmp.lt.s32.totalorder %s11, 1
        %s182 = scalar_select %p181, %s11, 1
        %s183 = smul.addr %s182, 2
        %s184 = smul.addr %s183, 4
        %s185 = scalar_lea.vmem %s0, %s184
      $region36: #{text_image_forward.7} parent=31 // pred_fallthru
        _
    $region32: #{text_image_forward.7} parent=5 // pred_fallthru
      _
    %p186 = scmp.le.s32.totalorder 1, %s11
    %p187 = scmp.lt.s32.totalorder %s11, 3
    %p188 = pnand %p186, %p187
    %p189 = pneg %p188
    // Predicated region
    $region37: #{text_image_forward.7} parent=5 // pred_check
      _
    $region38: #{text_image_forward.7} parent=5 // pred_check_branch
      %191 = sbr.rel (%p188) target = $region40
    $region39: #{text_image_forward.7} parent=5 // pred_region
      %s192 = ssub.s32 %s11, 1
      %p193 = scmp.lt.s32.totalorder %s16, 1
      %s194 = scalar_select %p193, %s16, 1
      %s195 = smul.addr %s194, 2
      %s196 = smul.addr %s195, 4
      %s197 = scalar_lea.vmem %s0, %s196
      %p198 = pneg %p37
      %p199 = pneg %p34
      %p200 = pneg %p58
      %p201 = pneg %p55
      %p202 = pneg %p79
      %p203 = pneg %p76
      %p204 = pneg %p100
      %p205 = pneg %p97
      %p206 = pneg %p121
      %p207 = pneg %p118
      %p208 = pneg %p147
      %p209 = pneg %p144
      %p210 = scmp.lt.s32.totalorder %s16, 1
      %s211 = scalar_select %p210, %s16, 1
      %s212 = smul.addr %s211, 8
      %s213 = scalar_lea.vmem %s5, %s212
      %p214 = scmp.lt.s32.totalorder %s16, 1
      %s215 = scalar_select %p214, %s16, 1
      %s216 = smul.addr %s215, 2
      %s217 = smul.addr %s216, 4
      %s218 = scalar_lea.vmem %s0, %s217
      %p219 = scmp.lt.s32.totalorder %s16, 1
      %s220 = scalar_select %p219, %s16, 1
      %s221 = smul.addr %s220, 8
      %s222 = scalar_lea.vmem %s5, %s221
      %v224 = vld [vmem:[%s218] sm:$0xff]
      %v226 = vcombine.high %v224, %v224
      %v228 = vpack.c.bf16 %v224, %v224
      %v229 = vpack.c.bf16 %v226, %v226
      %v230 = vld [vmem:[%s1] sm:$0xf]
      %v231 = vld [vmem:[%s1 + $0x4] sm:$0xf]
      %v232 = vld [vmem:[%s1 + $0x8] sm:$0xf]
      %v233 = vld [vmem:[%s1 + $0xc] sm:$0xf]
      %v234 = vld [vmem:[%s1 + $0x10] sm:$0xf]
      %v235 = vld [vmem:[%s1 + $0x14] sm:$0xf]
      %v236 = vld [vmem:[%s1 + $0x18] sm:$0xf]
      %v237 = vld [vmem:[%s1 + $0x1c] sm:$0xf]
      %v238 = vld [vmem:[%s1 + $0x20] sm:$0xf]
      %v239 = vld [vmem:[%s1 + $0x24] sm:$0xf]
      %v240 = vld [vmem:[%s1 + $0x28] sm:$0xf]
      %v241 = vld [vmem:[%s1 + $0x2c] sm:$0xf]
      %v242 = vld [vmem:[%s1 + $0x30] sm:$0xf]
      %v243 = vld [vmem:[%s1 + $0x34] sm:$0xf]
      %v244 = vld [vmem:[%s1 + $0x38] sm:$0xf]
      %v245 = vld [vmem:[%s1 + $0x3c] sm:$0xf]
      %v246 = vld [vmem:[%s1 + $0x40] sm:$0xf]
      %v247 = vld [vmem:[%s1 + $0x44] sm:$0xf]
      %v248 = vld [vmem:[%s1 + $0x48] sm:$0xf]
      %v249 = vld [vmem:[%s1 + $0x4c] sm:$0xf]
      %v250 = vld [vmem:[%s1 + $0x50] sm:$0xf]
      %v251 = vld [vmem:[%s1 + $0x54] sm:$0xf]
      %v252 = vld [vmem:[%s1 + $0x58] sm:$0xf]
      %v253 = vld [vmem:[%s1 + $0x5c] sm:$0xf]
      %v254 = vld [vmem:[%s2] sm:$0x1]
      %v256 = vlaneseq
      %v257 = vshrl.u32 %v256, 7
      %v258 = vsub.s32 0, %v257
      %v259 = vrot.slane %v254, %v258
      %v285 = vunpack.c.l.b16 %v230
      %v286 = vunpack.c.l.b16 %v231
      %v287 = vunpack.c.l.b16 %v232
      %v288 = vunpack.c.l.b16 %v233
      %v289 = vunpack.c.l.b16 %v234
      %v290 = vunpack.c.l.b16 %v235
      %v291 = vunpack.c.l.b16 %v236
      %v292 = vunpack.c.l.b16 %v237
      %v293 = vunpack.c.l.b16 %v238
      %v294 = vunpack.c.l.b16 %v239
      %v295 = vunpack.c.l.b16 %v240
      %v296 = vunpack.c.l.b16 %v241
      %v297 = vunpack.c.l.b16 %v242
      %v298 = vunpack.c.l.b16 %v243
      %v299 = vunpack.c.l.b16 %v244
      %v300 = vunpack.c.l.b16 %v245
      %v301 = vunpack.c.l.b16 %v246
      %v302 = vunpack.c.l.b16 %v247
      %v303 = vunpack.c.l.b16 %v248
      %v304 = vunpack.c.l.b16 %v249
      %v305 = vunpack.c.l.b16 %v250
      %v306 = vunpack.c.l.b16 %v251
      %v307 = vunpack.c.l.b16 %v252
      %v308 = vunpack.c.l.b16 %v253
      %v309 = vpack.c.b16 %v286, %v285
      %v310 = vpack.c.b16 %v288, %v287
      %v311 = vpack.c.b16 %v290, %v289
      %v312 = vpack.c.b16 %v292, %v291
      %v313 = vpack.c.b16 %v294, %v293
      %v314 = vpack.c.b16 %v296, %v295
      %v315 = vpack.c.b16 %v298, %v297
      %v316 = vpack.c.b16 %v300, %v299
      %v317 = vpack.c.b16 %v302, %v301
      %v318 = vpack.c.b16 %v304, %v303
      %v319 = vpack.c.b16 %v306, %v305
      %v320 = vpack.c.b16 %v308, %v307
      %vm333 = vcmask 523264
      %v335 = vsel %vm333, %v229, 0
      %337 = vmatprep.subr.bf16.mxu0 0
      %338 = vmatpush1.bf16.msra.mxu0 %v316
      %339 = vmatprep.subr.bf16.mxu0 0
      %340 = vmatpush1.bf16.msra.mxu0 %v315
      %341 = vmatprep.subr.bf16.mxu0 0
      %342 = vmatpush1.bf16.msra.mxu0 %v314
      %343 = vmatprep.subr.bf16.mxu0 0
      %344 = vmatpush1.bf16.msra.mxu0 %v313
      %345 = vmatprep.subr.bf16.mxu0 0
      %346 = vmatpush1.bf16.msra.mxu0 %v312
      %347 = vmatprep.subr.bf16.mxu0 0
      %348 = vmatpush1.bf16.msra.mxu0 %v311
      %349 = vmatprep.subr.bf16.mxu0 0
      %350 = vmatpush1.bf16.msra.mxu0 %v310
      %351 = vmatprep.subr.bf16.mxu0 0
      %352 = vmatpush1.bf16.msra.mxu0 %v309
      %353 = vmatprep.subr.bf16.mxu0 0
      %354 = vmatpush2.bf16.msra.mxu0 0
      %355 = vmatprep.subr.bf16.mxu0 0
      %356 = vmatpush2.bf16.msra.mxu0 0
      %357 = vmatprep.subr.bf16.mxu0 0
      %358 = vmatpush2.bf16.msra.mxu0 0
      %359 = vmatprep.subr.bf16.mxu0 0
      %360 = vmatpush2.bf16.msra.mxu0 0
      %361 = vmatprep.subr.bf16.mxu0 0
      %362 = vmatpush2.bf16.msra.mxu0 %v320
      %363 = vmatprep.subr.bf16.mxu0 0
      %364 = vmatpush2.bf16.msra.mxu0 %v319
      %365 = vmatprep.subr.bf16.mxu0 0
      %366 = vmatpush2.bf16.msra.mxu0 %v318
      %367 = vmatprep.subr.bf16.mxu0 0
      %368 = vmatpush2.bf16.msra.mxu0 %v317
      %369 = vmatprep.mubr.bf16.mxu0 %v335
      %370 = vmatmul.mubr.bf16.gmra.mxu0 %v228
      %v371 = vpop.f32.mrf.mxu0
      %v372 = vadd.f32 %v259, %v371
      %v373 = vpop.f32.mrf.mxu0
      %v374 = vpop.f32.mrf.mxu0
      %v375 = vpop.f32.mrf.mxu0
      %376 = vdwg.mxu0
      %v377 = vld [vmem:[%s3] sm:$0x1]
      %v379 = vrot.slane %v372, 7
      %vm381 = vcmask 1040384
      %v382 = vsel %vm381, %v377, %v379
      %vm383 = vcmask 1044480
      %v384 = vsel %vm383, %v382, 0.0
      %v385 = vld [vmem:[%s4] sm:$0xff]
      %v386 = vadd.f32 %v384, %v385
      %387 = vst [vmem:[%s222] sm:$0xff] %v386
      %p388 = scmp.lt.s32.totalorder %s16, 1
      %s389 = scalar_select %p388, %s16, 1
      %s390 = smul.addr %s389, 8
      %s391 = scalar_lea.vmem %s5, %s390
      // Predicated region
      $region41: #{text_image_forward.7} parent=39 // pred_check
        %p392 = pneg %p144
      $region42: #{text_image_forward.7} parent=39 // pred_check_branch
        %394 = sbr.rel (%p392) target = $region44
      $region43: #{text_image_forward.7} parent=39 // pred_region
        _
      $region44: #{text_image_forward.7} parent=39 // pred_fallthru
        _
    $region40: #{text_image_forward.7} parent=5 // pred_fallthru
      _
    %p395 = scmp.le.s32.totalorder 2, %s11
    // Predicated region
    $region45: #{text_image_forward.7} parent=5 // pred_check
      %p396 = pneg %p395
    $region46: #{text_image_forward.7} parent=5 // pred_check_branch
      %398 = sbr.rel (%p396) target = $region48
    $region47: #{text_image_forward.7} parent=5 // pred_region
      %s399 = ssub.s32 %s11, 2
      // Predicated region
      $region49: #{text_image_forward.7} parent=47 // pred_check
        %p400 = pneg %p150
      $region50: #{text_image_forward.7} parent=47 // pred_check_branch
        %402 = sbr.rel (%p400) target = $region52
      $region51: #{text_image_forward.7} parent=47 // pred_region
        %p403 = scmp.lt.s32.totalorder %s17, 1
        %s404 = scalar_select %p403, %s17, 1
        %s405 = smul.addr %s404, 8
        %s406 = scalar_lea.vmem %s5, %s405
      $region52: #{text_image_forward.7} parent=47 // pred_fallthru
        _
    $region48: #{text_image_forward.7} parent=5 // pred_fallthru
      _
  $region6: #{text_image_forward.7} parent=0 // loop_footer
    %s15 = sadd.s32 1, %s11
  $region7: #{text_image_forward.7} parent=0 // loop_footer_branch
    %10 = sbr.rel target = $region3
  $region8: #{text_image_forward.7} parent=0 // loop_exit
    _

// kernel: text_image_forward.6
$region0: #{text_image_forward.6}
  #allocation0 [shape = 'u32[]', space=smem, size = 0x4, offset = 0x4, fixed_abs, tag = 'smem constant byte address 0x4 - core index']
  #allocation1 [shape = 'u32[144,128]{1,0:T(1,128)}', space=vmem, size = 0x12000, scoped, tag = 'internal scratch']
  %s0 = inlined_call_operand.vmem [shape: f32[2,8,128], index: 0, kind: input, shape index: {}]
  %s1 = inlined_call_operand.vmem [shape: f32[2,1,8], index: 1, kind: input, shape index: {}]
  %s2 = inlined_call_operand.hbm [shape: bf16[2,128,768], index: 2, kind: input, shape index: {}]
  %s3 = inlined_call_operand.vmem [shape: f32[2,1,768], index: 3, kind: input, shape index: {}]
  %s4 = inlined_call_operand.vmem [shape: bf16[2,256,128], index: 4, kind: input, shape index: {}]
  %s5 = inlined_call_operand.vmem [shape: f32[2,1,128], index: 5, kind: input, shape index: {}]
  %s6 = inlined_call_operand.hbm [shape: f32[2,1,128], index: 6, kind: input, shape index: {}]
  %s7 = inlined_call_operand.hbm [shape: f32[2,1,128], index: 7, kind: input, shape index: {}]
  %s8 = inlined_call_operand.hbm [shape: f32[2,1,128], index: 8, kind: input, shape index: {}]
  %s9 = inlined_call_operand.hbm [shape: f32[2,1,128], index: 9, kind: input, shape index: {}]
  %s10 = inlined_call_operand.hbm [shape: bf16[2,128,256], index: 10, kind: input, shape index: {}]
  %s11 = inlined_call_operand.vmem [shape: f32[2,1,256], index: 11, kind: input, shape index: {}]
  %s12 = inlined_call_operand.hbm [shape: bf16[2,256,128], index: 12, kind: input, shape index: {}]
  %s13 = inlined_call_operand.hbm [shape: f32[2,1,128], index: 13, kind: input, shape index: {}]
  %s14 = inlined_call_operand.vmem [shape: f32[2,8,128], index: 14, kind: output, shape index: {}]
  %s15 = sld [smem:[#allocation0]]
  $region125: #{text_image_forward.6} parent=0
    _
  %s17 = ssub.s32 1, %s15
  %s18 = scalar_select 0, %s17, %s15
  $region1: #{text_image_forward.6} parent=0
    #allocation2 [shape = 'u8[393216]{0}', space=vmem, size = 0x60000, scoped, tag = 'input window, operand 2']
    #allocation3 [shape = 's32[2]{0}', space=sflag, size = 0x8, scoped, tag = 'scoped memory for text_image_forward.6']
    #allocation4 [shape = 'u8[1024]{0}', space=vmem, size = 0x400, scoped, tag = 'input window, operand 6']
    #allocation5 [shape = 's32[2]{0}', space=sflag, size = 0x8, scoped, tag = 'scoped memory for text_image_forward.6']
    #allocation6 [shape = 'u8[1024]{0}', space=vmem, size = 0x400, scoped, tag = 'input window, operand 7']
    #allocation7 [shape = 'u8[1024]{0}', space=vmem, size = 0x400, scoped, tag = 'input window, operand 8']
    #allocation8 [shape = 's32[2]{0}', space=sflag, size = 0x8, scoped, tag = 'scoped memory for text_image_forward.6']
    #allocation9 [shape = 'u8[1024]{0}', space=vmem, size = 0x400, scoped, tag = 'input window, operand 9']
    #allocation10 [shape = 'u8[131072]{0}', space=vmem, size = 0x20000, scoped, tag = 'input window, operand 10']
    #allocation11 [shape = 's32[2]{0}', space=sflag, size = 0x8, scoped, tag = 'scoped memory for text_image_forward.6']
    #allocation12 [shape = 'u8[131072]{0}', space=vmem, size = 0x20000, scoped, tag = 'input window, operand 12']
    #allocation13 [shape = 'u8[1024]{0}', space=vmem, size = 0x400, scoped, tag = 'input window, operand 13']
    #allocation14 [shape = 's32[2]{0}', space=sflag, size = 0x8, scoped, tag = 'scoped memory for text_image_forward.6']
    %19 = vsyncpa [#allocation3], 0
    %s20 = scalar_lea.sflag [#allocation3], 1
    %21 = vsyncpa %s20, 0
    %22 = vsyncpa [#allocation5], 0
    %s23 = scalar_lea.sflag [#allocation5], 1
    %24 = vsyncpa %s23, 0
    %25 = vsyncpa [#allocation8], 0
    %s26 = scalar_lea.sflag [#allocation8], 1
    %27 = vsyncpa %s26, 0
    %28 = vsyncpa [#allocation11], 0
    %s29 = scalar_lea.sflag [#allocation11], 1
    %30 = vsyncpa %s29, 0
    %31 = vsyncpa [#allocation14], 0
    %s32 = scalar_lea.sflag [#allocation14], 1
    %33 = vsyncpa %s32, 0
    loop: start=0, step=1, limit=6
    $region2: #{text_image_forward.6} parent=1 // loop_pre_header
      _
    $region3: #{text_image_forward.6} parent=1 // loop_header
      %s35 = sphi 0, %s39
      %p36 = scmp.ge.s32.totalorder %s35, 6
      %s42 = sphi 0, %s54
      %s43 = sphi 0, %s50
      %s44 = sphi 0, %s42
      %s45 = sphi 0, %s43
      %s46 = sphi 0, %s44
      %s47 = sphi 0, %s45
      %s57 = sphi 0, %s59
      %s60 = sphi 0, %s57
      %s61 = sphi 0, %s60
      %s77 = sphi 0, %s61
      %s83 = sphi 0, %s85
      %s86 = sphi 0, %s83
      %s87 = sphi 0, %s86
      %s103 = sphi 0, %s87
      %s109 = sphi 0, %s111
      %s112 = sphi 0, %s109
      %s113 = sphi 0, %s112
      %s129 = sphi 0, %s113
      %s135 = sphi 0, %s137
      %s138 = sphi 0, %s135
      %s139 = sphi 0, %s138
      %s155 = sphi 0, %s139
      %s161 = sphi 0, %s163
      %s164 = sphi 0, %s161
      %s165 = sphi 0, %s164
      %s181 = sphi 0, %s165
      %s187 = sphi 0, %s189
      %s190 = sphi 0, %s187
      %s191 = sphi 0, %s190
      %s207 = sphi 0, %s191
      %s213 = sphi 0, %s215
      %s216 = sphi 0, %s213
      %s217 = sphi 0, %s216
      %s233 = sphi 0, %s217
      %s239 = sphi 0, %s241
      %s242 = sphi 0, %s239
      %s243 = sphi 0, %s242
      %s259 = sphi 0, %s243
      %s265 = sphi 0, %s267
      %s268 = sphi 0, %s265
      %s269 = sphi 0, %s268
      %s285 = sphi 0, %s269
      %s291 = sphi 0, %s293
      %s294 = sphi 0, %s291
      %s295 = sphi 0, %s294
      %s311 = sphi 0, %s295
      %s317 = sphi 0, %s319
      %s320 = sphi 0, %s317
      %s321 = sphi 0, %s320
      %s337 = sphi 0, %s321
      %s343 = sphi 0, %s345
      %s346 = sphi 0, %s343
      %s347 = sphi 0, %s346
      %s363 = sphi 0, %s347
      %s369 = sphi 0, %s371
      %s372 = sphi 0, %s369
      %s373 = sphi 0, %s372
      %s389 = sphi 0, %s373
      %s395 = sphi 0, %s397
      %s398 = sphi 0, %s395
      %s399 = sphi 0, %s398
      %s415 = sphi 0, %s399
      %s421 = sphi 0, %s423
      %s424 = sphi 0, %s421
      %s425 = sphi 0, %s424
      %s441 = sphi 0, %s425
    $region4: #{text_image_forward.6} parent=1 // loop_header_branch
      %38 = sbr.rel (%p36) target = $region8
    $region5: #{text_image_forward.6} parent=1 // loop_body
      %s40 = ssub.s32 %s35, 1
      %s41 = ssub.s32 %s35, 2
      %s48 = sadd.s32 1, %s43
      %p49 = scmp.ge.s32.totalorder %s48, 2
      %s50 = scalar_select %p49, 0, %s48
      %s51 = sadd.s32 1, %s42
      %s52 = scalar_select %p49, %s51, %s42
      %p53 = scmp.ge.s32.totalorder %s52, 2
      %s54 = scalar_select %p53, 0, %s52
      %s55 = ssub.s32 %s42, %s54
      %p56 = scmp.eq.s32.totalorder %s55, 0
      %s58 = sadd.s32 %s57, 1
      %s59 = scalar_select %p56, %s57, %s58
      %p62 = pneg %p56
      %p63 = scmp.eq.s32.totalorder %s35, 3
      %p64 = por %p62, %p63
      %p65 = scmp.ne.s32.totalorder %s57, %s60
      %p66 = scmp.eq.s32.totalorder %s35, 0
      %p67 = por %p65, %p66
      %p68 = scmp.ne.s32.totalorder %s57, %s60
      %p69 = scmp.eq.s32.totalorder %s40, 3
      %p70 = por %p68, %p69
      %p71 = scmp.ne.s32.totalorder %s60, %s61
      %p72 = scmp.eq.s32.totalorder %s40, 0
      %p73 = por %p71, %p72
      %p74 = scmp.ne.s32.totalorder %s60, %s61
      %p75 = scmp.eq.s32.totalorder %s41, 3
      %p76 = por %p74, %p75
      %p78 = scmp.ne.s32.totalorder %s61, %s77
      %p79 = scmp.eq.s32.totalorder %s41, 0
      %p80 = por %p78, %p79
      %s81 = ssub.s32 %s42, %s54
      %p82 = scmp.eq.s32.totalorder %s81, 0
      %s84 = sadd.s32 %s83, 1
      %s85 = scalar_select %p82, %s83, %s84
      %p88 = pneg %p82
      %p89 = scmp.eq.s32.totalorder %s35, 3
      %p90 = por %p88, %p89
      %p91 = scmp.ne.s32.totalorder %s83, %s86
      %p92 = scmp.eq.s32.totalorder %s35, 0
      %p93 = por %p91, %p92
      %p94 = scmp.ne.s32.totalorder %s83, %s86
      %p95 = scmp.eq.s32.totalorder %s40, 3
      %p96 = por %p94, %p95
      %p97 = scmp.ne.s32.totalorder %s86, %s87
      %p98 = scmp.eq.s32.totalorder %s40, 0
      %p99 = por %p97, %p98
      %p100 = scmp.ne.s32.totalorder %s86, %s87
      %p101 = scmp.eq.s32.totalorder %s41, 3
      %p102 = por %p100, %p101
      %p104 = scmp.ne.s32.totalorder %s87, %s103
      %p105 = scmp.eq.s32.totalorder %s41, 0
      %p106 = por %p104, %p105
      %s107 = ssub.s32 %s43, %s50
      %p108 = scmp.eq.s32.totalorder %s107, 0
      %s110 = sadd.s32 %s109, 1
      %s111 = scalar_select %p108, %s109, %s110
      %p114 = pneg %p108
      %p115 = scmp.eq.s32.totalorder %s35, 3
      %p116 = por %p114, %p115
      %p117 = scmp.ne.s32.totalorder %s109, %s112
      %p118 = scmp.eq.s32.totalorder %s35, 0
      %p119 = por %p117, %p118
      %p120 = scmp.ne.s32.totalorder %s109, %s112
      %p121 = scmp.eq.s32.totalorder %s40, 3
      %p122 = por %p120, %p121
      %p123 = scmp.ne.s32.totalorder %s112, %s113
      %p124 = scmp.eq.s32.totalorder %s40, 0
      %p125 = por %p123, %p124
      %p126 = scmp.ne.s32.totalorder %s112, %s113
      %p127 = scmp.eq.s32.totalorder %s41, 3
      %p128 = por %p126, %p127
      %p130 = scmp.ne.s32.totalorder %s113, %s129
      %p131 = scmp.eq.s32.totalorder %s41, 0
      %p132 = por %p130, %p131
      %s133 = ssub.s32 %s43, %s50
      %p134 = scmp.eq.s32.totalorder %s133, 0
      %s136 = sadd.s32 %s135, 1
      %s137 = scalar_select %p134, %s135, %s136
      %p140 = pneg %p134
      %p141 = scmp.eq.s32.totalorder %s35, 3
      %p142 = por %p140, %p141
      %p143 = scmp.ne.s32.totalorder %s135, %s138
      %p144 = scmp.eq.s32.totalorder %s35, 0
      %p145 = por %p143, %p144
      %p146 = scmp.ne.s32.totalorder %s135, %s138
      %p147 = scmp.eq.s32.totalorder %s40, 3
      %p148 = por %p146, %p147
      %p149 = scmp.ne.s32.totalorder %s138, %s139
      %p150 = scmp.eq.s32.totalorder %s40, 0
      %p151 = por %p149, %p150
      %p152 = scmp.ne.s32.totalorder %s138, %s139
      %p153 = scmp.eq.s32.totalorder %s41, 3
      %p154 = por %p152, %p153
      %p156 = scmp.ne.s32.totalorder %s139, %s155
      %p157 = scmp.eq.s32.totalorder %s41, 0
      %p158 = por %p156, %p157
      %s159 = ssub.s32 %s43, %s50
      %p160 = scmp.eq.s32.totalorder %s159, 0
      %s162 = sadd.s32 %s161, 1
      %s163 = scalar_select %p160, %s161, %s162
      %p166 = pneg %p160
      %p167 = scmp.eq.s32.totalorder %s35, 3
      %p168 = por %p166, %p167
      %p169 = scmp.ne.s32.totalorder %s161, %s164
      %p170 = scmp.eq.s32.totalorder %s35, 0
      %p171 = por %p169, %p170
      %p172 = scmp.ne.s32.totalorder %s161, %s164
      %p173 = scmp.eq.s32.totalorder %s40, 3
      %p174 = por %p172, %p173
      %p175 = scmp.ne.s32.totalorder %s164, %s165
      %p176 = scmp.eq.s32.totalorder %s40, 0
      %p177 = por %p175, %p176
      %p178 = scmp.ne.s32.totalorder %s164, %s165
      %p179 = scmp.eq.s32.totalorder %s41, 3
      %p180 = por %p178, %p179
      %p182 = scmp.ne.s32.totalorder %s165, %s181
      %p183 = scmp.eq.s32.totalorder %s41, 0
      %p184 = por %p182, %p183
      %s185 = ssub.s32 %s43, %s50
      %p186 = scmp.eq.s32.totalorder %s185, 0
      %s188 = sadd.s32 %s187, 1
      %s189 = scalar_select %p186, %s187, %s188
      %p192 = pneg %p186
      %p193 = scmp.eq.s32.totalorder %s35, 3
      %p194 = por %p192, %p193
      %p195 = scmp.ne.s32.totalorder %s187, %s190
      %p196 = scmp.eq.s32.totalorder %s35, 0
      %p197 = por %p195, %p196
      %p198 = scmp.ne.s32.totalorder %s187, %s190
      %p199 = scmp.eq.s32.totalorder %s40, 3
      %p200 = por %p198, %p199
      %p201 = scmp.ne.s32.totalorder %s190, %s191
      %p202 = scmp.eq.s32.totalorder %s40, 0
      %p203 = por %p201, %p202
      %p204 = scmp.ne.s32.totalorder %s190, %s191
      %p205 = scmp.eq.s32.totalorder %s41, 3
      %p206 = por %p204, %p205
      %p208 = scmp.ne.s32.totalorder %s191, %s207
      %p209 = scmp.eq.s32.totalorder %s41, 0
      %p210 = por %p208, %p209
      %s211 = ssub.s32 %s43, %s50
      %p212 = scmp.eq.s32.totalorder %s211, 0
      %s214 = sadd.s32 %s213, 1
      %s215 = scalar_select %p212, %s213, %s214
      %p218 = pneg %p212
      %p219 = scmp.eq.s32.totalorder %s35, 3
      %p220 = por %p218, %p219
      %p221 = scmp.ne.s32.totalorder %s213, %s216
      %p222 = scmp.eq.s32.totalorder %s35, 0
      %p223 = por %p221, %p222
      %p224 = scmp.ne.s32.totalorder %s213, %s216
      %p225 = scmp.eq.s32.totalorder %s40, 3
      %p226 = por %p224, %p225
      %p227 = scmp.ne.s32.totalorder %s216, %s217
      %p228 = scmp.eq.s32.totalorder %s40, 0
      %p229 = por %p227, %p228
      %p230 = scmp.ne.s32.totalorder %s216, %s217
      %p231 = scmp.eq.s32.totalorder %s41, 3
      %p232 = por %p230, %p231
      %p234 = scmp.ne.s32.totalorder %s217, %s233
      %p235 = scmp.eq.s32.totalorder %s41, 0
      %p236 = por %p234, %p235
      %s237 = ssub.s32 %s43, %s50
      %p238 = scmp.eq.s32.totalorder %s237, 0
      %s240 = sadd.s32 %s239, 1
      %s241 = scalar_select %p238, %s239, %s240
      %p244 = pneg %p238
      %p245 = scmp.eq.s32.totalorder %s35, 3
      %p246 = por %p244, %p245
      %p247 = scmp.ne.s32.totalorder %s239, %s242
      %p248 = scmp.eq.s32.totalorder %s35, 0
      %p249 = por %p247, %p248
      %p250 = scmp.ne.s32.totalorder %s239, %s242
      %p251 = scmp.eq.s32.totalorder %s40, 3
      %p252 = por %p250, %p251
      %p253 = scmp.ne.s32.totalorder %s242, %s243
      %p254 = scmp.eq.s32.totalorder %s40, 0
      %p255 = por %p253, %p254
      %p256 = scmp.ne.s32.totalorder %s242, %s243
      %p257 = scmp.eq.s32.totalorder %s41, 3
      %p258 = por %p256, %p257
      %p260 = scmp.ne.s32.totalorder %s243, %s259
      %p261 = scmp.eq.s32.totalorder %s41, 0
      %p262 = por %p260, %p261
      %s263 = ssub.s32 %s43, %s50
      %p264 = scmp.eq.s32.totalorder %s263, 0
      %s266 = sadd.s32 %s265, 1
      %s267 = scalar_select %p264, %s265, %s266
      %p270 = pneg %p264
      %p271 = scmp.eq.s32.totalorder %s35, 3
      %p272 = por %p270, %p271
      %p273 = scmp.ne.s32.totalorder %s265, %s268
      %p274 = scmp.eq.s32.totalorder %s35, 0
      %p275 = por %p273, %p274
      %p276 = scmp.ne.s32.totalorder %s265, %s268
      %p277 = scmp.eq.s32.totalorder %s40, 3
      %p278 = por %p276, %p277
      %p279 = scmp.ne.s32.totalorder %s268, %s269
      %p280 = scmp.eq.s32.totalorder %s40, 0
      %p281 = por %p279, %p280
      %p282 = scmp.ne.s32.totalorder %s268, %s269
      %p283 = scmp.eq.s32.totalorder %s41, 3
      %p284 = por %p282, %p283
      %p286 = scmp.ne.s32.totalorder %s269, %s285
      %p287 = scmp.eq.s32.totalorder %s41, 0
      %p288 = por %p286, %p287
      %s289 = ssub.s32 %s43, %s50
      %p290 = scmp.eq.s32.totalorder %s289, 0
      %s292 = sadd.s32 %s291, 1
      %s293 = scalar_select %p290, %s291, %s292
      %p296 = pneg %p290
      %p297 = scmp.eq.s32.totalorder %s35, 3
      %p298 = por %p296, %p297
      %p299 = scmp.ne.s32.totalorder %s291, %s294
      %p300 = scmp.eq.s32.totalorder %s35, 0
      %p301 = por %p299, %p300
      %p302 = scmp.ne.s32.totalorder %s291, %s294
      %p303 = scmp.eq.s32.totalorder %s40, 3
      %p304 = por %p302, %p303
      %p305 = scmp.ne.s32.totalorder %s294, %s295
      %p306 = scmp.eq.s32.totalorder %s40, 0
      %p307 = por %p305, %p306
      %p308 = scmp.ne.s32.totalorder %s294, %s295
      %p309 = scmp.eq.s32.totalorder %s41, 3
      %p310 = por %p308, %p309
      %p312 = scmp.ne.s32.totalorder %s295, %s311
      %p313 = scmp.eq.s32.totalorder %s41, 0
      %p314 = por %p312, %p313
      %s315 = ssub.s32 %s43, %s50
      %p316 = scmp.eq.s32.totalorder %s315, 0
      %s318 = sadd.s32 %s317, 1
      %s319 = scalar_select %p316, %s317, %s318
      %p322 = pneg %p316
      %p323 = scmp.eq.s32.totalorder %s35, 3
      %p324 = por %p322, %p323
      %p325 = scmp.ne.s32.totalorder %s317, %s320
      %p326 = scmp.eq.s32.totalorder %s35, 0
      %p327 = por %p325, %p326
      %p328 = scmp.ne.s32.totalorder %s317, %s320
      %p329 = scmp.eq.s32.totalorder %s40, 3
      %p330 = por %p328, %p329
      %p331 = scmp.ne.s32.totalorder %s320, %s321
      %p332 = scmp.eq.s32.totalorder %s40, 0
      %p333 = por %p331, %p332
      %p334 = scmp.ne.s32.totalorder %s320, %s321
      %p335 = scmp.eq.s32.totalorder %s41, 3
      %p336 = por %p334, %p335
      %p338 = scmp.ne.s32.totalorder %s321, %s337
      %p339 = scmp.eq.s32.totalorder %s41, 0
      %p340 = por %p338, %p339
      %s341 = ssub.s32 %s43, %s50
      %p342 = scmp.eq.s32.totalorder %s341, 0
      %s344 = sadd.s32 %s343, 1
      %s345 = scalar_select %p342, %s343, %s344
      %p348 = pneg %p342
      %p349 = scmp.eq.s32.totalorder %s35, 3
      %p350 = por %p348, %p349
      %p351 = scmp.ne.s32.totalorder %s343, %s346
      %p352 = scmp.eq.s32.totalorder %s35, 0
      %p353 = por %p351, %p352
      %p354 = scmp.ne.s32.totalorder %s343, %s346
      %p355 = scmp.eq.s32.totalorder %s40, 3
      %p356 = por %p354, %p355
      %p357 = scmp.ne.s32.totalorder %s346, %s347
      %p358 = scmp.eq.s32.totalorder %s40, 0
      %p359 = por %p357, %p358
      %p360 = scmp.ne.s32.totalorder %s346, %s347
      %p361 = scmp.eq.s32.totalorder %s41, 3
      %p362 = por %p360, %p361
      %p364 = scmp.ne.s32.totalorder %s347, %s363
      %p365 = scmp.eq.s32.totalorder %s41, 0
      %p366 = por %p364, %p365
      %s367 = ssub.s32 %s43, %s50
      %p368 = scmp.eq.s32.totalorder %s367, 0
      %s370 = sadd.s32 %s369, 1
      %s371 = scalar_select %p368, %s369, %s370
      %p374 = pneg %p368
      %p375 = scmp.eq.s32.totalorder %s35, 3
      %p376 = por %p374, %p375
      %p377 = scmp.ne.s32.totalorder %s369, %s372
      %p378 = scmp.eq.s32.totalorder %s35, 0
      %p379 = por %p377, %p378
      %p380 = scmp.ne.s32.totalorder %s369, %s372
      %p381 = scmp.eq.s32.totalorder %s40, 3
      %p382 = por %p380, %p381
      %p383 = scmp.ne.s32.totalorder %s372, %s373
      %p384 = scmp.eq.s32.totalorder %s40, 0
      %p385 = por %p383, %p384
      %p386 = scmp.ne.s32.totalorder %s372, %s373
      %p387 = scmp.eq.s32.totalorder %s41, 3
      %p388 = por %p386, %p387
      %p390 = scmp.ne.s32.totalorder %s373, %s389
      %p391 = scmp.eq.s32.totalorder %s41, 0
      %p392 = por %p390, %p391
      %s393 = ssub.s32 %s43, %s50
      %p394 = scmp.eq.s32.totalorder %s393, 0
      %s396 = sadd.s32 %s395, 1
      %s397 = scalar_select %p394, %s395, %s396
      %p400 = pneg %p394
      %p401 = scmp.eq.s32.totalorder %s35, 3
      %p402 = por %p400, %p401
      %p403 = scmp.ne.s32.totalorder %s395, %s398
      %p404 = scmp.eq.s32.totalorder %s35, 0
      %p405 = por %p403, %p404
      %p406 = scmp.ne.s32.totalorder %s395, %s398
      %p407 = scmp.eq.s32.totalorder %s40, 3
      %p408 = por %p406, %p407
      %p409 = scmp.ne.s32.totalorder %s398, %s399
      %p410 = scmp.eq.s32.totalorder %s40, 0
      %p411 = por %p409, %p410
      %p412 = scmp.ne.s32.totalorder %s398, %s399
      %p413 = scmp.eq.s32.totalorder %s41, 3
      %p414 = por %p412, %p413
      %p416 = scmp.ne.s32.totalorder %s399, %s415
      %p417 = scmp.eq.s32.totalorder %s41, 0
      %p418 = por %p416, %p417
      %s419 = ssub.s32 %s42, %s54
      %p420 = scmp.eq.s32.totalorder %s419, 0
      %s422 = sadd.s32 %s421, 1
      %s423 = scalar_select %p420, %s421, %s422
      %p426 = pneg %p420
      %p427 = scmp.eq.s32.totalorder %s35, 3
      %p428 = por %p426, %p427
      %p429 = scmp.ne.s32.totalorder %s421, %s424
      %p430 = scmp.eq.s32.totalorder %s35, 0
      %p431 = por %p429, %p430
      %p432 = scmp.ne.s32.totalorder %s421, %s424
      %p433 = scmp.eq.s32.totalorder %s40, 3
      %p434 = por %p432, %p433
      %p435 = scmp.ne.s32.totalorder %s424, %s425
      %p436 = scmp.eq.s32.totalorder %s40, 0
      %p437 = por %p435, %p436
      %p438 = scmp.ne.s32.totalorder %s424, %s425
      %p439 = scmp.eq.s32.totalorder %s41, 3
      %p440 = por %p438, %p439
      %p442 = scmp.ne.s32.totalorder %s425, %s441
      %p443 = scmp.eq.s32.totalorder %s41, 0
      %p444 = por %p442, %p443
      %p445 = scmp.le.s32.totalorder 1, %s35
      %p446 = scmp.lt.s32.totalorder %s35, 5
      %p447 = pnand %p445, %p446
      %p448 = pneg %p447
      // Predicated region
      $region9: #{text_image_forward.6} parent=5 // pred_check
        _
      $region10: #{text_image_forward.6} parent=5 // pred_check_branch
        %450 = sbr.rel (%p447) target = $region12
      $region11: #{text_image_forward.6} parent=5 // pred_region
        %s451 = ssub.s32 %s35, 1
      $region12: #{text_image_forward.6} parent=5 // pred_fallthru
        _
      %p452 = scmp.lt.s32.totalorder %s35, 4
      // Predicated region
      $region13: #{text_image_forward.6} parent=5 // pred_check
        %p453 = pneg %p452
      $region14: #{text_image_forward.6} parent=5 // pred_check_branch
        %455 = sbr.rel (%p453) target = $region16
      $region15: #{text_image_forward.6} parent=5 // pred_region
        // Predicated region
        $region17: #{text_image_forward.6} parent=15 // pred_check
          %p456 = pneg %p67
        $region18: #{text_image_forward.6} parent=15 // pred_check_branch
          %458 = sbr.rel (%p456) target = $region20
        $region19: #{text_image_forward.6} parent=15 // pred_region
          %p459 = scmp.lt.s32.totalorder %s42, 1
          %s460 = scalar_select %p459, %s42, 1
          %s461 = smul.addr %s460, 8
          %s462 = scalar_lea.vmem %s0, %s461
        $region20: #{text_image_forward.6} parent=15 // pred_fallthru
          _
        // Predicated region
        $region21: #{text_image_forward.6} parent=15 // pred_check
          %p463 = pneg %p93
        $region22: #{text_image_forward.6} parent=15 // pred_check_branch
          %465 = sbr.rel (%p463) target = $region24
        $region23: #{text_image_forward.6} parent=15 // pred_region
          %p466 = scmp.lt.s32.totalorder %s42, 1
          %s467 = scalar_select %p466, %s42, 1
          %s468 = scalar_lea.vmem %s1, %s467
        $region24: #{text_image_forward.6} parent=15 // pred_fallthru
          _
        // Predicated region
        $region25: #{text_image_forward.6} parent=15 // pred_check
          %p469 = pneg %p119
        $region26: #{text_image_forward.6} parent=15 // pred_check_branch
          %471 = sbr.rel (%p469) target = $region28
        $region27: #{text_image_forward.6} parent=15 // pred_region
          %s472 = sand.u32 %s109, 1
          %s473 = scalar_lea.sflag [#allocation3], %s472
          %s474 = sand.u32 %s109, 1
          %s475 = smul.addr %s474, 384
          %s476 = scalar_lea.vmem [#allocation2], %s475
          %s478 = ssub.s32 6144, 6144
          %479 = vsyncadd %s473, %s478
          %s480 = smul.addr %s43, 96
          %s481 = smul.addr %s480, 64
          %s482 = scalar_lea.hbm %s2, %s481
          %s483 = sshll.u32 %s476, 4
          %s484 = int_to_ptr.vmem [resolvable:$true] %s483
          %489 = dma.hbm_to_vmem [thread:$0]  %s482, 6144, %s484, %s473, 384, 384, 24
        $region28: #{text_image_forward.6} parent=15 // pred_fallthru
          _
        // Predicated region
        $region29: #{text_image_forward.6} parent=15 // pred_check
          %p490 = pneg %p145
        $region30: #{text_image_forward.6} parent=15 // pred_check_branch
          %492 = sbr.rel (%p490) target = $region32
        $region31: #{text_image_forward.6} parent=15 // pred_region
          %p493 = scmp.lt.s32.totalorder %s43, 1
          %s494 = scalar_select %p493, %s43, 1
          %s495 = smul.addr %s494, 6
          %s496 = scalar_lea.vmem %s3, %s495
        $region32: #{text_image_forward.6} parent=15 // pred_fallthru
          _
        // Predicated region
        $region33: #{text_image_forward.6} parent=15 // pred_check
          %p497 = pneg %p171
        $region34: #{text_image_forward.6} parent=15 // pred_check_branch
          %499 = sbr.rel (%p497) target = $region36
        $region35: #{text_image_forward.6} parent=15 // pred_region
          %p500 = scmp.lt.s32.totalorder %s43, 1
          %s501 = scalar_select %p500, %s43, 1
          %s502 = smul.addr %s501, 32
          %s503 = smul.addr %s502, 4
          %s504 = scalar_lea.vmem %s4, %s503
        $region36: #{text_image_forward.6} parent=15 // pred_fallthru
          _
        // Predicated region
        $region37: #{text_image_forward.6} parent=15 // pred_check
          %p505 = pneg %p197
        $region38: #{text_image_forward.6} parent=15 // pred_check_branch
          %507 = sbr.rel (%p505) target = $region40
        $region39: #{text_image_forward.6} parent=15 // pred_region
          %p508 = scmp.lt.s32.totalorder %s43, 1
          %s509 = scalar_select %p508, %s43, 1
          %s510 = scalar_lea.vmem %s5, %s509
        $region40: #{text_image_forward.6} parent=15 // pred_fallthru
          _
        // Predicated region
        $region41: #{text_image_forward.6} parent=15 // pred_check
          %p511 = pneg %p223
        $region42: #{text_image_forward.6} parent=15 // pred_check_branch
          %513 = sbr.rel (%p511) target = $region44
        $region43: #{text_image_forward.6} parent=15 // pred_region
          %s514 = sand.u32 %s35, 1
          %s515 = scalar_lea.sflag [#allocation5], %s514
          %s516 = sand.u32 %s213, 1
          %s517 = scalar_lea.vmem [#allocation4], %s516
          %s519 = ssub.s32 16, 16
          %520 = vsyncadd %s515, %s519
          %s521 = smul.addr %s43, 16
          %s522 = scalar_lea.hbm %s6, %s521
          %s524 = sshll.u32 %s517, 4
          %s525 = int_to_ptr.vmem [resolvable:$true] %s524
          %527 = dma.hbm_to_vmem [thread:$0]  %s522, 16, %s525, %s515
        $region44: #{text_image_forward.6} parent=15 // pred_fallthru
          _
        // Predicated region
        $region45: #{text_image_forward.6} parent=15 // pred_check
          %p528 = pneg %p249
        $region46: #{text_image_forward.6} parent=15 // pred_check_branch
          %530 = sbr.rel (%p528) target = $region48
        $region47: #{text_image_forward.6} parent=15 // pred_region
          %s531 = sand.u32 %s35, 1
          %s532 = scalar_lea.sflag [#allocation5], %s531
          %s533 = sand.u32 %s239, 1
          %s534 = scalar_lea.vmem [#allocation6], %s533
          %s536 = ssub.s32 16, 16
          %537 = vsyncadd %s532, %s536
          %s538 = smul.addr %s43, 16
          %s539 = scalar_lea.hbm %s7, %s538
          %s541 = sshll.u32 %s534, 4
          %s542 = int_to_ptr.vmem [resolvable:$true] %s541
          %544 = dma.hbm_to_vmem [thread:$0]  %s539, 16, %s542, %s532
        $region48: #{text_image_forward.6} parent=15 // pred_fallthru
          _
        // Predicated region
        $region49: #{text_image_forward.6} parent=15 // pred_check
          %p545 = pneg %p275
        $region50: #{text_image_forward.6} parent=15 // pred_check_branch
          %547 = sbr.rel (%p545) target = $region52
        $region51: #{text_image_forward.6} parent=15 // pred_region
          %s548 = sand.u32 %s35, 1
          %s549 = scalar_lea.sflag [#allocation8], %s548
          %s550 = sand.u32 %s265, 1
          %s551 = scalar_lea.vmem [#allocation7], %s550
          %s553 = ssub.s32 16, 16
          %554 = vsyncadd %s549, %s553
          %s555 = smul.addr %s43, 16
          %s556 = scalar_lea.hbm %s8, %s555
          %s558 = sshll.u32 %s551, 4
          %s559 = int_to_ptr.vmem [resolvable:$true] %s558
          %561 = dma.hbm_to_vmem [thread:$0]  %s556, 16, %s559, %s549
        $region52: #{text_image_forward.6} parent=15 // pred_fallthru
          _
        // Predicated region
        $region53: #{text_image_forward.6} parent=15 // pred_check
          %p562 = pneg %p301
        $region54: #{text_image_forward.6} parent=15 // pred_check_branch
          %564 = sbr.rel (%p562) target = $region56
        $region55: #{text_image_forward.6} parent=15 // pred_region
          %s565 = sand.u32 %s35, 1
          %s566 = scalar_lea.sflag [#allocation8], %s565
          %s567 = sand.u32 %s291, 1
          %s568 = scalar_lea.vmem [#allocation9], %s567
          %s570 = ssub.s32 16, 16
          %571 = vsyncadd %s566, %s570
          %s572 = smul.addr %s43, 16
          %s573 = scalar_lea.hbm %s9, %s572
          %s575 = sshll.u32 %s568, 4
          %s576 = int_to_ptr.vmem [resolvable:$true] %s575
          %578 = dma.hbm_to_vmem [thread:$0]  %s573, 16, %s576, %s566
        $region56: #{text_image_forward.6} parent=15 // pred_fallthru
          _
        // Predicated region
        $region57: #{text_image_forward.6} parent=15 // pred_check
          %p579 = pneg %p327
        $region58: #{text_image_forward.6} parent=15 // pred_check_branch
          %581 = sbr.rel (%p579) target = $region60
        $region59: #{text_image_forward.6} parent=15 // pred_region
          %s582 = sand.u32 %s35, 1
          %s583 = scalar_lea.sflag [#allocation11], %s582
          %s584 = sand.u32 %s317, 1
          %s585 = smul.addr %s584, 128
          %s586 = scalar_lea.vmem [#allocation10], %s585
          %s588 = ssub.s32 2048, 2048
          %589 = vsyncadd %s583, %s588
          %s590 = smul.addr %s43, 32
          %s591 = smul.addr %s590, 64
          %s592 = scalar_lea.hbm %s10, %s591
          %s593 = sshll.u32 %s586, 4
          %s594 = int_to_ptr.vmem [resolvable:$true] %s593
          %599 = dma.hbm_to_vmem [thread:$0]  %s592, 2048, %s594, %s583, 128, 128, 8
        $region60: #{text_image_forward.6} parent=15 // pred_fallthru
          _
        // Predicated region
        $region61: #{text_image_forward.6} parent=15 // pred_check
          %p600 = pneg %p353
        $region62: #{text_image_forward.6} parent=15 // pred_check_branch
          %602 = sbr.rel (%p600) target = $region64
        $region63: #{text_image_forward.6} parent=15 // pred_region
          %p603 = scmp.lt.s32.totalorder %s43, 1
          %s604 = scalar_select %p603, %s43, 1
          %s605 = smul.addr %s604, 2
          %s606 = scalar_lea.vmem %s11, %s605
        $region64: #{text_image_forward.6} parent=15 // pred_fallthru
          _
        // Predicated region
        $region65: #{text_image_forward.6} parent=15 // pred_check
          %p607 = pneg %p379
        $region66: #{text_image_forward.6} parent=15 // pred_check_branch
          %609 = sbr.rel (%p607) target = $region68
        $region67: #{text_image_forward.6} parent=15 // pred_region
          %s610 = sand.u32 %s35, 1
          %s611 = scalar_lea.sflag [#allocation11], %s610
          %s612 = sand.u32 %s369, 1
          %s613 = smul.addr %s612, 128
          %s614 = scalar_lea.vmem [#allocation12], %s613
          %s616 = ssub.s32 2048, 2048
          %617 = vsyncadd %s611, %s616
          %s618 = smul.addr %s43, 32
          %s619 = smul.addr %s618, 64
          %s620 = scalar_lea.hbm %s12, %s619
          %s621 = sshll.u32 %s614, 4
          %s622 = int_to_ptr.vmem [resolvable:$true] %s621
          %627 = dma.hbm_to_vmem [thread:$0]  %s620, 2048, %s622, %s611, 64, 64, 4
        $region68: #{text_image_forward.6} parent=15 // pred_fallthru
          _
        // Predicated region
        $region69: #{text_image_forward.6} parent=15 // pred_check
          %p628 = pneg %p405
        $region70: #{text_image_forward.6} parent=15 // pred_check_branch
          %630 = sbr.rel (%p628) target = $region72
        $region71: #{text_image_forward.6} parent=15 // pred_region
          %s631 = sand.u32 %s395, 1
          %s632 = scalar_lea.sflag [#allocation14], %s631
          %s633 = sand.u32 %s395, 1
          %s634 = scalar_lea.vmem [#allocation13], %s633
          %s636 = ssub.s32 16, 16
          %637 = vsyncadd %s632, %s636
          %s638 = smul.addr %s43, 16
          %s639 = scalar_lea.hbm %s13, %s638
          %s641 = sshll.u32 %s634, 4
          %s642 = int_to_ptr.vmem [resolvable:$true] %s641
          %644 = dma.hbm_to_vmem [thread:$0]  %s639, 16, %s642, %s632
        $region72: #{text_image_forward.6} parent=15 // pred_fallthru
          _
      $region16: #{text_image_forward.6} parent=5 // pred_fallthru
        _
      %p645 = scmp.le.s32.totalorder 1, %s35
      %p646 = scmp.lt.s32.totalorder %s35, 5
      %p647 = pnand %p645, %p646
      %p648 = pneg %p647
      // Predicated region
      $region73: #{text_image_forward.6} parent=5 // pred_check
        _
      $region74: #{text_image_forward.6} parent=5 // pred_check_branch
        %650 = sbr.rel (%p647) target = $region76
      $region75: #{text_image_forward.6} parent=5 // pred_region
        %s651 = ssub.s32 %s35, 1
        %s652 = sand.u32 %s112, 1
        %s653 = scalar_lea.sflag [#allocation3], %s652
        %s654 = sand.u32 %s112, 1
        %s655 = smul.addr %s654, 384
        %s656 = scalar_lea.vmem [#allocation2], %s655
        // Predicated region
        $region77: #{text_image_forward.6} parent=75 // pred_check
          %p657 = pneg %p125
        $region78: #{text_image_forward.6} parent=75 // pred_check_branch
          %659 = sbr.rel (%p657) target = $region80
        $region79: #{text_image_forward.6} parent=75 // pred_region
          %660 = dma.done %s653, 6144
        $region80: #{text_image_forward.6} parent=75 // pred_fallthru
          _
        %s661 = sand.u32 %s40, 1
        %s662 = scalar_lea.sflag [#allocation5], %s661
        %s663 = sand.u32 %s216, 1
        %s664 = scalar_lea.vmem [#allocation4], %s663
        // Predicated region
        $region81: #{text_image_forward.6} parent=75 // pred_check
          %p665 = pneg %p229
        $region82: #{text_image_forward.6} parent=75 // pred_check_branch
          %667 = sbr.rel (%p665) target = $region84
        $region83: #{text_image_forward.6} parent=75 // pred_region
          %668 = dma.done %s662, 16
        $region84: #{text_image_forward.6} parent=75 // pred_fallthru
          _
        %s669 = sand.u32 %s40, 1
        %s670 = scalar_lea.sflag [#allocation5], %s669
        %s671 = sand.u32 %s242, 1
        %s672 = scalar_lea.vmem [#allocation6], %s671
        // Predicated region
        $region85: #{text_image_forward.6} parent=75 // pred_check
          %p673 = pneg %p255
        $region86: #{text_image_forward.6} parent=75 // pred_check_branch
          %675 = sbr.rel (%p673) target = $region88
        $region87: #{text_image_forward.6} parent=75 // pred_region
          %676 = dma.done %s670, 16
        $region88: #{text_image_forward.6} parent=75 // pred_fallthru
          _
        %s677 = sand.u32 %s40, 1
        %s678 = scalar_lea.sflag [#allocation8], %s677
        %s679 = sand.u32 %s268, 1
        %s680 = scalar_lea.vmem [#allocation7], %s679
        // Predicated region
        $region89: #{text_image_forward.6} parent=75 // pred_check
          %p681 = pneg %p281
        $region90: #{text_image_forward.6} parent=75 // pred_check_branch
          %683 = sbr.rel (%p681) target = $region92
        $region91: #{text_image_forward.6} parent=75 // pred_region
          %684 = dma.done %s678, 16
        $region92: #{text_image_forward.6} parent=75 // pred_fallthru
          _
        %s685 = sand.u32 %s40, 1
        %s686 = scalar_lea.sflag [#allocation8], %s685
        %s687 = sand.u32 %s294, 1
        %s688 = scalar_lea.vmem [#allocation9], %s687
        // Predicated region
        $region93: #{text_image_forward.6} parent=75 // pred_check
          %p689 = pneg %p307
        $region94: #{text_image_forward.6} parent=75 // pred_check_branch
          %691 = sbr.rel (%p689) target = $region96
        $region95: #{text_image_forward.6} parent=75 // pred_region
          %692 = dma.done %s686, 16
        $region96: #{text_image_forward.6} parent=75 // pred_fallthru
          _
        %s693 = sand.u32 %s40, 1
        %s694 = scalar_lea.sflag [#allocation11], %s693
        %s695 = sand.u32 %s320, 1
        %s696 = smul.addr %s695, 128
        %s697 = scalar_lea.vmem [#allocation10], %s696
        // Predicated region
        $region97: #{text_image_forward.6} parent=75 // pred_check
          %p698 = pneg %p333
        $region98: #{text_image_forward.6} parent=75 // pred_check_branch
          %700 = sbr.rel (%p698) target = $region100
        $region99: #{text_image_forward.6} parent=75 // pred_region
          %701 = dma.done %s694, 2048
        $region100: #{text_image_forward.6} parent=75 // pred_fallthru
          _
        %s702 = sand.u32 %s40, 1
        %s703 = scalar_lea.sflag [#allocation11], %s702
        %s704 = sand.u32 %s372, 1
        %s705 = smul.addr %s704, 128
        %s706 = scalar_lea.vmem [#allocation12], %s705
        // Predicated region
        $region101: #{text_image_forward.6} parent=75 // pred_check
          %p707 = pneg %p385
        $region102: #{text_image_forward.6} parent=75 // pred_check_branch
          %709 = sbr.rel (%p707) target = $region104
        $region103: #{text_image_forward.6} parent=75 // pred_region
          %710 = dma.done %s703, 2048
        $region104: #{text_image_forward.6} parent=75 // pred_fallthru
          _
        %s711 = sand.u32 %s398, 1
        %s712 = scalar_lea.sflag [#allocation14], %s711
        %s713 = sand.u32 %s398, 1
        %s714 = scalar_lea.vmem [#allocation13], %s713
        // Predicated region
        $region105: #{text_image_forward.6} parent=75 // pred_check
          %p715 = pneg %p411
        $region106: #{text_image_forward.6} parent=75 // pred_check_branch
          %717 = sbr.rel (%p715) target = $region108
        $region107: #{text_image_forward.6} parent=75 // pred_region
          %718 = dma.done %s712, 16
        $region108: #{text_image_forward.6} parent=75 // pred_fallthru
          _
        %p719 = scmp.lt.s32.totalorder %s44, 1
        %s720 = scalar_select %p719, %s44, 1
        %s721 = smul.addr %s720, 8
        %s722 = scalar_lea.vmem %s0, %s721
        %p723 = pneg %p73
        %p724 = pneg %p70
        %p725 = scmp.lt.s32.totalorder %s44, 1
        %s726 = scalar_select %p725, %s44, 1
        %s727 = scalar_lea.vmem %s1, %s726
        %p728 = pneg %p99
        %p729 = pneg %p96
        %s730 = sand.u32 %s112, 1
        %s731 = scalar_lea.sflag [#allocation3], %s730
        %s732 = sand.u32 %s112, 1
        %s733 = smul.addr %s732, 384
        %s734 = scalar_lea.vmem [#allocation2], %s733
        %p735 = pneg %p125
        %p736 = pneg %p122
        %p737 = scmp.lt.s32.totalorder %s45, 1
        %s738 = scalar_select %p737, %s45, 1
        %s739 = smul.addr %s738, 6
        %s740 = scalar_lea.vmem %s3, %s739
        %p741 = pneg %p151
        %p742 = pneg %p148
        %p743 = scmp.lt.s32.totalorder %s45, 1
        %s744 = scalar_select %p743, %s45, 1
        %s745 = smul.addr %s744, 32
        %s746 = smul.addr %s745, 4
        %s747 = scalar_lea.vmem %s4, %s746
        %p748 = pneg %p177
        %p749 = pneg %p174
        %p750 = scmp.lt.s32.totalorder %s45, 1
        %s751 = scalar_select %p750, %s45, 1
        %s752 = scalar_lea.vmem %s5, %s751
        %p753 = pneg %p203
        %p754 = pneg %p200
        %s755 = sand.u32 %s40, 1
        %s756 = scalar_lea.sflag [#allocation5], %s755
        %s757 = sand.u32 %s216, 1
        %s758 = scalar_lea.vmem [#allocation4], %s757
        %p759 = pneg %p229
        %p760 = pneg %p226
        %s761 = sand.u32 %s40, 1
        %s762 = scalar_lea.sflag [#allocation5], %s761
        %s763 = sand.u32 %s242, 1
        %s764 = scalar_lea.vmem [#allocation6], %s763
        %p765 = pneg %p255
        %p766 = pneg %p252
        %s767 = sand.u32 %s40, 1
        %s768 = scalar_lea.sflag [#allocation8], %s767
        %s769 = sand.u32 %s268, 1
        %s770 = scalar_lea.vmem [#allocation7], %s769
        %p771 = pneg %p281
        %p772 = pneg %p278
        %s773 = sand.u32 %s40, 1
        %s774 = scalar_lea.sflag [#allocation8], %s773
        %s775 = sand.u32 %s294, 1
        %s776 = scalar_lea.vmem [#allocation9], %s775
        %p777 = pneg %p307
        %p778 = pneg %p304
        %s779 = sand.u32 %s40, 1
        %s780 = scalar_lea.sflag [#allocation11], %s779
        %s781 = sand.u32 %s320, 1
        %s782 = smul.addr %s781, 128
        %s783 = scalar_lea.vmem [#allocation10], %s782
        %p784 = pneg %p333
        %p785 = pneg %p330
        %p786 = scmp.lt.s32.totalorder %s45, 1
        %s787 = scalar_select %p786, %s45, 1
        %s788 = smul.addr %s787, 2
        %s789 = scalar_lea.vmem %s11, %s788
        %p790 = pneg %p359
        %p791 = pneg %p356
        %s792 = sand.u32 %s40, 1
        %s793 = scalar_lea.sflag [#allocation11], %s792
        %s794 = sand.u32 %s372, 1
        %s795 = smul.addr %s794, 128
        %s796 = scalar_lea.vmem [#allocation12], %s795
        %p797 = pneg %p385
        %p798 = pneg %p382
        %s799 = sand.u32 %s398, 1
        %s800 = scalar_lea.sflag [#allocation14], %s799
        %s801 = sand.u32 %s398, 1
        %s802 = scalar_lea.vmem [#allocation13], %s801
        %p803 = pneg %p411
        %p804 = pneg %p408
        %p805 = pneg %p437
        %p806 = pneg %p434
        %p807 = scmp.lt.s32.totalorder %s44, 1
        %s808 = scalar_select %p807, %s44, 1
        %s809 = smul.addr %s808, 8
        %s810 = scalar_lea.vmem %s14, %s809
        %p811 = scmp.lt.s32.totalorder %s44, 1
        %s812 = scalar_select %p811, %s44, 1
        %s813 = smul.addr %s812, 8
        %s814 = scalar_lea.vmem %s0, %s813
        %p815 = scmp.lt.s32.totalorder %s44, 1
        %s816 = scalar_select %p815, %s44, 1
        %s817 = scalar_lea.vmem %s1, %s816
        %p818 = scmp.lt.s32.totalorder %s45, 1
        %s819 = scalar_select %p818, %s45, 1
        %s820 = smul.addr %s819, 6
        %s821 = scalar_lea.vmem %s3, %s820
        %p822 = scmp.lt.s32.totalorder %s45, 1
        %s823 = scalar_select %p822, %s45, 1
        %s824 = smul.addr %s823, 32
        %s825 = smul.addr %s824, 4
        %s826 = scalar_lea.vmem %s4, %s825
        %p827 = scmp.lt.s32.totalorder %s45, 1
        %s828 = scalar_select %p827, %s45, 1
        %s829 = scalar_lea.vmem %s5, %s828
        %p830 = scmp.lt.s32.totalorder %s45, 1
        %s831 = scalar_select %p830, %s45, 1
        %s832 = smul.addr %s831, 2
        %s833 = scalar_lea.vmem %s11, %s832
        %p834 = scmp.lt.s32.totalorder %s44, 1
        %s835 = scalar_select %p834, %s44, 1
        %s836 = smul.addr %s835, 8
        %s837 = scalar_lea.vmem %s14, %s836
        %p839 = scmp.eq.s32.totalorder %s45, 0
        // Predicated region
        $region109: #{text_image_forward.6} parent=75 // pred_check
          %p840 = pneg %p839
        $region110: #{text_image_forward.6} parent=75 // pred_check_branch
          %842 = sbr.rel (%p840) target = $region112
        $region111: #{text_image_forward.6} parent=75 // pred_region
          %v843 = vld [vmem:[%s814] sm:$0xff]
          %844 = vst [vmem:[%s837] sm:$0xff] %v843
        $region112: #{text_image_forward.6} parent=75 // pred_fallthru
          _
        %v845 = vld [vmem:[%s837] sm:$0xff]
        %v846 = vld [vmem:[%s817] sm:$0x1]
        %v848 = vlaneseq
        %v849 = vshrl.u32 %v848, 7
        %v850 = vsub.s32 0, %v849
        %v851 = vrot.slane %v846, %v850
        %v853 = vld [vmem:[%s656] sm:$0xff]
        %v854 = vld [vmem:[%s656 + $0x8] sm:$0xff]
        %v855 = vld [vmem:[%s656 + $0x10] sm:$0xff]
        %v856 = vld [vmem:[%s656 + $0x18] sm:$0xff]
        %v857 = vld [vmem:[%s656 + $0x20] sm:$0xff]
        %v858 = vld [vmem:[%s656 + $0x28] sm:$0xff]
        %v859 = vld [vmem:[%s656 + $0x30] sm:$0xff]
        %v860 = vld [vmem:[%s656 + $0x38] sm:$0xff]
        %v861 = vld [vmem:[%s656 + $0x40] sm:$0xff]
        %v862 = vld [vmem:[%s656 + $0x48] sm:$0xff]
        %v863 = vld [vmem:[%s656 + $0x50] sm:$0xff]
        %v864 = vld [vmem:[%s656 + $0x58] sm:$0xff]
        %v865 = vld [vmem:[%s656 + $0x60] sm:$0xff]
        %v866 = vld [vmem:[%s656 + $0x68] sm:$0xff]
        %v867 = vld [vmem:[%s656 + $0x70] sm:$0xff]
        %v868 = vld [vmem:[%s656 + $0x78] sm:$0xff]
        %v869 = vld [vmem:[%s656 + $0x80] sm:$0xff]
        %v870 = vld [vmem:[%s656 + $0x88] sm:$0xff]
        %v871 = vld [vmem:[%s656 + $0x90] sm:$0xff]
        %v872 = vld [vmem:[%s656 + $0x98] sm:$0xff]
        %v873 = vld [vmem:[%s656 + $0xa0] sm:$0xff]
        %v874 = vld [vmem:[%s656 + $0xa8] sm:$0xff]
        %v875 = vld [vmem:[%s656 + $0xb0] sm:$0xff]
        %v876 = vld [vmem:[%s656 + $0xb8] sm:$0xff]
        %v877 = vld [vmem:[%s656 + $0xc0] sm:$0xff]
        %v878 = vld [vmem:[%s656 + $0xc8] sm:$0xff]
        %v879 = vld [vmem:[%s656 + $0xd0] sm:$0xff]
        %v880 = vld [vmem:[%s656 + $0xd8] sm:$0xff]
        %v881 = vld [vmem:[%s656 + $0xe0] sm:$0xff]
        %v882 = vld [vmem:[%s656 + $0xe8] sm:$0xff]
        %v883 = vld [vmem:[%s656 + $0xf0] sm:$0xff]
        %v884 = vld [vmem:[%s656 + $0xf8] sm:$0xff]
        %v885 = vld [vmem:[%s656 + $0x100] sm:$0xff]
        %v886 = vld [vmem:[%s656 + $0x108] sm:$0xff]
        %v887 = vld [vmem:[%s656 + $0x110] sm:$0xff]
        %v888 = vld [vmem:[%s656 + $0x118] sm:$0xff]
        %v889 = vld [vmem:[%s656 + $0x120] sm:$0xff]
        %v890 = vld [vmem:[%s656 + $0x128] sm:$0xff]
        %v891 = vld [vmem:[%s656 + $0x130] sm:$0xff]
        %v892 = vld [vmem:[%s656 + $0x138] sm:$0xff]
        %v893 = vld [vmem:[%s656 + $0x140] sm:$0xff]
        %v894 = vld [vmem:[%s656 + $0x148] sm:$0xff]
        %v895 = vld [vmem:[%s656 + $0x150] sm:$0xff]
        %v896 = vld [vmem:[%s656 + $0x158] sm:$0xff]
        %v897 = vld [vmem:[%s656 + $0x160] sm:$0xff]
        %v898 = vld [vmem:[%s656 + $0x168] sm:$0xff]
        %v899 = vld [vmem:[%s656 + $0x170] sm:$0xff]
        %v900 = vld [vmem:[%s656 + $0x178] sm:$0xff]
        %v901 = vld [vmem:[%s821] sm:$0x3f]
        %v902 = vpack.c.bf16 %v845, %v845
        %v904 = vlaneseq
        %v905 = vshrl.u32 %v904, 7
        %v906 = vsub.s32 0, %v905
        %v907 = vrot.slane %v901, %v906
        %v908 = vlaneseq
        %v909 = vshrl.u32 %v908, 7
        %v910 = vsub.s32 1, %v909
        %v911 = vrot.slane %v901, %v910
        %v912 = vlaneseq
        %v913 = vshrl.u32 %v912, 7
        %v914 = vsub.s32 2, %v913
        %v915 = vrot.slane %v901, %v914
        %v916 = vlaneseq
        %v917 = vshrl.u32 %v916, 7
        %v918 = vsub.s32 3, %v917
        %v919 = vrot.slane %v901, %v918
        %v920 = vlaneseq
        %v921 = vshrl.u32 %v920, 7
        %v922 = vsub.s32 4, %v921
        %v923 = vrot.slane %v901, %v922
        %v924 = vlaneseq
        %v925 = vshrl.u32 %v924, 7
        %v926 = vsub.s32 5, %v925
        %v927 = vrot.slane %v901, %v926
        %v982 = vunpack.c.l.b16 %v853
        %v983 = vunpack.c.h.b16 %v853
        %v984 = vunpack.c.l.b16 %v854
        %v985 = vunpack.c.h.b16 %v854
        %v986 = vunpack.c.l.b16 %v855
        %v987 = vunpack.c.h.b16 %v855
        %v988 = vunpack.c.l.b16 %v856
        %v989 = vunpack.c.h.b16 %v856
        %v990 = vunpack.c.l.b16 %v857
        %v991 = vunpack.c.h.b16 %v857
        %v992 = vunpack.c.l.b16 %v858
        %v993 = vunpack.c.h.b16 %v858
        %v994 = vunpack.c.l.b16 %v859
        %v995 = vunpack.c.h.b16 %v859
        %v996 = vunpack.c.l.b16 %v860
        %v997 = vunpack.c.h.b16 %v860
        %v998 = vunpack.c.l.b16 %v861
        %v999 = vunpack.c.h.b16 %v861
        %v1000 = vunpack.c.l.b16 %v862
        %v1001 = vunpack.c.h.b16 %v862
        %v1002 = vunpack.c.l.b16 %v863
        %v1003 = vunpack.c.h.b16 %v863
        %v1004 = vunpack.c.l.b16 %v864
        %v1005 = vunpack.c.h.b16 %v864
        %v1006 = vunpack.c.l.b16 %v865
        %v1007 = vunpack.c.h.b16 %v865
        %v1008 = vunpack.c.l.b16 %v866
        %v1009 = vunpack.c.h.b16 %v866
        %v1010 = vunpack.c.l.b16 %v867
        %v1011 = vunpack.c.h.b16 %v867
        %v1012 = vunpack.c.l.b16 %v868
        %v1013 = vunpack.c.h.b16 %v868
        %v1014 = vunpack.c.l.b16 %v869
        %v1015 = vunpack.c.h.b16 %v869
        %v1016 = vunpack.c.l.b16 %v870
        %v1017 = vunpack.c.h.b16 %v870
        %v1018 = vunpack.c.l.b16 %v871
        %v1019 = vunpack.c.h.b16 %v871
        %v1020 = vunpack.c.l.b16 %v872
        %v1021 = vunpack.c.h.b16 %v872
        %v1022 = vunpack.c.l.b16 %v873
        %v1023 = vunpack.c.h.b16 %v873
        %v1024 = vunpack.c.l.b16 %v874
        %v1025 = vunpack.c.h.b16 %v874
        %v1026 = vunpack.c.l.b16 %v875
        %v1027 = vunpack.c.h.b16 %v875
        %v1028 = vunpack.c.l.b16 %v876
        %v1029 = vunpack.c.h.b16 %v876
        %v1030 = vunpack.c.l.b16 %v877
        %v1031 = vunpack.c.h.b16 %v877
        %v1032 = vunpack.c.l.b16 %v878
        %v1033 = vunpack.c.h.b16 %v878
        %v1034 = vunpack.c.l.b16 %v879
        %v1035 = vunpack.c.h.b16 %v879
        %v1036 = vunpack.c.l.b16 %v880
        %v1037 = vunpack.c.h.b16 %v880
        %v1038 = vunpack.c.l.b16 %v881
        %v1039 = vunpack.c.h.b16 %v881
        %v1040 = vunpack.c.l.b16 %v882
        %v1041 = vunpack.c.h.b16 %v882
        %v1042 = vunpack.c.l.b16 %v883
        %v1043 = vunpack.c.h.b16 %v883
        %v1044 = vunpack.c.l.b16 %v884
        %v1045 = vunpack.c.h.b16 %v884
        %v1046 = vunpack.c.l.b16 %v885
        %v1047 = vunpack.c.h.b16 %v885
        %v1048 = vunpack.c.l.b16 %v886
        %v1049 = vunpack.c.h.b16 %v886
        %v1050 = vunpack.c.l.b16 %v887
        %v1051 = vunpack.c.h.b16 %v887
        %v1052 = vunpack.c.l.b16 %v888
        %v1053 = vunpack.c.h.b16 %v888
        %v1054 = vunpack.c.l.b16 %v889
        %v1055 = vunpack.c.h.b16 %v889
        %v1056 = vunpack.c.l.b16 %v890
        %v1057 = vunpack.c.h.b16 %v890
        %v1058 = vunpack.c.l.b16 %v891
        %v1059 = vunpack.c.h.b16 %v891
        %v1060 = vunpack.c.l.b16 %v892
        %v1061 = vunpack.c.h.b16 %v892
        %v1062 = vunpack.c.l.b16 %v893
        %v1063 = vunpack.c.h.b16 %v893
        %v1064 = vunpack.c.l.b16 %v894
        %v1065 = vunpack.c.h.b16 %v894
        %v1066 = vunpack.c.l.b16 %v895
        %v1067 = vunpack.c.h.b16 %v895
        %v1068 = vunpack.c.l.b16 %v896
        %v1069 = vunpack.c.h.b16 %v896
        %v1070 = vunpack.c.l.b16 %v897
        %v1071 = vunpack.c.h.b16 %v897
        %v1072 = vunpack.c.l.b16 %v898
        %v1073 = vunpack.c.h.b16 %v898
        %v1074 = vunpack.c.l.b16 %v899
        %v1075 = vunpack.c.h.b16 %v899
        %v1076 = vunpack.c.l.b16 %v900
        %v1077 = vunpack.c.h.b16 %v900
        %v1078 = vpack.c.b16 %v988, %v982
        %v1079 = vpack.c.b16 %v989, %v983
        %v1080 = vpack.c.b16 %v990, %v984
        %v1081 = vpack.c.b16 %v991, %v985
        %v1082 = vpack.c.b16 %v992, %v986
        %v1083 = vpack.c.b16 %v993, %v987
        %v1084 = vpack.c.b16 %v1000, %v994
        %v1085 = vpack.c.b16 %v1001, %v995
        %v1086 = vpack.c.b16 %v1002, %v996
        %v1087 = vpack.c.b16 %v1003, %v997
        %v1088 = vpack.c.b16 %v1004, %v998
        %v1089 = vpack.c.b16 %v1005, %v999
        %v1090 = vpack.c.b16 %v1012, %v1006
        %v1091 = vpack.c.b16 %v1013, %v1007
        %v1092 = vpack.c.b16 %v1014, %v1008
        %v1093 = vpack.c.b16 %v1015, %v1009
        %v1094 = vpack.c.b16 %v1016, %v1010
        %v1095 = vpack.c.b16 %v1017, %v1011
        %v1096 = vpack.c.b16 %v1024, %v1018
        %v1097 = vpack.c.b16 %v1025, %v1019
        %v1098 = vpack.c.b16 %v1026, %v1020
        %v1099 = vpack.c.b16 %v1027, %v1021
        %v1100 = vpack.c.b16 %v1028, %v1022
        %v1101 = vpack.c.b16 %v1029, %v1023
        %v1102 = vpack.c.b16 %v1036, %v1030
        %v1103 = vpack.c.b16 %v1037, %v1031
        %v1104 = vpack.c.b16 %v1038, %v1032
        %v1105 = vpack.c.b16 %v1039, %v1033
        %v1106 = vpack.c.b16 %v1040, %v1034
        %v1107 = vpack.c.b16 %v1041, %v1035
        %v1108 = vpack.c.b16 %v1048, %v1042
        %v1109 = vpack.c.b16 %v1049, %v1043
        %v1110 = vpack.c.b16 %v1050, %v1044
        %v1111 = vpack.c.b16 %v1051, %v1045
        %v1112 = vpack.c.b16 %v1052, %v1046
        %v1113 = vpack.c.b16 %v1053, %v1047
        %v1114 = vpack.c.b16 %v1060, %v1054
        %v1115 = vpack.c.b16 %v1061, %v1055
        %v1116 = vpack.c.b16 %v1062, %v1056
        %v1117 = vpack.c.b16 %v1063, %v1057
        %v1118 = vpack.c.b16 %v1064, %v1058
        %v1119 = vpack.c.b16 %v1065, %v1059
        %v1120 = vpack.c.b16 %v1072, %v1066
        %v1121 = vpack.c.b16 %v1073, %v1067
        %v1122 = vpack.c.b16 %v1074, %v1068
        %v1123 = vpack.c.b16 %v1075, %v1069
        %v1124 = vpack.c.b16 %v1076, %v1070
        %v1125 = vpack.c.b16 %v1077, %v1071
        %1174 = vmatprep.subr.bf16.mxu0 %v1121
        %1175 = vmatpush1.bf16.msra.mxu0 %v1120
        %1176 = vmatprep.subr.bf16.mxu0 %v1115
        %1177 = vmatpush1.bf16.msra.mxu0 %v1114
        %1178 = vmatprep.subr.bf16.mxu0 %v1109
        %1179 = vmatpush1.bf16.msra.mxu0 %v1108
        %1180 = vmatprep.subr.bf16.mxu0 %v1103
        %1181 = vmatpush1.bf16.msra.mxu0 %v1102
        %1182 = vmatprep.subr.bf16.mxu0 %v1097
        %1183 = vmatpush1.bf16.msra.mxu0 %v1096
        %1184 = vmatprep.subr.bf16.mxu0 %v1091
        %1185 = vmatpush1.bf16.msra.mxu0 %v1090
        %1186 = vmatprep.subr.bf16.mxu0 %v1085
        %1187 = vmatpush1.bf16.msra.mxu0 %v1084
        %1188 = vmatprep.subr.bf16.mxu0 %v1079
        %1189 = vmatpush1.bf16.msra.mxu0 %v1078
        %1190 = vmatprep.subr.bf16.mxu0 0
        %1191 = vmatpush2.bf16.msra.mxu0 0
        %1192 = vmatprep.subr.bf16.mxu0 0
        %1193 = vmatpush2.bf16.msra.mxu0 0
        %1194 = vmatprep.subr.bf16.mxu0 0
        %1195 = vmatpush2.bf16.msra.mxu0 0
        %1196 = vmatprep.subr.bf16.mxu0 0
        %1197 = vmatpush2.bf16.msra.mxu0 0
        %1198 = vmatprep.subr.bf16.mxu0 0
        %1199 = vmatpush2.bf16.msra.mxu0 0
        %1200 = vmatprep.subr.bf16.mxu0 0
        %1201 = vmatpush2.bf16.msra.mxu0 0
        %1202 = vmatprep.subr.bf16.mxu0 0
        %1203 = vmatpush2.bf16.msra.mxu0 0
        %1204 = vmatprep.subr.bf16.mxu0 0
        %1205 = vmatpush2.bf16.msra.mxu0 0
        %1206 = vmatprep.mubr.bf16.mxu0 0
        %1207 = vmatmul.mubr.bf16.gmra.mxu0 %v902
        %v1208 = vpop.f32.mrf.mxu0
        %v1209 = vadd.f32 %v907, %v1208
        %v1210 = vpop.f32.mrf.mxu0
        %v1211 = vadd.f32 %v911, %v1210
        %v1212 = vpop.f32.mrf.mxu0
        %v1213 = vpop.f32.mrf.mxu0
        %1214 = vdwg.mxu0
        %1215 = vmatprep.subr.bf16.mxu0 %v1123
        %1216 = vmatpush1.bf16.msra.mxu0 %v1122
        %1217 = vmatprep.subr.bf16.mxu0 %v1117
        %1218 = vmatpush1.bf16.msra.mxu0 %v1116
        %1219 = vmatprep.subr.bf16.mxu0 %v1111
        %1220 = vmatpush1.bf16.msra.mxu0 %v1110
        %1221 = vmatprep.subr.bf16.mxu0 %v1105
        %1222 = vmatpush1.bf16.msra.mxu0 %v1104
        %1223 = vmatprep.subr.bf16.mxu0 %v1099
        %1224 = vmatpush1.bf16.msra.mxu0 %v1098
        %1225 = vmatprep.subr.bf16.mxu0 %v1093
        %1226 = vmatpush1.bf16.msra.mxu0 %v1092
        %1227 = vmatprep.subr.bf16.mxu0 %v1087
        %1228 = vmatpush1.bf16.msra.mxu0 %v1086
        %1229 = vmatprep.subr.bf16.mxu0 %v1081
        %1230 = vmatpush1.bf16.msra.mxu0 %v1080
        %1231 = vmatprep.subr.bf16.mxu0 0
        %1232 = vmatpush2.bf16.msra.mxu0 0
        %1233 = vmatprep.subr.bf16.mxu0 0
        %1234 = vmatpush2.bf16.msra.mxu0 0
        %1235 = vmatprep.subr.bf16.mxu0 0
        %1236 = vmatpush2.bf16.msra.mxu0 0
        %1237 = vmatprep.subr.bf16.mxu0 0
        %1238 = vmatpush2.bf16.msra.mxu0 0
        %1239 = vmatprep.subr.bf16.mxu0 0
        %1240 = vmatpush2.bf16.msra.mxu0 0
        %1241 = vmatprep.subr.bf16.mxu0 0
        %1242 = vmatpush2.bf16.msra.mxu0 0
        %1243 = vmatprep.subr.bf16.mxu0 0
        %1244 = vmatpush2.bf16.msra.mxu0 0
        %1245 = vmatprep.subr.bf16.mxu0 0
        %1246 = vmatpush2.bf16.msra.mxu0 0
        %1247 = vmatprep.mubr.bf16.mxu0 0
        %1248 = vmatmul.mubr.bf16.gmra.mxu0 %v902
        %v1249 = vpop.f32.mrf.mxu0
        %v1250 = vadd.f32 %v915, %v1249
        %v1251 = vpop.f32.mrf.mxu0
        %v1252 = vadd.f32 %v919, %v1251
        %v1253 = vpop.f32.mrf.mxu0
        %v1254 = vpop.f32.mrf.mxu0
        %1255 = vdwg.mxu0
        %1256 = vmatprep.subr.bf16.mxu0 %v1125
        %1257 = vmatpush1.bf16.msra.mxu0 %v1124
        %1258 = vmatprep.subr.bf16.mxu0 %v1119
        %1259 = vmatpush1.bf16.msra.mxu0 %v1118
        %1260 = vmatprep.subr.bf16.mxu0 %v1113
        %1261 = vmatpush1.bf16.msra.mxu0 %v1112
        %1262 = vmatprep.subr.bf16.mxu0 %v1107
        %1263 = vmatpush1.bf16.msra.mxu0 %v1106
        %1264 = vmatprep.subr.bf16.mxu0 %v1101
        %1265 = vmatpush1.bf16.msra.mxu0 %v1100
        %1266 = vmatprep.subr.bf16.mxu0 %v1095
        %1267 = vmatpush1.bf16.msra.mxu0 %v1094
        %1268 = vmatprep.subr.bf16.mxu0 %v1089
        %1269 = vmatpush1.bf16.msra.mxu0 %v1088
        %1270 = vmatprep.subr.bf16.mxu0 %v1083
        %1271 = vmatpush1.bf16.msra.mxu0 %v1082
        %1272 = vmatprep.subr.bf16.mxu0 0
        %1273 = vmatpush2.bf16.msra.mxu0 0
        %1274 = vmatprep.subr.bf16.mxu0 0
        %1275 = vmatpush2.bf16.msra.mxu0 0
        %1276 = vmatprep.subr.bf16.mxu0 0
        %1277 = vmatpush2.bf16.msra.mxu0 0
        %1278 = vmatprep.subr.bf16.mxu0 0
        %1279 = vmatpush2.bf16.msra.mxu0 0
        %1280 = vmatprep.subr.bf16.mxu0 0
        %1281 = vmatpush2.bf16.msra.mxu0 0
        %1282 = vmatprep.subr.bf16.mxu0 0
        %1283 = vmatpush2.bf16.msra.mxu0 0
        %1284 = vmatprep.subr.bf16.mxu0 0
        %1285 = vmatpush2.bf16.msra.mxu0 0
        %1286 = vmatprep.subr.bf16.mxu0 0
        %1287 = vmatpush2.bf16.msra.mxu0 0
        %1288 = vmatprep.mubr.bf16.mxu0 0
        %1289 = vmatmul.mubr.bf16.gmra.mxu0 %v902
        %v1290 = vpop.f32.mrf.mxu0
        %v1291 = vadd.f32 %v923, %v1290
        %v1292 = vpop.f32.mrf.mxu0
        %v1293 = vadd.f32 %v927, %v1292
        %v1294 = vpop.f32.mrf.mxu0
        %v1295 = vpop.f32.mrf.mxu0
        %1296 = vdwg.mxu0
        %v1297 = vpack.c.bf16 %v1209, %v1209
        %v1298 = vpack.c.bf16 %v1250, %v1250
        %1299 = vmatprep.subr.bf16.mxu0 0
        %1300 = vmatpush1.bf16.xpose.msra.mxu0 0
        %1301 = vmatprep.subr.bf16.mxu0 0
        %1302 = vmatpush1.bf16.xpose.msra.mxu0 0
        %1303 = vmatprep.subr.bf16.mxu0 0
        %1304 = vmatpush1.bf16.xpose.msra.mxu0 0
        %1305 = vmatprep.subr.bf16.mxu0 0
        %1306 = vmatpush1.bf16.xpose.msra.mxu0 0
        %1307 = vmatprep.subr.bf16.mxu0 0
        %1308 = vmatpush1.bf16.xpose.msra.mxu0 0
        %1309 = vmatprep.subr.bf16.mxu0 0
        %1310 = vmatpush1.bf16.xpose.msra.mxu0 0
        %1311 = vmatprep.subr.bf16.mxu0 0
        %1312 = vmatpush1.bf16.xpose.msra.mxu0 0
        %1313 = vmatprep.subr.bf16.mxu0 0
        %1314 = vmatpush1.bf16.xpose.msra.mxu0 %v1298
        %1315 = vmatprep.subr.bf16.mxu0 0
        %1316 = vmatpush2.bf16.xpose.msra.mxu0 0
        %1317 = vmatprep.subr.bf16.mxu0 0
        %1318 = vmatpush2.bf16.xpose.msra.mxu0 0
        %1319 = vmatprep.subr.bf16.mxu0 0
        %1320 = vmatpush2.bf16.xpose.msra.mxu0 0
        %1321 = vmatprep.subr.bf16.mxu0 0
        %1322 = vmatpush2.bf16.xpose.msra.mxu0 0
        %1323 = vmatprep.subr.bf16.mxu0 0
        %1324 = vmatpush2.bf16.xpose.msra.mxu0 0
        %1325 = vmatprep.subr.bf16.mxu0 0
        %1326 = vmatpush2.bf16.xpose.msra.mxu0 0
        %1327 = vmatprep.subr.bf16.mxu0 0
        %1328 = vmatpush2.bf16.xpose.msra.mxu0 0
        %1329 = vmatprep.subr.bf16.mxu0 0
        %1330 = vmatpush2.bf16.xpose.msra.mxu0 0
        %1331 = vmatprep.mubr.bf16.mxu0 0
        %1332 = vmatmul.mubr.bf16.gmra.mxu0 %v1297
        %v1333 = vpop.f32.mrf.mxu0
        %v1334 = vadd.f32 %v851, %v1333
        %v1335 = vpop.f32.mrf.mxu0
        %v1336 = vpop.f32.mrf.mxu0
        %v1337 = vpop.f32.mrf.mxu0
        %1338 = vdwg.mxu0
        %vm1339 = vcmask 64512
        %v1340 = vsel %vm1339, %v1334, -inf
        %1341 = vmax.xlane.f32.xlu0 %v1340
        %v1342 = vpop.xlane.xlu0 %1341
        %v1343 = vsub.f32 %v1334, %v1342
        %v1344 = vmul.f32 %v1343, 1.442695
        %v1345 = vpow.pop %v1344
        %v1346 = vsel %vm1339, %v1345, 0.0
        %1347 = vadd.xlane.f32.xlu0 %v1346
        %v1348 = vpop.xlane.xlu0 %1347
        %v1349 = vrcp.pop %v1348
        %v1350 = vmul.f32 %v1345, %v1349
        %v1351 = vpack.c.bf16 %v1350, %v1350
        %v1352 = vpack.c.bf16 %v1291, %v1291
        %v1354 = vsel %vm1339, %v1351, 0
        %vm1356 = vcmask 1043456
        %v1358 = vsel %vm1356, %v1352, 0
        %1360 = vmatprep.subr.bf16.mxu0 0
        %1361 = vmatpush1.bf16.msra.mxu0 0
        %1362 = vmatprep.subr.bf16.mxu0 0
        %1363 = vmatpush1.bf16.msra.mxu0 0
        %1364 = vmatprep.subr.bf16.mxu0 0
        %1365 = vmatpush1.bf16.msra.mxu0 0
        %1366 = vmatprep.subr.bf16.mxu0 0
        %1367 = vmatpush1.bf16.msra.mxu0 0
        %1368 = vmatprep.subr.bf16.mxu0 0
        %1369 = vmatpush1.bf16.msra.mxu0 0
        %1370 = vmatprep.subr.bf16.mxu0 0
        %1371 = vmatpush1.bf16.msra.mxu0 0
        %1372 = vmatprep.subr.bf16.mxu0 0
        %1373 = vmatpush1.bf16.msra.mxu0 0
        %1374 = vmatprep.subr.bf16.mxu0 0
        %1375 = vmatpush1.bf16.msra.mxu0 %v1358
        %1376 = vmatprep.subr.bf16.mxu0 0
        %1377 = vmatpush2.bf16.msra.mxu0 0
        %1378 = vmatprep.subr.bf16.mxu0 0
        %1379 = vmatpush2.bf16.msra.mxu0 0
        %1380 = vmatprep.subr.bf16.mxu0 0
        %1381 = vmatpush2.bf16.msra.mxu0 0
        %1382 = vmatprep.subr.bf16.mxu0 0
        %1383 = vmatpush2.bf16.msra.mxu0 0
        %1384 = vmatprep.subr.bf16.mxu0 0
        %1385 = vmatpush2.bf16.msra.mxu0 0
        %1386 = vmatprep.subr.bf16.mxu0 0
        %1387 = vmatpush2.bf16.msra.mxu0 0
        %1388 = vmatprep.subr.bf16.mxu0 0
        %1389 = vmatpush2.bf16.msra.mxu0 0
        %1390 = vmatprep.subr.bf16.mxu0 0
        %1391 = vmatpush2.bf16.msra.mxu0 0
        %1392 = vmatprep.mubr.bf16.mxu0 0
        %1393 = vmatmul.mubr.bf16.gmra.mxu0 %v1354
        %v1394 = vpop.f32.mrf.mxu0
        %v1395 = vadd.f32 0.0, %v1394
        %v1396 = vpop.f32.mrf.mxu0
        %v1397 = vpop.f32.mrf.mxu0
        %v1398 = vpop.f32.mrf.mxu0
        %1399 = vdwg.mxu0
        %v1400 = vpack.c.bf16 %v1211, %v1211
        %v1401 = vpack.c.bf16 %v1252, %v1252
        %1402 = vmatprep.subr.bf16.mxu0 0
        %1403 = vmatpush1.bf16.xpose.msra.mxu0 0
        %1404 = vmatprep.subr.bf16.mxu0 0
        %1405 = vmatpush1.bf16.xpose.msra.mxu0 0
        %1406 = vmatprep.subr.bf16.mxu0 0
        %1407 = vmatpush1.bf16.xpose.msra.mxu0 0
        %1408 = vmatprep.subr.bf16.mxu0 0
        %1409 = vmatpush1.bf16.xpose.msra.mxu0 0
        %1410 = vmatprep.subr.bf16.mxu0 0
        %1411 = vmatpush1.bf16.xpose.msra.mxu0 0
        %1412 = vmatprep.subr.bf16.mxu0 0
        %1413 = vmatpush1.bf16.xpose.msra.mxu0 0
        %1414 = vmatprep.subr.bf16.mxu0 0
        %1415 = vmatpush1.bf16.xpose.msra.mxu0 0
        %1416 = vmatprep.subr.bf16.mxu0 0
        %1417 = vmatpush1.bf16.xpose.msra.mxu0 %v1401
        %1418 = vmatprep.subr.bf16.mxu0 0
        %1419 = vmatpush2.bf16.xpose.msra.mxu0 0
        %1420 = vmatprep.subr.bf16.mxu0 0
        %1421 = vmatpush2.bf16.xpose.msra.mxu0 0
        %1422 = vmatprep.subr.bf16.mxu0 0
        %1423 = vmatpush2.bf16.xpose.msra.mxu0 0
        %1424 = vmatprep.subr.bf16.mxu0 0
        %1425 = vmatpush2.bf16.xpose.msra.mxu0 0
        %1426 = vmatprep.subr.bf16.mxu0 0
        %1427 = vmatpush2.bf16.xpose.msra.mxu0 0
        %1428 = vmatprep.subr.bf16.mxu0 0
        %1429 = vmatpush2.bf16.xpose.msra.mxu0 0
        %1430 = vmatprep.subr.bf16.mxu0 0
        %1431 = vmatpush2.bf16.xpose.msra.mxu0 0
        %1432 = vmatprep.subr.bf16.mxu0 0
        %1433 = vmatpush2.bf16.xpose.msra.mxu0 0
        %1434 = vmatprep.mubr.bf16.mxu0 0
        %1435 = vmatmul.mubr.bf16.gmra.mxu0 %v1400
        %v1436 = vpop.f32.mrf.mxu0
        %v1437 = vadd.f32 %v851, %v1436
        %v1438 = vpop.f32.mrf.mxu0
        %v1439 = vpop.f32.mrf.mxu0
        %v1440 = vpop.f32.mrf.mxu0
        %1441 = vdwg.mxu0
        %v1442 = vsel %vm1339, %v1437, -inf
        %1443 = vmax.xlane.f32.xlu0 %v1442
        %v1444 = vpop.xlane.xlu0 %1443
        %v1445 = vsub.f32 %v1437, %v1444
        %v1446 = vmul.f32 %v1445, 1.442695
        %v1447 = vpow.pop %v1446
        %v1448 = vsel %vm1339, %v1447, 0.0
        %1449 = vadd.xlane.f32.xlu0 %v1448
        %v1450 = vpop.xlane.xlu0 %1449
        %v1451 = vrcp.pop %v1450
        %v1452 = vmul.f32 %v1447, %v1451
        %v1453 = vpack.c.bf16 %v1452, %v1452
        %v1454 = vpack.c.bf16 %v1293, %v1293
        %v1456 = vsel %vm1339, %v1453, 0
        %v1459 = vsel %vm1356, %v1454, 0
        %1461 = vmatprep.subr.bf16.mxu0 0
        %1462 = vmatpush1.bf16.msra.mxu0 0
        %1463 = vmatprep.subr.bf16.mxu0 0
        %1464 = vmatpush1.bf16.msra.mxu0 0
        %1465 = vmatprep.subr.bf16.mxu0 0
        %1466 = vmatpush1.bf16.msra.mxu0 0
        %1467 = vmatprep.subr.bf16.mxu0 0
        %1468 = vmatpush1.bf16.msra.mxu0 0
        %1469 = vmatprep.subr.bf16.mxu0 0
        %1470 = vmatpush1.bf16.msra.mxu0 0
        %1471 = vmatprep.subr.bf16.mxu0 0
        %1472 = vmatpush1.bf16.msra.mxu0 0
        %1473 = vmatprep.subr.bf16.mxu0 0
        %1474 = vmatpush1.bf16.msra.mxu0 0
        %1475 = vmatprep.subr.bf16.mxu0 0
        %1476 = vmatpush1.bf16.msra.mxu0 %v1459
        %1477 = vmatprep.subr.bf16.mxu0 0
        %1478 = vmatpush2.bf16.msra.mxu0 0
        %1479 = vmatprep.subr.bf16.mxu0 0
        %1480 = vmatpush2.bf16.msra.mxu0 0
        %1481 = vmatprep.subr.bf16.mxu0 0
        %1482 = vmatpush2.bf16.msra.mxu0 0
        %1483 = vmatprep.subr.bf16.mxu0 0
        %1484 = vmatpush2.bf16.msra.mxu0 0
        %1485 = vmatprep.subr.bf16.mxu0 0
        %1486 = vmatpush2.bf16.msra.mxu0 0
        %1487 = vmatprep.subr.bf16.mxu0 0
        %1488 = vmatpush2.bf16.msra.mxu0 0
        %1489 = vmatprep.subr.bf16.mxu0 0
        %1490 = vmatpush2.bf16.msra.mxu0 0
        %1491 = vmatprep.subr.bf16.mxu0 0
        %1492 = vmatpush2.bf16.msra.mxu0 0
        %1493 = vmatprep.mubr.bf16.mxu0 0
        %1494 = vmatmul.mubr.bf16.gmra.mxu0 %v1456
        %v1495 = vpop.f32.mrf.mxu0
        %v1496 = vadd.f32 0.0, %v1495
        %v1497 = vpop.f32.mrf.mxu0
        %v1498 = vpop.f32.mrf.mxu0
        %v1499 = vpop.f32.mrf.mxu0
        %1500 = vdwg.mxu0
        %v1501 = vpack.c.bf16 %v1395, %v1395
        %v1502 = vpack.c.bf16 %v1496, %v1496
        %v1503 = vld [vmem:[%s826] sm:$0xf]
        %v1504 = vld [vmem:[%s826 + $0x4] sm:$0xf]
        %v1505 = vld [vmem:[%s826 + $0x8] sm:$0xf]
        %v1506 = vld [vmem:[%s826 + $0xc] sm:$0xf]
        %v1507 = vld [vmem:[%s826 + $0x10] sm:$0xf]
        %v1508 = vld [vmem:[%s826 + $0x14] sm:$0xf]
        %v1509 = vld [vmem:[%s826 + $0x18] sm:$0xf]
        %v1510 = vld [vmem:[%s826 + $0x1c] sm:$0xf]
        %v1511 = vld [vmem:[%s826 + $0x20] sm:$0xf]
        %v1512 = vld [vmem:[%s826 + $0x24] sm:$0xf]
        %v1513 = vld [vmem:[%s826 + $0x28] sm:$0xf]
        %v1514 = vld [vmem:[%s826 + $0x2c] sm:$0xf]
        %v1515 = vld [vmem:[%s826 + $0x30] sm:$0xf]
        %v1516 = vld [vmem:[%s826 + $0x34] sm:$0xf]
        %v1517 = vld [vmem:[%s826 + $0x38] sm:$0xf]
        %v1518 = vld [vmem:[%s826 + $0x3c] sm:$0xf]
        %v1519 = vld [vmem:[%s826 + $0x40] sm:$0xf]
        %v1520 = vld [vmem:[%s826 + $0x44] sm:$0xf]
        %v1521 = vld [vmem:[%s826 + $0x48] sm:$0xf]
        %v1522 = vld [vmem:[%s826 + $0x4c] sm:$0xf]
        %v1523 = vld [vmem:[%s826 + $0x50] sm:$0xf]
        %v1524 = vld [vmem:[%s826 + $0x54] sm:$0xf]
        %v1525 = vld [vmem:[%s826 + $0x58] sm:$0xf]
        %v1526 = vld [vmem:[%s826 + $0x5c] sm:$0xf]
        %v1527 = vld [vmem:[%s826 + $0x60] sm:$0xf]
        %v1528 = vld [vmem:[%s826 + $0x64] sm:$0xf]
        %v1529 = vld [vmem:[%s826 + $0x68] sm:$0xf]
        %v1530 = vld [vmem:[%s826 + $0x6c] sm:$0xf]
        %v1531 = vld [vmem:[%s826 + $0x70] sm:$0xf]
        %v1532 = vld [vmem:[%s826 + $0x74] sm:$0xf]
        %v1533 = vld [vmem:[%s826 + $0x78] sm:$0xf]
        %v1534 = vld [vmem:[%s826 + $0x7c] sm:$0xf]
        %v1535 = vld [vmem:[%s829] sm:$0x1]
        %v1537 = vlaneseq
        %v1538 = vshrl.u32 %v1537, 7
        %v1539 = vsub.s32 0, %v1538
        %v1540 = vrot.slane %v1535, %v1539
        %v1574 = vunpack.c.l.b16 %v1503
        %v1575 = vunpack.c.l.b16 %v1504
        %v1576 = vunpack.c.l.b16 %v1505
        %v1577 = vunpack.c.l.b16 %v1506
        %v1578 = vunpack.c.l.b16 %v1507
        %v1579 = vunpack.c.l.b16 %v1508
        %v1580 = vunpack.c.l.b16 %v1509
        %v1581 = vunpack.c.l.b16 %v1510
        %v1582 = vunpack.c.l.b16 %v1511
        %v1583 = vunpack.c.l.b16 %v1512
        %v1584 = vunpack.c.l.b16 %v1513
        %v1585 = vunpack.c.l.b16 %v1514
        %v1586 = vunpack.c.l.b16 %v1515
        %v1587 = vunpack.c.l.b16 %v1516
        %v1588 = vunpack.c.l.b16 %v1517
        %v1589 = vunpack.c.l.b16 %v1518
        %v1590 = vunpack.c.l.b16 %v1519
        %v1591 = vunpack.c.l.b16 %v1520
        %v1592 = vunpack.c.l.b16 %v1521
        %v1593 = vunpack.c.l.b16 %v1522
        %v1594 = vunpack.c.l.b16 %v1523
        %v1595 = vunpack.c.l.b16 %v1524
        %v1596 = vunpack.c.l.b16 %v1525
        %v1597 = vunpack.c.l.b16 %v1526
        %v1598 = vunpack.c.l.b16 %v1527
        %v1599 = vunpack.c.l.b16 %v1528
        %v1600 = vunpack.c.l.b16 %v1529
        %v1601 = vunpack.c.l.b16 %v1530
        %v1602 = vunpack.c.l.b16 %v1531
        %v1603 = vunpack.c.l.b16 %v1532
        %v1604 = vunpack.c.l.b16 %v1533
        %v1605 = vunpack.c.l.b16 %v1534
        %v1606 = vpack.c.b16 %v1575, %v1574
        %v1607 = vpack.c.b16 %v1577, %v1576
        %v1608 = vpack.c.b16 %v1579, %v1578
        %v1609 = vpack.c.b16 %v1581, %v1580
        %v1610 = vpack.c.b16 %v1583, %v1582
        %v1611 = vpack.c.b16 %v1585, %v1584
        %v1612 = vpack.c.b16 %v1587, %v1586
        %v1613 = vpack.c.b16 %v1589, %v1588
        %v1614 = vpack.c.b16 %v1591, %v1590
        %v1615 = vpack.c.b16 %v1593, %v1592
        %v1616 = vpack.c.b16 %v1595, %v1594
        %v1617 = vpack.c.b16 %v1597, %v1596
        %v1618 = vpack.c.b16 %v1599, %v1598
        %v1619 = vpack.c.b16 %v1601, %v1600
        %v1620 = vpack.c.b16 %v1603, %v1602
        %v1621 = vpack.c.b16 %v1605, %v1604
        %1638 = vmatprep.subr.bf16.mxu0 0
        %1639 = vmatpush1.bf16.msra.mxu0 %v1613
        %1640 = vmatprep.subr.bf16.mxu0 0
        %1641 = vmatpush1.bf16.msra.mxu0 %v1612
        %1642 = vmatprep.subr.bf16.mxu0 0
        %1643 = vmatpush1.bf16.msra.mxu0 %v1611
        %1644 = vmatprep.subr.bf16.mxu0 0
        %1645 = vmatpush1.bf16.msra.mxu0 %v1610
        %1646 = vmatprep.subr.bf16.mxu0 0
        %1647 = vmatpush1.bf16.msra.mxu0 %v1609
        %1648 = vmatprep.subr.bf16.mxu0 0
        %1649 = vmatpush1.bf16.msra.mxu0 %v1608
        %1650 = vmatprep.subr.bf16.mxu0 0
        %1651 = vmatpush1.bf16.msra.mxu0 %v1607
        %1652 = vmatprep.subr.bf16.mxu0 0
        %1653 = vmatpush1.bf16.msra.mxu0 %v1606
        %1654 = vmatprep.subr.bf16.mxu0 0
        %1655 = vmatpush2.bf16.msra.mxu0 %v1621
        %1656 = vmatprep.subr.bf16.mxu0 0
        %1657 = vmatpush2.bf16.msra.mxu0 %v1620
        %1658 = vmatprep.subr.bf16.mxu0 0
        %1659 = vmatpush2.bf16.msra.mxu0 %v1619
        %1660 = vmatprep.subr.bf16.mxu0 0
        %1661 = vmatpush2.bf16.msra.mxu0 %v1618
        %1662 = vmatprep.subr.bf16.mxu0 0
        %1663 = vmatpush2.bf16.msra.mxu0 %v1617
        %1664 = vmatprep.subr.bf16.mxu0 0
        %1665 = vmatpush2.bf16.msra.mxu0 %v1616
        %1666 = vmatprep.subr.bf16.mxu0 0
        %1667 = vmatpush2.bf16.msra.mxu0 %v1615
        %1668 = vmatprep.subr.bf16.mxu0 0
        %1669 = vmatpush2.bf16.msra.mxu0 %v1614
        %1670 = vmatprep.mubr.bf16.mxu0 %v1502
        %1671 = vmatmul.mubr.bf16.gmra.mxu0 %v1501
        %v1672 = vpop.f32.mrf.mxu0
        %v1673 = vadd.f32 %v1540, %v1672
        %v1674 = vpop.f32.mrf.mxu0
        %v1675 = vpop.f32.mrf.mxu0
        %v1676 = vpop.f32.mrf.mxu0
        %1677 = vdwg.mxu0
        %v1678 = vadd.f32 %v845, %v1673
        %1679 = vadd.xlane.f32.xlu0 %v1678
        %v1680 = vpop.xlane.xlu0 %1679
        %v1681 = vrcp.pop 128.0
        %v1682 = vmul.f32 %v1680, %v1681
        %v1683 = vsub.f32 %v1678, %v1682
        %v1684 = vmul.f32 %v1683, %v1683
        %1685 = vadd.xlane.f32.xlu0 %v1684
        %v1686 = vpop.xlane.xlu0 %1685
        %v1687 = vmul.f32 %v1686, %v1681
        %v1688 = vadd.f32 %v1687, 1e-05
        %v1689 = vrsqrt.pop %v1688
        %v1690 = vmul.f32 %v1683, %v1689
        %v1691 = vld [vmem:[%s664] sm:$0x1]
        %v1693 = vlaneseq
        %v1694 = vshrl.u32 %v1693, 7
        %v1695 = vsub.s32 0, %v1694
        %v1696 = vrot.slane %v1691, %v1695
        %v1698 = vmul.f32 %v1690, %v1696
        %v1699 = vld [vmem:[%s672] sm:$0x1]
        %v1701 = vlaneseq
        %v1702 = vshrl.u32 %v1701, 7
        %v1703 = vsub.s32 0, %v1702
        %v1704 = vrot.slane %v1699, %v1703
        %v1706 = vadd.f32 %v1698, %v1704
        %v1707 = vld [vmem:[%s697] sm:$0xff]
        %v1708 = vld [vmem:[%s697 + $0x8] sm:$0xff]
        %v1709 = vld [vmem:[%s697 + $0x10] sm:$0xff]
        %v1710 = vld [vmem:[%s697 + $0x18] sm:$0xff]
        %v1711 = vld [vmem:[%s697 + $0x20] sm:$0xff]
        %v1712 = vld [vmem:[%s697 + $0x28] sm:$0xff]
        %v1713 = vld [vmem:[%s697 + $0x30] sm:$0xff]
        %v1714 = vld [vmem:[%s697 + $0x38] sm:$0xff]
        %v1715 = vld [vmem:[%s697 + $0x40] sm:$0xff]
        %v1716 = vld [vmem:[%s697 + $0x48] sm:$0xff]
        %v1717 = vld [vmem:[%s697 + $0x50] sm:$0xff]
        %v1718 = vld [vmem:[%s697 + $0x58] sm:$0xff]
        %v1719 = vld [vmem:[%s697 + $0x60] sm:$0xff]
        %v1720 = vld [vmem:[%s697 + $0x68] sm:$0xff]
        %v1721 = vld [vmem:[%s697 + $0x70] sm:$0xff]
        %v1722 = vld [vmem:[%s697 + $0x78] sm:$0xff]
        %v1723 = vld [vmem:[%s833] sm:$0x3]
        %v1724 = vpack.c.bf16 %v1706, %v1706
        %v1726 = vlaneseq
        %v1727 = vshrl.u32 %v1726, 7
        %v1728 = vsub.s32 0, %v1727
        %v1729 = vrot.slane %v1723, %v1728
        %v1730 = vlaneseq
        %v1731 = vshrl.u32 %v1730, 7
        %v1732 = vsub.s32 1, %v1731
        %v1733 = vrot.slane %v1723, %v1732
        %v1752 = vunpack.c.l.b16 %v1707
        %v1753 = vunpack.c.h.b16 %v1707
        %v1754 = vunpack.c.l.b16 %v1708
        %v1755 = vunpack.c.h.b16 %v1708
        %v1756 = vunpack.c.l.b16 %v1709
        %v1757 = vunpack.c.h.b16 %v1709
        %v1758 = vunpack.c.l.b16 %v1710
        %v1759 = vunpack.c.h.b16 %v1710
        %v1760 = vunpack.c.l.b16 %v1711
        %v1761 = vunpack.c.h.b16 %v1711
        %v1762 = vunpack.c.l.b16 %v1712
        %v1763 = vunpack.c.h.b16 %v1712
        %v1764 = vunpack.c.l.b16 %v1713
        %v1765 = vunpack.c.h.b16 %v1713
        %v1766 = vunpack.c.l.b16 %v1714
        %v1767 = vunpack.c.h.b16 %v1714
        %v1768 = vunpack.c.l.b16 %v1715
        %v1769 = vunpack.c.h.b16 %v1715
        %v1770 = vunpack.c.l.b16 %v1716
        %v1771 = vunpack.c.h.b16 %v1716
        %v1772 = vunpack.c.l.b16 %v1717
        %v1773 = vunpack.c.h.b16 %v1717
        %v1774 = vunpack.c.l.b16 %v1718
        %v1775 = vunpack.c.h.b16 %v1718
        %v1776 = vunpack.c.l.b16 %v1719
        %v1777 = vunpack.c.h.b16 %v1719
        %v1778 = vunpack.c.l.b16 %v1720
        %v1779 = vunpack.c.h.b16 %v1720
        %v1780 = vunpack.c.l.b16 %v1721
        %v1781 = vunpack.c.h.b16 %v1721
        %v1782 = vunpack.c.l.b16 %v1722
        %v1783 = vunpack.c.h.b16 %v1722
        %v1784 = vpack.c.b16 %v1754, %v1752
        %v1785 = vpack.c.b16 %v1755, %v1753
        %v1786 = vpack.c.b16 %v1758, %v1756
        %v1787 = vpack.c.b16 %v1759, %v1757
        %v1788 = vpack.c.b16 %v1762, %v1760
        %v1789 = vpack.c.b16 %v1763, %v1761
        %v1790 = vpack.c.b16 %v1766, %v1764
        %v1791 = vpack.c.b16 %v1767, %v1765
        %v1792 = vpack.c.b16 %v1770, %v1768
        %v1793 = vpack.c.b16 %v1771, %v1769
        %v1794 = vpack.c.b16 %v1774, %v1772
        %v1795 = vpack.c.b16 %v1775, %v1773
        %v1796 = vpack.c.b16 %v1778, %v1776
        %v1797 = vpack.c.b16 %v1779, %v1777
        %v1798 = vpack.c.b16 %v1782, %v1780
        %v1799 = vpack.c.b16 %v1783, %v1781
        %1816 = vmatprep.subr.bf16.mxu0 %v1799
        %1817 = vmatpush1.bf16.msra.mxu0 %v1798
        %1818 = vmatprep.subr.bf16.mxu0 %v1797
        %1819 = vmatpush1.bf16.msra.mxu0 %v1796
        %1820 = vmatprep.subr.bf16.mxu0 %v1795
        %1821 = vmatpush1.bf16.msra.mxu0 %v1794
        %1822 = vmatprep.subr.bf16.mxu0 %v1793
        %1823 = vmatpush1.bf16.msra.mxu0 %v1792
        %1824 = vmatprep.subr.bf16.mxu0 %v1791
        %1825 = vmatpush1.bf16.msra.mxu0 %v1790
        %1826 = vmatprep.subr.bf16.mxu0 %v1789
        %1827 = vmatpush1.bf16.msra.mxu0 %v1788
        %1828 = vmatprep.subr.bf16.mxu0 %v1787
        %1829 = vmatpush1.bf16.msra.mxu0 %v1786
        %1830 = vmatprep.subr.bf16.mxu0 %v1785
        %1831 = vmatpush1.bf16.msra.mxu0 %v1784
        %1832 = vmatprep.subr.bf16.mxu0 0
        %1833 = vmatpush2.bf16.msra.mxu0 0
        %1834 = vmatprep.subr.bf16.mxu0 0
        %1835 = vmatpush2.bf16.msra.mxu0 0
        %1836 = vmatprep.subr.bf16.mxu0 0
        %1837 = vmatpush2.bf16.msra.mxu0 0
        %1838 = vmatprep.subr.bf16.mxu0 0
        %1839 = vmatpush2.bf16.msra.mxu0 0
        %1840 = vmatprep.subr.bf16.mxu0 0
        %1841 = vmatpush2.bf16.msra.mxu0 0
        %1842 = vmatprep.subr.bf16.mxu0 0
        %1843 = vmatpush2.bf16.msra.mxu0 0
        %1844 = vmatprep.subr.bf16.mxu0 0
        %1845 = vmatpush2.bf16.msra.mxu0 0
        %1846 = vmatprep.subr.bf16.mxu0 0
        %1847 = vmatpush2.bf16.msra.mxu0 0
        %1848 = vmatprep.mubr.bf16.mxu0 0
        %1849 = vmatmul.mubr.bf16.gmra.mxu0 %v1724
        %v1850 = vpop.f32.mrf.mxu0
        %v1851 = vadd.f32 %v1729, %v1850
        %v1852 = vpop.f32.mrf.mxu0
        %v1853 = vadd.f32 %v1733, %v1852
        %v1854 = vpop.f32.mrf.mxu0
        %v1855 = vpop.f32.mrf.mxu0
        %1856 = vdwg.mxu0
        %v1857 = vmul.f32 %v1851, %v1851
        %v1858 = vmul.f32 %v1853, %v1853
        %v1859 = vmul.f32 %v1851, %v1857
        %v1860 = vmul.f32 %v1853, %v1858
        %v1861 = vmul.f32 %v1859, 0.044715
        %v1862 = vmul.f32 %v1860, 0.044715
        %v1863 = vadd.f32 %v1851, %v1861
        %v1864 = vadd.f32 %v1853, %v1862
        %v1865 = vmul.f32 %v1863, 0.7978846
        %v1866 = vmul.f32 %v1864, 0.7978846
        %v1867 = vtanh.pop %v1865
        %v1868 = vtanh.pop %v1866
        %v1869 = vadd.f32 %v1867, 1.0
        %v1870 = vadd.f32 %v1868, 1.0
        %v1871 = vmul.f32 %v1869, 0.5
        %v1872 = vmul.f32 %v1870, 0.5
        %v1873 = vmul.f32 %v1851, %v1871
        %v1874 = vmul.f32 %v1853, %v1872
        %v1875 = vld [vmem:[%s706] sm:$0xf]
        %v1876 = vld [vmem:[%s706 + $0x4] sm:$0xf]
        %v1877 = vld [vmem:[%s706 + $0x8] sm:$0xf]
        %v1878 = vld [vmem:[%s706 + $0xc] sm:$0xf]
        %v1879 = vld [vmem:[%s706 + $0x10] sm:$0xf]
        %v1880 = vld [vmem:[%s706 + $0x14] sm:$0xf]
        %v1881 = vld [vmem:[%s706 + $0x18] sm:$0xf]
        %v1882 = vld [vmem:[%s706 + $0x1c] sm:$0xf]
        %v1883 = vld [vmem:[%s706 + $0x20] sm:$0xf]
        %v1884 = vld [vmem:[%s706 + $0x24] sm:$0xf]
        %v1885 = vld [vmem:[%s706 + $0x28] sm:$0xf]
        %v1886 = vld [vmem:[%s706 + $0x2c] sm:$0xf]
        %v1887 = vld [vmem:[%s706 + $0x30] sm:$0xf]
        %v1888 = vld [vmem:[%s706 + $0x34] sm:$0xf]
        %v1889 = vld [vmem:[%s706 + $0x38] sm:$0xf]
        %v1890 = vld [vmem:[%s706 + $0x3c] sm:$0xf]
        %v1891 = vld [vmem:[%s706 + $0x40] sm:$0xf]
        %v1892 = vld [vmem:[%s706 + $0x44] sm:$0xf]
        %v1893 = vld [vmem:[%s706 + $0x48] sm:$0xf]
        %v1894 = vld [vmem:[%s706 + $0x4c] sm:$0xf]
        %v1895 = vld [vmem:[%s706 + $0x50] sm:$0xf]
        %v1896 = vld [vmem:[%s706 + $0x54] sm:$0xf]
        %v1897 = vld [vmem:[%s706 + $0x58] sm:$0xf]
        %v1898 = vld [vmem:[%s706 + $0x5c] sm:$0xf]
        %v1899 = vld [vmem:[%s706 + $0x60] sm:$0xf]
        %v1900 = vld [vmem:[%s706 + $0x64] sm:$0xf]
        %v1901 = vld [vmem:[%s706 + $0x68] sm:$0xf]
        %v1902 = vld [vmem:[%s706 + $0x6c] sm:$0xf]
        %v1903 = vld [vmem:[%s706 + $0x70] sm:$0xf]
        %v1904 = vld [vmem:[%s706 + $0x74] sm:$0xf]
        %v1905 = vld [vmem:[%s706 + $0x78] sm:$0xf]
        %v1906 = vld [vmem:[%s706 + $0x7c] sm:$0xf]
        %v1907 = vld [vmem:[%s714] sm:$0x1]
        %v1908 = vpack.c.bf16 %v1873, %v1873
        %v1909 = vpack.c.bf16 %v1874, %v1874
        %v1911 = vlaneseq
        %v1912 = vshrl.u32 %v1911, 7
        %v1913 = vsub.s32 0, %v1912
        %v1914 = vrot.slane %v1907, %v1913
        %v1948 = vunpack.c.l.b16 %v1875
        %v1949 = vunpack.c.l.b16 %v1876
        %v1950 = vunpack.c.l.b16 %v1877
        %v1951 = vunpack.c.l.b16 %v1878
        %v1952 = vunpack.c.l.b16 %v1879
        %v1953 = vunpack.c.l.b16 %v1880
        %v1954 = vunpack.c.l.b16 %v1881
        %v1955 = vunpack.c.l.b16 %v1882
        %v1956 = vunpack.c.l.b16 %v1883
        %v1957 = vunpack.c.l.b16 %v1884
        %v1958 = vunpack.c.l.b16 %v1885
        %v1959 = vunpack.c.l.b16 %v1886
        %v1960 = vunpack.c.l.b16 %v1887
        %v1961 = vunpack.c.l.b16 %v1888
        %v1962 = vunpack.c.l.b16 %v1889
        %v1963 = vunpack.c.l.b16 %v1890
        %v1964 = vunpack.c.l.b16 %v1891
        %v1965 = vunpack.c.l.b16 %v1892
        %v1966 = vunpack.c.l.b16 %v1893
        %v1967 = vunpack.c.l.b16 %v1894
        %v1968 = vunpack.c.l.b16 %v1895
        %v1969 = vunpack.c.l.b16 %v1896
        %v1970 = vunpack.c.l.b16 %v1897
        %v1971 = vunpack.c.l.b16 %v1898
        %v1972 = vunpack.c.l.b16 %v1899
        %v1973 = vunpack.c.l.b16 %v1900
        %v1974 = vunpack.c.l.b16 %v1901
        %v1975 = vunpack.c.l.b16 %v1902
        %v1976 = vunpack.c.l.b16 %v1903
        %v1977 = vunpack.c.l.b16 %v1904
        %v1978 = vunpack.c.l.b16 %v1905
        %v1979 = vunpack.c.l.b16 %v1906
        %v1980 = vpack.c.b16 %v1949, %v1948
        %v1981 = vpack.c.b16 %v1951, %v1950
        %v1982 = vpack.c.b16 %v1953, %v1952
        %v1983 = vpack.c.b16 %v1955, %v1954
        %v1984 = vpack.c.b16 %v1957, %v1956
        %v1985 = vpack.c.b16 %v1959, %v1958
        %v1986 = vpack.c.b16 %v1961, %v1960
        %v1987 = vpack.c.b16 %v1963, %v1962
        %v1988 = vpack.c.b16 %v1965, %v1964
        %v1989 = vpack.c.b16 %v1967, %v1966
        %v1990 = vpack.c.b16 %v1969, %v1968
        %v1991 = vpack.c.b16 %v1971, %v1970
        %v1992 = vpack.c.b16 %v1973, %v1972
        %v1993 = vpack.c.b16 %v1975, %v1974
        %v1994 = vpack.c.b16 %v1977, %v1976
        %v1995 = vpack.c.b16 %v1979, %v1978
        %2012 = vmatprep.subr.bf16.mxu0 0
        %2013 = vmatpush1.bf16.msra.mxu0 %v1987
        %2014 = vmatprep.subr.bf16.mxu0 0
        %2015 = vmatpush1.bf16.msra.mxu0 %v1986
        %2016 = vmatprep.subr.bf16.mxu0 0
        %2017 = vmatpush1.bf16.msra.mxu0 %v1985
        %2018 = vmatprep.subr.bf16.mxu0 0
        %2019 = vmatpush1.bf16.msra.mxu0 %v1984
        %2020 = vmatprep.subr.bf16.mxu0 0
        %2021 = vmatpush1.bf16.msra.mxu0 %v1983
        %2022 = vmatprep.subr.bf16.mxu0 0
        %2023 = vmatpush1.bf16.msra.mxu0 %v1982
        %2024 = vmatprep.subr.bf16.mxu0 0
        %2025 = vmatpush1.bf16.msra.mxu0 %v1981
        %2026 = vmatprep.subr.bf16.mxu0 0
        %2027 = vmatpush1.bf16.msra.mxu0 %v1980
        %2028 = vmatprep.subr.bf16.mxu0 0
        %2029 = vmatpush2.bf16.msra.mxu0 %v1995
        %2030 = vmatprep.subr.bf16.mxu0 0
        %2031 = vmatpush2.bf16.msra.mxu0 %v1994
        %2032 = vmatprep.subr.bf16.mxu0 0
        %2033 = vmatpush2.bf16.msra.mxu0 %v1993
        %2034 = vmatprep.subr.bf16.mxu0 0
        %2035 = vmatpush2.bf16.msra.mxu0 %v1992
        %2036 = vmatprep.subr.bf16.mxu0 0
        %2037 = vmatpush2.bf16.msra.mxu0 %v1991
        %2038 = vmatprep.subr.bf16.mxu0 0
        %2039 = vmatpush2.bf16.msra.mxu0 %v1990
        %2040 = vmatprep.subr.bf16.mxu0 0
        %2041 = vmatpush2.bf16.msra.mxu0 %v1989
        %2042 = vmatprep.subr.bf16.mxu0 0
        %2043 = vmatpush2.bf16.msra.mxu0 %v1988
        %2044 = vmatprep.mubr.bf16.mxu0 %v1909
        %2045 = vmatmul.mubr.bf16.gmra.mxu0 %v1908
        %v2046 = vpop.f32.mrf.mxu0
        %v2047 = vadd.f32 %v1914, %v2046
        %v2048 = vpop.f32.mrf.mxu0
        %v2049 = vpop.f32.mrf.mxu0
        %v2050 = vpop.f32.mrf.mxu0
        %2051 = vdwg.mxu0
        %v2052 = vadd.f32 %v1706, %v2047
        %2053 = vadd.xlane.f32.xlu0 %v2052
        %v2054 = vpop.xlane.xlu0 %2053
        %v2055 = vmul.f32 %v2054, %v1681
        %v2056 = vsub.f32 %v2052, %v2055
        %v2057 = vmul.f32 %v2056, %v2056
        %2058 = vadd.xlane.f32.xlu0 %v2057
        %v2059 = vpop.xlane.xlu0 %2058
        %v2060 = vmul.f32 %v2059, %v1681
        %v2061 = vadd.f32 %v2060, 1e-05
        %v2062 = vrsqrt.pop %v2061
        %v2063 = vmul.f32 %v2056, %v2062
        %v2064 = vld [vmem:[%s680] sm:$0x1]
        %v2066 = vlaneseq
        %v2067 = vshrl.u32 %v2066, 7
        %v2068 = vsub.s32 0, %v2067
        %v2069 = vrot.slane %v2064, %v2068
        %v2071 = vmul.f32 %v2063, %v2069
        %v2072 = vld [vmem:[%s688] sm:$0x1]
        %v2074 = vlaneseq
        %v2075 = vshrl.u32 %v2074, 7
        %v2076 = vsub.s32 0, %v2075
        %v2077 = vrot.slane %v2072, %v2076
        %v2079 = vadd.f32 %v2071, %v2077
        %2080 = vst [vmem:[%s837] sm:$0xff] %v2079
        %p2081 = scmp.lt.s32.totalorder %s44, 1
        %s2082 = scalar_select %p2081, %s44, 1
        %s2083 = smul.addr %s2082, 8
        %s2084 = scalar_lea.vmem %s14, %s2083
        // Predicated region
        $region113: #{text_image_forward.6} parent=75 // pred_check
          %p2085 = pneg %p434
        $region114: #{text_image_forward.6} parent=75 // pred_check_branch
          %2087 = sbr.rel (%p2085) target = $region116
        $region115: #{text_image_forward.6} parent=75 // pred_region
          _
        $region116: #{text_image_forward.6} parent=75 // pred_fallthru
          _
      $region76: #{text_image_forward.6} parent=5 // pred_fallthru
        _
      %p2088 = scmp.le.s32.totalorder 2, %s35
      // Predicated region
      $region117: #{text_image_forward.6} parent=5 // pred_check
        %p2089 = pneg %p2088
      $region118: #{text_image_forward.6} parent=5 // pred_check_branch
        %2091 = sbr.rel (%p2089) target = $region120
      $region119: #{text_image_forward.6} parent=5 // pred_region
        %s2092 = ssub.s32 %s35, 2
        // Predicated region
        $region121: #{text_image_forward.6} parent=119 // pred_check
          %p2093 = pneg %p440
        $region122: #{text_image_forward.6} parent=119 // pred_check_branch
          %2095 = sbr.rel (%p2093) target = $region124
        $region123: #{text_image_forward.6} parent=119 // pred_region
          %p2096 = scmp.lt.s32.totalorder %s46, 1
          %s2097 = scalar_select %p2096, %s46, 1
          %s2098 = smul.addr %s2097, 8
          %s2099 = scalar_lea.vmem %s14, %s2098
        $region124: #{text_image_forward.6} parent=119 // pred_fallthru
          _
      $region120: #{text_image_forward.6} parent=5 // pred_fallthru
        _
    $region6: #{text_image_forward.6} parent=1 // loop_footer
      %s39 = sadd.s32 1, %s35
    $region7: #{text_image_forward.6} parent=1 // loop_footer_branch
      %34 = sbr.rel target = $region3
    $region8: #{text_image_forward.6} parent=1 // loop_exit
      _
    %2100 = vsyncpa [#allocation3], 1
    %s2101 = scalar_lea.sflag [#allocation3], 1
    %2102 = vsyncpa %s2101, 1
    %2103 = vsyncpa [#allocation5], 1
    %s2104 = scalar_lea.sflag [#allocation5], 1
    %2105 = vsyncpa %s2104, 1
    %2106 = vsyncpa [#allocation8], 1
    %s2107 = scalar_lea.sflag [#allocation8], 1
    %2108 = vsyncpa %s2107, 1
    %2109 = vsyncpa [#allocation11], 1
    %s2110 = scalar_lea.sflag [#allocation11], 1
    %2111 = vsyncpa %s2110, 1
    %2112 = vsyncpa [#allocation14], 1
    %s2113 = scalar_lea.sflag [#allocation14], 1
    %2114 = vsyncpa %s2113, 1

// kernel: text_image_forward.9
$region0: #{text_image_forward.9}
  #allocation0 [shape = 'u32[]', space=smem, size = 0x4, offset = 0x4, fixed_abs, tag = 'smem constant byte address 0x4 - core index']
  #allocation1 [shape = 'u32[144,128]{1,0:T(1,128)}', space=vmem, size = 0x12000, scoped, tag = 'internal scratch']
  #allocation2 [shape = 'f32[1,1]{1,0:T(1,128)S(1)}', space=vmem, size = 0x200, scoped, tag = 'scoped memory for text_image_forward.9']
  %s0 = inlined_call_operand.vmem [shape: f32[2,128], index: 0, kind: input, shape index: {}]
  %s1 = inlined_call_operand.vmem [shape: f32[2,128], index: 1, kind: input, shape index: {}]
  %s2 = inlined_call_operand.vmem [shape: f32[1,128], index: 2, kind: input, shape index: {}]
  %s3 = inlined_call_operand.vmem [shape: f32[1,128], index: 3, kind: input, shape index: {}]
  %s4 = inlined_call_operand.vmem [shape: bf16[128,128], index: 4, kind: input, shape index: {}]
  %s5 = inlined_call_operand.vmem [shape: f32[1,128], index: 5, kind: input, shape index: {}]
  %s6 = inlined_call_operand.vmem [shape: bf16[128,128], index: 6, kind: input, shape index: {}]
  %s7 = inlined_call_operand.vmem [shape: f32[1,128], index: 7, kind: input, shape index: {}]
  %s8 = inlined_call_operand.vmem [shape: bf16[128,2], index: 8, kind: input, shape index: {}]
  %s9 = inlined_call_operand.vmem [shape: f32[1,2], index: 9, kind: input, shape index: {}]
  %s10 = inlined_call_operand.vmem [shape: bf16[128,2], index: 10, kind: input, shape index: {}]
  %s11 = inlined_call_operand.vmem [shape: f32[1,2], index: 11, kind: input, shape index: {}]
  %s12 = inlined_call_operand.vmem [shape: bf16[128,1], index: 12, kind: input, shape index: {}]
  %s13 = inlined_call_operand.<no memory space> [shape: f32[1,1], index: 13, kind: input, shape index: {}]
  %s14 = inlined_call_operand.vmem [shape: f32[2,640], index: 14, kind: output, shape index: {}]
  %s15 = sld [smem:[#allocation0]]
  $region66: #{text_image_forward.9} parent=0
    _
  %s17 = ssub.s32 1, %s15
  %s18 = scalar_select 0, %s17, %s15
  %v19 = vstv %s13
  %20 = vst [vmem:[#allocation2] sm:$0x1] %v19
  // Predicated region
  $region2: #{text_image_forward.9} parent=0 // pred_check
    _
  $region3: #{text_image_forward.9} parent=0 // pred_check_branch
    %22 = sbr.rel (0) target = $region5
  $region4: #{text_image_forward.9} parent=0 // pred_region
    _
  $region5: #{text_image_forward.9} parent=0 // pred_fallthru
    _
  // Predicated region
  $region6: #{text_image_forward.9} parent=0 // pred_check
    _
  $region7: #{text_image_forward.9} parent=0 // pred_check_branch
    %24 = sbr.rel (0) target = $region9
  $region8: #{text_image_forward.9} parent=0 // pred_region
    _
  $region9: #{text_image_forward.9} parent=0 // pred_fallthru
    _
  // Predicated region
  $region10: #{text_image_forward.9} parent=0 // pred_check
    _
  $region11: #{text_image_forward.9} parent=0 // pred_check_branch
    %26 = sbr.rel (0) target = $region13
  $region12: #{text_image_forward.9} parent=0 // pred_region
    _
  $region13: #{text_image_forward.9} parent=0 // pred_fallthru
    _
  // Predicated region
  $region14: #{text_image_forward.9} parent=0 // pred_check
    _
  $region15: #{text_image_forward.9} parent=0 // pred_check_branch
    %28 = sbr.rel (0) target = $region17
  $region16: #{text_image_forward.9} parent=0 // pred_region
    _
  $region17: #{text_image_forward.9} parent=0 // pred_fallthru
    _
  // Predicated region
  $region18: #{text_image_forward.9} parent=0 // pred_check
    _
  $region19: #{text_image_forward.9} parent=0 // pred_check_branch
    %30 = sbr.rel (0) target = $region21
  $region20: #{text_image_forward.9} parent=0 // pred_region
    _
  $region21: #{text_image_forward.9} parent=0 // pred_fallthru
    _
  // Predicated region
  $region22: #{text_image_forward.9} parent=0 // pred_check
    _
  $region23: #{text_image_forward.9} parent=0 // pred_check_branch
    %32 = sbr.rel (0) target = $region25
  $region24: #{text_image_forward.9} parent=0 // pred_region
    _
  $region25: #{text_image_forward.9} parent=0 // pred_fallthru
    _
  // Predicated region
  $region26: #{text_image_forward.9} parent=0 // pred_check
    _
  $region27: #{text_image_forward.9} parent=0 // pred_check_branch
    %34 = sbr.rel (0) target = $region29
  $region28: #{text_image_forward.9} parent=0 // pred_region
    _
  $region29: #{text_image_forward.9} parent=0 // pred_fallthru
    _
  // Predicated region
  $region30: #{text_image_forward.9} parent=0 // pred_check
    _
  $region31: #{text_image_forward.9} parent=0 // pred_check_branch
    %36 = sbr.rel (0) target = $region33
  $region32: #{text_image_forward.9} parent=0 // pred_region
    _
  $region33: #{text_image_forward.9} parent=0 // pred_fallthru
    _
  // Predicated region
  $region34: #{text_image_forward.9} parent=0 // pred_check
    _
  $region35: #{text_image_forward.9} parent=0 // pred_check_branch
    %38 = sbr.rel (0) target = $region37
  $region36: #{text_image_forward.9} parent=0 // pred_region
    _
  $region37: #{text_image_forward.9} parent=0 // pred_fallthru
    _
  // Predicated region
  $region38: #{text_image_forward.9} parent=0 // pred_check
    _
  $region39: #{text_image_forward.9} parent=0 // pred_check_branch
    %40 = sbr.rel (0) target = $region41
  $region40: #{text_image_forward.9} parent=0 // pred_region
    _
  $region41: #{text_image_forward.9} parent=0 // pred_fallthru
    _
  // Predicated region
  $region42: #{text_image_forward.9} parent=0 // pred_check
    _
  $region43: #{text_image_forward.9} parent=0 // pred_check_branch
    %42 = sbr.rel (0) target = $region45
  $region44: #{text_image_forward.9} parent=0 // pred_region
    _
  $region45: #{text_image_forward.9} parent=0 // pred_fallthru
    _
  // Predicated region
  $region46: #{text_image_forward.9} parent=0 // pred_check
    _
  $region47: #{text_image_forward.9} parent=0 // pred_check_branch
    %44 = sbr.rel (0) target = $region49
  $region48: #{text_image_forward.9} parent=0 // pred_region
    _
  $region49: #{text_image_forward.9} parent=0 // pred_fallthru
    _
  // Predicated region
  $region50: #{text_image_forward.9} parent=0 // pred_check
    _
  $region51: #{text_image_forward.9} parent=0 // pred_check_branch
    %46 = sbr.rel (0) target = $region53
  $region52: #{text_image_forward.9} parent=0 // pred_region
    _
  $region53: #{text_image_forward.9} parent=0 // pred_fallthru
    _
  // Predicated region
  $region54: #{text_image_forward.9} parent=0 // pred_check
    _
  $region55: #{text_image_forward.9} parent=0 // pred_check_branch
    %48 = sbr.rel (0) target = $region57
  $region56: #{text_image_forward.9} parent=0 // pred_region
    _
  $region57: #{text_image_forward.9} parent=0 // pred_fallthru
    _
  %v50 = vld [vmem:[%s0] sm:$0x3]
  %v51 = vld [vmem:[%s1] sm:$0x3]
  %vm52 = vcmask 1041408
  %v53 = vsel %vm52, %v51, 0.0
  %54 = vadd.xlane.f32.xlu0 %v53
  %v55 = vpop.xlane.xlu0 %54
  %v56 = vrcp.pop 128.0
  %v57 = vmul.f32 %v55, %v56
  %v58 = vsub.f32 %v51, %v57
  %v59 = vmul.f32 %v58, %v58
  %v60 = vsel %vm52, %v59, 0.0
  %61 = vadd.xlane.f32.xlu0 %v60
  %v62 = vpop.xlane.xlu0 %61
  %v63 = vmul.f32 %v62, %v56
  %v64 = vadd.f32 %v63, 1e-06
  %v65 = vrsqrt.pop %v64
  %v66 = vmul.f32 %v58, %v65
  %v67 = vld [vmem:[%s2] sm:$0x1]
  %v69 = vlaneseq
  %v70 = vshrl.u32 %v69, 7
  %v71 = vsub.s32 0, %v70
  %v72 = vrot.slane %v67, %v71
  %v74 = vmul.f32 %v66, %v72
  %v75 = vld [vmem:[%s3] sm:$0x1]
  %v77 = vlaneseq
  %v78 = vshrl.u32 %v77, 7
  %v79 = vsub.s32 0, %v78
  %v80 = vrot.slane %v75, %v79
  %v82 = vadd.f32 %v74, %v80
  %v83 = vpack.c.bf16 %v50, %v50
  %v84 = vld [vmem:[%s4] sm:$0xf]
  %v85 = vld [vmem:[%s4 + $0x4] sm:$0xf]
  %v86 = vld [vmem:[%s4 + $0x8] sm:$0xf]
  %v87 = vld [vmem:[%s4 + $0xc] sm:$0xf]
  %v88 = vld [vmem:[%s4 + $0x10] sm:$0xf]
  %v89 = vld [vmem:[%s4 + $0x14] sm:$0xf]
  %v90 = vld [vmem:[%s4 + $0x18] sm:$0xf]
  %v91 = vld [vmem:[%s4 + $0x1c] sm:$0xf]
  %v92 = vld [vmem:[%s4 + $0x20] sm:$0xf]
  %v93 = vld [vmem:[%s4 + $0x24] sm:$0xf]
  %v94 = vld [vmem:[%s4 + $0x28] sm:$0xf]
  %v95 = vld [vmem:[%s4 + $0x2c] sm:$0xf]
  %v96 = vld [vmem:[%s4 + $0x30] sm:$0xf]
  %v97 = vld [vmem:[%s4 + $0x34] sm:$0xf]
  %v98 = vld [vmem:[%s4 + $0x38] sm:$0xf]
  %v99 = vld [vmem:[%s4 + $0x3c] sm:$0xf]
  %v100 = vld [vmem:[%s5] sm:$0x1]
  %v102 = vlaneseq
  %v103 = vshrl.u32 %v102, 7
  %v104 = vsub.s32 0, %v103
  %v105 = vrot.slane %v100, %v104
  %v123 = vunpack.c.l.b16 %v84
  %v124 = vunpack.c.l.b16 %v85
  %v125 = vunpack.c.l.b16 %v86
  %v126 = vunpack.c.l.b16 %v87
  %v127 = vunpack.c.l.b16 %v88
  %v128 = vunpack.c.l.b16 %v89
  %v129 = vunpack.c.l.b16 %v90
  %v130 = vunpack.c.l.b16 %v91
  %v131 = vunpack.c.l.b16 %v92
  %v132 = vunpack.c.l.b16 %v93
  %v133 = vunpack.c.l.b16 %v94
  %v134 = vunpack.c.l.b16 %v95
  %v135 = vunpack.c.l.b16 %v96
  %v136 = vunpack.c.l.b16 %v97
  %v137 = vunpack.c.l.b16 %v98
  %v138 = vunpack.c.l.b16 %v99
  %v139 = vpack.c.b16 %v124, %v123
  %v140 = vpack.c.b16 %v126, %v125
  %v141 = vpack.c.b16 %v128, %v127
  %v142 = vpack.c.b16 %v130, %v129
  %v143 = vpack.c.b16 %v132, %v131
  %v144 = vpack.c.b16 %v134, %v133
  %v145 = vpack.c.b16 %v136, %v135
  %v146 = vpack.c.b16 %v138, %v137
  %155 = vmatprep.subr.bf16.mxu0 0
  %156 = vmatpush1.bf16.msra.mxu0 %v146
  %157 = vmatprep.subr.bf16.mxu0 0
  %158 = vmatpush1.bf16.msra.mxu0 %v145
  %159 = vmatprep.subr.bf16.mxu0 0
  %160 = vmatpush1.bf16.msra.mxu0 %v144
  %161 = vmatprep.subr.bf16.mxu0 0
  %162 = vmatpush1.bf16.msra.mxu0 %v143
  %163 = vmatprep.subr.bf16.mxu0 0
  %164 = vmatpush1.bf16.msra.mxu0 %v142
  %165 = vmatprep.subr.bf16.mxu0 0
  %166 = vmatpush1.bf16.msra.mxu0 %v141
  %167 = vmatprep.subr.bf16.mxu0 0
  %168 = vmatpush1.bf16.msra.mxu0 %v140
  %169 = vmatprep.subr.bf16.mxu0 0
  %170 = vmatpush1.bf16.msra.mxu0 %v139
  %171 = vmatprep.subr.bf16.mxu0 0
  %172 = vmatpush2.bf16.msra.mxu0 0
  %173 = vmatprep.subr.bf16.mxu0 0
  %174 = vmatpush2.bf16.msra.mxu0 0
  %175 = vmatprep.subr.bf16.mxu0 0
  %176 = vmatpush2.bf16.msra.mxu0 0
  %177 = vmatprep.subr.bf16.mxu0 0
  %178 = vmatpush2.bf16.msra.mxu0 0
  %179 = vmatprep.subr.bf16.mxu0 0
  %180 = vmatpush2.bf16.msra.mxu0 0
  %181 = vmatprep.subr.bf16.mxu0 0
  %182 = vmatpush2.bf16.msra.mxu0 0
  %183 = vmatprep.subr.bf16.mxu0 0
  %184 = vmatpush2.bf16.msra.mxu0 0
  %185 = vmatprep.subr.bf16.mxu0 0
  %186 = vmatpush2.bf16.msra.mxu0 0
  %187 = vmatprep.mubr.bf16.mxu0 0
  %188 = vmatmul.mubr.bf16.gmra.mxu0 %v83
  %v189 = vpop.f32.mrf.mxu0
  %v190 = vadd.f32 %v105, %v189
  %v191 = vpop.f32.mrf.mxu0
  %v192 = vpop.f32.mrf.mxu0
  %v193 = vpop.f32.mrf.mxu0
  %194 = vdwg.mxu0
  %v195 = vpack.c.bf16 %v82, %v82
  %v196 = vld [vmem:[%s6] sm:$0xf]
  %v197 = vld [vmem:[%s6 + $0x4] sm:$0xf]
  %v198 = vld [vmem:[%s6 + $0x8] sm:$0xf]
  %v199 = vld [vmem:[%s6 + $0xc] sm:$0xf]
  %v200 = vld [vmem:[%s6 + $0x10] sm:$0xf]
  %v201 = vld [vmem:[%s6 + $0x14] sm:$0xf]
  %v202 = vld [vmem:[%s6 + $0x18] sm:$0xf]
  %v203 = vld [vmem:[%s6 + $0x1c] sm:$0xf]
  %v204 = vld [vmem:[%s6 + $0x20] sm:$0xf]
  %v205 = vld [vmem:[%s6 + $0x24] sm:$0xf]
  %v206 = vld [vmem:[%s6 + $0x28] sm:$0xf]
  %v207 = vld [vmem:[%s6 + $0x2c] sm:$0xf]
  %v208 = vld [vmem:[%s6 + $0x30] sm:$0xf]
  %v209 = vld [vmem:[%s6 + $0x34] sm:$0xf]
  %v210 = vld [vmem:[%s6 + $0x38] sm:$0xf]
  %v211 = vld [vmem:[%s6 + $0x3c] sm:$0xf]
  %v212 = vld [vmem:[%s7] sm:$0x1]
  %v214 = vlaneseq
  %v215 = vshrl.u32 %v214, 7
  %v216 = vsub.s32 0, %v215
  %v217 = vrot.slane %v212, %v216
  %v235 = vunpack.c.l.b16 %v196
  %v236 = vunpack.c.l.b16 %v197
  %v237 = vunpack.c.l.b16 %v198
  %v238 = vunpack.c.l.b16 %v199
  %v239 = vunpack.c.l.b16 %v200
  %v240 = vunpack.c.l.b16 %v201
  %v241 = vunpack.c.l.b16 %v202
  %v242 = vunpack.c.l.b16 %v203
  %v243 = vunpack.c.l.b16 %v204
  %v244 = vunpack.c.l.b16 %v205
  %v245 = vunpack.c.l.b16 %v206
  %v246 = vunpack.c.l.b16 %v207
  %v247 = vunpack.c.l.b16 %v208
  %v248 = vunpack.c.l.b16 %v209
  %v249 = vunpack.c.l.b16 %v210
  %v250 = vunpack.c.l.b16 %v211
  %v251 = vpack.c.b16 %v236, %v235
  %v252 = vpack.c.b16 %v238, %v237
  %v253 = vpack.c.b16 %v240, %v239
  %v254 = vpack.c.b16 %v242, %v241
  %v255 = vpack.c.b16 %v244, %v243
  %v256 = vpack.c.b16 %v246, %v245
  %v257 = vpack.c.b16 %v248, %v247
  %v258 = vpack.c.b16 %v250, %v249
  %267 = vmatprep.subr.bf16.mxu0 0
  %268 = vmatpush1.bf16.msra.mxu0 %v258
  %269 = vmatprep.subr.bf16.mxu0 0
  %270 = vmatpush1.bf16.msra.mxu0 %v257
  %271 = vmatprep.subr.bf16.mxu0 0
  %272 = vmatpush1.bf16.msra.mxu0 %v256
  %273 = vmatprep.subr.bf16.mxu0 0
  %274 = vmatpush1.bf16.msra.mxu0 %v255
  %275 = vmatprep.subr.bf16.mxu0 0
  %276 = vmatpush1.bf16.msra.mxu0 %v254
  %277 = vmatprep.subr.bf16.mxu0 0
  %278 = vmatpush1.bf16.msra.mxu0 %v253
  %279 = vmatprep.subr.bf16.mxu0 0
  %280 = vmatpush1.bf16.msra.mxu0 %v252
  %281 = vmatprep.subr.bf16.mxu0 0
  %282 = vmatpush1.bf16.msra.mxu0 %v251
  %283 = vmatprep.subr.bf16.mxu0 0
  %284 = vmatpush2.bf16.msra.mxu0 0
  %285 = vmatprep.subr.bf16.mxu0 0
  %286 = vmatpush2.bf16.msra.mxu0 0
  %287 = vmatprep.subr.bf16.mxu0 0
  %288 = vmatpush2.bf16.msra.mxu0 0
  %289 = vmatprep.subr.bf16.mxu0 0
  %290 = vmatpush2.bf16.msra.mxu0 0
  %291 = vmatprep.subr.bf16.mxu0 0
  %292 = vmatpush2.bf16.msra.mxu0 0
  %293 = vmatprep.subr.bf16.mxu0 0
  %294 = vmatpush2.bf16.msra.mxu0 0
  %295 = vmatprep.subr.bf16.mxu0 0
  %296 = vmatpush2.bf16.msra.mxu0 0
  %297 = vmatprep.subr.bf16.mxu0 0
  %298 = vmatpush2.bf16.msra.mxu0 0
  %299 = vmatprep.mubr.bf16.mxu0 0
  %300 = vmatmul.mubr.bf16.gmra.mxu0 %v195
  %v301 = vpop.f32.mrf.mxu0
  %v302 = vadd.f32 %v217, %v301
  %v303 = vpop.f32.mrf.mxu0
  %v304 = vpop.f32.mrf.mxu0
  %v305 = vpop.f32.mrf.mxu0
  %306 = vdwg.mxu0
  %v307 = vpack.c.bf16 %v190, %v190
  %v308 = vld [vmem:[%s8] sm:$0xf]
  %v309 = vld [vmem:[%s8 + $0x4] sm:$0xf]
  %v310 = vld [vmem:[%s8 + $0x8] sm:$0xf]
  %v311 = vld [vmem:[%s8 + $0xc] sm:$0xf]
  %v312 = vld [vmem:[%s8 + $0x10] sm:$0xf]
  %v313 = vld [vmem:[%s8 + $0x14] sm:$0xf]
  %v314 = vld [vmem:[%s8 + $0x18] sm:$0xf]
  %v315 = vld [vmem:[%s8 + $0x1c] sm:$0xf]
  %v316 = vld [vmem:[%s8 + $0x20] sm:$0xf]
  %v317 = vld [vmem:[%s8 + $0x24] sm:$0xf]
  %v318 = vld [vmem:[%s8 + $0x28] sm:$0xf]
  %v319 = vld [vmem:[%s8 + $0x2c] sm:$0xf]
  %v320 = vld [vmem:[%s8 + $0x30] sm:$0xf]
  %v321 = vld [vmem:[%s8 + $0x34] sm:$0xf]
  %v322 = vld [vmem:[%s8 + $0x38] sm:$0xf]
  %v323 = vld [vmem:[%s8 + $0x3c] sm:$0xf]
  %v324 = vld [vmem:[%s9] sm:$0x1]
  %v326 = vlaneseq
  %v327 = vshrl.u32 %v326, 7
  %v328 = vsub.s32 0, %v327
  %v329 = vrot.slane %v324, %v328
  %v347 = vunpack.c.l.b16 %v308
  %v348 = vunpack.c.l.b16 %v309
  %v349 = vunpack.c.l.b16 %v310
  %v350 = vunpack.c.l.b16 %v311
  %v351 = vunpack.c.l.b16 %v312
  %v352 = vunpack.c.l.b16 %v313
  %v353 = vunpack.c.l.b16 %v314
  %v354 = vunpack.c.l.b16 %v315
  %v355 = vunpack.c.l.b16 %v316
  %v356 = vunpack.c.l.b16 %v317
  %v357 = vunpack.c.l.b16 %v318
  %v358 = vunpack.c.l.b16 %v319
  %v359 = vunpack.c.l.b16 %v320
  %v360 = vunpack.c.l.b16 %v321
  %v361 = vunpack.c.l.b16 %v322
  %v362 = vunpack.c.l.b16 %v323
  %v363 = vpack.c.b16 %v348, %v347
  %v364 = vpack.c.b16 %v350, %v349
  %v365 = vpack.c.b16 %v352, %v351
  %v366 = vpack.c.b16 %v354, %v353
  %v367 = vpack.c.b16 %v356, %v355
  %v368 = vpack.c.b16 %v358, %v357
  %v369 = vpack.c.b16 %v360, %v359
  %v370 = vpack.c.b16 %v362, %v361
  %379 = vmatprep.subr.bf16.mxu0 0
  %380 = vmatpush1.bf16.msra.mxu0 %v370
  %381 = vmatprep.subr.bf16.mxu0 0
  %382 = vmatpush1.bf16.msra.mxu0 %v369
  %383 = vmatprep.subr.bf16.mxu0 0
  %384 = vmatpush1.bf16.msra.mxu0 %v368
  %385 = vmatprep.subr.bf16.mxu0 0
  %386 = vmatpush1.bf16.msra.mxu0 %v367
  %387 = vmatprep.subr.bf16.mxu0 0
  %388 = vmatpush1.bf16.msra.mxu0 %v366
  %389 = vmatprep.subr.bf16.mxu0 0
  %390 = vmatpush1.bf16.msra.mxu0 %v365
  %391 = vmatprep.subr.bf16.mxu0 0
  %392 = vmatpush1.bf16.msra.mxu0 %v364
  %393 = vmatprep.subr.bf16.mxu0 0
  %394 = vmatpush1.bf16.msra.mxu0 %v363
  %395 = vmatprep.subr.bf16.mxu0 0
  %396 = vmatpush2.bf16.msra.mxu0 0
  %397 = vmatprep.subr.bf16.mxu0 0
  %398 = vmatpush2.bf16.msra.mxu0 0
  %399 = vmatprep.subr.bf16.mxu0 0
  %400 = vmatpush2.bf16.msra.mxu0 0
  %401 = vmatprep.subr.bf16.mxu0 0
  %402 = vmatpush2.bf16.msra.mxu0 0
  %403 = vmatprep.subr.bf16.mxu0 0
  %404 = vmatpush2.bf16.msra.mxu0 0
  %405 = vmatprep.subr.bf16.mxu0 0
  %406 = vmatpush2.bf16.msra.mxu0 0
  %407 = vmatprep.subr.bf16.mxu0 0
  %408 = vmatpush2.bf16.msra.mxu0 0
  %409 = vmatprep.subr.bf16.mxu0 0
  %410 = vmatpush2.bf16.msra.mxu0 0
  %411 = vmatprep.mubr.bf16.mxu0 0
  %412 = vmatmul.mubr.bf16.gmra.mxu0 %v307
  %v413 = vpop.f32.mrf.mxu0
  %v414 = vadd.f32 %v329, %v413
  %v415 = vpop.f32.mrf.mxu0
  %v416 = vpop.f32.mrf.mxu0
  %v417 = vpop.f32.mrf.mxu0
  %418 = vdwg.mxu0
  %v419 = vpack.c.bf16 %v302, %v302
  %v420 = vld [vmem:[%s10] sm:$0xf]
  %v421 = vld [vmem:[%s10 + $0x4] sm:$0xf]
  %v422 = vld [vmem:[%s10 + $0x8] sm:$0xf]
  %v423 = vld [vmem:[%s10 + $0xc] sm:$0xf]
  %v424 = vld [vmem:[%s10 + $0x10] sm:$0xf]
  %v425 = vld [vmem:[%s10 + $0x14] sm:$0xf]
  %v426 = vld [vmem:[%s10 + $0x18] sm:$0xf]
  %v427 = vld [vmem:[%s10 + $0x1c] sm:$0xf]
  %v428 = vld [vmem:[%s10 + $0x20] sm:$0xf]
  %v429 = vld [vmem:[%s10 + $0x24] sm:$0xf]
  %v430 = vld [vmem:[%s10 + $0x28] sm:$0xf]
  %v431 = vld [vmem:[%s10 + $0x2c] sm:$0xf]
  %v432 = vld [vmem:[%s10 + $0x30] sm:$0xf]
  %v433 = vld [vmem:[%s10 + $0x34] sm:$0xf]
  %v434 = vld [vmem:[%s10 + $0x38] sm:$0xf]
  %v435 = vld [vmem:[%s10 + $0x3c] sm:$0xf]
  %v436 = vld [vmem:[%s11] sm:$0x1]
  %v438 = vlaneseq
  %v439 = vshrl.u32 %v438, 7
  %v440 = vsub.s32 0, %v439
  %v441 = vrot.slane %v436, %v440
  %v459 = vunpack.c.l.b16 %v420
  %v460 = vunpack.c.l.b16 %v421
  %v461 = vunpack.c.l.b16 %v422
  %v462 = vunpack.c.l.b16 %v423
  %v463 = vunpack.c.l.b16 %v424
  %v464 = vunpack.c.l.b16 %v425
  %v465 = vunpack.c.l.b16 %v426
  %v466 = vunpack.c.l.b16 %v427
  %v467 = vunpack.c.l.b16 %v428
  %v468 = vunpack.c.l.b16 %v429
  %v469 = vunpack.c.l.b16 %v430
  %v470 = vunpack.c.l.b16 %v431
  %v471 = vunpack.c.l.b16 %v432
  %v472 = vunpack.c.l.b16 %v433
  %v473 = vunpack.c.l.b16 %v434
  %v474 = vunpack.c.l.b16 %v435
  %v475 = vpack.c.b16 %v460, %v459
  %v476 = vpack.c.b16 %v462, %v461
  %v477 = vpack.c.b16 %v464, %v463
  %v478 = vpack.c.b16 %v466, %v465
  %v479 = vpack.c.b16 %v468, %v467
  %v480 = vpack.c.b16 %v470, %v469
  %v481 = vpack.c.b16 %v472, %v471
  %v482 = vpack.c.b16 %v474, %v473
  %491 = vmatprep.subr.bf16.mxu0 0
  %492 = vmatpush1.bf16.msra.mxu0 %v482
  %493 = vmatprep.subr.bf16.mxu0 0
  %494 = vmatpush1.bf16.msra.mxu0 %v481
  %495 = vmatprep.subr.bf16.mxu0 0
  %496 = vmatpush1.bf16.msra.mxu0 %v480
  %497 = vmatprep.subr.bf16.mxu0 0
  %498 = vmatpush1.bf16.msra.mxu0 %v479
  %499 = vmatprep.subr.bf16.mxu0 0
  %500 = vmatpush1.bf16.msra.mxu0 %v478
  %501 = vmatprep.subr.bf16.mxu0 0
  %502 = vmatpush1.bf16.msra.mxu0 %v477
  %503 = vmatprep.subr.bf16.mxu0 0
  %504 = vmatpush1.bf16.msra.mxu0 %v476
  %505 = vmatprep.subr.bf16.mxu0 0
  %506 = vmatpush1.bf16.msra.mxu0 %v475
  %507 = vmatprep.subr.bf16.mxu0 0
  %508 = vmatpush2.bf16.msra.mxu0 0
  %509 = vmatprep.subr.bf16.mxu0 0
  %510 = vmatpush2.bf16.msra.mxu0 0
  %511 = vmatprep.subr.bf16.mxu0 0
  %512 = vmatpush2.bf16.msra.mxu0 0
  %513 = vmatprep.subr.bf16.mxu0 0
  %514 = vmatpush2.bf16.msra.mxu0 0
  %515 = vmatprep.subr.bf16.mxu0 0
  %516 = vmatpush2.bf16.msra.mxu0 0
  %517 = vmatprep.subr.bf16.mxu0 0
  %518 = vmatpush2.bf16.msra.mxu0 0
  %519 = vmatprep.subr.bf16.mxu0 0
  %520 = vmatpush2.bf16.msra.mxu0 0
  %521 = vmatprep.subr.bf16.mxu0 0
  %522 = vmatpush2.bf16.msra.mxu0 0
  %523 = vmatprep.mubr.bf16.mxu0 0
  %524 = vmatmul.mubr.bf16.gmra.mxu0 %v419
  %v525 = vpop.f32.mrf.mxu0
  %v526 = vadd.f32 %v441, %v525
  %v527 = vpop.f32.mrf.mxu0
  %v528 = vpop.f32.mrf.mxu0
  %v529 = vpop.f32.mrf.mxu0
  %530 = vdwg.mxu0
  %v531 = vmul.f32 %v190, %v190
  %v532 = vsel %vm52, %v531, 0.0
  %533 = vadd.xlane.f32.xlu0 %v532
  %v534 = vpop.xlane.xlu0 %533
  %v535 = vadd.f32 %v534, 1e-08
  %v536 = vrsqrt.pop %v535
  %v537 = vmul.f32 %v190, %v536
  %v538 = vmul.f32 %v302, %v302
  %v539 = vsel %vm52, %v538, 0.0
  %540 = vadd.xlane.f32.xlu0 %v539
  %v541 = vpop.xlane.xlu0 %540
  %v542 = vadd.f32 %v541, 1e-08
  %v543 = vrsqrt.pop %v542
  %v544 = vmul.f32 %v302, %v543
  %v545 = vmul.f32 %v537, %v544
  %v546 = vsel %vm52, %v545, 0.0
  %547 = vadd.xlane.f32.xlu0 %v546
  %v548 = vpop.xlane.xlu0 %547
  %v549 = vadd.f32 %v190, %v302
  %v550 = vmul.f32 %v549, 0.5
  %v551 = vmul.f32 %v550, %v550
  %v552 = vmul.f32 %v550, %v551
  %v553 = vmul.f32 %v552, 0.044715
  %v554 = vadd.f32 %v550, %v553
  %v555 = vmul.f32 %v554, 0.7978846
  %v556 = vtanh.pop %v555
  %v557 = vadd.f32 %v556, 1.0
  %v558 = vmul.f32 %v557, 0.5
  %v559 = vmul.f32 %v550, %v558
  %v560 = vpack.c.bf16 %v559, %v559
  %v561 = vld [vmem:[%s12] sm:$0xf]
  %v562 = vld [vmem:[%s12 + $0x4] sm:$0xf]
  %v563 = vld [vmem:[%s12 + $0x8] sm:$0xf]
  %v564 = vld [vmem:[%s12 + $0xc] sm:$0xf]
  %v565 = vld [vmem:[%s12 + $0x10] sm:$0xf]
  %v566 = vld [vmem:[%s12 + $0x14] sm:$0xf]
  %v567 = vld [vmem:[%s12 + $0x18] sm:$0xf]
  %v568 = vld [vmem:[%s12 + $0x1c] sm:$0xf]
  %v569 = vld [vmem:[%s12 + $0x20] sm:$0xf]
  %v570 = vld [vmem:[%s12 + $0x24] sm:$0xf]
  %v571 = vld [vmem:[%s12 + $0x28] sm:$0xf]
  %v572 = vld [vmem:[%s12 + $0x2c] sm:$0xf]
  %v573 = vld [vmem:[%s12 + $0x30] sm:$0xf]
  %v574 = vld [vmem:[%s12 + $0x34] sm:$0xf]
  %v575 = vld [vmem:[%s12 + $0x38] sm:$0xf]
  %v576 = vld [vmem:[%s12 + $0x3c] sm:$0xf]
  %v577 = vld [vmem:[#allocation2] sm:$0x1]
  %v579 = vlaneseq
  %v580 = vshrl.u32 %v579, 7
  %v581 = vsub.s32 0, %v580
  %v582 = vrot.slane %v577, %v581
  %v600 = vunpack.c.l.b16 %v561
  %v601 = vunpack.c.l.b16 %v562
  %v602 = vunpack.c.l.b16 %v563
  %v603 = vunpack.c.l.b16 %v564
  %v604 = vunpack.c.l.b16 %v565
  %v605 = vunpack.c.l.b16 %v566
  %v606 = vunpack.c.l.b16 %v567
  %v607 = vunpack.c.l.b16 %v568
  %v608 = vunpack.c.l.b16 %v569
  %v609 = vunpack.c.l.b16 %v570
  %v610 = vunpack.c.l.b16 %v571
  %v611 = vunpack.c.l.b16 %v572
  %v612 = vunpack.c.l.b16 %v573
  %v613 = vunpack.c.l.b16 %v574
  %v614 = vunpack.c.l.b16 %v575
  %v615 = vunpack.c.l.b16 %v576
  %v616 = vpack.c.b16 %v601, %v600
  %v617 = vpack.c.b16 %v603, %v602
  %v618 = vpack.c.b16 %v605, %v604
  %v619 = vpack.c.b16 %v607, %v606
  %v620 = vpack.c.b16 %v609, %v608
  %v621 = vpack.c.b16 %v611, %v610
  %v622 = vpack.c.b16 %v613, %v612
  %v623 = vpack.c.b16 %v615, %v614
  %632 = vmatprep.subr.bf16.mxu0 0
  %633 = vmatpush1.bf16.msra.mxu0 %v623
  %634 = vmatprep.subr.bf16.mxu0 0
  %635 = vmatpush1.bf16.msra.mxu0 %v622
  %636 = vmatprep.subr.bf16.mxu0 0
  %637 = vmatpush1.bf16.msra.mxu0 %v621
  %638 = vmatprep.subr.bf16.mxu0 0
  %639 = vmatpush1.bf16.msra.mxu0 %v620
  %640 = vmatprep.subr.bf16.mxu0 0
  %641 = vmatpush1.bf16.msra.mxu0 %v619
  %642 = vmatprep.subr.bf16.mxu0 0
  %643 = vmatpush1.bf16.msra.mxu0 %v618
  %644 = vmatprep.subr.bf16.mxu0 0
  %645 = vmatpush1.bf16.msra.mxu0 %v617
  %646 = vmatprep.subr.bf16.mxu0 0
  %647 = vmatpush1.bf16.msra.mxu0 %v616
  %648 = vmatprep.subr.bf16.mxu0 0
  %649 = vmatpush2.bf16.msra.mxu0 0
  %650 = vmatprep.subr.bf16.mxu0 0
  %651 = vmatpush2.bf16.msra.mxu0 0
  %652 = vmatprep.subr.bf16.mxu0 0
  %653 = vmatpush2.bf16.msra.mxu0 0
  %654 = vmatprep.subr.bf16.mxu0 0
  %655 = vmatpush2.bf16.msra.mxu0 0
  %656 = vmatprep.subr.bf16.mxu0 0
  %657 = vmatpush2.bf16.msra.mxu0 0
  %658 = vmatprep.subr.bf16.mxu0 0
  %659 = vmatpush2.bf16.msra.mxu0 0
  %660 = vmatprep.subr.bf16.mxu0 0
  %661 = vmatpush2.bf16.msra.mxu0 0
  %662 = vmatprep.subr.bf16.mxu0 0
  %663 = vmatpush2.bf16.msra.mxu0 0
  %664 = vmatprep.mubr.bf16.mxu0 0
  %665 = vmatmul.mubr.bf16.gmra.mxu0 %v560
  %v666 = vpop.f32.mrf.mxu0
  %v667 = vadd.f32 %v582, %v666
  %v668 = vpop.f32.mrf.mxu0
  %v669 = vpop.f32.mrf.mxu0
  %v670 = vpop.f32.mrf.mxu0
  %671 = vdwg.mxu0
  %673 = vrot.lane.b32.xlu0 %v526, 2
  %v674 = vpop.permute.xlu0 %673
  %677 = vrot.lane.b32.xlu0 %v667, 5
  %v678 = vpop.permute.xlu0 %677
  %vm680 = vcmask 15360
  %v681 = vsel %vm680, %v414, %v674
  %vm682 = vcmask 31744
  %v683 = vsel %vm682, %v681, %v548
  %vm684 = vcmask 39936
  %v685 = vsel %vm684, %v683, %v678
  %vm686 = vcmask 48128
  %v687 = vsel %vm686, %v685, 0.0
  %v693 = vcombine.low %v82, %v190
  %v694 = vcombine.low %v302, %v550
  %v696 = vunpack.c.l.s4 1983009808
  %v697 = vunpack.c.0.s8 %v696
  %v698 = vlaneseq
  %v699 = vshrl.u32 %v698, 7
  %v700 = vsub.s32 %v697, %v699
  %v701 = vrot.slane %v693, %v700
  %v703 = vunpack.c.l.s4 1983009808
  %v704 = vunpack.c.0.s8 %v703
  %v705 = vlaneseq
  %v706 = vshrl.u32 %v705, 7
  %v707 = vsub.s32 %v704, %v706
  %v708 = vrot.slane %v694, %v707
  %v709 = vcombine.low %v701, %v708
  %v711 = vunpack.c.l.s4 1983009808
  %v712 = vunpack.c.0.s8 %v711
  %v713 = vlaneseq
  %v714 = vshrl.u32 %v713, 7
  %v715 = vsub.s32 %v712, %v714
  %v716 = vrot.slane %v687, %v715
  %719 = vst [vmem:[%s14] sm:$0xff] %v709
  %720 = vst [vmem:[%s14 + $0x8] sm:$0x3] %v716
  // Predicated region
  $region58: #{text_image_forward.9} parent=0 // pred_check
    _
  $region59: #{text_image_forward.9} parent=0 // pred_check_branch
    %722 = sbr.rel (0) target = $region61
  $region60: #{text_image_forward.9} parent=0 // pred_region
    _
  $region61: #{text_image_forward.9} parent=0 // pred_fallthru
    _
  // Predicated region
  $region62: #{text_image_forward.9} parent=0 // pred_check
    _
  $region63: #{text_image_forward.9} parent=0 // pred_check_branch
    %724 = sbr.rel (0) target = $region65
  $region64: #{text_image_forward.9} parent=0 // pred_region
    _
  $region65: #{text_image_forward.9} parent=0 // pred_fallthru
    _

// kernel: text_image_forward.8
$region0: #{text_image_forward.8}
  #allocation0 [shape = 'u32[]', space=smem, size = 0x4, offset = 0x4, fixed_abs, tag = 'smem constant byte address 0x4 - core index']
  #allocation1 [shape = 'u32[144,128]{1,0:T(1,128)}', space=vmem, size = 0x12000, scoped, tag = 'internal scratch']
  %s0 = inlined_call_operand.vmem [shape: f32[2,8,128], index: 0, kind: input, shape index: {}]
  %s1 = inlined_call_operand.vmem [shape: f32[2,1,8], index: 1, kind: input, shape index: {}]
  %s2 = inlined_call_operand.vmem [shape: bf16[2,128,768], index: 2, kind: input, shape index: {}]
  %s3 = inlined_call_operand.vmem [shape: f32[2,1,768], index: 3, kind: input, shape index: {}]
  %s4 = inlined_call_operand.vmem [shape: bf16[2,256,128], index: 4, kind: input, shape index: {}]
  %s5 = inlined_call_operand.vmem [shape: f32[2,1,128], index: 5, kind: input, shape index: {}]
  %s6 = inlined_call_operand.vmem [shape: f32[2,1,128], index: 6, kind: input, shape index: {}]
  %s7 = inlined_call_operand.vmem [shape: f32[2,1,128], index: 7, kind: input, shape index: {}]
  %s8 = inlined_call_operand.vmem [shape: f32[2,1,128], index: 8, kind: input, shape index: {}]
  %s9 = inlined_call_operand.vmem [shape: f32[2,1,128], index: 9, kind: input, shape index: {}]
  %s10 = inlined_call_operand.vmem [shape: bf16[2,128,256], index: 10, kind: input, shape index: {}]
  %s11 = inlined_call_operand.vmem [shape: f32[2,1,256], index: 11, kind: input, shape index: {}]
  %s12 = inlined_call_operand.vmem [shape: bf16[2,256,128], index: 12, kind: input, shape index: {}]
  %s13 = inlined_call_operand.vmem [shape: f32[2,1,128], index: 13, kind: input, shape index: {}]
  %s14 = inlined_call_operand.vmem [shape: f32[2,8,128], index: 14, kind: output, shape index: {}]
  %s15 = sld [smem:[#allocation0]]
  $region93: #{text_image_forward.8} parent=0
    _
  %s17 = ssub.s32 1, %s15
  %s18 = scalar_select 0, %s17, %s15
  loop: start=0, step=1, limit=6
  $region2: #{text_image_forward.8} parent=0 // loop_pre_header
    _
  $region3: #{text_image_forward.8} parent=0 // loop_header
    %s20 = sphi 0, %s24
    %p21 = scmp.ge.s32.totalorder %s20, 6
    %s27 = sphi 0, %s39
    %s28 = sphi 0, %s35
    %s29 = sphi 0, %s27
    %s30 = sphi 0, %s28
    %s31 = sphi 0, %s29
    %s32 = sphi 0, %s30
    %s42 = sphi 0, %s44
    %s45 = sphi 0, %s42
    %s46 = sphi 0, %s45
    %s62 = sphi 0, %s46
    %s68 = sphi 0, %s70
    %s71 = sphi 0, %s68
    %s72 = sphi 0, %s71
    %s88 = sphi 0, %s72
    %s94 = sphi 0, %s96
    %s97 = sphi 0, %s94
    %s98 = sphi 0, %s97
    %s114 = sphi 0, %s98
    %s120 = sphi 0, %s122
    %s123 = sphi 0, %s120
    %s124 = sphi 0, %s123
    %s140 = sphi 0, %s124
    %s146 = sphi 0, %s148
    %s149 = sphi 0, %s146
    %s150 = sphi 0, %s149
    %s166 = sphi 0, %s150
    %s172 = sphi 0, %s174
    %s175 = sphi 0, %s172
    %s176 = sphi 0, %s175
    %s192 = sphi 0, %s176
    %s198 = sphi 0, %s200
    %s201 = sphi 0, %s198
    %s202 = sphi 0, %s201
    %s218 = sphi 0, %s202
    %s224 = sphi 0, %s226
    %s227 = sphi 0, %s224
    %s228 = sphi 0, %s227
    %s244 = sphi 0, %s228
    %s250 = sphi 0, %s252
    %s253 = sphi 0, %s250
    %s254 = sphi 0, %s253
    %s270 = sphi 0, %s254
    %s276 = sphi 0, %s278
    %s279 = sphi 0, %s276
    %s280 = sphi 0, %s279
    %s296 = sphi 0, %s280
    %s302 = sphi 0, %s304
    %s305 = sphi 0, %s302
    %s306 = sphi 0, %s305
    %s322 = sphi 0, %s306
    %s328 = sphi 0, %s330
    %s331 = sphi 0, %s328
    %s332 = sphi 0, %s331
    %s348 = sphi 0, %s332
    %s354 = sphi 0, %s356
    %s357 = sphi 0, %s354
    %s358 = sphi 0, %s357
    %s374 = sphi 0, %s358
    %s380 = sphi 0, %s382
    %s383 = sphi 0, %s380
    %s384 = sphi 0, %s383
    %s400 = sphi 0, %s384
    %s406 = sphi 0, %s408
    %s409 = sphi 0, %s406
    %s410 = sphi 0, %s409
    %s426 = sphi 0, %s410
  $region4: #{text_image_forward.8} parent=0 // loop_header_branch
    %23 = sbr.rel (%p21) target = $region8
  $region5: #{text_image_forward.8} parent=0 // loop_body
    %s25 = ssub.s32 %s20, 1
    %s26 = ssub.s32 %s20, 2
    %s33 = sadd.s32 1, %s28
    %p34 = scmp.ge.s32.totalorder %s33, 2
    %s35 = scalar_select %p34, 0, %s33
    %s36 = sadd.s32 1, %s27
    %s37 = scalar_select %p34, %s36, %s27
    %p38 = scmp.ge.s32.totalorder %s37, 2
    %s39 = scalar_select %p38, 0, %s37
    %s40 = ssub.s32 %s27, %s39
    %p41 = scmp.eq.s32.totalorder %s40, 0
    %s43 = sadd.s32 %s42, 1
    %s44 = scalar_select %p41, %s42, %s43
    %p47 = pneg %p41
    %p48 = scmp.eq.s32.totalorder %s20, 3
    %p49 = por %p47, %p48
    %p50 = scmp.ne.s32.totalorder %s42, %s45
    %p51 = scmp.eq.s32.totalorder %s20, 0
    %p52 = por %p50, %p51
    %p53 = scmp.ne.s32.totalorder %s42, %s45
    %p54 = scmp.eq.s32.totalorder %s25, 3
    %p55 = por %p53, %p54
    %p56 = scmp.ne.s32.totalorder %s45, %s46
    %p57 = scmp.eq.s32.totalorder %s25, 0
    %p58 = por %p56, %p57
    %p59 = scmp.ne.s32.totalorder %s45, %s46
    %p60 = scmp.eq.s32.totalorder %s26, 3
    %p61 = por %p59, %p60
    %p63 = scmp.ne.s32.totalorder %s46, %s62
    %p64 = scmp.eq.s32.totalorder %s26, 0
    %p65 = por %p63, %p64
    %s66 = ssub.s32 %s27, %s39
    %p67 = scmp.eq.s32.totalorder %s66, 0
    %s69 = sadd.s32 %s68, 1
    %s70 = scalar_select %p67, %s68, %s69
    %p73 = pneg %p67
    %p74 = scmp.eq.s32.totalorder %s20, 3
    %p75 = por %p73, %p74
    %p76 = scmp.ne.s32.totalorder %s68, %s71
    %p77 = scmp.eq.s32.totalorder %s20, 0
    %p78 = por %p76, %p77
    %p79 = scmp.ne.s32.totalorder %s68, %s71
    %p80 = scmp.eq.s32.totalorder %s25, 3
    %p81 = por %p79, %p80
    %p82 = scmp.ne.s32.totalorder %s71, %s72
    %p83 = scmp.eq.s32.totalorder %s25, 0
    %p84 = por %p82, %p83
    %p85 = scmp.ne.s32.totalorder %s71, %s72
    %p86 = scmp.eq.s32.totalorder %s26, 3
    %p87 = por %p85, %p86
    %p89 = scmp.ne.s32.totalorder %s72, %s88
    %p90 = scmp.eq.s32.totalorder %s26, 0
    %p91 = por %p89, %p90
    %s92 = ssub.s32 %s28, %s35
    %p93 = scmp.eq.s32.totalorder %s92, 0
    %s95 = sadd.s32 %s94, 1
    %s96 = scalar_select %p93, %s94, %s95
    %p99 = pneg %p93
    %p100 = scmp.eq.s32.totalorder %s20, 3
    %p101 = por %p99, %p100
    %p102 = scmp.ne.s32.totalorder %s94, %s97
    %p103 = scmp.eq.s32.totalorder %s20, 0
    %p104 = por %p102, %p103
    %p105 = scmp.ne.s32.totalorder %s94, %s97
    %p106 = scmp.eq.s32.totalorder %s25, 3
    %p107 = por %p105, %p106
    %p108 = scmp.ne.s32.totalorder %s97, %s98
    %p109 = scmp.eq.s32.totalorder %s25, 0
    %p110 = por %p108, %p109
    %p111 = scmp.ne.s32.totalorder %s97, %s98
    %p112 = scmp.eq.s32.totalorder %s26, 3
    %p113 = por %p111, %p112
    %p115 = scmp.ne.s32.totalorder %s98, %s114
    %p116 = scmp.eq.s32.totalorder %s26, 0
    %p117 = por %p115, %p116
    %s118 = ssub.s32 %s28, %s35
    %p119 = scmp.eq.s32.totalorder %s118, 0
    %s121 = sadd.s32 %s120, 1
    %s122 = scalar_select %p119, %s120, %s121
    %p125 = pneg %p119
    %p126 = scmp.eq.s32.totalorder %s20, 3
    %p127 = por %p125, %p126
    %p128 = scmp.ne.s32.totalorder %s120, %s123
    %p129 = scmp.eq.s32.totalorder %s20, 0
    %p130 = por %p128, %p129
    %p131 = scmp.ne.s32.totalorder %s120, %s123
    %p132 = scmp.eq.s32.totalorder %s25, 3
    %p133 = por %p131, %p132
    %p134 = scmp.ne.s32.totalorder %s123, %s124
    %p135 = scmp.eq.s32.totalorder %s25, 0
    %p136 = por %p134, %p135
    %p137 = scmp.ne.s32.totalorder %s123, %s124
    %p138 = scmp.eq.s32.totalorder %s26, 3
    %p139 = por %p137, %p138
    %p141 = scmp.ne.s32.totalorder %s124, %s140
    %p142 = scmp.eq.s32.totalorder %s26, 0
    %p143 = por %p141, %p142
    %s144 = ssub.s32 %s28, %s35
    %p145 = scmp.eq.s32.totalorder %s144, 0
    %s147 = sadd.s32 %s146, 1
    %s148 = scalar_select %p145, %s146, %s147
    %p151 = pneg %p145
    %p152 = scmp.eq.s32.totalorder %s20, 3
    %p153 = por %p151, %p152
    %p154 = scmp.ne.s32.totalorder %s146, %s149
    %p155 = scmp.eq.s32.totalorder %s20, 0
    %p156 = por %p154, %p155
    %p157 = scmp.ne.s32.totalorder %s146, %s149
    %p158 = scmp.eq.s32.totalorder %s25, 3
    %p159 = por %p157, %p158
    %p160 = scmp.ne.s32.totalorder %s149, %s150
    %p161 = scmp.eq.s32.totalorder %s25, 0
    %p162 = por %p160, %p161
    %p163 = scmp.ne.s32.totalorder %s149, %s150
    %p164 = scmp.eq.s32.totalorder %s26, 3
    %p165 = por %p163, %p164
    %p167 = scmp.ne.s32.totalorder %s150, %s166
    %p168 = scmp.eq.s32.totalorder %s26, 0
    %p169 = por %p167, %p168
    %s170 = ssub.s32 %s28, %s35
    %p171 = scmp.eq.s32.totalorder %s170, 0
    %s173 = sadd.s32 %s172, 1
    %s174 = scalar_select %p171, %s172, %s173
    %p177 = pneg %p171
    %p178 = scmp.eq.s32.totalorder %s20, 3
    %p179 = por %p177, %p178
    %p180 = scmp.ne.s32.totalorder %s172, %s175
    %p181 = scmp.eq.s32.totalorder %s20, 0
    %p182 = por %p180, %p181
    %p183 = scmp.ne.s32.totalorder %s172, %s175
    %p184 = scmp.eq.s32.totalorder %s25, 3
    %p185 = por %p183, %p184
    %p186 = scmp.ne.s32.totalorder %s175, %s176
    %p187 = scmp.eq.s32.totalorder %s25, 0
    %p188 = por %p186, %p187
    %p189 = scmp.ne.s32.totalorder %s175, %s176
    %p190 = scmp.eq.s32.totalorder %s26, 3
    %p191 = por %p189, %p190
    %p193 = scmp.ne.s32.totalorder %s176, %s192
    %p194 = scmp.eq.s32.totalorder %s26, 0
    %p195 = por %p193, %p194
    %s196 = ssub.s32 %s28, %s35
    %p197 = scmp.eq.s32.totalorder %s196, 0
    %s199 = sadd.s32 %s198, 1
    %s200 = scalar_select %p197, %s198, %s199
    %p203 = pneg %p197
    %p204 = scmp.eq.s32.totalorder %s20, 3
    %p205 = por %p203, %p204
    %p206 = scmp.ne.s32.totalorder %s198, %s201
    %p207 = scmp.eq.s32.totalorder %s20, 0
    %p208 = por %p206, %p207
    %p209 = scmp.ne.s32.totalorder %s198, %s201
    %p210 = scmp.eq.s32.totalorder %s25, 3
    %p211 = por %p209, %p210
    %p212 = scmp.ne.s32.totalorder %s201, %s202
    %p213 = scmp.eq.s32.totalorder %s25, 0
    %p214 = por %p212, %p213
    %p215 = scmp.ne.s32.totalorder %s201, %s202
    %p216 = scmp.eq.s32.totalorder %s26, 3
    %p217 = por %p215, %p216
    %p219 = scmp.ne.s32.totalorder %s202, %s218
    %p220 = scmp.eq.s32.totalorder %s26, 0
    %p221 = por %p219, %p220
    %s222 = ssub.s32 %s28, %s35
    %p223 = scmp.eq.s32.totalorder %s222, 0
    %s225 = sadd.s32 %s224, 1
    %s226 = scalar_select %p223, %s224, %s225
    %p229 = pneg %p223
    %p230 = scmp.eq.s32.totalorder %s20, 3
    %p231 = por %p229, %p230
    %p232 = scmp.ne.s32.totalorder %s224, %s227
    %p233 = scmp.eq.s32.totalorder %s20, 0
    %p234 = por %p232, %p233
    %p235 = scmp.ne.s32.totalorder %s224, %s227
    %p236 = scmp.eq.s32.totalorder %s25, 3
    %p237 = por %p235, %p236
    %p238 = scmp.ne.s32.totalorder %s227, %s228
    %p239 = scmp.eq.s32.totalorder %s25, 0
    %p240 = por %p238, %p239
    %p241 = scmp.ne.s32.totalorder %s227, %s228
    %p242 = scmp.eq.s32.totalorder %s26, 3
    %p243 = por %p241, %p242
    %p245 = scmp.ne.s32.totalorder %s228, %s244
    %p246 = scmp.eq.s32.totalorder %s26, 0
    %p247 = por %p245, %p246
    %s248 = ssub.s32 %s28, %s35
    %p249 = scmp.eq.s32.totalorder %s248, 0
    %s251 = sadd.s32 %s250, 1
    %s252 = scalar_select %p249, %s250, %s251
    %p255 = pneg %p249
    %p256 = scmp.eq.s32.totalorder %s20, 3
    %p257 = por %p255, %p256
    %p258 = scmp.ne.s32.totalorder %s250, %s253
    %p259 = scmp.eq.s32.totalorder %s20, 0
    %p260 = por %p258, %p259
    %p261 = scmp.ne.s32.totalorder %s250, %s253
    %p262 = scmp.eq.s32.totalorder %s25, 3
    %p263 = por %p261, %p262
    %p264 = scmp.ne.s32.totalorder %s253, %s254
    %p265 = scmp.eq.s32.totalorder %s25, 0
    %p266 = por %p264, %p265
    %p267 = scmp.ne.s32.totalorder %s253, %s254
    %p268 = scmp.eq.s32.totalorder %s26, 3
    %p269 = por %p267, %p268
    %p271 = scmp.ne.s32.totalorder %s254, %s270
    %p272 = scmp.eq.s32.totalorder %s26, 0
    %p273 = por %p271, %p272
    %s274 = ssub.s32 %s28, %s35
    %p275 = scmp.eq.s32.totalorder %s274, 0
    %s277 = sadd.s32 %s276, 1
    %s278 = scalar_select %p275, %s276, %s277
    %p281 = pneg %p275
    %p282 = scmp.eq.s32.totalorder %s20, 3
    %p283 = por %p281, %p282
    %p284 = scmp.ne.s32.totalorder %s276, %s279
    %p285 = scmp.eq.s32.totalorder %s20, 0
    %p286 = por %p284, %p285
    %p287 = scmp.ne.s32.totalorder %s276, %s279
    %p288 = scmp.eq.s32.totalorder %s25, 3
    %p289 = por %p287, %p288
    %p290 = scmp.ne.s32.totalorder %s279, %s280
    %p291 = scmp.eq.s32.totalorder %s25, 0
    %p292 = por %p290, %p291
    %p293 = scmp.ne.s32.totalorder %s279, %s280
    %p294 = scmp.eq.s32.totalorder %s26, 3
    %p295 = por %p293, %p294
    %p297 = scmp.ne.s32.totalorder %s280, %s296
    %p298 = scmp.eq.s32.totalorder %s26, 0
    %p299 = por %p297, %p298
    %s300 = ssub.s32 %s28, %s35
    %p301 = scmp.eq.s32.totalorder %s300, 0
    %s303 = sadd.s32 %s302, 1
    %s304 = scalar_select %p301, %s302, %s303
    %p307 = pneg %p301
    %p308 = scmp.eq.s32.totalorder %s20, 3
    %p309 = por %p307, %p308
    %p310 = scmp.ne.s32.totalorder %s302, %s305
    %p311 = scmp.eq.s32.totalorder %s20, 0
    %p312 = por %p310, %p311
    %p313 = scmp.ne.s32.totalorder %s302, %s305
    %p314 = scmp.eq.s32.totalorder %s25, 3
    %p315 = por %p313, %p314
    %p316 = scmp.ne.s32.totalorder %s305, %s306
    %p317 = scmp.eq.s32.totalorder %s25, 0
    %p318 = por %p316, %p317
    %p319 = scmp.ne.s32.totalorder %s305, %s306
    %p320 = scmp.eq.s32.totalorder %s26, 3
    %p321 = por %p319, %p320
    %p323 = scmp.ne.s32.totalorder %s306, %s322
    %p324 = scmp.eq.s32.totalorder %s26, 0
    %p325 = por %p323, %p324
    %s326 = ssub.s32 %s28, %s35
    %p327 = scmp.eq.s32.totalorder %s326, 0
    %s329 = sadd.s32 %s328, 1
    %s330 = scalar_select %p327, %s328, %s329
    %p333 = pneg %p327
    %p334 = scmp.eq.s32.totalorder %s20, 3
    %p335 = por %p333, %p334
    %p336 = scmp.ne.s32.totalorder %s328, %s331
    %p337 = scmp.eq.s32.totalorder %s20, 0
    %p338 = por %p336, %p337
    %p339 = scmp.ne.s32.totalorder %s328, %s331
    %p340 = scmp.eq.s32.totalorder %s25, 3
    %p341 = por %p339, %p340
    %p342 = scmp.ne.s32.totalorder %s331, %s332
    %p343 = scmp.eq.s32.totalorder %s25, 0
    %p344 = por %p342, %p343
    %p345 = scmp.ne.s32.totalorder %s331, %s332
    %p346 = scmp.eq.s32.totalorder %s26, 3
    %p347 = por %p345, %p346
    %p349 = scmp.ne.s32.totalorder %s332, %s348
    %p350 = scmp.eq.s32.totalorder %s26, 0
    %p351 = por %p349, %p350
    %s352 = ssub.s32 %s28, %s35
    %p353 = scmp.eq.s32.totalorder %s352, 0
    %s355 = sadd.s32 %s354, 1
    %s356 = scalar_select %p353, %s354, %s355
    %p359 = pneg %p353
    %p360 = scmp.eq.s32.totalorder %s20, 3
    %p361 = por %p359, %p360
    %p362 = scmp.ne.s32.totalorder %s354, %s357
    %p363 = scmp.eq.s32.totalorder %s20, 0
    %p364 = por %p362, %p363
    %p365 = scmp.ne.s32.totalorder %s354, %s357
    %p366 = scmp.eq.s32.totalorder %s25, 3
    %p367 = por %p365, %p366
    %p368 = scmp.ne.s32.totalorder %s357, %s358
    %p369 = scmp.eq.s32.totalorder %s25, 0
    %p370 = por %p368, %p369
    %p371 = scmp.ne.s32.totalorder %s357, %s358
    %p372 = scmp.eq.s32.totalorder %s26, 3
    %p373 = por %p371, %p372
    %p375 = scmp.ne.s32.totalorder %s358, %s374
    %p376 = scmp.eq.s32.totalorder %s26, 0
    %p377 = por %p375, %p376
    %s378 = ssub.s32 %s28, %s35
    %p379 = scmp.eq.s32.totalorder %s378, 0
    %s381 = sadd.s32 %s380, 1
    %s382 = scalar_select %p379, %s380, %s381
    %p385 = pneg %p379
    %p386 = scmp.eq.s32.totalorder %s20, 3
    %p387 = por %p385, %p386
    %p388 = scmp.ne.s32.totalorder %s380, %s383
    %p389 = scmp.eq.s32.totalorder %s20, 0
    %p390 = por %p388, %p389
    %p391 = scmp.ne.s32.totalorder %s380, %s383
    %p392 = scmp.eq.s32.totalorder %s25, 3
    %p393 = por %p391, %p392
    %p394 = scmp.ne.s32.totalorder %s383, %s384
    %p395 = scmp.eq.s32.totalorder %s25, 0
    %p396 = por %p394, %p395
    %p397 = scmp.ne.s32.totalorder %s383, %s384
    %p398 = scmp.eq.s32.totalorder %s26, 3
    %p399 = por %p397, %p398
    %p401 = scmp.ne.s32.totalorder %s384, %s400
    %p402 = scmp.eq.s32.totalorder %s26, 0
    %p403 = por %p401, %p402
    %s404 = ssub.s32 %s27, %s39
    %p405 = scmp.eq.s32.totalorder %s404, 0
    %s407 = sadd.s32 %s406, 1
    %s408 = scalar_select %p405, %s406, %s407
    %p411 = pneg %p405
    %p412 = scmp.eq.s32.totalorder %s20, 3
    %p413 = por %p411, %p412
    %p414 = scmp.ne.s32.totalorder %s406, %s409
    %p415 = scmp.eq.s32.totalorder %s20, 0
    %p416 = por %p414, %p415
    %p417 = scmp.ne.s32.totalorder %s406, %s409
    %p418 = scmp.eq.s32.totalorder %s25, 3
    %p419 = por %p417, %p418
    %p420 = scmp.ne.s32.totalorder %s409, %s410
    %p421 = scmp.eq.s32.totalorder %s25, 0
    %p422 = por %p420, %p421
    %p423 = scmp.ne.s32.totalorder %s409, %s410
    %p424 = scmp.eq.s32.totalorder %s26, 3
    %p425 = por %p423, %p424
    %p427 = scmp.ne.s32.totalorder %s410, %s426
    %p428 = scmp.eq.s32.totalorder %s26, 0
    %p429 = por %p427, %p428
    %p430 = scmp.le.s32.totalorder 1, %s20
    %p431 = scmp.lt.s32.totalorder %s20, 5
    %p432 = pnand %p430, %p431
    %p433 = pneg %p432
    // Predicated region
    $region9: #{text_image_forward.8} parent=5 // pred_check
      _
    $region10: #{text_image_forward.8} parent=5 // pred_check_branch
      %435 = sbr.rel (%p432) target = $region12
    $region11: #{text_image_forward.8} parent=5 // pred_region
      %s436 = ssub.s32 %s20, 1
    $region12: #{text_image_forward.8} parent=5 // pred_fallthru
      _
    %p437 = scmp.lt.s32.totalorder %s20, 4
    // Predicated region
    $region13: #{text_image_forward.8} parent=5 // pred_check
      %p438 = pneg %p437
    $region14: #{text_image_forward.8} parent=5 // pred_check_branch
      %440 = sbr.rel (%p438) target = $region16
    $region15: #{text_image_forward.8} parent=5 // pred_region
      // Predicated region
      $region17: #{text_image_forward.8} parent=15 // pred_check
        %p441 = pneg %p52
      $region18: #{text_image_forward.8} parent=15 // pred_check_branch
        %443 = sbr.rel (%p441) target = $region20
      $region19: #{text_image_forward.8} parent=15 // pred_region
        %p444 = scmp.lt.s32.totalorder %s27, 1
        %s445 = scalar_select %p444, %s27, 1
        %s446 = smul.addr %s445, 8
        %s447 = scalar_lea.vmem %s0, %s446
      $region20: #{text_image_forward.8} parent=15 // pred_fallthru
        _
      // Predicated region
      $region21: #{text_image_forward.8} parent=15 // pred_check
        %p448 = pneg %p78
      $region22: #{text_image_forward.8} parent=15 // pred_check_branch
        %450 = sbr.rel (%p448) target = $region24
      $region23: #{text_image_forward.8} parent=15 // pred_region
        %p451 = scmp.lt.s32.totalorder %s27, 1
        %s452 = scalar_select %p451, %s27, 1
        %s453 = scalar_lea.vmem %s1, %s452
      $region24: #{text_image_forward.8} parent=15 // pred_fallthru
        _
      // Predicated region
      $region25: #{text_image_forward.8} parent=15 // pred_check
        %p454 = pneg %p104
      $region26: #{text_image_forward.8} parent=15 // pred_check_branch
        %456 = sbr.rel (%p454) target = $region28
      $region27: #{text_image_forward.8} parent=15 // pred_region
        %p457 = scmp.lt.s32.totalorder %s28, 1
        %s458 = scalar_select %p457, %s28, 1
        %s459 = smul.addr %s458, 96
        %s460 = smul.addr %s459, 4
        %s461 = scalar_lea.vmem %s2, %s460
      $region28: #{text_image_forward.8} parent=15 // pred_fallthru
        _
      // Predicated region
      $region29: #{text_image_forward.8} parent=15 // pred_check
        %p462 = pneg %p130
      $region30: #{text_image_forward.8} parent=15 // pred_check_branch
        %464 = sbr.rel (%p462) target = $region32
      $region31: #{text_image_forward.8} parent=15 // pred_region
        %p465 = scmp.lt.s32.totalorder %s28, 1
        %s466 = scalar_select %p465, %s28, 1
        %s467 = smul.addr %s466, 6
        %s468 = scalar_lea.vmem %s3, %s467
      $region32: #{text_image_forward.8} parent=15 // pred_fallthru
        _
      // Predicated region
      $region33: #{text_image_forward.8} parent=15 // pred_check
        %p469 = pneg %p156
      $region34: #{text_image_forward.8} parent=15 // pred_check_branch
        %471 = sbr.rel (%p469) target = $region36
      $region35: #{text_image_forward.8} parent=15 // pred_region
        %p472 = scmp.lt.s32.totalorder %s28, 1
        %s473 = scalar_select %p472, %s28, 1
        %s474 = smul.addr %s473, 32
        %s475 = smul.addr %s474, 4
        %s476 = scalar_lea.vmem %s4, %s475
      $region36: #{text_image_forward.8} parent=15 // pred_fallthru
        _
      // Predicated region
      $region37: #{text_image_forward.8} parent=15 // pred_check
        %p477 = pneg %p182
      $region38: #{text_image_forward.8} parent=15 // pred_check_branch
        %479 = sbr.rel (%p477) target = $region40
      $region39: #{text_image_forward.8} parent=15 // pred_region
        %p480 = scmp.lt.s32.totalorder %s28, 1
        %s481 = scalar_select %p480, %s28, 1
        %s482 = scalar_lea.vmem %s5, %s481
      $region40: #{text_image_forward.8} parent=15 // pred_fallthru
        _
      // Predicated region
      $region41: #{text_image_forward.8} parent=15 // pred_check
        %p483 = pneg %p208
      $region42: #{text_image_forward.8} parent=15 // pred_check_branch
        %485 = sbr.rel (%p483) target = $region44
      $region43: #{text_image_forward.8} parent=15 // pred_region
        %p486 = scmp.lt.s32.totalorder %s28, 1
        %s487 = scalar_select %p486, %s28, 1
        %s488 = scalar_lea.vmem %s6, %s487
      $region44: #{text_image_forward.8} parent=15 // pred_fallthru
        _
      // Predicated region
      $region45: #{text_image_forward.8} parent=15 // pred_check
        %p489 = pneg %p234
      $region46: #{text_image_forward.8} parent=15 // pred_check_branch
        %491 = sbr.rel (%p489) target = $region48
      $region47: #{text_image_forward.8} parent=15 // pred_region
        %p492 = scmp.lt.s32.totalorder %s28, 1
        %s493 = scalar_select %p492, %s28, 1
        %s494 = scalar_lea.vmem %s7, %s493
      $region48: #{text_image_forward.8} parent=15 // pred_fallthru
        _
      // Predicated region
      $region49: #{text_image_forward.8} parent=15 // pred_check
        %p495 = pneg %p260
      $region50: #{text_image_forward.8} parent=15 // pred_check_branch
        %497 = sbr.rel (%p495) target = $region52
      $region51: #{text_image_forward.8} parent=15 // pred_region
        %p498 = scmp.lt.s32.totalorder %s28, 1
        %s499 = scalar_select %p498, %s28, 1
        %s500 = scalar_lea.vmem %s8, %s499
      $region52: #{text_image_forward.8} parent=15 // pred_fallthru
        _
      // Predicated region
      $region53: #{text_image_forward.8} parent=15 // pred_check
        %p501 = pneg %p286
      $region54: #{text_image_forward.8} parent=15 // pred_check_branch
        %503 = sbr.rel (%p501) target = $region56
      $region55: #{text_image_forward.8} parent=15 // pred_region
        %p504 = scmp.lt.s32.totalorder %s28, 1
        %s505 = scalar_select %p504, %s28, 1
        %s506 = scalar_lea.vmem %s9, %s505
      $region56: #{text_image_forward.8} parent=15 // pred_fallthru
        _
      // Predicated region
      $region57: #{text_image_forward.8} parent=15 // pred_check
        %p507 = pneg %p312
      $region58: #{text_image_forward.8} parent=15 // pred_check_branch
        %509 = sbr.rel (%p507) target = $region60
      $region59: #{text_image_forward.8} parent=15 // pred_region
        %p510 = scmp.lt.s32.totalorder %s28, 1
        %s511 = scalar_select %p510, %s28, 1
        %s512 = smul.addr %s511, 32
        %s513 = smul.addr %s512, 4
        %s514 = scalar_lea.vmem %s10, %s513
      $region60: #{text_image_forward.8} parent=15 // pred_fallthru
        _
      // Predicated region
      $region61: #{text_image_forward.8} parent=15 // pred_check
        %p515 = pneg %p338
      $region62: #{text_image_forward.8} parent=15 // pred_check_branch
        %517 = sbr.rel (%p515) target = $region64
      $region63: #{text_image_forward.8} parent=15 // pred_region
        %p518 = scmp.lt.s32.totalorder %s28, 1
        %s519 = scalar_select %p518, %s28, 1
        %s520 = smul.addr %s519, 2
        %s521 = scalar_lea.vmem %s11, %s520
      $region64: #{text_image_forward.8} parent=15 // pred_fallthru
        _
      // Predicated region
      $region65: #{text_image_forward.8} parent=15 // pred_check
        %p522 = pneg %p364
      $region66: #{text_image_forward.8} parent=15 // pred_check_branch
        %524 = sbr.rel (%p522) target = $region68
      $region67: #{text_image_forward.8} parent=15 // pred_region
        %p525 = scmp.lt.s32.totalorder %s28, 1
        %s526 = scalar_select %p525, %s28, 1
        %s527 = smul.addr %s526, 32
        %s528 = smul.addr %s527, 4
        %s529 = scalar_lea.vmem %s12, %s528
      $region68: #{text_image_forward.8} parent=15 // pred_fallthru
        _
      // Predicated region
      $region69: #{text_image_forward.8} parent=15 // pred_check
        %p530 = pneg %p390
      $region70: #{text_image_forward.8} parent=15 // pred_check_branch
        %532 = sbr.rel (%p530) target = $region72
      $region71: #{text_image_forward.8} parent=15 // pred_region
        %p533 = scmp.lt.s32.totalorder %s28, 1
        %s534 = scalar_select %p533, %s28, 1
        %s535 = scalar_lea.vmem %s13, %s534
      $region72: #{text_image_forward.8} parent=15 // pred_fallthru
        _
    $region16: #{text_image_forward.8} parent=5 // pred_fallthru
      _
    %p536 = scmp.le.s32.totalorder 1, %s20
    %p537 = scmp.lt.s32.totalorder %s20, 5
    %p538 = pnand %p536, %p537
    %p539 = pneg %p538
    // Predicated region
    $region73: #{text_image_forward.8} parent=5 // pred_check
      _
    $region74: #{text_image_forward.8} parent=5 // pred_check_branch
      %541 = sbr.rel (%p538) target = $region76
    $region75: #{text_image_forward.8} parent=5 // pred_region
      %s542 = ssub.s32 %s20, 1
      %p543 = scmp.lt.s32.totalorder %s29, 1
      %s544 = scalar_select %p543, %s29, 1
      %s545 = smul.addr %s544, 8
      %s546 = scalar_lea.vmem %s0, %s545
      %p547 = pneg %p58
      %p548 = pneg %p55
      %p549 = scmp.lt.s32.totalorder %s29, 1
      %s550 = scalar_select %p549, %s29, 1
      %s551 = scalar_lea.vmem %s1, %s550
      %p552 = pneg %p84
      %p553 = pneg %p81
      %p554 = scmp.lt.s32.totalorder %s30, 1
      %s555 = scalar_select %p554, %s30, 1
      %s556 = smul.addr %s555, 96
      %s557 = smul.addr %s556, 4
      %s558 = scalar_lea.vmem %s2, %s557
      %p559 = pneg %p110
      %p560 = pneg %p107
      %p561 = scmp.lt.s32.totalorder %s30, 1
      %s562 = scalar_select %p561, %s30, 1
      %s563 = smul.addr %s562, 6
      %s564 = scalar_lea.vmem %s3, %s563
      %p565 = pneg %p136
      %p566 = pneg %p133
      %p567 = scmp.lt.s32.totalorder %s30, 1
      %s568 = scalar_select %p567, %s30, 1
      %s569 = smul.addr %s568, 32
      %s570 = smul.addr %s569, 4
      %s571 = scalar_lea.vmem %s4, %s570
      %p572 = pneg %p162
      %p573 = pneg %p159
      %p574 = scmp.lt.s32.totalorder %s30, 1
      %s575 = scalar_select %p574, %s30, 1
      %s576 = scalar_lea.vmem %s5, %s575
      %p577 = pneg %p188
      %p578 = pneg %p185
      %p579 = scmp.lt.s32.totalorder %s30, 1
      %s580 = scalar_select %p579, %s30, 1
      %s581 = scalar_lea.vmem %s6, %s580
      %p582 = pneg %p214
      %p583 = pneg %p211
      %p584 = scmp.lt.s32.totalorder %s30, 1
      %s585 = scalar_select %p584, %s30, 1
      %s586 = scalar_lea.vmem %s7, %s585
      %p587 = pneg %p240
      %p588 = pneg %p237
      %p589 = scmp.lt.s32.totalorder %s30, 1
      %s590 = scalar_select %p589, %s30, 1
      %s591 = scalar_lea.vmem %s8, %s590
      %p592 = pneg %p266
      %p593 = pneg %p263
      %p594 = scmp.lt.s32.totalorder %s30, 1
      %s595 = scalar_select %p594, %s30, 1
      %s596 = scalar_lea.vmem %s9, %s595
      %p597 = pneg %p292
      %p598 = pneg %p289
      %p599 = scmp.lt.s32.totalorder %s30, 1
      %s600 = scalar_select %p599, %s30, 1
      %s601 = smul.addr %s600, 32
      %s602 = smul.addr %s601, 4
      %s603 = scalar_lea.vmem %s10, %s602
      %p604 = pneg %p318
      %p605 = pneg %p315
      %p606 = scmp.lt.s32.totalorder %s30, 1
      %s607 = scalar_select %p606, %s30, 1
      %s608 = smul.addr %s607, 2
      %s609 = scalar_lea.vmem %s11, %s608
      %p610 = pneg %p344
      %p611 = pneg %p341
      %p612 = scmp.lt.s32.totalorder %s30, 1
      %s613 = scalar_select %p612, %s30, 1
      %s614 = smul.addr %s613, 32
      %s615 = smul.addr %s614, 4
      %s616 = scalar_lea.vmem %s12, %s615
      %p617 = pneg %p370
      %p618 = pneg %p367
      %p619 = scmp.lt.s32.totalorder %s30, 1
      %s620 = scalar_select %p619, %s30, 1
      %s621 = scalar_lea.vmem %s13, %s620
      %p622 = pneg %p396
      %p623 = pneg %p393
      %p624 = pneg %p422
      %p625 = pneg %p419
      %p626 = scmp.lt.s32.totalorder %s29, 1
      %s627 = scalar_select %p626, %s29, 1
      %s628 = smul.addr %s627, 8
      %s629 = scalar_lea.vmem %s14, %s628
      %p630 = scmp.lt.s32.totalorder %s29, 1
      %s631 = scalar_select %p630, %s29, 1
      %s632 = smul.addr %s631, 8
      %s633 = scalar_lea.vmem %s0, %s632
      %p634 = scmp.lt.s32.totalorder %s29, 1
      %s635 = scalar_select %p634, %s29, 1
      %s636 = scalar_lea.vmem %s1, %s635
      %p637 = scmp.lt.s32.totalorder %s30, 1
      %s638 = scalar_select %p637, %s30, 1
      %s639 = smul.addr %s638, 96
      %s640 = smul.addr %s639, 4
      %s641 = scalar_lea.vmem %s2, %s640
      %p642 = scmp.lt.s32.totalorder %s30, 1
      %s643 = scalar_select %p642, %s30, 1
      %s644 = smul.addr %s643, 6
      %s645 = scalar_lea.vmem %s3, %s644
      %p646 = scmp.lt.s32.totalorder %s30, 1
      %s647 = scalar_select %p646, %s30, 1
      %s648 = smul.addr %s647, 32
      %s649 = smul.addr %s648, 4
      %s650 = scalar_lea.vmem %s4, %s649
      %p651 = scmp.lt.s32.totalorder %s30, 1
      %s652 = scalar_select %p651, %s30, 1
      %s653 = scalar_lea.vmem %s5, %s652
      %p654 = scmp.lt.s32.totalorder %s30, 1
      %s655 = scalar_select %p654, %s30, 1
      %s656 = scalar_lea.vmem %s6, %s655
      %p657 = scmp.lt.s32.totalorder %s30, 1
      %s658 = scalar_select %p657, %s30, 1
      %s659 = scalar_lea.vmem %s7, %s658
      %p660 = scmp.lt.s32.totalorder %s30, 1
      %s661 = scalar_select %p660, %s30, 1
      %s662 = scalar_lea.vmem %s8, %s661
      %p663 = scmp.lt.s32.totalorder %s30, 1
      %s664 = scalar_select %p663, %s30, 1
      %s665 = scalar_lea.vmem %s9, %s664
      %p666 = scmp.lt.s32.totalorder %s30, 1
      %s667 = scalar_select %p666, %s30, 1
      %s668 = smul.addr %s667, 32
      %s669 = smul.addr %s668, 4
      %s670 = scalar_lea.vmem %s10, %s669
      %p671 = scmp.lt.s32.totalorder %s30, 1
      %s672 = scalar_select %p671, %s30, 1
      %s673 = smul.addr %s672, 2
      %s674 = scalar_lea.vmem %s11, %s673
      %p675 = scmp.lt.s32.totalorder %s30, 1
      %s676 = scalar_select %p675, %s30, 1
      %s677 = smul.addr %s676, 32
      %s678 = smul.addr %s677, 4
      %s679 = scalar_lea.vmem %s12, %s678
      %p680 = scmp.lt.s32.totalorder %s30, 1
      %s681 = scalar_select %p680, %s30, 1
      %s682 = scalar_lea.vmem %s13, %s681
      %p683 = scmp.lt.s32.totalorder %s29, 1
      %s684 = scalar_select %p683, %s29, 1
      %s685 = smul.addr %s684, 8
      %s686 = scalar_lea.vmem %s14, %s685
      %p688 = scmp.eq.s32.totalorder %s30, 0
      // Predicated region
      $region77: #{text_image_forward.8} parent=75 // pred_check
        %p689 = pneg %p688
      $region78: #{text_image_forward.8} parent=75 // pred_check_branch
        %691 = sbr.rel (%p689) target = $region80
      $region79: #{text_image_forward.8} parent=75 // pred_region
        %v692 = vld [vmem:[%s633] sm:$0xff]
        %693 = vst [vmem:[%s686] sm:$0xff] %v692
      $region80: #{text_image_forward.8} parent=75 // pred_fallthru
        _
      %v694 = vld [vmem:[%s686] sm:$0xff]
      %v695 = vld [vmem:[%s636] sm:$0x1]
      %v697 = vlaneseq
      %v698 = vshrl.u32 %v697, 7
      %v699 = vsub.s32 0, %v698
      %v700 = vrot.slane %v695, %v699
      %702 = vadd.xlane.f32.xlu0 %v694
      %v703 = vpop.xlane.xlu0 %702
      %v704 = vrcp.pop 128.0
      %v705 = vmul.f32 %v703, %v704
      %v706 = vsub.f32 %v694, %v705
      %v707 = vmul.f32 %v706, %v706
      %708 = vadd.xlane.f32.xlu0 %v707
      %v709 = vpop.xlane.xlu0 %708
      %v710 = vmul.f32 %v709, %v704
      %v711 = vadd.f32 %v710, 1e-06
      %v712 = vrsqrt.pop %v711
      %v713 = vmul.f32 %v706, %v712
      %v714 = vld [vmem:[%s656] sm:$0x1]
      %v716 = vlaneseq
      %v717 = vshrl.u32 %v716, 7
      %v718 = vsub.s32 0, %v717
      %v719 = vrot.slane %v714, %v718
      %v721 = vmul.f32 %v713, %v719
      %v722 = vld [vmem:[%s659] sm:$0x1]
      %v724 = vlaneseq
      %v725 = vshrl.u32 %v724, 7
      %v726 = vsub.s32 0, %v725
      %v727 = vrot.slane %v722, %v726
      %v729 = vadd.f32 %v721, %v727
      %v730 = vld [vmem:[%s641] sm:$0xff]
      %v731 = vld [vmem:[%s641 + $0x8] sm:$0xff]
      %v732 = vld [vmem:[%s641 + $0x10] sm:$0xff]
      %v733 = vld [vmem:[%s641 + $0x18] sm:$0xff]
      %v734 = vld [vmem:[%s641 + $0x20] sm:$0xff]
      %v735 = vld [vmem:[%s641 + $0x28] sm:$0xff]
      %v736 = vld [vmem:[%s641 + $0x30] sm:$0xff]
      %v737 = vld [vmem:[%s641 + $0x38] sm:$0xff]
      %v738 = vld [vmem:[%s641 + $0x40] sm:$0xff]
      %v739 = vld [vmem:[%s641 + $0x48] sm:$0xff]
      %v740 = vld [vmem:[%s641 + $0x50] sm:$0xff]
      %v741 = vld [vmem:[%s641 + $0x58] sm:$0xff]
      %v742 = vld [vmem:[%s641 + $0x60] sm:$0xff]
      %v743 = vld [vmem:[%s641 + $0x68] sm:$0xff]
      %v744 = vld [vmem:[%s641 + $0x70] sm:$0xff]
      %v745 = vld [vmem:[%s641 + $0x78] sm:$0xff]
      %v746 = vld [vmem:[%s641 + $0x80] sm:$0xff]
      %v747 = vld [vmem:[%s641 + $0x88] sm:$0xff]
      %v748 = vld [vmem:[%s641 + $0x90] sm:$0xff]
      %v749 = vld [vmem:[%s641 + $0x98] sm:$0xff]
      %v750 = vld [vmem:[%s641 + $0xa0] sm:$0xff]
      %v751 = vld [vmem:[%s641 + $0xa8] sm:$0xff]
      %v752 = vld [vmem:[%s641 + $0xb0] sm:$0xff]
      %v753 = vld [vmem:[%s641 + $0xb8] sm:$0xff]
      %v754 = vld [vmem:[%s641 + $0xc0] sm:$0xff]
      %v755 = vld [vmem:[%s641 + $0xc8] sm:$0xff]
      %v756 = vld [vmem:[%s641 + $0xd0] sm:$0xff]
      %v757 = vld [vmem:[%s641 + $0xd8] sm:$0xff]
      %v758 = vld [vmem:[%s641 + $0xe0] sm:$0xff]
      %v759 = vld [vmem:[%s641 + $0xe8] sm:$0xff]
      %v760 = vld [vmem:[%s641 + $0xf0] sm:$0xff]
      %v761 = vld [vmem:[%s641 + $0xf8] sm:$0xff]
      %v762 = vld [vmem:[%s641 + $0x100] sm:$0xff]
      %v763 = vld [vmem:[%s641 + $0x108] sm:$0xff]
      %v764 = vld [vmem:[%s641 + $0x110] sm:$0xff]
      %v765 = vld [vmem:[%s641 + $0x118] sm:$0xff]
      %v766 = vld [vmem:[%s641 + $0x120] sm:$0xff]
      %v767 = vld [vmem:[%s641 + $0x128] sm:$0xff]
      %v768 = vld [vmem:[%s641 + $0x130] sm:$0xff]
      %v769 = vld [vmem:[%s641 + $0x138] sm:$0xff]
      %v770 = vld [vmem:[%s641 + $0x140] sm:$0xff]
      %v771 = vld [vmem:[%s641 + $0x148] sm:$0xff]
      %v772 = vld [vmem:[%s641 + $0x150] sm:$0xff]
      %v773 = vld [vmem:[%s641 + $0x158] sm:$0xff]
      %v774 = vld [vmem:[%s641 + $0x160] sm:$0xff]
      %v775 = vld [vmem:[%s641 + $0x168] sm:$0xff]
      %v776 = vld [vmem:[%s641 + $0x170] sm:$0xff]
      %v777 = vld [vmem:[%s641 + $0x178] sm:$0xff]
      %v778 = vld [vmem:[%s645] sm:$0x3f]
      %v779 = vpack.c.bf16 %v729, %v729
      %v781 = vlaneseq
      %v782 = vshrl.u32 %v781, 7
      %v783 = vsub.s32 0, %v782
      %v784 = vrot.slane %v778, %v783
      %v785 = vlaneseq
      %v786 = vshrl.u32 %v785, 7
      %v787 = vsub.s32 1, %v786
      %v788 = vrot.slane %v778, %v787
      %v789 = vlaneseq
      %v790 = vshrl.u32 %v789, 7
      %v791 = vsub.s32 2, %v790
      %v792 = vrot.slane %v778, %v791
      %v793 = vlaneseq
      %v794 = vshrl.u32 %v793, 7
      %v795 = vsub.s32 3, %v794
      %v796 = vrot.slane %v778, %v795
      %v797 = vlaneseq
      %v798 = vshrl.u32 %v797, 7
      %v799 = vsub.s32 4, %v798
      %v800 = vrot.slane %v778, %v799
      %v801 = vlaneseq
      %v802 = vshrl.u32 %v801, 7
      %v803 = vsub.s32 5, %v802
      %v804 = vrot.slane %v778, %v803
      %v859 = vunpack.c.l.b16 %v730
      %v860 = vunpack.c.h.b16 %v730
      %v861 = vunpack.c.l.b16 %v731
      %v862 = vunpack.c.h.b16 %v731
      %v863 = vunpack.c.l.b16 %v732
      %v864 = vunpack.c.h.b16 %v732
      %v865 = vunpack.c.l.b16 %v733
      %v866 = vunpack.c.h.b16 %v733
      %v867 = vunpack.c.l.b16 %v734
      %v868 = vunpack.c.h.b16 %v734
      %v869 = vunpack.c.l.b16 %v735
      %v870 = vunpack.c.h.b16 %v735
      %v871 = vunpack.c.l.b16 %v736
      %v872 = vunpack.c.h.b16 %v736
      %v873 = vunpack.c.l.b16 %v737
      %v874 = vunpack.c.h.b16 %v737
      %v875 = vunpack.c.l.b16 %v738
      %v876 = vunpack.c.h.b16 %v738
      %v877 = vunpack.c.l.b16 %v739
      %v878 = vunpack.c.h.b16 %v739
      %v879 = vunpack.c.l.b16 %v740
      %v880 = vunpack.c.h.b16 %v740
      %v881 = vunpack.c.l.b16 %v741
      %v882 = vunpack.c.h.b16 %v741
      %v883 = vunpack.c.l.b16 %v742
      %v884 = vunpack.c.h.b16 %v742
      %v885 = vunpack.c.l.b16 %v743
      %v886 = vunpack.c.h.b16 %v743
      %v887 = vunpack.c.l.b16 %v744
      %v888 = vunpack.c.h.b16 %v744
      %v889 = vunpack.c.l.b16 %v745
      %v890 = vunpack.c.h.b16 %v745
      %v891 = vunpack.c.l.b16 %v746
      %v892 = vunpack.c.h.b16 %v746
      %v893 = vunpack.c.l.b16 %v747
      %v894 = vunpack.c.h.b16 %v747
      %v895 = vunpack.c.l.b16 %v748
      %v896 = vunpack.c.h.b16 %v748
      %v897 = vunpack.c.l.b16 %v749
      %v898 = vunpack.c.h.b16 %v749
      %v899 = vunpack.c.l.b16 %v750
      %v900 = vunpack.c.h.b16 %v750
      %v901 = vunpack.c.l.b16 %v751
      %v902 = vunpack.c.h.b16 %v751
      %v903 = vunpack.c.l.b16 %v752
      %v904 = vunpack.c.h.b16 %v752
      %v905 = vunpack.c.l.b16 %v753
      %v906 = vunpack.c.h.b16 %v753
      %v907 = vunpack.c.l.b16 %v754
      %v908 = vunpack.c.h.b16 %v754
      %v909 = vunpack.c.l.b16 %v755
      %v910 = vunpack.c.h.b16 %v755
      %v911 = vunpack.c.l.b16 %v756
      %v912 = vunpack.c.h.b16 %v756
      %v913 = vunpack.c.l.b16 %v757
      %v914 = vunpack.c.h.b16 %v757
      %v915 = vunpack.c.l.b16 %v758
      %v916 = vunpack.c.h.b16 %v758
      %v917 = vunpack.c.l.b16 %v759
      %v918 = vunpack.c.h.b16 %v759
      %v919 = vunpack.c.l.b16 %v760
      %v920 = vunpack.c.h.b16 %v760
      %v921 = vunpack.c.l.b16 %v761
      %v922 = vunpack.c.h.b16 %v761
      %v923 = vunpack.c.l.b16 %v762
      %v924 = vunpack.c.h.b16 %v762
      %v925 = vunpack.c.l.b16 %v763
      %v926 = vunpack.c.h.b16 %v763
      %v927 = vunpack.c.l.b16 %v764
      %v928 = vunpack.c.h.b16 %v764
      %v929 = vunpack.c.l.b16 %v765
      %v930 = vunpack.c.h.b16 %v765
      %v931 = vunpack.c.l.b16 %v766
      %v932 = vunpack.c.h.b16 %v766
      %v933 = vunpack.c.l.b16 %v767
      %v934 = vunpack.c.h.b16 %v767
      %v935 = vunpack.c.l.b16 %v768
      %v936 = vunpack.c.h.b16 %v768
      %v937 = vunpack.c.l.b16 %v769
      %v938 = vunpack.c.h.b16 %v769
      %v939 = vunpack.c.l.b16 %v770
      %v940 = vunpack.c.h.b16 %v770
      %v941 = vunpack.c.l.b16 %v771
      %v942 = vunpack.c.h.b16 %v771
      %v943 = vunpack.c.l.b16 %v772
      %v944 = vunpack.c.h.b16 %v772
      %v945 = vunpack.c.l.b16 %v773
      %v946 = vunpack.c.h.b16 %v773
      %v947 = vunpack.c.l.b16 %v774
      %v948 = vunpack.c.h.b16 %v774
      %v949 = vunpack.c.l.b16 %v775
      %v950 = vunpack.c.h.b16 %v775
      %v951 = vunpack.c.l.b16 %v776
      %v952 = vunpack.c.h.b16 %v776
      %v953 = vunpack.c.l.b16 %v777
      %v954 = vunpack.c.h.b16 %v777
      %v955 = vpack.c.b16 %v865, %v859
      %v956 = vpack.c.b16 %v866, %v860
      %v957 = vpack.c.b16 %v867, %v861
      %v958 = vpack.c.b16 %v868, %v862
      %v959 = vpack.c.b16 %v869, %v863
      %v960 = vpack.c.b16 %v870, %v864
      %v961 = vpack.c.b16 %v877, %v871
      %v962 = vpack.c.b16 %v878, %v872
      %v963 = vpack.c.b16 %v879, %v873
      %v964 = vpack.c.b16 %v880, %v874
      %v965 = vpack.c.b16 %v881, %v875
      %v966 = vpack.c.b16 %v882, %v876
      %v967 = vpack.c.b16 %v889, %v883
      %v968 = vpack.c.b16 %v890, %v884
      %v969 = vpack.c.b16 %v891, %v885
      %v970 = vpack.c.b16 %v892, %v886
      %v971 = vpack.c.b16 %v893, %v887
      %v972 = vpack.c.b16 %v894, %v888
      %v973 = vpack.c.b16 %v901, %v895
      %v974 = vpack.c.b16 %v902, %v896
      %v975 = vpack.c.b16 %v903, %v897
      %v976 = vpack.c.b16 %v904, %v898
      %v977 = vpack.c.b16 %v905, %v899
      %v978 = vpack.c.b16 %v906, %v900
      %v979 = vpack.c.b16 %v913, %v907
      %v980 = vpack.c.b16 %v914, %v908
      %v981 = vpack.c.b16 %v915, %v909
      %v982 = vpack.c.b16 %v916, %v910
      %v983 = vpack.c.b16 %v917, %v911
      %v984 = vpack.c.b16 %v918, %v912
      %v985 = vpack.c.b16 %v925, %v919
      %v986 = vpack.c.b16 %v926, %v920
      %v987 = vpack.c.b16 %v927, %v921
      %v988 = vpack.c.b16 %v928, %v922
      %v989 = vpack.c.b16 %v929, %v923
      %v990 = vpack.c.b16 %v930, %v924
      %v991 = vpack.c.b16 %v937, %v931
      %v992 = vpack.c.b16 %v938, %v932
      %v993 = vpack.c.b16 %v939, %v933
      %v994 = vpack.c.b16 %v940, %v934
      %v995 = vpack.c.b16 %v941, %v935
      %v996 = vpack.c.b16 %v942, %v936
      %v997 = vpack.c.b16 %v949, %v943
      %v998 = vpack.c.b16 %v950, %v944
      %v999 = vpack.c.b16 %v951, %v945
      %v1000 = vpack.c.b16 %v952, %v946
      %v1001 = vpack.c.b16 %v953, %v947
      %v1002 = vpack.c.b16 %v954, %v948
      %1051 = vmatprep.subr.bf16.mxu0 %v998
      %1052 = vmatpush1.bf16.msra.mxu0 %v997
      %1053 = vmatprep.subr.bf16.mxu0 %v992
      %1054 = vmatpush1.bf16.msra.mxu0 %v991
      %1055 = vmatprep.subr.bf16.mxu0 %v986
      %1056 = vmatpush1.bf16.msra.mxu0 %v985
      %1057 = vmatprep.subr.bf16.mxu0 %v980
      %1058 = vmatpush1.bf16.msra.mxu0 %v979
      %1059 = vmatprep.subr.bf16.mxu0 %v974
      %1060 = vmatpush1.bf16.msra.mxu0 %v973
      %1061 = vmatprep.subr.bf16.mxu0 %v968
      %1062 = vmatpush1.bf16.msra.mxu0 %v967
      %1063 = vmatprep.subr.bf16.mxu0 %v962
      %1064 = vmatpush1.bf16.msra.mxu0 %v961
      %1065 = vmatprep.subr.bf16.mxu0 %v956
      %1066 = vmatpush1.bf16.msra.mxu0 %v955
      %1067 = vmatprep.subr.bf16.mxu0 0
      %1068 = vmatpush2.bf16.msra.mxu0 0
      %1069 = vmatprep.subr.bf16.mxu0 0
      %1070 = vmatpush2.bf16.msra.mxu0 0
      %1071 = vmatprep.subr.bf16.mxu0 0
      %1072 = vmatpush2.bf16.msra.mxu0 0
      %1073 = vmatprep.subr.bf16.mxu0 0
      %1074 = vmatpush2.bf16.msra.mxu0 0
      %1075 = vmatprep.subr.bf16.mxu0 0
      %1076 = vmatpush2.bf16.msra.mxu0 0
      %1077 = vmatprep.subr.bf16.mxu0 0
      %1078 = vmatpush2.bf16.msra.mxu0 0
      %1079 = vmatprep.subr.bf16.mxu0 0
      %1080 = vmatpush2.bf16.msra.mxu0 0
      %1081 = vmatprep.subr.bf16.mxu0 0
      %1082 = vmatpush2.bf16.msra.mxu0 0
      %1083 = vmatprep.mubr.bf16.mxu0 0
      %1084 = vmatmul.mubr.bf16.gmra.mxu0 %v779
      %v1085 = vpop.f32.mrf.mxu0
      %v1086 = vadd.f32 %v784, %v1085
      %v1087 = vpop.f32.mrf.mxu0
      %v1088 = vadd.f32 %v788, %v1087
      %v1089 = vpop.f32.mrf.mxu0
      %v1090 = vpop.f32.mrf.mxu0
      %1091 = vdwg.mxu0
      %1092 = vmatprep.subr.bf16.mxu0 %v1000
      %1093 = vmatpush1.bf16.msra.mxu0 %v999
      %1094 = vmatprep.subr.bf16.mxu0 %v994
      %1095 = vmatpush1.bf16.msra.mxu0 %v993
      %1096 = vmatprep.subr.bf16.mxu0 %v988
      %1097 = vmatpush1.bf16.msra.mxu0 %v987
      %1098 = vmatprep.subr.bf16.mxu0 %v982
      %1099 = vmatpush1.bf16.msra.mxu0 %v981
      %1100 = vmatprep.subr.bf16.mxu0 %v976
      %1101 = vmatpush1.bf16.msra.mxu0 %v975
      %1102 = vmatprep.subr.bf16.mxu0 %v970
      %1103 = vmatpush1.bf16.msra.mxu0 %v969
      %1104 = vmatprep.subr.bf16.mxu0 %v964
      %1105 = vmatpush1.bf16.msra.mxu0 %v963
      %1106 = vmatprep.subr.bf16.mxu0 %v958
      %1107 = vmatpush1.bf16.msra.mxu0 %v957
      %1108 = vmatprep.subr.bf16.mxu0 0
      %1109 = vmatpush2.bf16.msra.mxu0 0
      %1110 = vmatprep.subr.bf16.mxu0 0
      %1111 = vmatpush2.bf16.msra.mxu0 0
      %1112 = vmatprep.subr.bf16.mxu0 0
      %1113 = vmatpush2.bf16.msra.mxu0 0
      %1114 = vmatprep.subr.bf16.mxu0 0
      %1115 = vmatpush2.bf16.msra.mxu0 0
      %1116 = vmatprep.subr.bf16.mxu0 0
      %1117 = vmatpush2.bf16.msra.mxu0 0
      %1118 = vmatprep.subr.bf16.mxu0 0
      %1119 = vmatpush2.bf16.msra.mxu0 0
      %1120 = vmatprep.subr.bf16.mxu0 0
      %1121 = vmatpush2.bf16.msra.mxu0 0
      %1122 = vmatprep.subr.bf16.mxu0 0
      %1123 = vmatpush2.bf16.msra.mxu0 0
      %1124 = vmatprep.mubr.bf16.mxu0 0
      %1125 = vmatmul.mubr.bf16.gmra.mxu0 %v779
      %v1126 = vpop.f32.mrf.mxu0
      %v1127 = vadd.f32 %v792, %v1126
      %v1128 = vpop.f32.mrf.mxu0
      %v1129 = vadd.f32 %v796, %v1128
      %v1130 = vpop.f32.mrf.mxu0
      %v1131 = vpop.f32.mrf.mxu0
      %1132 = vdwg.mxu0
      %1133 = vmatprep.subr.bf16.mxu0 %v1002
      %1134 = vmatpush1.bf16.msra.mxu0 %v1001
      %1135 = vmatprep.subr.bf16.mxu0 %v996
      %1136 = vmatpush1.bf16.msra.mxu0 %v995
      %1137 = vmatprep.subr.bf16.mxu0 %v990
      %1138 = vmatpush1.bf16.msra.mxu0 %v989
      %1139 = vmatprep.subr.bf16.mxu0 %v984
      %1140 = vmatpush1.bf16.msra.mxu0 %v983
      %1141 = vmatprep.subr.bf16.mxu0 %v978
      %1142 = vmatpush1.bf16.msra.mxu0 %v977
      %1143 = vmatprep.subr.bf16.mxu0 %v972
      %1144 = vmatpush1.bf16.msra.mxu0 %v971
      %1145 = vmatprep.subr.bf16.mxu0 %v966
      %1146 = vmatpush1.bf16.msra.mxu0 %v965
      %1147 = vmatprep.subr.bf16.mxu0 %v960
      %1148 = vmatpush1.bf16.msra.mxu0 %v959
      %1149 = vmatprep.subr.bf16.mxu0 0
      %1150 = vmatpush2.bf16.msra.mxu0 0
      %1151 = vmatprep.subr.bf16.mxu0 0
      %1152 = vmatpush2.bf16.msra.mxu0 0
      %1153 = vmatprep.subr.bf16.mxu0 0
      %1154 = vmatpush2.bf16.msra.mxu0 0
      %1155 = vmatprep.subr.bf16.mxu0 0
      %1156 = vmatpush2.bf16.msra.mxu0 0
      %1157 = vmatprep.subr.bf16.mxu0 0
      %1158 = vmatpush2.bf16.msra.mxu0 0
      %1159 = vmatprep.subr.bf16.mxu0 0
      %1160 = vmatpush2.bf16.msra.mxu0 0
      %1161 = vmatprep.subr.bf16.mxu0 0
      %1162 = vmatpush2.bf16.msra.mxu0 0
      %1163 = vmatprep.subr.bf16.mxu0 0
      %1164 = vmatpush2.bf16.msra.mxu0 0
      %1165 = vmatprep.mubr.bf16.mxu0 0
      %1166 = vmatmul.mubr.bf16.gmra.mxu0 %v779
      %v1167 = vpop.f32.mrf.mxu0
      %v1168 = vadd.f32 %v800, %v1167
      %v1169 = vpop.f32.mrf.mxu0
      %v1170 = vadd.f32 %v804, %v1169
      %v1171 = vpop.f32.mrf.mxu0
      %v1172 = vpop.f32.mrf.mxu0
      %1173 = vdwg.mxu0
      %v1174 = vpack.c.bf16 %v1086, %v1086
      %v1175 = vpack.c.bf16 %v1127, %v1127
      %1176 = vmatprep.subr.bf16.mxu0 0
      %1177 = vmatpush1.bf16.xpose.msra.mxu0 0
      %1178 = vmatprep.subr.bf16.mxu0 0
      %1179 = vmatpush1.bf16.xpose.msra.mxu0 0
      %1180 = vmatprep.subr.bf16.mxu0 0
      %1181 = vmatpush1.bf16.xpose.msra.mxu0 0
      %1182 = vmatprep.subr.bf16.mxu0 0
      %1183 = vmatpush1.bf16.xpose.msra.mxu0 0
      %1184 = vmatprep.subr.bf16.mxu0 0
      %1185 = vmatpush1.bf16.xpose.msra.mxu0 0
      %1186 = vmatprep.subr.bf16.mxu0 0
      %1187 = vmatpush1.bf16.xpose.msra.mxu0 0
      %1188 = vmatprep.subr.bf16.mxu0 0
      %1189 = vmatpush1.bf16.xpose.msra.mxu0 0
      %1190 = vmatprep.subr.bf16.mxu0 0
      %1191 = vmatpush1.bf16.xpose.msra.mxu0 %v1175
      %1192 = vmatprep.subr.bf16.mxu0 0
      %1193 = vmatpush2.bf16.xpose.msra.mxu0 0
      %1194 = vmatprep.subr.bf16.mxu0 0
      %1195 = vmatpush2.bf16.xpose.msra.mxu0 0
      %1196 = vmatprep.subr.bf16.mxu0 0
      %1197 = vmatpush2.bf16.xpose.msra.mxu0 0
      %1198 = vmatprep.subr.bf16.mxu0 0
      %1199 = vmatpush2.bf16.xpose.msra.mxu0 0
      %1200 = vmatprep.subr.bf16.mxu0 0
      %1201 = vmatpush2.bf16.xpose.msra.mxu0 0
      %1202 = vmatprep.subr.bf16.mxu0 0
      %1203 = vmatpush2.bf16.xpose.msra.mxu0 0
      %1204 = vmatprep.subr.bf16.mxu0 0
      %1205 = vmatpush2.bf16.xpose.msra.mxu0 0
      %1206 = vmatprep.subr.bf16.mxu0 0
      %1207 = vmatpush2.bf16.xpose.msra.mxu0 0
      %1208 = vmatprep.mubr.bf16.mxu0 0
      %1209 = vmatmul.mubr.bf16.gmra.mxu0 %v1174
      %v1210 = vpop.f32.mrf.mxu0
      %v1211 = vadd.f32 %v700, %v1210
      %v1212 = vpop.f32.mrf.mxu0
      %v1213 = vpop.f32.mrf.mxu0
      %v1214 = vpop.f32.mrf.mxu0
      %1215 = vdwg.mxu0
      %vm1216 = vcmask 64512
      %v1217 = vsel %vm1216, %v1211, -inf
      %1218 = vmax.xlane.f32.xlu0 %v1217
      %v1219 = vpop.xlane.xlu0 %1218
      %v1220 = vsub.f32 %v1211, %v1219
      %v1221 = vmul.f32 %v1220, 1.442695
      %v1222 = vpow.pop %v1221
      %v1223 = vsel %vm1216, %v1222, 0.0
      %1224 = vadd.xlane.f32.xlu0 %v1223
      %v1225 = vpop.xlane.xlu0 %1224
      %v1226 = vrcp.pop %v1225
      %v1227 = vmul.f32 %v1222, %v1226
      %v1228 = vpack.c.bf16 %v1227, %v1227
      %v1229 = vpack.c.bf16 %v1168, %v1168
      %v1231 = vsel %vm1216, %v1228, 0
      %vm1233 = vcmask 1043456
      %v1235 = vsel %vm1233, %v1229, 0
      %1237 = vmatprep.subr.bf16.mxu0 0
      %1238 = vmatpush1.bf16.msra.mxu0 0
      %1239 = vmatprep.subr.bf16.mxu0 0
      %1240 = vmatpush1.bf16.msra.mxu0 0
      %1241 = vmatprep.subr.bf16.mxu0 0
      %1242 = vmatpush1.bf16.msra.mxu0 0
      %1243 = vmatprep.subr.bf16.mxu0 0
      %1244 = vmatpush1.bf16.msra.mxu0 0
      %1245 = vmatprep.subr.bf16.mxu0 0
      %1246 = vmatpush1.bf16.msra.mxu0 0
      %1247 = vmatprep.subr.bf16.mxu0 0
      %1248 = vmatpush1.bf16.msra.mxu0 0
      %1249 = vmatprep.subr.bf16.mxu0 0
      %1250 = vmatpush1.bf16.msra.mxu0 0
      %1251 = vmatprep.subr.bf16.mxu0 0
      %1252 = vmatpush1.bf16.msra.mxu0 %v1235
      %1253 = vmatprep.subr.bf16.mxu0 0
      %1254 = vmatpush2.bf16.msra.mxu0 0
      %1255 = vmatprep.subr.bf16.mxu0 0
      %1256 = vmatpush2.bf16.msra.mxu0 0
      %1257 = vmatprep.subr.bf16.mxu0 0
      %1258 = vmatpush2.bf16.msra.mxu0 0
      %1259 = vmatprep.subr.bf16.mxu0 0
      %1260 = vmatpush2.bf16.msra.mxu0 0
      %1261 = vmatprep.subr.bf16.mxu0 0
      %1262 = vmatpush2.bf16.msra.mxu0 0
      %1263 = vmatprep.subr.bf16.mxu0 0
      %1264 = vmatpush2.bf16.msra.mxu0 0
      %1265 = vmatprep.subr.bf16.mxu0 0
      %1266 = vmatpush2.bf16.msra.mxu0 0
      %1267 = vmatprep.subr.bf16.mxu0 0
      %1268 = vmatpush2.bf16.msra.mxu0 0
      %1269 = vmatprep.mubr.bf16.mxu0 0
      %1270 = vmatmul.mubr.bf16.gmra.mxu0 %v1231
      %v1271 = vpop.f32.mrf.mxu0
      %v1272 = vadd.f32 0.0, %v1271
      %v1273 = vpop.f32.mrf.mxu0
      %v1274 = vpop.f32.mrf.mxu0
      %v1275 = vpop.f32.mrf.mxu0
      %1276 = vdwg.mxu0
      %v1277 = vpack.c.bf16 %v1088, %v1088
      %v1278 = vpack.c.bf16 %v1129, %v1129
      %1279 = vmatprep.subr.bf16.mxu0 0
      %1280 = vmatpush1.bf16.xpose.msra.mxu0 0
      %1281 = vmatprep.subr.bf16.mxu0 0
      %1282 = vmatpush1.bf16.xpose.msra.mxu0 0
      %1283 = vmatprep.subr.bf16.mxu0 0
      %1284 = vmatpush1.bf16.xpose.msra.mxu0 0
      %1285 = vmatprep.subr.bf16.mxu0 0
      %1286 = vmatpush1.bf16.xpose.msra.mxu0 0
      %1287 = vmatprep.subr.bf16.mxu0 0
      %1288 = vmatpush1.bf16.xpose.msra.mxu0 0
      %1289 = vmatprep.subr.bf16.mxu0 0
      %1290 = vmatpush1.bf16.xpose.msra.mxu0 0
      %1291 = vmatprep.subr.bf16.mxu0 0
      %1292 = vmatpush1.bf16.xpose.msra.mxu0 0
      %1293 = vmatprep.subr.bf16.mxu0 0
      %1294 = vmatpush1.bf16.xpose.msra.mxu0 %v1278
      %1295 = vmatprep.subr.bf16.mxu0 0
      %1296 = vmatpush2.bf16.xpose.msra.mxu0 0
      %1297 = vmatprep.subr.bf16.mxu0 0
      %1298 = vmatpush2.bf16.xpose.msra.mxu0 0
      %1299 = vmatprep.subr.bf16.mxu0 0
      %1300 = vmatpush2.bf16.xpose.msra.mxu0 0
      %1301 = vmatprep.subr.bf16.mxu0 0
      %1302 = vmatpush2.bf16.xpose.msra.mxu0 0
      %1303 = vmatprep.subr.bf16.mxu0 0
      %1304 = vmatpush2.bf16.xpose.msra.mxu0 0
      %1305 = vmatprep.subr.bf16.mxu0 0
      %1306 = vmatpush2.bf16.xpose.msra.mxu0 0
      %1307 = vmatprep.subr.bf16.mxu0 0
      %1308 = vmatpush2.bf16.xpose.msra.mxu0 0
      %1309 = vmatprep.subr.bf16.mxu0 0
      %1310 = vmatpush2.bf16.xpose.msra.mxu0 0
      %1311 = vmatprep.mubr.bf16.mxu0 0
      %1312 = vmatmul.mubr.bf16.gmra.mxu0 %v1277
      %v1313 = vpop.f32.mrf.mxu0
      %v1314 = vadd.f32 %v700, %v1313
      %v1315 = vpop.f32.mrf.mxu0
      %v1316 = vpop.f32.mrf.mxu0
      %v1317 = vpop.f32.mrf.mxu0
      %1318 = vdwg.mxu0
      %v1319 = vsel %vm1216, %v1314, -inf
      %1320 = vmax.xlane.f32.xlu0 %v1319
      %v1321 = vpop.xlane.xlu0 %1320
      %v1322 = vsub.f32 %v1314, %v1321
      %v1323 = vmul.f32 %v1322, 1.442695
      %v1324 = vpow.pop %v1323
      %v1325 = vsel %vm1216, %v1324, 0.0
      %1326 = vadd.xlane.f32.xlu0 %v1325
      %v1327 = vpop.xlane.xlu0 %1326
      %v1328 = vrcp.pop %v1327
      %v1329 = vmul.f32 %v1324, %v1328
      %v1330 = vpack.c.bf16 %v1329, %v1329
      %v1331 = vpack.c.bf16 %v1170, %v1170
      %v1333 = vsel %vm1216, %v1330, 0
      %v1336 = vsel %vm1233, %v1331, 0
      %1338 = vmatprep.subr.bf16.mxu0 0
      %1339 = vmatpush1.bf16.msra.mxu0 0
      %1340 = vmatprep.subr.bf16.mxu0 0
      %1341 = vmatpush1.bf16.msra.mxu0 0
      %1342 = vmatprep.subr.bf16.mxu0 0
      %1343 = vmatpush1.bf16.msra.mxu0 0
      %1344 = vmatprep.subr.bf16.mxu0 0
      %1345 = vmatpush1.bf16.msra.mxu0 0
      %1346 = vmatprep.subr.bf16.mxu0 0
      %1347 = vmatpush1.bf16.msra.mxu0 0
      %1348 = vmatprep.subr.bf16.mxu0 0
      %1349 = vmatpush1.bf16.msra.mxu0 0
      %1350 = vmatprep.subr.bf16.mxu0 0
      %1351 = vmatpush1.bf16.msra.mxu0 0
      %1352 = vmatprep.subr.bf16.mxu0 0
      %1353 = vmatpush1.bf16.msra.mxu0 %v1336
      %1354 = vmatprep.subr.bf16.mxu0 0
      %1355 = vmatpush2.bf16.msra.mxu0 0
      %1356 = vmatprep.subr.bf16.mxu0 0
      %1357 = vmatpush2.bf16.msra.mxu0 0
      %1358 = vmatprep.subr.bf16.mxu0 0
      %1359 = vmatpush2.bf16.msra.mxu0 0
      %1360 = vmatprep.subr.bf16.mxu0 0
      %1361 = vmatpush2.bf16.msra.mxu0 0
      %1362 = vmatprep.subr.bf16.mxu0 0
      %1363 = vmatpush2.bf16.msra.mxu0 0
      %1364 = vmatprep.subr.bf16.mxu0 0
      %1365 = vmatpush2.bf16.msra.mxu0 0
      %1366 = vmatprep.subr.bf16.mxu0 0
      %1367 = vmatpush2.bf16.msra.mxu0 0
      %1368 = vmatprep.subr.bf16.mxu0 0
      %1369 = vmatpush2.bf16.msra.mxu0 0
      %1370 = vmatprep.mubr.bf16.mxu0 0
      %1371 = vmatmul.mubr.bf16.gmra.mxu0 %v1333
      %v1372 = vpop.f32.mrf.mxu0
      %v1373 = vadd.f32 0.0, %v1372
      %v1374 = vpop.f32.mrf.mxu0
      %v1375 = vpop.f32.mrf.mxu0
      %v1376 = vpop.f32.mrf.mxu0
      %1377 = vdwg.mxu0
      %v1378 = vpack.c.bf16 %v1272, %v1272
      %v1379 = vpack.c.bf16 %v1373, %v1373
      %v1380 = vld [vmem:[%s650] sm:$0xf]
      %v1381 = vld [vmem:[%s650 + $0x4] sm:$0xf]
      %v1382 = vld [vmem:[%s650 + $0x8] sm:$0xf]
      %v1383 = vld [vmem:[%s650 + $0xc] sm:$0xf]
      %v1384 = vld [vmem:[%s650 + $0x10] sm:$0xf]
      %v1385 = vld [vmem:[%s650 + $0x14] sm:$0xf]
      %v1386 = vld [vmem:[%s650 + $0x18] sm:$0xf]
      %v1387 = vld [vmem:[%s650 + $0x1c] sm:$0xf]
      %v1388 = vld [vmem:[%s650 + $0x20] sm:$0xf]
      %v1389 = vld [vmem:[%s650 + $0x24] sm:$0xf]
      %v1390 = vld [vmem:[%s650 + $0x28] sm:$0xf]
      %v1391 = vld [vmem:[%s650 + $0x2c] sm:$0xf]
      %v1392 = vld [vmem:[%s650 + $0x30] sm:$0xf]
      %v1393 = vld [vmem:[%s650 + $0x34] sm:$0xf]
      %v1394 = vld [vmem:[%s650 + $0x38] sm:$0xf]
      %v1395 = vld [vmem:[%s650 + $0x3c] sm:$0xf]
      %v1396 = vld [vmem:[%s650 + $0x40] sm:$0xf]
      %v1397 = vld [vmem:[%s650 + $0x44] sm:$0xf]
      %v1398 = vld [vmem:[%s650 + $0x48] sm:$0xf]
      %v1399 = vld [vmem:[%s650 + $0x4c] sm:$0xf]
      %v1400 = vld [vmem:[%s650 + $0x50] sm:$0xf]
      %v1401 = vld [vmem:[%s650 + $0x54] sm:$0xf]
      %v1402 = vld [vmem:[%s650 + $0x58] sm:$0xf]
      %v1403 = vld [vmem:[%s650 + $0x5c] sm:$0xf]
      %v1404 = vld [vmem:[%s650 + $0x60] sm:$0xf]
      %v1405 = vld [vmem:[%s650 + $0x64] sm:$0xf]
      %v1406 = vld [vmem:[%s650 + $0x68] sm:$0xf]
      %v1407 = vld [vmem:[%s650 + $0x6c] sm:$0xf]
      %v1408 = vld [vmem:[%s650 + $0x70] sm:$0xf]
      %v1409 = vld [vmem:[%s650 + $0x74] sm:$0xf]
      %v1410 = vld [vmem:[%s650 + $0x78] sm:$0xf]
      %v1411 = vld [vmem:[%s650 + $0x7c] sm:$0xf]
      %v1412 = vld [vmem:[%s653] sm:$0x1]
      %v1414 = vlaneseq
      %v1415 = vshrl.u32 %v1414, 7
      %v1416 = vsub.s32 0, %v1415
      %v1417 = vrot.slane %v1412, %v1416
      %v1451 = vunpack.c.l.b16 %v1380
      %v1452 = vunpack.c.l.b16 %v1381
      %v1453 = vunpack.c.l.b16 %v1382
      %v1454 = vunpack.c.l.b16 %v1383
      %v1455 = vunpack.c.l.b16 %v1384
      %v1456 = vunpack.c.l.b16 %v1385
      %v1457 = vunpack.c.l.b16 %v1386
      %v1458 = vunpack.c.l.b16 %v1387
      %v1459 = vunpack.c.l.b16 %v1388
      %v1460 = vunpack.c.l.b16 %v1389
      %v1461 = vunpack.c.l.b16 %v1390
      %v1462 = vunpack.c.l.b16 %v1391
      %v1463 = vunpack.c.l.b16 %v1392
      %v1464 = vunpack.c.l.b16 %v1393
      %v1465 = vunpack.c.l.b16 %v1394
      %v1466 = vunpack.c.l.b16 %v1395
      %v1467 = vunpack.c.l.b16 %v1396
      %v1468 = vunpack.c.l.b16 %v1397
      %v1469 = vunpack.c.l.b16 %v1398
      %v1470 = vunpack.c.l.b16 %v1399
      %v1471 = vunpack.c.l.b16 %v1400
      %v1472 = vunpack.c.l.b16 %v1401
      %v1473 = vunpack.c.l.b16 %v1402
      %v1474 = vunpack.c.l.b16 %v1403
      %v1475 = vunpack.c.l.b16 %v1404
      %v1476 = vunpack.c.l.b16 %v1405
      %v1477 = vunpack.c.l.b16 %v1406
      %v1478 = vunpack.c.l.b16 %v1407
      %v1479 = vunpack.c.l.b16 %v1408
      %v1480 = vunpack.c.l.b16 %v1409
      %v1481 = vunpack.c.l.b16 %v1410
      %v1482 = vunpack.c.l.b16 %v1411
      %v1483 = vpack.c.b16 %v1452, %v1451
      %v1484 = vpack.c.b16 %v1454, %v1453
      %v1485 = vpack.c.b16 %v1456, %v1455
      %v1486 = vpack.c.b16 %v1458, %v1457
      %v1487 = vpack.c.b16 %v1460, %v1459
      %v1488 = vpack.c.b16 %v1462, %v1461
      %v1489 = vpack.c.b16 %v1464, %v1463
      %v1490 = vpack.c.b16 %v1466, %v1465
      %v1491 = vpack.c.b16 %v1468, %v1467
      %v1492 = vpack.c.b16 %v1470, %v1469
      %v1493 = vpack.c.b16 %v1472, %v1471
      %v1494 = vpack.c.b16 %v1474, %v1473
      %v1495 = vpack.c.b16 %v1476, %v1475
      %v1496 = vpack.c.b16 %v1478, %v1477
      %v1497 = vpack.c.b16 %v1480, %v1479
      %v1498 = vpack.c.b16 %v1482, %v1481
      %1515 = vmatprep.subr.bf16.mxu0 0
      %1516 = vmatpush1.bf16.msra.mxu0 %v1490
      %1517 = vmatprep.subr.bf16.mxu0 0
      %1518 = vmatpush1.bf16.msra.mxu0 %v1489
      %1519 = vmatprep.subr.bf16.mxu0 0
      %1520 = vmatpush1.bf16.msra.mxu0 %v1488
      %1521 = vmatprep.subr.bf16.mxu0 0
      %1522 = vmatpush1.bf16.msra.mxu0 %v1487
      %1523 = vmatprep.subr.bf16.mxu0 0
      %1524 = vmatpush1.bf16.msra.mxu0 %v1486
      %1525 = vmatprep.subr.bf16.mxu0 0
      %1526 = vmatpush1.bf16.msra.mxu0 %v1485
      %1527 = vmatprep.subr.bf16.mxu0 0
      %1528 = vmatpush1.bf16.msra.mxu0 %v1484
      %1529 = vmatprep.subr.bf16.mxu0 0
      %1530 = vmatpush1.bf16.msra.mxu0 %v1483
      %1531 = vmatprep.subr.bf16.mxu0 0
      %1532 = vmatpush2.bf16.msra.mxu0 %v1498
      %1533 = vmatprep.subr.bf16.mxu0 0
      %1534 = vmatpush2.bf16.msra.mxu0 %v1497
      %1535 = vmatprep.subr.bf16.mxu0 0
      %1536 = vmatpush2.bf16.msra.mxu0 %v1496
      %1537 = vmatprep.subr.bf16.mxu0 0
      %1538 = vmatpush2.bf16.msra.mxu0 %v1495
      %1539 = vmatprep.subr.bf16.mxu0 0
      %1540 = vmatpush2.bf16.msra.mxu0 %v1494
      %1541 = vmatprep.subr.bf16.mxu0 0
      %1542 = vmatpush2.bf16.msra.mxu0 %v1493
      %1543 = vmatprep.subr.bf16.mxu0 0
      %1544 = vmatpush2.bf16.msra.mxu0 %v1492
      %1545 = vmatprep.subr.bf16.mxu0 0
      %1546 = vmatpush2.bf16.msra.mxu0 %v1491
      %1547 = vmatprep.mubr.bf16.mxu0 %v1379
      %1548 = vmatmul.mubr.bf16.gmra.mxu0 %v1378
      %v1549 = vpop.f32.mrf.mxu0
      %v1550 = vadd.f32 %v1417, %v1549
      %v1551 = vpop.f32.mrf.mxu0
      %v1552 = vpop.f32.mrf.mxu0
      %v1553 = vpop.f32.mrf.mxu0
      %1554 = vdwg.mxu0
      %v1555 = vadd.f32 %v694, %v1550
      %1556 = vadd.xlane.f32.xlu0 %v1555
      %v1557 = vpop.xlane.xlu0 %1556
      %v1558 = vmul.f32 %v1557, %v704
      %v1559 = vsub.f32 %v1555, %v1558
      %v1560 = vmul.f32 %v1559, %v1559
      %1561 = vadd.xlane.f32.xlu0 %v1560
      %v1562 = vpop.xlane.xlu0 %1561
      %v1563 = vmul.f32 %v1562, %v704
      %v1564 = vadd.f32 %v1563, 1e-06
      %v1565 = vrsqrt.pop %v1564
      %v1566 = vmul.f32 %v1559, %v1565
      %v1567 = vld [vmem:[%s662] sm:$0x1]
      %v1569 = vlaneseq
      %v1570 = vshrl.u32 %v1569, 7
      %v1571 = vsub.s32 0, %v1570
      %v1572 = vrot.slane %v1567, %v1571
      %v1574 = vmul.f32 %v1566, %v1572
      %v1575 = vld [vmem:[%s665] sm:$0x1]
      %v1577 = vlaneseq
      %v1578 = vshrl.u32 %v1577, 7
      %v1579 = vsub.s32 0, %v1578
      %v1580 = vrot.slane %v1575, %v1579
      %v1582 = vadd.f32 %v1574, %v1580
      %v1583 = vld [vmem:[%s670] sm:$0xff]
      %v1584 = vld [vmem:[%s670 + $0x8] sm:$0xff]
      %v1585 = vld [vmem:[%s670 + $0x10] sm:$0xff]
      %v1586 = vld [vmem:[%s670 + $0x18] sm:$0xff]
      %v1587 = vld [vmem:[%s670 + $0x20] sm:$0xff]
      %v1588 = vld [vmem:[%s670 + $0x28] sm:$0xff]
      %v1589 = vld [vmem:[%s670 + $0x30] sm:$0xff]
      %v1590 = vld [vmem:[%s670 + $0x38] sm:$0xff]
      %v1591 = vld [vmem:[%s670 + $0x40] sm:$0xff]
      %v1592 = vld [vmem:[%s670 + $0x48] sm:$0xff]
      %v1593 = vld [vmem:[%s670 + $0x50] sm:$0xff]
      %v1594 = vld [vmem:[%s670 + $0x58] sm:$0xff]
      %v1595 = vld [vmem:[%s670 + $0x60] sm:$0xff]
      %v1596 = vld [vmem:[%s670 + $0x68] sm:$0xff]
      %v1597 = vld [vmem:[%s670 + $0x70] sm:$0xff]
      %v1598 = vld [vmem:[%s670 + $0x78] sm:$0xff]
      %v1599 = vld [vmem:[%s674] sm:$0x3]
      %v1600 = vpack.c.bf16 %v1582, %v1582
      %v1602 = vlaneseq
      %v1603 = vshrl.u32 %v1602, 7
      %v1604 = vsub.s32 0, %v1603
      %v1605 = vrot.slane %v1599, %v1604
      %v1606 = vlaneseq
      %v1607 = vshrl.u32 %v1606, 7
      %v1608 = vsub.s32 1, %v1607
      %v1609 = vrot.slane %v1599, %v1608
      %v1628 = vunpack.c.l.b16 %v1583
      %v1629 = vunpack.c.h.b16 %v1583
      %v1630 = vunpack.c.l.b16 %v1584
      %v1631 = vunpack.c.h.b16 %v1584
      %v1632 = vunpack.c.l.b16 %v1585
      %v1633 = vunpack.c.h.b16 %v1585
      %v1634 = vunpack.c.l.b16 %v1586
      %v1635 = vunpack.c.h.b16 %v1586
      %v1636 = vunpack.c.l.b16 %v1587
      %v1637 = vunpack.c.h.b16 %v1587
      %v1638 = vunpack.c.l.b16 %v1588
      %v1639 = vunpack.c.h.b16 %v1588
      %v1640 = vunpack.c.l.b16 %v1589
      %v1641 = vunpack.c.h.b16 %v1589
      %v1642 = vunpack.c.l.b16 %v1590
      %v1643 = vunpack.c.h.b16 %v1590
      %v1644 = vunpack.c.l.b16 %v1591
      %v1645 = vunpack.c.h.b16 %v1591
      %v1646 = vunpack.c.l.b16 %v1592
      %v1647 = vunpack.c.h.b16 %v1592
      %v1648 = vunpack.c.l.b16 %v1593
      %v1649 = vunpack.c.h.b16 %v1593
      %v1650 = vunpack.c.l.b16 %v1594
      %v1651 = vunpack.c.h.b16 %v1594
      %v1652 = vunpack.c.l.b16 %v1595
      %v1653 = vunpack.c.h.b16 %v1595
      %v1654 = vunpack.c.l.b16 %v1596
      %v1655 = vunpack.c.h.b16 %v1596
      %v1656 = vunpack.c.l.b16 %v1597
      %v1657 = vunpack.c.h.b16 %v1597
      %v1658 = vunpack.c.l.b16 %v1598
      %v1659 = vunpack.c.h.b16 %v1598
      %v1660 = vpack.c.b16 %v1630, %v1628
      %v1661 = vpack.c.b16 %v1631, %v1629
      %v1662 = vpack.c.b16 %v1634, %v1632
      %v1663 = vpack.c.b16 %v1635, %v1633
      %v1664 = vpack.c.b16 %v1638, %v1636
      %v1665 = vpack.c.b16 %v1639, %v1637
      %v1666 = vpack.c.b16 %v1642, %v1640
      %v1667 = vpack.c.b16 %v1643, %v1641
      %v1668 = vpack.c.b16 %v1646, %v1644
      %v1669 = vpack.c.b16 %v1647, %v1645
      %v1670 = vpack.c.b16 %v1650, %v1648
      %v1671 = vpack.c.b16 %v1651, %v1649
      %v1672 = vpack.c.b16 %v1654, %v1652
      %v1673 = vpack.c.b16 %v1655, %v1653
      %v1674 = vpack.c.b16 %v1658, %v1656
      %v1675 = vpack.c.b16 %v1659, %v1657
      %1692 = vmatprep.subr.bf16.mxu0 %v1675
      %1693 = vmatpush1.bf16.msra.mxu0 %v1674
      %1694 = vmatprep.subr.bf16.mxu0 %v1673
      %1695 = vmatpush1.bf16.msra.mxu0 %v1672
      %1696 = vmatprep.subr.bf16.mxu0 %v1671
      %1697 = vmatpush1.bf16.msra.mxu0 %v1670
      %1698 = vmatprep.subr.bf16.mxu0 %v1669
      %1699 = vmatpush1.bf16.msra.mxu0 %v1668
      %1700 = vmatprep.subr.bf16.mxu0 %v1667
      %1701 = vmatpush1.bf16.msra.mxu0 %v1666
      %1702 = vmatprep.subr.bf16.mxu0 %v1665
      %1703 = vmatpush1.bf16.msra.mxu0 %v1664
      %1704 = vmatprep.subr.bf16.mxu0 %v1663
      %1705 = vmatpush1.bf16.msra.mxu0 %v1662
      %1706 = vmatprep.subr.bf16.mxu0 %v1661
      %1707 = vmatpush1.bf16.msra.mxu0 %v1660
      %1708 = vmatprep.subr.bf16.mxu0 0
      %1709 = vmatpush2.bf16.msra.mxu0 0
      %1710 = vmatprep.subr.bf16.mxu0 0
      %1711 = vmatpush2.bf16.msra.mxu0 0
      %1712 = vmatprep.subr.bf16.mxu0 0
      %1713 = vmatpush2.bf16.msra.mxu0 0
      %1714 = vmatprep.subr.bf16.mxu0 0
      %1715 = vmatpush2.bf16.msra.mxu0 0
      %1716 = vmatprep.subr.bf16.mxu0 0
      %1717 = vmatpush2.bf16.msra.mxu0 0
      %1718 = vmatprep.subr.bf16.mxu0 0
      %1719 = vmatpush2.bf16.msra.mxu0 0
      %1720 = vmatprep.subr.bf16.mxu0 0
      %1721 = vmatpush2.bf16.msra.mxu0 0
      %1722 = vmatprep.subr.bf16.mxu0 0
      %1723 = vmatpush2.bf16.msra.mxu0 0
      %1724 = vmatprep.mubr.bf16.mxu0 0
      %1725 = vmatmul.mubr.bf16.gmra.mxu0 %v1600
      %v1726 = vpop.f32.mrf.mxu0
      %v1727 = vadd.f32 %v1605, %v1726
      %v1728 = vpop.f32.mrf.mxu0
      %v1729 = vadd.f32 %v1609, %v1728
      %v1730 = vpop.f32.mrf.mxu0
      %v1731 = vpop.f32.mrf.mxu0
      %1732 = vdwg.mxu0
      %v1733 = vmul.f32 %v1727, %v1727
      %v1734 = vmul.f32 %v1729, %v1729
      %v1735 = vmul.f32 %v1727, %v1733
      %v1736 = vmul.f32 %v1729, %v1734
      %v1737 = vmul.f32 %v1735, 0.044715
      %v1738 = vmul.f32 %v1736, 0.044715
      %v1739 = vadd.f32 %v1727, %v1737
      %v1740 = vadd.f32 %v1729, %v1738
      %v1741 = vmul.f32 %v1739, 0.7978846
      %v1742 = vmul.f32 %v1740, 0.7978846
      %v1743 = vtanh.pop %v1741
      %v1744 = vtanh.pop %v1742
      %v1745 = vadd.f32 %v1743, 1.0
      %v1746 = vadd.f32 %v1744, 1.0
      %v1747 = vmul.f32 %v1745, 0.5
      %v1748 = vmul.f32 %v1746, 0.5
      %v1749 = vmul.f32 %v1727, %v1747
      %v1750 = vmul.f32 %v1729, %v1748
      %v1751 = vld [vmem:[%s679] sm:$0xf]
      %v1752 = vld [vmem:[%s679 + $0x4] sm:$0xf]
      %v1753 = vld [vmem:[%s679 + $0x8] sm:$0xf]
      %v1754 = vld [vmem:[%s679 + $0xc] sm:$0xf]
      %v1755 = vld [vmem:[%s679 + $0x10] sm:$0xf]
      %v1756 = vld [vmem:[%s679 + $0x14] sm:$0xf]
      %v1757 = vld [vmem:[%s679 + $0x18] sm:$0xf]
      %v1758 = vld [vmem:[%s679 + $0x1c] sm:$0xf]
      %v1759 = vld [vmem:[%s679 + $0x20] sm:$0xf]
      %v1760 = vld [vmem:[%s679 + $0x24] sm:$0xf]
      %v1761 = vld [vmem:[%s679 + $0x28] sm:$0xf]
      %v1762 = vld [vmem:[%s679 + $0x2c] sm:$0xf]
      %v1763 = vld [vmem:[%s679 + $0x30] sm:$0xf]
      %v1764 = vld [vmem:[%s679 + $0x34] sm:$0xf]
      %v1765 = vld [vmem:[%s679 + $0x38] sm:$0xf]
      %v1766 = vld [vmem:[%s679 + $0x3c] sm:$0xf]
      %v1767 = vld [vmem:[%s679 + $0x40] sm:$0xf]
      %v1768 = vld [vmem:[%s679 + $0x44] sm:$0xf]
      %v1769 = vld [vmem:[%s679 + $0x48] sm:$0xf]
      %v1770 = vld [vmem:[%s679 + $0x4c] sm:$0xf]
      %v1771 = vld [vmem:[%s679 + $0x50] sm:$0xf]
      %v1772 = vld [vmem:[%s679 + $0x54] sm:$0xf]
      %v1773 = vld [vmem:[%s679 + $0x58] sm:$0xf]
      %v1774 = vld [vmem:[%s679 + $0x5c] sm:$0xf]
      %v1775 = vld [vmem:[%s679 + $0x60] sm:$0xf]
      %v1776 = vld [vmem:[%s679 + $0x64] sm:$0xf]
      %v1777 = vld [vmem:[%s679 + $0x68] sm:$0xf]
      %v1778 = vld [vmem:[%s679 + $0x6c] sm:$0xf]
      %v1779 = vld [vmem:[%s679 + $0x70] sm:$0xf]
      %v1780 = vld [vmem:[%s679 + $0x74] sm:$0xf]
      %v1781 = vld [vmem:[%s679 + $0x78] sm:$0xf]
      %v1782 = vld [vmem:[%s679 + $0x7c] sm:$0xf]
      %v1783 = vld [vmem:[%s682] sm:$0x1]
      %v1784 = vpack.c.bf16 %v1749, %v1749
      %v1785 = vpack.c.bf16 %v1750, %v1750
      %v1787 = vlaneseq
      %v1788 = vshrl.u32 %v1787, 7
      %v1789 = vsub.s32 0, %v1788
      %v1790 = vrot.slane %v1783, %v1789
      %v1824 = vunpack.c.l.b16 %v1751
      %v1825 = vunpack.c.l.b16 %v1752
      %v1826 = vunpack.c.l.b16 %v1753
      %v1827 = vunpack.c.l.b16 %v1754
      %v1828 = vunpack.c.l.b16 %v1755
      %v1829 = vunpack.c.l.b16 %v1756
      %v1830 = vunpack.c.l.b16 %v1757
      %v1831 = vunpack.c.l.b16 %v1758
      %v1832 = vunpack.c.l.b16 %v1759
      %v1833 = vunpack.c.l.b16 %v1760
      %v1834 = vunpack.c.l.b16 %v1761
      %v1835 = vunpack.c.l.b16 %v1762
      %v1836 = vunpack.c.l.b16 %v1763
      %v1837 = vunpack.c.l.b16 %v1764
      %v1838 = vunpack.c.l.b16 %v1765
      %v1839 = vunpack.c.l.b16 %v1766
      %v1840 = vunpack.c.l.b16 %v1767
      %v1841 = vunpack.c.l.b16 %v1768
      %v1842 = vunpack.c.l.b16 %v1769
      %v1843 = vunpack.c.l.b16 %v1770
      %v1844 = vunpack.c.l.b16 %v1771
      %v1845 = vunpack.c.l.b16 %v1772
      %v1846 = vunpack.c.l.b16 %v1773
      %v1847 = vunpack.c.l.b16 %v1774
      %v1848 = vunpack.c.l.b16 %v1775
      %v1849 = vunpack.c.l.b16 %v1776
      %v1850 = vunpack.c.l.b16 %v1777
      %v1851 = vunpack.c.l.b16 %v1778
      %v1852 = vunpack.c.l.b16 %v1779
      %v1853 = vunpack.c.l.b16 %v1780
      %v1854 = vunpack.c.l.b16 %v1781
      %v1855 = vunpack.c.l.b16 %v1782
      %v1856 = vpack.c.b16 %v1825, %v1824
      %v1857 = vpack.c.b16 %v1827, %v1826
      %v1858 = vpack.c.b16 %v1829, %v1828
      %v1859 = vpack.c.b16 %v1831, %v1830
      %v1860 = vpack.c.b16 %v1833, %v1832
      %v1861 = vpack.c.b16 %v1835, %v1834
      %v1862 = vpack.c.b16 %v1837, %v1836
      %v1863 = vpack.c.b16 %v1839, %v1838
      %v1864 = vpack.c.b16 %v1841, %v1840
      %v1865 = vpack.c.b16 %v1843, %v1842
      %v1866 = vpack.c.b16 %v1845, %v1844
      %v1867 = vpack.c.b16 %v1847, %v1846
      %v1868 = vpack.c.b16 %v1849, %v1848
      %v1869 = vpack.c.b16 %v1851, %v1850
      %v1870 = vpack.c.b16 %v1853, %v1852
      %v1871 = vpack.c.b16 %v1855, %v1854
      %1888 = vmatprep.subr.bf16.mxu0 0
      %1889 = vmatpush1.bf16.msra.mxu0 %v1863
      %1890 = vmatprep.subr.bf16.mxu0 0
      %1891 = vmatpush1.bf16.msra.mxu0 %v1862
      %1892 = vmatprep.subr.bf16.mxu0 0
      %1893 = vmatpush1.bf16.msra.mxu0 %v1861
      %1894 = vmatprep.subr.bf16.mxu0 0
      %1895 = vmatpush1.bf16.msra.mxu0 %v1860
      %1896 = vmatprep.subr.bf16.mxu0 0
      %1897 = vmatpush1.bf16.msra.mxu0 %v1859
      %1898 = vmatprep.subr.bf16.mxu0 0
      %1899 = vmatpush1.bf16.msra.mxu0 %v1858
      %1900 = vmatprep.subr.bf16.mxu0 0
      %1901 = vmatpush1.bf16.msra.mxu0 %v1857
      %1902 = vmatprep.subr.bf16.mxu0 0
      %1903 = vmatpush1.bf16.msra.mxu0 %v1856
      %1904 = vmatprep.subr.bf16.mxu0 0
      %1905 = vmatpush2.bf16.msra.mxu0 %v1871
      %1906 = vmatprep.subr.bf16.mxu0 0
      %1907 = vmatpush2.bf16.msra.mxu0 %v1870
      %1908 = vmatprep.subr.bf16.mxu0 0
      %1909 = vmatpush2.bf16.msra.mxu0 %v1869
      %1910 = vmatprep.subr.bf16.mxu0 0
      %1911 = vmatpush2.bf16.msra.mxu0 %v1868
      %1912 = vmatprep.subr.bf16.mxu0 0
      %1913 = vmatpush2.bf16.msra.mxu0 %v1867
      %1914 = vmatprep.subr.bf16.mxu0 0
      %1915 = vmatpush2.bf16.msra.mxu0 %v1866
      %1916 = vmatprep.subr.bf16.mxu0 0
      %1917 = vmatpush2.bf16.msra.mxu0 %v1865
      %1918 = vmatprep.subr.bf16.mxu0 0
      %1919 = vmatpush2.bf16.msra.mxu0 %v1864
      %1920 = vmatprep.mubr.bf16.mxu0 %v1785
      %1921 = vmatmul.mubr.bf16.gmra.mxu0 %v1784
      %v1922 = vpop.f32.mrf.mxu0
      %v1923 = vadd.f32 %v1790, %v1922
      %v1924 = vpop.f32.mrf.mxu0
      %v1925 = vpop.f32.mrf.mxu0
      %v1926 = vpop.f32.mrf.mxu0
      %1927 = vdwg.mxu0
      %v1928 = vadd.f32 %v1555, %v1923
      %1929 = vst [vmem:[%s686] sm:$0xff] %v1928
      %p1930 = scmp.lt.s32.totalorder %s29, 1
      %s1931 = scalar_select %p1930, %s29, 1
      %s1932 = smul.addr %s1931, 8
      %s1933 = scalar_lea.vmem %s14, %s1932
      // Predicated region
      $region81: #{text_image_forward.8} parent=75 // pred_check
        %p1934 = pneg %p419
      $region82: #{text_image_forward.8} parent=75 // pred_check_branch
        %1936 = sbr.rel (%p1934) target = $region84
      $region83: #{text_image_forward.8} parent=75 // pred_region
        _
      $region84: #{text_image_forward.8} parent=75 // pred_fallthru
        _
    $region76: #{text_image_forward.8} parent=5 // pred_fallthru
      _
    %p1937 = scmp.le.s32.totalorder 2, %s20
    // Predicated region
    $region85: #{text_image_forward.8} parent=5 // pred_check
      %p1938 = pneg %p1937
    $region86: #{text_image_forward.8} parent=5 // pred_check_branch
      %1940 = sbr.rel (%p1938) target = $region88
    $region87: #{text_image_forward.8} parent=5 // pred_region
      %s1941 = ssub.s32 %s20, 2
      // Predicated region
      $region89: #{text_image_forward.8} parent=87 // pred_check
        %p1942 = pneg %p425
      $region90: #{text_image_forward.8} parent=87 // pred_check_branch
        %1944 = sbr.rel (%p1942) target = $region92
      $region91: #{text_image_forward.8} parent=87 // pred_region
        %p1945 = scmp.lt.s32.totalorder %s31, 1
        %s1946 = scalar_select %p1945, %s31, 1
        %s1947 = smul.addr %s1946, 8
        %s1948 = scalar_lea.vmem %s14, %s1947
      $region92: #{text_image_forward.8} parent=87 // pred_fallthru
        _
    $region88: #{text_image_forward.8} parent=5 // pred_fallthru
      _
  $region6: #{text_image_forward.8} parent=0 // loop_footer
    %s24 = sadd.s32 1, %s20
  $region7: #{text_image_forward.8} parent=0 // loop_footer_branch
    %19 = sbr.rel target = $region3
  $region8: #{text_image_forward.8} parent=0 // loop_exit
    _

</llo_original>
